<compile_context>
chip_gen: v7x
topology: tpu7x:2x2x1
jax: 0.10.0
libtpu: 0.0.40
codegen_flags: <defaults>
</compile_context>

<pallas_src>
import functools

import jax
import jax.numpy as jnp
from jax.experimental import pallas as pl
from jax.experimental.pallas import tpu as pltpu

_HEAD_PAD = 128     # lane-dense padding for the actor/critic head outputs


# ----------------------------------------------------------------------------
# Fused kernel: one grid step == one branch (0: actor, 1: critic).
# ----------------------------------------------------------------------------
def _fused_kernel(p1_ref, w1_ref, b1_ref, w2_ref, b2_ref,
                  wf1_ref, bf1_ref, wf2_ref, bf2_ref, wh_ref, bh_ref,
                  out_ref, *, B, H, W):
    k = pl.program_id(0)
    Ho1, Wo1 = H - 1, W - 1          # conv1 output spatial dims
    Ho2, Wo2 = H - 2, W - 2          # conv2 output spatial dims
    S = Ho2 * Wo2

    def mm(x, w):                    # bf16 MXU matmul, f32 accumulation
        return jnp.dot(x.astype(jnp.bfloat16), w,
                       preferred_element_type=jnp.float32)

    # ---- conv1 as im2col matmul + bias + ReLU; rows ordered (b, i1, j1) ----
    h1 = mm(p1_ref[...], w1_ref[...][0]) + b1_ref[...][0]
    h1 = jnp.maximum(h1, 0.0)                        # (B*Ho1*Wo1, 256) f32

    # ---- conv2: build im2col patches from h1 with static slices (VMEM only)
    def gather(di, dj):
        rows = []
        for b in range(B):
            for i in range(Ho2):
                s = b * Ho1 * Wo1 + (i + di) * Wo1 + dj
                rows.append(h1[s:s + Wo2, :])
        return jnp.concatenate(rows, axis=0)         # (B*Ho2*Wo2, 256)

    p2 = jnp.concatenate([gather(di, dj) for di in (0, 1) for dj in (0, 1)],
                         axis=-1)                    # (M2, 1024), (kh,kw,c)
    h2 = jnp.maximum(mm(p2, w2_ref[...][0]) + b2_ref[...][0], 0.0)   # (M2, 512)

    # ---- flatten per sample in (i, j, c) order (fc1 columns were permuted in
    #      pack_params so this matches PyTorch's NCHW flatten exactly) -------
    flat = jnp.concatenate(
        [jnp.concatenate([h2[b * S + s:b * S + s + 1, :] for s in range(S)],
                         axis=-1)
         for b in range(B)], axis=0)                 # (B, n_flatten)

    # ---- fc1 -> fc2 -> head -------------------------------------------------
    f1 = jnp.maximum(mm(flat, wf1_ref[...][0]) + bf1_ref[...][0], 0.0)
    f2 = jnp.maximum(mm(f1, wf2_ref[...][0]) + bf2_ref[...][0], 0.0)
    logits = mm(f2, wh_ref[...][0]) + bh_ref[...][0]                 # (B, 128)

    @pl.when(k == 0)      # actor head: softmax (padded lanes biased to -1e30)
    def _():
        m = jnp.max(logits, axis=-1, keepdims=True)
        e = jnp.exp(logits - m)
        inv = pl.reciprocal(jnp.sum(e, axis=-1, keepdims=True), approx=True)
        out_ref[...] = (e * inv)[None].astype(out_ref.dtype)

    @pl.when(k == 1)      # critic head: raw value (lane 0)
    def _():
        out_ref[...] = logits[None].astype(out_ref.dtype)


# ----------------------------------------------------------------------------
# One-time weight packing: PyTorch-layout f32 -> bf16 kernel operands,
# stacked along a leading branch axis (0: actor, 1: critic).
# ----------------------------------------------------------------------------
def pack_params(params, shared=False):
    bf16 = jnp.bfloat16
    pa = params["actor"]
    pc = params["actor"] if shared else params["critic"]

    c2_out = pa["conv2"][0].shape[0]                 # 512
    n_flat = pa["fc1"][0].shape[1]
    S = n_flat // c2_out                             # (H-2)*(W-2)

    def conv_mat(w):       # (O, Cin, 2, 2) -> (4*Cin, O), rows in (kh, kw, c)
        O, Cin = w.shape[0], w.shape[1]
        return jnp.transpose(w, (2, 3, 1, 0)).reshape(4 * Cin, O)

    def fc1_mat(w):        # cols (c, s) -> rows (s, c): matches kernel flatten
        out_dim = w.shape[0]
        return jnp.transpose(w.reshape(out_dim, c2_out, S),
                             (2, 1, 0)).reshape(S * c2_out, out_dim)

    def fc_mat(w):         # (out, in) -> (in, out)
        return w.T

    def head_mat(w, b, pad_bias):
        out_dim, in_dim = w.shape
        assert out_dim <= _HEAD_PAD
        wm = jnp.zeros((in_dim, _HEAD_PAD), jnp.float32).at[:, :out_dim].set(w.T)
        bm = jnp.full((_HEAD_PAD,), pad_bias, jnp.float32).at[:out_dim].set(b)
        return wm, bm

    def stack_w(fn, key):
        return jnp.stack([fn(pa[key][0]), fn(pc[key][0])]).astype(bf16)

    def stack_b(key):
        return jnp.stack([pa[key][1], pc[key][1]])[:, None, :].astype(jnp.float32)

    wha, bha = head_mat(*params["actor_head"], pad_bias=-1e30)  # mask padded logits
    whc, bhc = head_mat(*params["critic_head"], pad_bias=0.0)

    return dict(
        w1=stack_w(conv_mat, "conv1"), b1=stack_b("conv1"),
        w2=stack_w(conv_mat, "conv2"), b2=stack_b("conv2"),
        wf1=stack_w(fc1_mat, "fc1"), bf1=stack_b("fc1"),
        wf2=stack_w(fc_mat, "fc2"), bf2=stack_b("fc2"),
        wh=jnp.stack([wha, whc]).astype(bf16),
        bh=jnp.stack([bha, bhc])[:, None, :],
    )


# ----------------------------------------------------------------------------
# Forward pass wrapper (matches CNN22_ActorCritic.forward).
# ----------------------------------------------------------------------------
def actor_critic_forward(obs, packed, action_dim):
    """obs: (B, C, H, W) f32 NCHW -> (probs (B, action_dim), value (B, 1))."""
    B, C, H, W = obs.shape
    Ho1, Wo1 = H - 1, W - 1
    M1 = B * Ho1 * Wo1

    # conv1 im2col in the wrapper (tiny): feature order (kh, kw, c)
    x = jnp.transpose(obs, (0, 2, 3, 1))             # NHWC
    patches = jnp.concatenate(
        [x[:, di:di + Ho1, dj:dj + Wo1, :] for di in (0, 1) for dj in (0, 1)],
        axis=-1).reshape(M1, 4 * C).astype(jnp.bfloat16)

    def branch_spec(a):      # one branch's full weight/bias tile per grid step
        return pl.BlockSpec((1,) + a.shape[1:],
                            lambda k: (k,) + (0,) * (a.ndim - 1))

    operands = (patches, packed["w1"], packed["b1"], packed["w2"], packed["b2"],
                packed["wf1"], packed["bf1"], packed["wf2"], packed["bf2"],
                packed["wh"], packed["bh"])
    in_specs = [pl.BlockSpec(patches.shape, lambda k: (0, 0))]
    in_specs += [branch_spec(a) for a in operands[1:]]

    out = pl.pallas_call(
        functools.partial(_fused_kernel, B=B, H=H, W=W),
        out_shape=jax.ShapeDtypeStruct((2, B, _HEAD_PAD), jnp.float32),
        grid=(2,),
        in_specs=in_specs,
        out_specs=pl.BlockSpec((1, B, _HEAD_PAD), lambda k: (k, 0, 0)),
        compiler_params=pltpu.CompilerParams(
            dimension_semantics=("parallel",),
            vmem_limit_bytes=32 * 1024 * 1024),
    )(*operands)

    probs = out[0, :, :action_dim]
    value = out[1, :, :1]
    return probs, value


# ----------------------------------------------------------------------------
# Parameter init (deterministic, synthetic — no checkpoint loading).
# ----------------------------------------------------------------------------
def _init_params(key, n_input_channels, n_flatten, action_dim):
    ks = jax.random.split(key, 32)
    ki = iter(ks)

    def dense(out_dim, in_dim):
        return (0.05 * jax.random.normal(next(ki), (out_dim, in_dim), jnp.float32),
                0.05 * jax.random.normal(next(ki), (out_dim,), jnp.float32))

    def conv(out_ch, in_ch):
        return (0.05 * jax.random.normal(next(ki), (out_ch, in_ch, 2, 2), jnp.float32),
                0.05 * jax.random.normal(next(ki), (out_ch,), jnp.float32))

    def branch():
        return {"conv1": conv(256, n_input_channels), "conv2": conv(512, 256),
                "fc1": dense(1024, n_flatten), "fc2": dense(256, 1024)}

    return {"actor": branch(), "critic": branch(),
            "actor_head": dense(action_dim, 256), "critic_head": dense(1, 256)}


# ----------------------------------------------------------------------------
# Pure-JAX f32 reference (for correctness sanity check).
# ----------------------------------------------------------------------------
def _reference_forward(obs, params, shared=False):
    def conv_relu(x, w, b):
        y = jax.lax.conv_general_dilated(
            x, w, window_strides=(1, 1), padding="VALID",
            dimension_numbers=("NCHW", "OIHW", "NCHW"))
        return jax.nn.relu(y + b[None, :, None, None])

    def feats(x, p):
        h = conv_relu(x, *p["conv1"])
        h = conv_relu(h, *p["conv2"])
        h = h.reshape(x.shape[0], -1)
        h = jax.nn.relu(h @ p["fc1"][0].T + p["fc1"][1])
        h = jax.nn.relu(h @ p["fc2"][0].T + p["fc2"][1])
        return h

    fa = feats(obs, params["actor"])
    fc = fa if shared else feats(obs, params["critic"])
    probs = jax.nn.softmax(fa @ params["actor_head"][0].T + params["actor_head"][1],
                           axis=-1)
    value = fc @ params["critic_head"][0].T + params["critic_head"][1]
    return probs, value


if __name__ == "__main__":
    # observation_space.shape = (C, H, W) = (4, 4, 4), batch = 2, action_dim = 8
    B, C, H, W = 2, 4, 4, 4
    action_dim = 8
    n_flatten = 512 * (H - 2) * (W - 2)

    key = jax.random.PRNGKey(0)
    k_obs, k_par = jax.random.split(key)
    obs = jax.random.normal(k_obs, (B, C, H, W), jnp.float32)
    params = _init_params(k_par, C, n_flatten, action_dim)

    fwd = jax.jit(functools.partial(actor_critic_forward, action_dim=action_dim))

    # --- shared_features_extractor = False (module default) -----------------
    packed = pack_params(params, shared=False)
    probs, value = fwd(obs, packed)
    probs = jax.block_until_ready(probs)
    value = jax.block_until_ready(value)

    ref_probs, ref_value = _reference_forward(obs, params, shared=False)
    assert probs.shape == (B, action_dim) and value.shape == (B, 1)
    assert jnp.allclose(probs, ref_probs, atol=2e-2, rtol=2e-2)
    assert jnp.allclose(value, ref_value, atol=2e-2, rtol=2e-2)
    assert jnp.allclose(jnp.sum(probs, axis=-1), 1.0, atol=5e-3)

    # --- shared_features_extractor = True (same compiled kernel, reused) ----
    packed_s = pack_params(params, shared=True)
    probs_s, value_s = fwd(obs, packed_s)
    probs_s = jax.block_until_ready(probs_s)
    value_s = jax.block_until_ready(value_s)
    ref_probs_s, ref_value_s = _reference_forward(obs, params, shared=True)
    assert jnp.allclose(probs_s, ref_probs_s, atol=2e-2, rtol=2e-2)
    assert jnp.allclose(value_s, ref_value_s, atol=2e-2, rtol=2e-2)

    print("KERNEL_OK")
</pallas_src>

<mosaic_0001>
module attributes {stable_mosaic.version = 11 : i64} {
  func.func @_fused_kernel(%arg0: i32, %arg1: memref<18x16xbf16, #tpu.memory_space<vmem>>, %arg2: memref<1x16x256xbf16, #tpu.memory_space<vmem>>, %arg3: memref<1x1x256xf32, #tpu.memory_space<vmem>>, %arg4: memref<1x1024x512xbf16, #tpu.memory_space<vmem>>, %arg5: memref<1x1x512xf32, #tpu.memory_space<vmem>>, %arg6: memref<1x2048x1024xbf16, #tpu.memory_space<vmem>>, %arg7: memref<1x1x1024xf32, #tpu.memory_space<vmem>>, %arg8: memref<1x1024x256xbf16, #tpu.memory_space<vmem>>, %arg9: memref<1x1x256xf32, #tpu.memory_space<vmem>>, %arg10: memref<1x256x128xbf16, #tpu.memory_space<vmem>>, %arg11: memref<1x1x128xf32, #tpu.memory_space<vmem>>, %arg12: memref<1x2x128xf32, #tpu.memory_space<vmem>>) attributes {dimension_semantics = [#tpu.dimension_semantics<parallel>], iteration_bounds = array<i64: 2>, scalar_prefetch = 0 : i64, scratch_operands = 0 : i64, tpu.core_type = #tpu.core_type<tc>, window_params = [{pipeline_mode = #tpu.pipeline_mode<synchronous>, transform_indices = @transform_0, window_bounds = array<i64: 18, 16>}, {transform_indices = @transform_1, window_bounds = array<i64: 1, 16, 256>}, {transform_indices = @transform_2, window_bounds = array<i64: 1, 1, 256>}, {transform_indices = @transform_3, window_bounds = array<i64: 1, 1024, 512>}, {transform_indices = @transform_4, window_bounds = array<i64: 1, 1, 512>}, {transform_indices = @transform_5, window_bounds = array<i64: 1, 2048, 1024>}, {transform_indices = @transform_6, window_bounds = array<i64: 1, 1, 1024>}, {transform_indices = @transform_7, window_bounds = array<i64: 1, 1024, 256>}, {transform_indices = @transform_8, window_bounds = array<i64: 1, 1, 256>}, {transform_indices = @transform_9, window_bounds = array<i64: 1, 256, 128>}, {transform_indices = @transform_10, window_bounds = array<i64: 1, 1, 128>}, {transform_indices = @transform_11, window_bounds = array<i64: 1, 2, 128>}]} {
    %c0 = arith.constant 0 : index
    %c0_0 = arith.constant 0 : index
    %0 = vector.load %arg1[%c0, %c0_0] : memref<18x16xbf16, #tpu.memory_space<vmem>>, vector<18x16xbf16>
    %c0_1 = arith.constant 0 : index
    %c0_2 = arith.constant 0 : index
    %c0_3 = arith.constant 0 : index
    %1 = vector.load %arg2[%c0_1, %c0_2, %c0_3] : memref<1x16x256xbf16, #tpu.memory_space<vmem>>, vector<1x16x256xbf16>
    %2 = vector.shape_cast %1 : vector<1x16x256xbf16> to vector<16x256xbf16>
    %cst = arith.constant dense<0.000000e+00> : vector<18x256xf32>
    %3 = tpu.matmul %0, %2, %cst {dimension_numbers = #tpu.dot_dimension_numbers<[1], [0], [0], [1], [0, 0, 1, 1], [], []>} : vector<18x16xbf16>, vector<16x256xbf16>, vector<18x256xf32> -> vector<18x256xf32>
    %c0_4 = arith.constant 0 : index
    %c0_5 = arith.constant 0 : index
    %c0_6 = arith.constant 0 : index
    %4 = vector.load %arg3[%c0_4, %c0_5, %c0_6] : memref<1x1x256xf32, #tpu.memory_space<vmem>>, vector<1x1x256xf32>
    %5 = vector.shape_cast %4 : vector<1x1x256xf32> to vector<1x256xf32>
    %6 = vector.broadcast %5 : vector<1x256xf32> to vector<18x256xf32>
    %7 = arith.addf %3, %6 : vector<18x256xf32>
    %cst_7 = arith.constant 0.000000e+00 : f32
    %8 = vector.broadcast %cst_7 : f32 to vector<18x256xf32>
    %9 = arith.maximumf %7, %8 : vector<18x256xf32>
    %10 = vector.extract_strided_slice %9 {offsets = [0, 0], sizes = [2, 256], strides = [1, 1]} : vector<18x256xf32> to vector<2x256xf32>
    %11 = vector.extract_strided_slice %9 {offsets = [3, 0], sizes = [2, 256], strides = [1, 1]} : vector<18x256xf32> to vector<2x256xf32>
    %12 = vector.extract_strided_slice %9 {offsets = [9, 0], sizes = [2, 256], strides = [1, 1]} : vector<18x256xf32> to vector<2x256xf32>
    %13 = vector.extract_strided_slice %9 {offsets = [12, 0], sizes = [2, 256], strides = [1, 1]} : vector<18x256xf32> to vector<2x256xf32>
    %14 = tpu.concatenate %10, %11, %12, %13 in 0 : vector<2x256xf32>, vector<2x256xf32>, vector<2x256xf32>, vector<2x256xf32> -> vector<8x256xf32>
    %15 = vector.extract_strided_slice %9 {offsets = [1, 0], sizes = [2, 256], strides = [1, 1]} : vector<18x256xf32> to vector<2x256xf32>
    %16 = vector.extract_strided_slice %9 {offsets = [4, 0], sizes = [2, 256], strides = [1, 1]} : vector<18x256xf32> to vector<2x256xf32>
    %17 = vector.extract_strided_slice %9 {offsets = [10, 0], sizes = [2, 256], strides = [1, 1]} : vector<18x256xf32> to vector<2x256xf32>
    %18 = vector.extract_strided_slice %9 {offsets = [13, 0], sizes = [2, 256], strides = [1, 1]} : vector<18x256xf32> to vector<2x256xf32>
    %19 = tpu.concatenate %15, %16, %17, %18 in 0 : vector<2x256xf32>, vector<2x256xf32>, vector<2x256xf32>, vector<2x256xf32> -> vector<8x256xf32>
    %20 = vector.extract_strided_slice %9 {offsets = [3, 0], sizes = [2, 256], strides = [1, 1]} : vector<18x256xf32> to vector<2x256xf32>
    %21 = vector.extract_strided_slice %9 {offsets = [6, 0], sizes = [2, 256], strides = [1, 1]} : vector<18x256xf32> to vector<2x256xf32>
    %22 = vector.extract_strided_slice %9 {offsets = [12, 0], sizes = [2, 256], strides = [1, 1]} : vector<18x256xf32> to vector<2x256xf32>
    %23 = vector.extract_strided_slice %9 {offsets = [15, 0], sizes = [2, 256], strides = [1, 1]} : vector<18x256xf32> to vector<2x256xf32>
    %24 = tpu.concatenate %20, %21, %22, %23 in 0 : vector<2x256xf32>, vector<2x256xf32>, vector<2x256xf32>, vector<2x256xf32> -> vector<8x256xf32>
    %25 = vector.extract_strided_slice %9 {offsets = [4, 0], sizes = [2, 256], strides = [1, 1]} : vector<18x256xf32> to vector<2x256xf32>
    %26 = vector.extract_strided_slice %9 {offsets = [7, 0], sizes = [2, 256], strides = [1, 1]} : vector<18x256xf32> to vector<2x256xf32>
    %27 = vector.extract_strided_slice %9 {offsets = [13, 0], sizes = [2, 256], strides = [1, 1]} : vector<18x256xf32> to vector<2x256xf32>
    %28 = vector.extract_strided_slice %9 {offsets = [16, 0], sizes = [2, 256], strides = [1, 1]} : vector<18x256xf32> to vector<2x256xf32>
    %29 = tpu.concatenate %25, %26, %27, %28 in 0 : vector<2x256xf32>, vector<2x256xf32>, vector<2x256xf32>, vector<2x256xf32> -> vector<8x256xf32>
    %30 = tpu.concatenate %14, %19, %24, %29 in 1 : vector<8x256xf32>, vector<8x256xf32>, vector<8x256xf32>, vector<8x256xf32> -> vector<8x1024xf32>
    %c0_8 = arith.constant 0 : index
    %c0_9 = arith.constant 0 : index
    %c0_10 = arith.constant 0 : index
    %31 = vector.load %arg4[%c0_8, %c0_9, %c0_10] : memref<1x1024x512xbf16, #tpu.memory_space<vmem>>, vector<1x1024x512xbf16>
    %32 = vector.shape_cast %31 : vector<1x1024x512xbf16> to vector<1024x512xbf16>
    %33 = arith.truncf %30 : vector<8x1024xf32> to vector<8x1024xbf16>
    %cst_11 = arith.constant dense<0.000000e+00> : vector<8x512xf32>
    %34 = tpu.matmul %33, %32, %cst_11 {dimension_numbers = #tpu.dot_dimension_numbers<[1], [0], [0], [1], [0, 0, 1, 1], [], []>} : vector<8x1024xbf16>, vector<1024x512xbf16>, vector<8x512xf32> -> vector<8x512xf32>
    %c0_12 = arith.constant 0 : index
    %c0_13 = arith.constant 0 : index
    %c0_14 = arith.constant 0 : index
    %35 = vector.load %arg5[%c0_12, %c0_13, %c0_14] : memref<1x1x512xf32, #tpu.memory_space<vmem>>, vector<1x1x512xf32>
    %36 = vector.shape_cast %35 : vector<1x1x512xf32> to vector<1x512xf32>
    %37 = vector.broadcast %36 : vector<1x512xf32> to vector<8x512xf32>
    %38 = arith.addf %34, %37 : vector<8x512xf32>
    %cst_15 = arith.constant 0.000000e+00 : f32
    %39 = vector.broadcast %cst_15 : f32 to vector<8x512xf32>
    %40 = arith.maximumf %38, %39 : vector<8x512xf32>
    %41 = vector.extract_strided_slice %40 {offsets = [0, 0], sizes = [1, 512], strides = [1, 1]} : vector<8x512xf32> to vector<1x512xf32>
    %42 = vector.extract_strided_slice %40 {offsets = [1, 0], sizes = [1, 512], strides = [1, 1]} : vector<8x512xf32> to vector<1x512xf32>
    %43 = vector.extract_strided_slice %40 {offsets = [2, 0], sizes = [1, 512], strides = [1, 1]} : vector<8x512xf32> to vector<1x512xf32>
    %44 = vector.extract_strided_slice %40 {offsets = [3, 0], sizes = [1, 512], strides = [1, 1]} : vector<8x512xf32> to vector<1x512xf32>
    %45 = tpu.concatenate %41, %42, %43, %44 in 1 : vector<1x512xf32>, vector<1x512xf32>, vector<1x512xf32>, vector<1x512xf32> -> vector<1x2048xf32>
    %46 = vector.extract_strided_slice %40 {offsets = [4, 0], sizes = [1, 512], strides = [1, 1]} : vector<8x512xf32> to vector<1x512xf32>
    %47 = vector.extract_strided_slice %40 {offsets = [5, 0], sizes = [1, 512], strides = [1, 1]} : vector<8x512xf32> to vector<1x512xf32>
    %48 = vector.extract_strided_slice %40 {offsets = [6, 0], sizes = [1, 512], strides = [1, 1]} : vector<8x512xf32> to vector<1x512xf32>
    %49 = vector.extract_strided_slice %40 {offsets = [7, 0], sizes = [1, 512], strides = [1, 1]} : vector<8x512xf32> to vector<1x512xf32>
    %50 = tpu.concatenate %46, %47, %48, %49 in 1 : vector<1x512xf32>, vector<1x512xf32>, vector<1x512xf32>, vector<1x512xf32> -> vector<1x2048xf32>
    %51 = tpu.concatenate %45, %50 in 0 : vector<1x2048xf32>, vector<1x2048xf32> -> vector<2x2048xf32>
    %c0_16 = arith.constant 0 : index
    %c0_17 = arith.constant 0 : index
    %c0_18 = arith.constant 0 : index
    %52 = vector.load %arg6[%c0_16, %c0_17, %c0_18] : memref<1x2048x1024xbf16, #tpu.memory_space<vmem>>, vector<1x2048x1024xbf16>
    %53 = vector.shape_cast %52 : vector<1x2048x1024xbf16> to vector<2048x1024xbf16>
    %54 = arith.truncf %51 : vector<2x2048xf32> to vector<2x2048xbf16>
    %cst_19 = arith.constant dense<0.000000e+00> : vector<2x1024xf32>
    %55 = tpu.matmul %54, %53, %cst_19 {dimension_numbers = #tpu.dot_dimension_numbers<[1], [0], [0], [1], [0, 0, 1, 1], [], []>} : vector<2x2048xbf16>, vector<2048x1024xbf16>, vector<2x1024xf32> -> vector<2x1024xf32>
    %c0_20 = arith.constant 0 : index
    %c0_21 = arith.constant 0 : index
    %c0_22 = arith.constant 0 : index
    %56 = vector.load %arg7[%c0_20, %c0_21, %c0_22] : memref<1x1x1024xf32, #tpu.memory_space<vmem>>, vector<1x1x1024xf32>
    %57 = vector.shape_cast %56 : vector<1x1x1024xf32> to vector<1x1024xf32>
    %58 = vector.broadcast %57 : vector<1x1024xf32> to vector<2x1024xf32>
    %59 = arith.addf %55, %58 : vector<2x1024xf32>
    %cst_23 = arith.constant 0.000000e+00 : f32
    %60 = vector.broadcast %cst_23 : f32 to vector<2x1024xf32>
    %61 = arith.maximumf %59, %60 : vector<2x1024xf32>
    %c0_24 = arith.constant 0 : index
    %c0_25 = arith.constant 0 : index
    %c0_26 = arith.constant 0 : index
    %62 = vector.load %arg8[%c0_24, %c0_25, %c0_26] : memref<1x1024x256xbf16, #tpu.memory_space<vmem>>, vector<1x1024x256xbf16>
    %63 = vector.shape_cast %62 : vector<1x1024x256xbf16> to vector<1024x256xbf16>
    %64 = arith.truncf %61 : vector<2x1024xf32> to vector<2x1024xbf16>
    %cst_27 = arith.constant dense<0.000000e+00> : vector<2x256xf32>
    %65 = tpu.matmul %64, %63, %cst_27 {dimension_numbers = #tpu.dot_dimension_numbers<[1], [0], [0], [1], [0, 0, 1, 1], [], []>} : vector<2x1024xbf16>, vector<1024x256xbf16>, vector<2x256xf32> -> vector<2x256xf32>
    %c0_28 = arith.constant 0 : index
    %c0_29 = arith.constant 0 : index
    %c0_30 = arith.constant 0 : index
    %66 = vector.load %arg9[%c0_28, %c0_29, %c0_30] : memref<1x1x256xf32, #tpu.memory_space<vmem>>, vector<1x1x256xf32>
    %67 = vector.shape_cast %66 : vector<1x1x256xf32> to vector<1x256xf32>
    %68 = vector.broadcast %67 : vector<1x256xf32> to vector<2x256xf32>
    %69 = arith.addf %65, %68 : vector<2x256xf32>
    %cst_31 = arith.constant 0.000000e+00 : f32
    %70 = vector.broadcast %cst_31 : f32 to vector<2x256xf32>
    %71 = arith.maximumf %69, %70 : vector<2x256xf32>
    %c0_32 = arith.constant 0 : index
    %c0_33 = arith.constant 0 : index
    %c0_34 = arith.constant 0 : index
    %72 = vector.load %arg10[%c0_32, %c0_33, %c0_34] : memref<1x256x128xbf16, #tpu.memory_space<vmem>>, vector<1x256x128xbf16>
    %73 = vector.shape_cast %72 : vector<1x256x128xbf16> to vector<256x128xbf16>
    %74 = arith.truncf %71 : vector<2x256xf32> to vector<2x256xbf16>
    %cst_35 = arith.constant dense<0.000000e+00> : vector<2x128xf32>
    %75 = tpu.matmul %74, %73, %cst_35 {dimension_numbers = #tpu.dot_dimension_numbers<[1], [0], [0], [1], [0, 0, 1, 1], [], []>} : vector<2x256xbf16>, vector<256x128xbf16>, vector<2x128xf32> -> vector<2x128xf32>
    %c0_36 = arith.constant 0 : index
    %c0_37 = arith.constant 0 : index
    %c0_38 = arith.constant 0 : index
    %76 = vector.load %arg11[%c0_36, %c0_37, %c0_38] : memref<1x1x128xf32, #tpu.memory_space<vmem>>, vector<1x1x128xf32>
    %77 = vector.shape_cast %76 : vector<1x1x128xf32> to vector<1x128xf32>
    %78 = vector.broadcast %77 : vector<1x128xf32> to vector<2x128xf32>
    %79 = arith.addf %75, %78 : vector<2x128xf32>
    %c0_i32 = arith.constant 0 : i32
    %80 = arith.cmpi eq, %arg0, %c0_i32 : i32
    %81 = arith.extui %80 : i1 to i32
    %c0_i32_39 = arith.constant 0 : i32
    %82 = arith.cmpi ne, %81, %c0_i32_39 : i32
    scf.if %82 {
      %cst_41 = arith.constant dense<0xFF800000> : vector<2xf32>
      %86 = vector.multi_reduction <maximumf>, %79, %cst_41 [1] : vector<2x128xf32> to vector<2xf32>
      %87 = vector.shape_cast %86 : vector<2xf32> to vector<2x1xf32>
      %88 = vector.broadcast %87 : vector<2x1xf32> to vector<2x128xf32>
      %89 = arith.subf %79, %88 : vector<2x128xf32>
      %90 = math.exp %89 : vector<2x128xf32>
      %cst_42 = arith.constant dense<0.000000e+00> : vector<2xf32>
      %91 = vector.multi_reduction <add>, %90, %cst_42 [1] : vector<2x128xf32> to vector<2xf32>
      %92 = vector.shape_cast %91 : vector<2xf32> to vector<2x1xf32>
      %93 = tpu.reciprocal %92 {approx = true} : vector<2x1xf32> -> vector<2x1xf32>
      %94 = vector.broadcast %93 : vector<2x1xf32> to vector<2x128xf32>
      %95 = arith.mulf %90, %94 : vector<2x128xf32>
      %96 = vector.shape_cast %95 : vector<2x128xf32> to vector<1x2x128xf32>
      %c0_43 = arith.constant 0 : index
      %c0_44 = arith.constant 0 : index
      %c0_45 = arith.constant 0 : index
      %97 = vector.load %arg12[%c0_43, %c0_44, %c0_45] : memref<1x2x128xf32, #tpu.memory_space<vmem>>, vector<1x2x128xf32>
      tpu.vector_store %arg12[%c0_43, %c0_44, %c0_45], %96 {strides = array<i32>} : memref<1x2x128xf32, #tpu.memory_space<vmem>>, vector<1x2x128xf32>,
    } else {
    }
    %c1_i32 = arith.constant 1 : i32
    %83 = arith.cmpi eq, %arg0, %c1_i32 : i32
    %84 = arith.extui %83 : i1 to i32
    %c0_i32_40 = arith.constant 0 : i32
    %85 = arith.cmpi ne, %84, %c0_i32_40 : i32
    scf.if %85 {
      %86 = vector.shape_cast %79 : vector<2x128xf32> to vector<1x2x128xf32>
      %c0_41 = arith.constant 0 : index
      %c0_42 = arith.constant 0 : index
      %c0_43 = arith.constant 0 : index
      %87 = vector.load %arg12[%c0_41, %c0_42, %c0_43] : memref<1x2x128xf32, #tpu.memory_space<vmem>>, vector<1x2x128xf32>
      tpu.vector_store %arg12[%c0_41, %c0_42, %c0_43], %86 {strides = array<i32>} : memref<1x2x128xf32, #tpu.memory_space<vmem>>, vector<1x2x128xf32>,
    } else {
    }
    return
  }
  func.func @transform_0(%arg0: i32) -> (i32, i32) {
    %c0_i32 = arith.constant 0 : i32
    %c0_i32_0 = arith.constant 0 : i32
    %c0_i32_1 = arith.constant 0 : i32
    return %c0_i32, %c0_i32_0 : i32, i32
  }
  func.func @transform_1(%arg0: i32) -> (i32, i32, i32) {
    %c0_i32 = arith.constant 0 : i32
    %c0_i32_0 = arith.constant 0 : i32
    %c0_i32_1 = arith.constant 0 : i32
    return %arg0, %c0_i32, %c0_i32_0 : i32, i32, i32
  }
  func.func @transform_2(%arg0: i32) -> (i32, i32, i32) {
    %c0_i32 = arith.constant 0 : i32
    %c0_i32_0 = arith.constant 0 : i32
    %c0_i32_1 = arith.constant 0 : i32
    return %arg0, %c0_i32, %c0_i32_0 : i32, i32, i32
  }
  func.func @transform_3(%arg0: i32) -> (i32, i32, i32) {
    %c0_i32 = arith.constant 0 : i32
    %c0_i32_0 = arith.constant 0 : i32
    %c0_i32_1 = arith.constant 0 : i32
    return %arg0, %c0_i32, %c0_i32_0 : i32, i32, i32
  }
  func.func @transform_4(%arg0: i32) -> (i32, i32, i32) {
    %c0_i32 = arith.constant 0 : i32
    %c0_i32_0 = arith.constant 0 : i32
    %c0_i32_1 = arith.constant 0 : i32
    return %arg0, %c0_i32, %c0_i32_0 : i32, i32, i32
  }
  func.func @transform_5(%arg0: i32) -> (i32, i32, i32) {
    %c0_i32 = arith.constant 0 : i32
    %c0_i32_0 = arith.constant 0 : i32
    %c0_i32_1 = arith.constant 0 : i32
    return %arg0, %c0_i32, %c0_i32_0 : i32, i32, i32
  }
  func.func @transform_6(%arg0: i32) -> (i32, i32, i32) {
    %c0_i32 = arith.constant 0 : i32
    %c0_i32_0 = arith.constant 0 : i32
    %c0_i32_1 = arith.constant 0 : i32
    return %arg0, %c0_i32, %c0_i32_0 : i32, i32, i32
  }
  func.func @transform_7(%arg0: i32) -> (i32, i32, i32) {
    %c0_i32 = arith.constant 0 : i32
    %c0_i32_0 = arith.constant 0 : i32
    %c0_i32_1 = arith.constant 0 : i32
    return %arg0, %c0_i32, %c0_i32_0 : i32, i32, i32
  }
  func.func @transform_8(%arg0: i32) -> (i32, i32, i32) {
    %c0_i32 = arith.constant 0 : i32
    %c0_i32_0 = arith.constant 0 : i32
    %c0_i32_1 = arith.constant 0 : i32
    return %arg0, %c0_i32, %c0_i32_0 : i32, i32, i32
  }
  func.func @transform_9(%arg0: i32) -> (i32, i32, i32) {
    %c0_i32 = arith.constant 0 : i32
    %c0_i32_0 = arith.constant 0 : i32
    %c0_i32_1 = arith.constant 0 : i32
    return %arg0, %c0_i32, %c0_i32_0 : i32, i32, i32
  }
  func.func @transform_10(%arg0: i32) -> (i32, i32, i32) {
    %c0_i32 = arith.constant 0 : i32
    %c0_i32_0 = arith.constant 0 : i32
    %c0_i32_1 = arith.constant 0 : i32
    return %arg0, %c0_i32, %c0_i32_0 : i32, i32, i32
  }
  func.func @transform_11(%arg0: i32) -> (i32, i32, i32) {
    %c0_i32 = arith.constant 0 : i32
    %c0_i32_0 = arith.constant 0 : i32
    %c0_i32_1 = arith.constant 0 : i32
    return %arg0, %c0_i32, %c0_i32_0 : i32, i32, i32
  }
}

</mosaic_0001>

<llo_original>
// kernel: actor_critic_forward.1
$region0: #{actor_critic_forward.1}
  #allocation0 [shape = 'u32[]', space=smem, size = 0x4, offset = 0x4, fixed_abs, tag = 'smem constant byte address 0x4 - core index']
  #allocation1 [shape = 'u32[144,128]{1,0:T(1,128)}', space=vmem, size = 0x12000, scoped, tag = 'internal scratch']
  %s0 = inlined_call_operand.vmem [shape: bf16[18,16], index: 0, kind: input, shape index: {}]
  %s1 = inlined_call_operand.hbm [shape: bf16[2,16,256], index: 1, kind: input, shape index: {}]
  %s2 = inlined_call_operand.hbm [shape: f32[2,1,256], index: 2, kind: input, shape index: {}]
  %s3 = inlined_call_operand.hbm [shape: bf16[2,1024,512], index: 3, kind: input, shape index: {}]
  %s4 = inlined_call_operand.hbm [shape: f32[2,1,512], index: 4, kind: input, shape index: {}]
  %s5 = inlined_call_operand.hbm [shape: bf16[2,2048,1024], index: 5, kind: input, shape index: {}]
  %s6 = inlined_call_operand.hbm [shape: f32[2,1,1024], index: 6, kind: input, shape index: {}]
  %s7 = inlined_call_operand.hbm [shape: bf16[2,1024,256], index: 7, kind: input, shape index: {}]
  %s8 = inlined_call_operand.hbm [shape: f32[2,1,256], index: 8, kind: input, shape index: {}]
  %s9 = inlined_call_operand.hbm [shape: bf16[2,256,128], index: 9, kind: input, shape index: {}]
  %s10 = inlined_call_operand.hbm [shape: f32[2,1,128], index: 10, kind: input, shape index: {}]
  %s11 = inlined_call_operand.vmem [shape: f32[2,2,128], index: 11, kind: output, shape index: {}]
  %s12 = sld [smem:[#allocation0]]
  $region125: #{actor_critic_forward.1} parent=0
    _
  %s14 = ssub.s32 1, %s12
  %s15 = scalar_select 0, %s14, %s12
  $region1: #{actor_critic_forward.1} parent=0
    #allocation2 [shape = 'u8[16384]{0}', space=vmem, size = 0x4000, scoped, tag = 'input window, operand 1']
    #allocation3 [shape = 's32[2]{0}', space=sflag, size = 0x8, scoped, tag = 'scoped memory for actor_critic_forward.1']
    #allocation4 [shape = 'u8[2048]{0}', space=vmem, size = 0x800, scoped, tag = 'input window, operand 2']
    #allocation5 [shape = 's32[2]{0}', space=sflag, size = 0x8, scoped, tag = 'scoped memory for actor_critic_forward.1']
    #allocation6 [shape = 'u8[2097152]{0}', space=vmem, size = 0x200000, scoped, tag = 'input window, operand 3']
    #allocation7 [shape = 'u8[4096]{0}', space=vmem, size = 0x1000, scoped, tag = 'input window, operand 4']
    #allocation8 [shape = 's32[2]{0}', space=sflag, size = 0x8, scoped, tag = 'scoped memory for actor_critic_forward.1']
    #allocation9 [shape = 'u8[8388608]{0}', space=vmem, size = 0x800000, scoped, tag = 'input window, operand 5']
    #allocation10 [shape = 'u8[8192]{0}', space=vmem, size = 0x2000, scoped, tag = 'input window, operand 6']
    #allocation11 [shape = 's32[2]{0}', space=sflag, size = 0x8, scoped, tag = 'scoped memory for actor_critic_forward.1']
    #allocation12 [shape = 'u8[1048576]{0}', space=vmem, size = 0x100000, scoped, tag = 'input window, operand 7']
    #allocation13 [shape = 'u8[2048]{0}', space=vmem, size = 0x800, scoped, tag = 'input window, operand 8']
    #allocation14 [shape = 's32[2]{0}', space=sflag, size = 0x8, scoped, tag = 'scoped memory for actor_critic_forward.1']
    #allocation15 [shape = 'u8[131072]{0}', space=vmem, size = 0x20000, scoped, tag = 'input window, operand 9']
    #allocation16 [shape = 'u8[1024]{0}', space=vmem, size = 0x400, scoped, tag = 'input window, operand 10']
    #allocation17 [shape = 's32[2]{0}', space=sflag, size = 0x8, scoped, tag = 'scoped memory for actor_critic_forward.1']
    %16 = vsyncpa [#allocation3], 0
    %s17 = scalar_lea.sflag [#allocation3], 1
    %18 = vsyncpa %s17, 0
    %19 = vsyncpa [#allocation5], 0
    %s20 = scalar_lea.sflag [#allocation5], 1
    %21 = vsyncpa %s20, 0
    %22 = vsyncpa [#allocation8], 0
    %s23 = scalar_lea.sflag [#allocation8], 1
    %24 = vsyncpa %s23, 0
    %25 = vsyncpa [#allocation11], 0
    %s26 = scalar_lea.sflag [#allocation11], 1
    %27 = vsyncpa %s26, 0
    %28 = vsyncpa [#allocation14], 0
    %s29 = scalar_lea.sflag [#allocation14], 1
    %30 = vsyncpa %s29, 0
    %31 = vsyncpa [#allocation17], 0
    %s32 = scalar_lea.sflag [#allocation17], 1
    %33 = vsyncpa %s32, 0
    loop: start=0, step=1, limit=4
    $region2: #{actor_critic_forward.1} parent=1 // loop_pre_header
      _
    $region3: #{actor_critic_forward.1} parent=1 // loop_header
      %s35 = sphi 0, %s39
      %p36 = scmp.ge.s32.totalorder %s35, 4
      %s43 = sphi 0, %s43
      %s45 = sphi 0, %s43
      %s46 = sphi 0, %s45
      %s60 = sphi 0, %s46
      %s66 = sphi 0, %s68
      %s69 = sphi 0, %s66
      %s70 = sphi 0, %s69
      %s86 = sphi 0, %s70
      %s92 = sphi 0, %s94
      %s95 = sphi 0, %s92
      %s96 = sphi 0, %s95
      %s112 = sphi 0, %s96
      %s118 = sphi 0, %s120
      %s121 = sphi 0, %s118
      %s122 = sphi 0, %s121
      %s138 = sphi 0, %s122
      %s144 = sphi 0, %s146
      %s147 = sphi 0, %s144
      %s148 = sphi 0, %s147
      %s164 = sphi 0, %s148
      %s170 = sphi 0, %s172
      %s173 = sphi 0, %s170
      %s174 = sphi 0, %s173
      %s190 = sphi 0, %s174
      %s196 = sphi 0, %s198
      %s199 = sphi 0, %s196
      %s200 = sphi 0, %s199
      %s216 = sphi 0, %s200
      %s222 = sphi 0, %s224
      %s225 = sphi 0, %s222
      %s226 = sphi 0, %s225
      %s242 = sphi 0, %s226
      %s248 = sphi 0, %s250
      %s251 = sphi 0, %s248
      %s252 = sphi 0, %s251
      %s268 = sphi 0, %s252
      %s274 = sphi 0, %s276
      %s277 = sphi 0, %s274
      %s278 = sphi 0, %s277
      %s294 = sphi 0, %s278
      %s300 = sphi 0, %s302
      %s303 = sphi 0, %s300
      %s304 = sphi 0, %s303
      %s320 = sphi 0, %s304
      %s326 = sphi 0, %s328
      %s329 = sphi 0, %s326
      %s330 = sphi 0, %s329
      %s346 = sphi 0, %s330
    $region4: #{actor_critic_forward.1} parent=1 // loop_header_branch
      %38 = sbr.rel (%p36) target = $region8
    $region5: #{actor_critic_forward.1} parent=1 // loop_body
      %s40 = ssub.s32 %s35, 1
      %s41 = ssub.s32 %s35, 2
      %s42 = sadd.s32 %s35, 1
      %s44 = sadd.s32 %s43, 1
      %p47 = scmp.eq.s32.totalorder %s35, 1
      %p48 = scmp.ne.s32.totalorder %s43, %s45
      %p49 = scmp.eq.s32.totalorder %s35, 0
      %p50 = por %p48, %p49
      %p51 = scmp.ne.s32.totalorder %s43, %s45
      %p52 = scmp.eq.s32.totalorder %s40, 1
      %p53 = por %p51, %p52
      %p54 = scmp.ne.s32.totalorder %s45, %s46
      %p55 = scmp.eq.s32.totalorder %s40, 0
      %p56 = por %p54, %p55
      %p57 = scmp.ne.s32.totalorder %s45, %s46
      %p58 = scmp.eq.s32.totalorder %s41, 1
      %p59 = por %p57, %p58
      %p61 = scmp.ne.s32.totalorder %s46, %s60
      %p62 = scmp.eq.s32.totalorder %s41, 0
      %p63 = por %p61, %p62
      %s64 = ssub.s32 %s35, %s42
      %p65 = scmp.eq.s32.totalorder %s64, 0
      %s67 = sadd.s32 %s66, 1
      %s68 = scalar_select %p65, %s66, %s67
      %p71 = pneg %p65
      %p72 = scmp.eq.s32.totalorder %s35, 1
      %p73 = por %p71, %p72
      %p74 = scmp.ne.s32.totalorder %s66, %s69
      %p75 = scmp.eq.s32.totalorder %s35, 0
      %p76 = por %p74, %p75
      %p77 = scmp.ne.s32.totalorder %s66, %s69
      %p78 = scmp.eq.s32.totalorder %s40, 1
      %p79 = por %p77, %p78
      %p80 = scmp.ne.s32.totalorder %s69, %s70
      %p81 = scmp.eq.s32.totalorder %s40, 0
      %p82 = por %p80, %p81
      %p83 = scmp.ne.s32.totalorder %s69, %s70
      %p84 = scmp.eq.s32.totalorder %s41, 1
      %p85 = por %p83, %p84
      %p87 = scmp.ne.s32.totalorder %s70, %s86
      %p88 = scmp.eq.s32.totalorder %s41, 0
      %p89 = por %p87, %p88
      %s90 = ssub.s32 %s35, %s42
      %p91 = scmp.eq.s32.totalorder %s90, 0
      %s93 = sadd.s32 %s92, 1
      %s94 = scalar_select %p91, %s92, %s93
      %p97 = pneg %p91
      %p98 = scmp.eq.s32.totalorder %s35, 1
      %p99 = por %p97, %p98
      %p100 = scmp.ne.s32.totalorder %s92, %s95
      %p101 = scmp.eq.s32.totalorder %s35, 0
      %p102 = por %p100, %p101
      %p103 = scmp.ne.s32.totalorder %s92, %s95
      %p104 = scmp.eq.s32.totalorder %s40, 1
      %p105 = por %p103, %p104
      %p106 = scmp.ne.s32.totalorder %s95, %s96
      %p107 = scmp.eq.s32.totalorder %s40, 0
      %p108 = por %p106, %p107
      %p109 = scmp.ne.s32.totalorder %s95, %s96
      %p110 = scmp.eq.s32.totalorder %s41, 1
      %p111 = por %p109, %p110
      %p113 = scmp.ne.s32.totalorder %s96, %s112
      %p114 = scmp.eq.s32.totalorder %s41, 0
      %p115 = por %p113, %p114
      %s116 = ssub.s32 %s35, %s42
      %p117 = scmp.eq.s32.totalorder %s116, 0
      %s119 = sadd.s32 %s118, 1
      %s120 = scalar_select %p117, %s118, %s119
      %p123 = pneg %p117
      %p124 = scmp.eq.s32.totalorder %s35, 1
      %p125 = por %p123, %p124
      %p126 = scmp.ne.s32.totalorder %s118, %s121
      %p127 = scmp.eq.s32.totalorder %s35, 0
      %p128 = por %p126, %p127
      %p129 = scmp.ne.s32.totalorder %s118, %s121
      %p130 = scmp.eq.s32.totalorder %s40, 1
      %p131 = por %p129, %p130
      %p132 = scmp.ne.s32.totalorder %s121, %s122
      %p133 = scmp.eq.s32.totalorder %s40, 0
      %p134 = por %p132, %p133
      %p135 = scmp.ne.s32.totalorder %s121, %s122
      %p136 = scmp.eq.s32.totalorder %s41, 1
      %p137 = por %p135, %p136
      %p139 = scmp.ne.s32.totalorder %s122, %s138
      %p140 = scmp.eq.s32.totalorder %s41, 0
      %p141 = por %p139, %p140
      %s142 = ssub.s32 %s35, %s42
      %p143 = scmp.eq.s32.totalorder %s142, 0
      %s145 = sadd.s32 %s144, 1
      %s146 = scalar_select %p143, %s144, %s145
      %p149 = pneg %p143
      %p150 = scmp.eq.s32.totalorder %s35, 1
      %p151 = por %p149, %p150
      %p152 = scmp.ne.s32.totalorder %s144, %s147
      %p153 = scmp.eq.s32.totalorder %s35, 0
      %p154 = por %p152, %p153
      %p155 = scmp.ne.s32.totalorder %s144, %s147
      %p156 = scmp.eq.s32.totalorder %s40, 1
      %p157 = por %p155, %p156
      %p158 = scmp.ne.s32.totalorder %s147, %s148
      %p159 = scmp.eq.s32.totalorder %s40, 0
      %p160 = por %p158, %p159
      %p161 = scmp.ne.s32.totalorder %s147, %s148
      %p162 = scmp.eq.s32.totalorder %s41, 1
      %p163 = por %p161, %p162
      %p165 = scmp.ne.s32.totalorder %s148, %s164
      %p166 = scmp.eq.s32.totalorder %s41, 0
      %p167 = por %p165, %p166
      %s168 = ssub.s32 %s35, %s42
      %p169 = scmp.eq.s32.totalorder %s168, 0
      %s171 = sadd.s32 %s170, 1
      %s172 = scalar_select %p169, %s170, %s171
      %p175 = pneg %p169
      %p176 = scmp.eq.s32.totalorder %s35, 1
      %p177 = por %p175, %p176
      %p178 = scmp.ne.s32.totalorder %s170, %s173
      %p179 = scmp.eq.s32.totalorder %s35, 0
      %p180 = por %p178, %p179
      %p181 = scmp.ne.s32.totalorder %s170, %s173
      %p182 = scmp.eq.s32.totalorder %s40, 1
      %p183 = por %p181, %p182
      %p184 = scmp.ne.s32.totalorder %s173, %s174
      %p185 = scmp.eq.s32.totalorder %s40, 0
      %p186 = por %p184, %p185
      %p187 = scmp.ne.s32.totalorder %s173, %s174
      %p188 = scmp.eq.s32.totalorder %s41, 1
      %p189 = por %p187, %p188
      %p191 = scmp.ne.s32.totalorder %s174, %s190
      %p192 = scmp.eq.s32.totalorder %s41, 0
      %p193 = por %p191, %p192
      %s194 = ssub.s32 %s35, %s42
      %p195 = scmp.eq.s32.totalorder %s194, 0
      %s197 = sadd.s32 %s196, 1
      %s198 = scalar_select %p195, %s196, %s197
      %p201 = pneg %p195
      %p202 = scmp.eq.s32.totalorder %s35, 1
      %p203 = por %p201, %p202
      %p204 = scmp.ne.s32.totalorder %s196, %s199
      %p205 = scmp.eq.s32.totalorder %s35, 0
      %p206 = por %p204, %p205
      %p207 = scmp.ne.s32.totalorder %s196, %s199
      %p208 = scmp.eq.s32.totalorder %s40, 1
      %p209 = por %p207, %p208
      %p210 = scmp.ne.s32.totalorder %s199, %s200
      %p211 = scmp.eq.s32.totalorder %s40, 0
      %p212 = por %p210, %p211
      %p213 = scmp.ne.s32.totalorder %s199, %s200
      %p214 = scmp.eq.s32.totalorder %s41, 1
      %p215 = por %p213, %p214
      %p217 = scmp.ne.s32.totalorder %s200, %s216
      %p218 = scmp.eq.s32.totalorder %s41, 0
      %p219 = por %p217, %p218
      %s220 = ssub.s32 %s35, %s42
      %p221 = scmp.eq.s32.totalorder %s220, 0
      %s223 = sadd.s32 %s222, 1
      %s224 = scalar_select %p221, %s222, %s223
      %p227 = pneg %p221
      %p228 = scmp.eq.s32.totalorder %s35, 1
      %p229 = por %p227, %p228
      %p230 = scmp.ne.s32.totalorder %s222, %s225
      %p231 = scmp.eq.s32.totalorder %s35, 0
      %p232 = por %p230, %p231
      %p233 = scmp.ne.s32.totalorder %s222, %s225
      %p234 = scmp.eq.s32.totalorder %s40, 1
      %p235 = por %p233, %p234
      %p236 = scmp.ne.s32.totalorder %s225, %s226
      %p237 = scmp.eq.s32.totalorder %s40, 0
      %p238 = por %p236, %p237
      %p239 = scmp.ne.s32.totalorder %s225, %s226
      %p240 = scmp.eq.s32.totalorder %s41, 1
      %p241 = por %p239, %p240
      %p243 = scmp.ne.s32.totalorder %s226, %s242
      %p244 = scmp.eq.s32.totalorder %s41, 0
      %p245 = por %p243, %p244
      %s246 = ssub.s32 %s35, %s42
      %p247 = scmp.eq.s32.totalorder %s246, 0
      %s249 = sadd.s32 %s248, 1
      %s250 = scalar_select %p247, %s248, %s249
      %p253 = pneg %p247
      %p254 = scmp.eq.s32.totalorder %s35, 1
      %p255 = por %p253, %p254
      %p256 = scmp.ne.s32.totalorder %s248, %s251
      %p257 = scmp.eq.s32.totalorder %s35, 0
      %p258 = por %p256, %p257
      %p259 = scmp.ne.s32.totalorder %s248, %s251
      %p260 = scmp.eq.s32.totalorder %s40, 1
      %p261 = por %p259, %p260
      %p262 = scmp.ne.s32.totalorder %s251, %s252
      %p263 = scmp.eq.s32.totalorder %s40, 0
      %p264 = por %p262, %p263
      %p265 = scmp.ne.s32.totalorder %s251, %s252
      %p266 = scmp.eq.s32.totalorder %s41, 1
      %p267 = por %p265, %p266
      %p269 = scmp.ne.s32.totalorder %s252, %s268
      %p270 = scmp.eq.s32.totalorder %s41, 0
      %p271 = por %p269, %p270
      %s272 = ssub.s32 %s35, %s42
      %p273 = scmp.eq.s32.totalorder %s272, 0
      %s275 = sadd.s32 %s274, 1
      %s276 = scalar_select %p273, %s274, %s275
      %p279 = pneg %p273
      %p280 = scmp.eq.s32.totalorder %s35, 1
      %p281 = por %p279, %p280
      %p282 = scmp.ne.s32.totalorder %s274, %s277
      %p283 = scmp.eq.s32.totalorder %s35, 0
      %p284 = por %p282, %p283
      %p285 = scmp.ne.s32.totalorder %s274, %s277
      %p286 = scmp.eq.s32.totalorder %s40, 1
      %p287 = por %p285, %p286
      %p288 = scmp.ne.s32.totalorder %s277, %s278
      %p289 = scmp.eq.s32.totalorder %s40, 0
      %p290 = por %p288, %p289
      %p291 = scmp.ne.s32.totalorder %s277, %s278
      %p292 = scmp.eq.s32.totalorder %s41, 1
      %p293 = por %p291, %p292
      %p295 = scmp.ne.s32.totalorder %s278, %s294
      %p296 = scmp.eq.s32.totalorder %s41, 0
      %p297 = por %p295, %p296
      %s298 = ssub.s32 %s35, %s42
      %p299 = scmp.eq.s32.totalorder %s298, 0
      %s301 = sadd.s32 %s300, 1
      %s302 = scalar_select %p299, %s300, %s301
      %p305 = pneg %p299
      %p306 = scmp.eq.s32.totalorder %s35, 1
      %p307 = por %p305, %p306
      %p308 = scmp.ne.s32.totalorder %s300, %s303
      %p309 = scmp.eq.s32.totalorder %s35, 0
      %p310 = por %p308, %p309
      %p311 = scmp.ne.s32.totalorder %s300, %s303
      %p312 = scmp.eq.s32.totalorder %s40, 1
      %p313 = por %p311, %p312
      %p314 = scmp.ne.s32.totalorder %s303, %s304
      %p315 = scmp.eq.s32.totalorder %s40, 0
      %p316 = por %p314, %p315
      %p317 = scmp.ne.s32.totalorder %s303, %s304
      %p318 = scmp.eq.s32.totalorder %s41, 1
      %p319 = por %p317, %p318
      %p321 = scmp.ne.s32.totalorder %s304, %s320
      %p322 = scmp.eq.s32.totalorder %s41, 0
      %p323 = por %p321, %p322
      %s324 = ssub.s32 %s35, %s42
      %p325 = scmp.eq.s32.totalorder %s324, 0
      %s327 = sadd.s32 %s326, 1
      %s328 = scalar_select %p325, %s326, %s327
      %p331 = pneg %p325
      %p332 = scmp.eq.s32.totalorder %s35, 1
      %p333 = por %p331, %p332
      %p334 = scmp.ne.s32.totalorder %s326, %s329
      %p335 = scmp.eq.s32.totalorder %s35, 0
      %p336 = por %p334, %p335
      %p337 = scmp.ne.s32.totalorder %s326, %s329
      %p338 = scmp.eq.s32.totalorder %s40, 1
      %p339 = por %p337, %p338
      %p340 = scmp.ne.s32.totalorder %s329, %s330
      %p341 = scmp.eq.s32.totalorder %s40, 0
      %p342 = por %p340, %p341
      %p343 = scmp.ne.s32.totalorder %s329, %s330
      %p344 = scmp.eq.s32.totalorder %s41, 1
      %p345 = por %p343, %p344
      %p347 = scmp.ne.s32.totalorder %s330, %s346
      %p348 = scmp.eq.s32.totalorder %s41, 0
      %p349 = por %p347, %p348
      %p350 = scmp.le.s32.totalorder 1, %s35
      %p351 = scmp.lt.s32.totalorder %s35, 3
      %p352 = pnand %p350, %p351
      %p353 = pneg %p352
      // Predicated region
      $region9: #{actor_critic_forward.1} parent=5 // pred_check
        _
      $region10: #{actor_critic_forward.1} parent=5 // pred_check_branch
        %355 = sbr.rel (%p352) target = $region12
      $region11: #{actor_critic_forward.1} parent=5 // pred_region
        %s356 = ssub.s32 %s35, 1
        // Predicated region
        $region13: #{actor_critic_forward.1} parent=11 // pred_check
          %p357 = pneg %p56
        $region14: #{actor_critic_forward.1} parent=11 // pred_check_branch
          %359 = sbr.rel (%p357) target = $region16
        $region15: #{actor_critic_forward.1} parent=11 // pred_region
          _
        $region16: #{actor_critic_forward.1} parent=11 // pred_fallthru
          _
      $region12: #{actor_critic_forward.1} parent=5 // pred_fallthru
        _
      %p360 = scmp.lt.s32.totalorder %s35, 2
      // Predicated region
      $region17: #{actor_critic_forward.1} parent=5 // pred_check
        %p361 = pneg %p360
      $region18: #{actor_critic_forward.1} parent=5 // pred_check_branch
        %363 = sbr.rel (%p361) target = $region20
      $region19: #{actor_critic_forward.1} parent=5 // pred_region
        // Predicated region
        $region21: #{actor_critic_forward.1} parent=19 // pred_check
          %p364 = pneg %p76
        $region22: #{actor_critic_forward.1} parent=19 // pred_check_branch
          %366 = sbr.rel (%p364) target = $region24
        $region23: #{actor_critic_forward.1} parent=19 // pred_region
          %s367 = sand.u32 %s66, 1
          %s368 = scalar_lea.sflag [#allocation3], %s367
          %s369 = sand.u32 %s66, 1
          %s370 = smul.addr %s369, 16
          %s371 = scalar_lea.vmem [#allocation2], %s370
          %s373 = ssub.s32 256, 256
          %374 = vsyncadd %s368, %s373
          %s375 = smul.addr %s35, 4
          %s376 = smul.addr %s375, 64
          %s377 = scalar_lea.hbm %s1, %s376
          %s378 = sshll.u32 %s371, 4
          %s379 = int_to_ptr.vmem [resolvable:$true] %s378
          %384 = dma.hbm_to_vmem [thread:$0]  %s377, 256, %s379, %s368, 128, 128, 8
        $region24: #{actor_critic_forward.1} parent=19 // pred_fallthru
          _
        // Predicated region
        $region25: #{actor_critic_forward.1} parent=19 // pred_check
          %p385 = pneg %p102
        $region26: #{actor_critic_forward.1} parent=19 // pred_check_branch
          %387 = sbr.rel (%p385) target = $region28
        $region27: #{actor_critic_forward.1} parent=19 // pred_region
          %s388 = sand.u32 %s35, 1
          %s389 = scalar_lea.sflag [#allocation5], %s388
          %s390 = sand.u32 %s92, 1
          %s391 = smul.addr %s390, 2
          %s392 = scalar_lea.vmem [#allocation4], %s391
          %s394 = ssub.s32 32, 32
          %395 = vsyncadd %s389, %s394
          %s396 = smul.addr %s35, 2
          %s397 = smul.addr %s396, 16
          %s398 = scalar_lea.hbm %s2, %s397
          %s400 = sshll.u32 %s392, 4
          %s401 = int_to_ptr.vmem [resolvable:$true] %s400
          %403 = dma.hbm_to_vmem [thread:$0]  %s398, 32, %s401, %s389
        $region28: #{actor_critic_forward.1} parent=19 // pred_fallthru
          _
        // Predicated region
        $region29: #{actor_critic_forward.1} parent=19 // pred_check
          %p404 = pneg %p128
        $region30: #{actor_critic_forward.1} parent=19 // pred_check_branch
          %406 = sbr.rel (%p404) target = $region32
        $region31: #{actor_critic_forward.1} parent=19 // pred_region
          %s407 = sand.u32 %s35, 1
          %s408 = scalar_lea.sflag [#allocation5], %s407
          %s409 = sand.u32 %s118, 1
          %s410 = smul.addr %s409, 2048
          %s411 = scalar_lea.vmem [#allocation6], %s410
          %s413 = ssub.s32 32768, 32768
          %414 = vsyncadd %s408, %s413
          %s415 = smul.addr %s35, 512
          %s416 = smul.addr %s415, 64
          %s417 = scalar_lea.hbm %s3, %s416
          %s418 = sshll.u32 %s411, 4
          %s419 = int_to_ptr.vmem [resolvable:$true] %s418
          %424 = dma.hbm_to_vmem [thread:$0]  %s417, 32768, %s419, %s408, 256, 256, 16
        $region32: #{actor_critic_forward.1} parent=19 // pred_fallthru
          _
        // Predicated region
        $region33: #{actor_critic_forward.1} parent=19 // pred_check
          %p425 = pneg %p154
        $region34: #{actor_critic_forward.1} parent=19 // pred_check_branch
          %427 = sbr.rel (%p425) target = $region36
        $region35: #{actor_critic_forward.1} parent=19 // pred_region
          %s428 = sand.u32 %s35, 1
          %s429 = scalar_lea.sflag [#allocation8], %s428
          %s430 = sand.u32 %s144, 1
          %s431 = smul.addr %s430, 4
          %s432 = scalar_lea.vmem [#allocation7], %s431
          %s434 = ssub.s32 64, 64
          %435 = vsyncadd %s429, %s434
          %s436 = smul.addr %s35, 4
          %s437 = smul.addr %s436, 16
          %s438 = scalar_lea.hbm %s4, %s437
          %s440 = sshll.u32 %s432, 4
          %s441 = int_to_ptr.vmem [resolvable:$true] %s440
          %443 = dma.hbm_to_vmem [thread:$0]  %s438, 64, %s441, %s429
        $region36: #{actor_critic_forward.1} parent=19 // pred_fallthru
          _
        // Predicated region
        $region37: #{actor_critic_forward.1} parent=19 // pred_check
          %p444 = pneg %p180
        $region38: #{actor_critic_forward.1} parent=19 // pred_check_branch
          %446 = sbr.rel (%p444) target = $region40
        $region39: #{actor_critic_forward.1} parent=19 // pred_region
          %s447 = sand.u32 %s35, 1
          %s448 = scalar_lea.sflag [#allocation8], %s447
          %s449 = sand.u32 %s170, 1
          %s450 = smul.addr %s449, 8192
          %s451 = scalar_lea.vmem [#allocation9], %s450
          %s453 = ssub.s32 131072, 131072
          %454 = vsyncadd %s448, %s453
          %s455 = smul.addr %s35, 2048
          %s456 = smul.addr %s455, 64
          %s457 = scalar_lea.hbm %s5, %s456
          %s458 = sshll.u32 %s451, 4
          %s459 = int_to_ptr.vmem [resolvable:$true] %s458
          %464 = dma.hbm_to_vmem [thread:$0]  %s457, 131072, %s459, %s448, 512, 512, 32
        $region40: #{actor_critic_forward.1} parent=19 // pred_fallthru
          _
        // Predicated region
        $region41: #{actor_critic_forward.1} parent=19 // pred_check
          %p465 = pneg %p206
        $region42: #{actor_critic_forward.1} parent=19 // pred_check_branch
          %467 = sbr.rel (%p465) target = $region44
        $region43: #{actor_critic_forward.1} parent=19 // pred_region
          %s468 = sand.u32 %s35, 1
          %s469 = scalar_lea.sflag [#allocation11], %s468
          %s470 = sand.u32 %s196, 1
          %s471 = smul.addr %s470, 8
          %s472 = scalar_lea.vmem [#allocation10], %s471
          %s474 = ssub.s32 128, 128
          %475 = vsyncadd %s469, %s474
          %s476 = smul.addr %s35, 8
          %s477 = smul.addr %s476, 16
          %s478 = scalar_lea.hbm %s6, %s477
          %s480 = sshll.u32 %s472, 4
          %s481 = int_to_ptr.vmem [resolvable:$true] %s480
          %483 = dma.hbm_to_vmem [thread:$0]  %s478, 128, %s481, %s469
        $region44: #{actor_critic_forward.1} parent=19 // pred_fallthru
          _
        // Predicated region
        $region45: #{actor_critic_forward.1} parent=19 // pred_check
          %p484 = pneg %p232
        $region46: #{actor_critic_forward.1} parent=19 // pred_check_branch
          %486 = sbr.rel (%p484) target = $region48
        $region47: #{actor_critic_forward.1} parent=19 // pred_region
          %s487 = sand.u32 %s35, 1
          %s488 = scalar_lea.sflag [#allocation11], %s487
          %s489 = sand.u32 %s222, 1
          %s490 = smul.addr %s489, 1024
          %s491 = scalar_lea.vmem [#allocation12], %s490
          %s493 = ssub.s32 16384, 16384
          %494 = vsyncadd %s488, %s493
          %s495 = smul.addr %s35, 256
          %s496 = smul.addr %s495, 64
          %s497 = scalar_lea.hbm %s7, %s496
          %s498 = sshll.u32 %s491, 4
          %s499 = int_to_ptr.vmem [resolvable:$true] %s498
          %504 = dma.hbm_to_vmem [thread:$0]  %s497, 16384, %s499, %s488, 128, 128, 8
        $region48: #{actor_critic_forward.1} parent=19 // pred_fallthru
          _
        // Predicated region
        $region49: #{actor_critic_forward.1} parent=19 // pred_check
          %p505 = pneg %p258
        $region50: #{actor_critic_forward.1} parent=19 // pred_check_branch
          %507 = sbr.rel (%p505) target = $region52
        $region51: #{actor_critic_forward.1} parent=19 // pred_region
          %s508 = sand.u32 %s35, 1
          %s509 = scalar_lea.sflag [#allocation14], %s508
          %s510 = sand.u32 %s248, 1
          %s511 = smul.addr %s510, 2
          %s512 = scalar_lea.vmem [#allocation13], %s511
          %s514 = ssub.s32 32, 32
          %515 = vsyncadd %s509, %s514
          %s516 = smul.addr %s35, 2
          %s517 = smul.addr %s516, 16
          %s518 = scalar_lea.hbm %s8, %s517
          %s520 = sshll.u32 %s512, 4
          %s521 = int_to_ptr.vmem [resolvable:$true] %s520
          %523 = dma.hbm_to_vmem [thread:$0]  %s518, 32, %s521, %s509
        $region52: #{actor_critic_forward.1} parent=19 // pred_fallthru
          _
        // Predicated region
        $region53: #{actor_critic_forward.1} parent=19 // pred_check
          %p524 = pneg %p284
        $region54: #{actor_critic_forward.1} parent=19 // pred_check_branch
          %526 = sbr.rel (%p524) target = $region56
        $region55: #{actor_critic_forward.1} parent=19 // pred_region
          %s527 = sand.u32 %s35, 1
          %s528 = scalar_lea.sflag [#allocation14], %s527
          %s529 = sand.u32 %s274, 1
          %s530 = smul.addr %s529, 128
          %s531 = scalar_lea.vmem [#allocation15], %s530
          %s533 = ssub.s32 2048, 2048
          %534 = vsyncadd %s528, %s533
          %s535 = smul.addr %s35, 32
          %s536 = smul.addr %s535, 64
          %s537 = scalar_lea.hbm %s9, %s536
          %s538 = sshll.u32 %s531, 4
          %s539 = int_to_ptr.vmem [resolvable:$true] %s538
          %544 = dma.hbm_to_vmem [thread:$0]  %s537, 2048, %s539, %s528, 64, 64, 4
        $region56: #{actor_critic_forward.1} parent=19 // pred_fallthru
          _
        // Predicated region
        $region57: #{actor_critic_forward.1} parent=19 // pred_check
          %p545 = pneg %p310
        $region58: #{actor_critic_forward.1} parent=19 // pred_check_branch
          %547 = sbr.rel (%p545) target = $region60
        $region59: #{actor_critic_forward.1} parent=19 // pred_region
          %s548 = sand.u32 %s300, 1
          %s549 = scalar_lea.sflag [#allocation17], %s548
          %s550 = sand.u32 %s300, 1
          %s551 = scalar_lea.vmem [#allocation16], %s550
          %s553 = ssub.s32 16, 16
          %554 = vsyncadd %s549, %s553
          %s555 = smul.addr %s35, 16
          %s556 = scalar_lea.hbm %s10, %s555
          %s558 = sshll.u32 %s551, 4
          %s559 = int_to_ptr.vmem [resolvable:$true] %s558
          %561 = dma.hbm_to_vmem [thread:$0]  %s556, 16, %s559, %s549
        $region60: #{actor_critic_forward.1} parent=19 // pred_fallthru
          _
      $region20: #{actor_critic_forward.1} parent=5 // pred_fallthru
        _
      %p562 = scmp.le.s32.totalorder 1, %s35
      %p563 = scmp.lt.s32.totalorder %s35, 3
      %p564 = pnand %p562, %p563
      %p565 = pneg %p564
      // Predicated region
      $region61: #{actor_critic_forward.1} parent=5 // pred_check
        _
      $region62: #{actor_critic_forward.1} parent=5 // pred_check_branch
        %567 = sbr.rel (%p564) target = $region64
      $region63: #{actor_critic_forward.1} parent=5 // pred_region
        %s568 = ssub.s32 %s35, 1
        %s569 = sand.u32 %s69, 1
        %s570 = scalar_lea.sflag [#allocation3], %s569
        %s571 = sand.u32 %s69, 1
        %s572 = smul.addr %s571, 16
        %s573 = scalar_lea.vmem [#allocation2], %s572
        // Predicated region
        $region65: #{actor_critic_forward.1} parent=63 // pred_check
          %p574 = pneg %p82
        $region66: #{actor_critic_forward.1} parent=63 // pred_check_branch
          %576 = sbr.rel (%p574) target = $region68
        $region67: #{actor_critic_forward.1} parent=63 // pred_region
          %577 = dma.done %s570, 256
        $region68: #{actor_critic_forward.1} parent=63 // pred_fallthru
          _
        %s578 = sand.u32 %s40, 1
        %s579 = scalar_lea.sflag [#allocation5], %s578
        %s580 = sand.u32 %s95, 1
        %s581 = smul.addr %s580, 2
        %s582 = scalar_lea.vmem [#allocation4], %s581
        // Predicated region
        $region69: #{actor_critic_forward.1} parent=63 // pred_check
          %p583 = pneg %p108
        $region70: #{actor_critic_forward.1} parent=63 // pred_check_branch
          %585 = sbr.rel (%p583) target = $region72
        $region71: #{actor_critic_forward.1} parent=63 // pred_region
          %586 = dma.done %s579, 32
        $region72: #{actor_critic_forward.1} parent=63 // pred_fallthru
          _
        %s587 = sand.u32 %s40, 1
        %s588 = scalar_lea.sflag [#allocation5], %s587
        %s589 = sand.u32 %s121, 1
        %s590 = smul.addr %s589, 2048
        %s591 = scalar_lea.vmem [#allocation6], %s590
        // Predicated region
        $region73: #{actor_critic_forward.1} parent=63 // pred_check
          %p592 = pneg %p134
        $region74: #{actor_critic_forward.1} parent=63 // pred_check_branch
          %594 = sbr.rel (%p592) target = $region76
        $region75: #{actor_critic_forward.1} parent=63 // pred_region
          %595 = dma.done %s588, 32768
        $region76: #{actor_critic_forward.1} parent=63 // pred_fallthru
          _
        %s596 = sand.u32 %s40, 1
        %s597 = scalar_lea.sflag [#allocation8], %s596
        %s598 = sand.u32 %s147, 1
        %s599 = smul.addr %s598, 4
        %s600 = scalar_lea.vmem [#allocation7], %s599
        // Predicated region
        $region77: #{actor_critic_forward.1} parent=63 // pred_check
          %p601 = pneg %p160
        $region78: #{actor_critic_forward.1} parent=63 // pred_check_branch
          %603 = sbr.rel (%p601) target = $region80
        $region79: #{actor_critic_forward.1} parent=63 // pred_region
          %604 = dma.done %s597, 64
        $region80: #{actor_critic_forward.1} parent=63 // pred_fallthru
          _
        %s605 = sand.u32 %s40, 1
        %s606 = scalar_lea.sflag [#allocation8], %s605
        %s607 = sand.u32 %s173, 1
        %s608 = smul.addr %s607, 8192
        %s609 = scalar_lea.vmem [#allocation9], %s608
        // Predicated region
        $region81: #{actor_critic_forward.1} parent=63 // pred_check
          %p610 = pneg %p186
        $region82: #{actor_critic_forward.1} parent=63 // pred_check_branch
          %612 = sbr.rel (%p610) target = $region84
        $region83: #{actor_critic_forward.1} parent=63 // pred_region
          %613 = dma.done %s606, 131072
        $region84: #{actor_critic_forward.1} parent=63 // pred_fallthru
          _
        %s614 = sand.u32 %s40, 1
        %s615 = scalar_lea.sflag [#allocation11], %s614
        %s616 = sand.u32 %s199, 1
        %s617 = smul.addr %s616, 8
        %s618 = scalar_lea.vmem [#allocation10], %s617
        // Predicated region
        $region85: #{actor_critic_forward.1} parent=63 // pred_check
          %p619 = pneg %p212
        $region86: #{actor_critic_forward.1} parent=63 // pred_check_branch
          %621 = sbr.rel (%p619) target = $region88
        $region87: #{actor_critic_forward.1} parent=63 // pred_region
          %622 = dma.done %s615, 128
        $region88: #{actor_critic_forward.1} parent=63 // pred_fallthru
          _
        %s623 = sand.u32 %s40, 1
        %s624 = scalar_lea.sflag [#allocation11], %s623
        %s625 = sand.u32 %s225, 1
        %s626 = smul.addr %s625, 1024
        %s627 = scalar_lea.vmem [#allocation12], %s626
        // Predicated region
        $region89: #{actor_critic_forward.1} parent=63 // pred_check
          %p628 = pneg %p238
        $region90: #{actor_critic_forward.1} parent=63 // pred_check_branch
          %630 = sbr.rel (%p628) target = $region92
        $region91: #{actor_critic_forward.1} parent=63 // pred_region
          %631 = dma.done %s624, 16384
        $region92: #{actor_critic_forward.1} parent=63 // pred_fallthru
          _
        %s632 = sand.u32 %s40, 1
        %s633 = scalar_lea.sflag [#allocation14], %s632
        %s634 = sand.u32 %s251, 1
        %s635 = smul.addr %s634, 2
        %s636 = scalar_lea.vmem [#allocation13], %s635
        // Predicated region
        $region93: #{actor_critic_forward.1} parent=63 // pred_check
          %p637 = pneg %p264
        $region94: #{actor_critic_forward.1} parent=63 // pred_check_branch
          %639 = sbr.rel (%p637) target = $region96
        $region95: #{actor_critic_forward.1} parent=63 // pred_region
          %640 = dma.done %s633, 32
        $region96: #{actor_critic_forward.1} parent=63 // pred_fallthru
          _
        %s641 = sand.u32 %s40, 1
        %s642 = scalar_lea.sflag [#allocation14], %s641
        %s643 = sand.u32 %s277, 1
        %s644 = smul.addr %s643, 128
        %s645 = scalar_lea.vmem [#allocation15], %s644
        // Predicated region
        $region97: #{actor_critic_forward.1} parent=63 // pred_check
          %p646 = pneg %p290
        $region98: #{actor_critic_forward.1} parent=63 // pred_check_branch
          %648 = sbr.rel (%p646) target = $region100
        $region99: #{actor_critic_forward.1} parent=63 // pred_region
          %649 = dma.done %s642, 2048
        $region100: #{actor_critic_forward.1} parent=63 // pred_fallthru
          _
        %s650 = sand.u32 %s303, 1
        %s651 = scalar_lea.sflag [#allocation17], %s650
        %s652 = sand.u32 %s303, 1
        %s653 = scalar_lea.vmem [#allocation16], %s652
        // Predicated region
        $region101: #{actor_critic_forward.1} parent=63 // pred_check
          %p654 = pneg %p316
        $region102: #{actor_critic_forward.1} parent=63 // pred_check_branch
          %656 = sbr.rel (%p654) target = $region104
        $region103: #{actor_critic_forward.1} parent=63 // pred_region
          %657 = dma.done %s651, 16
        $region104: #{actor_critic_forward.1} parent=63 // pred_fallthru
          _
        %p658 = pneg %p56
        %p659 = pneg %p53
        %s660 = sand.u32 %s69, 1
        %s661 = scalar_lea.sflag [#allocation3], %s660
        %s662 = sand.u32 %s69, 1
        %s663 = smul.addr %s662, 16
        %s664 = scalar_lea.vmem [#allocation2], %s663
        %p665 = pneg %p82
        %p666 = pneg %p79
        %s667 = sand.u32 %s40, 1
        %s668 = scalar_lea.sflag [#allocation5], %s667
        %s669 = sand.u32 %s95, 1
        %s670 = smul.addr %s669, 2
        %s671 = scalar_lea.vmem [#allocation4], %s670
        %p672 = pneg %p108
        %p673 = pneg %p105
        %s674 = sand.u32 %s40, 1
        %s675 = scalar_lea.sflag [#allocation5], %s674
        %s676 = sand.u32 %s121, 1
        %s677 = smul.addr %s676, 2048
        %s678 = scalar_lea.vmem [#allocation6], %s677
        %p679 = pneg %p134
        %p680 = pneg %p131
        %s681 = sand.u32 %s40, 1
        %s682 = scalar_lea.sflag [#allocation8], %s681
        %s683 = sand.u32 %s147, 1
        %s684 = smul.addr %s683, 4
        %s685 = scalar_lea.vmem [#allocation7], %s684
        %p686 = pneg %p160
        %p687 = pneg %p157
        %s688 = sand.u32 %s40, 1
        %s689 = scalar_lea.sflag [#allocation8], %s688
        %s690 = sand.u32 %s173, 1
        %s691 = smul.addr %s690, 8192
        %s692 = scalar_lea.vmem [#allocation9], %s691
        %p693 = pneg %p186
        %p694 = pneg %p183
        %s695 = sand.u32 %s40, 1
        %s696 = scalar_lea.sflag [#allocation11], %s695
        %s697 = sand.u32 %s199, 1
        %s698 = smul.addr %s697, 8
        %s699 = scalar_lea.vmem [#allocation10], %s698
        %p700 = pneg %p212
        %p701 = pneg %p209
        %s702 = sand.u32 %s40, 1
        %s703 = scalar_lea.sflag [#allocation11], %s702
        %s704 = sand.u32 %s225, 1
        %s705 = smul.addr %s704, 1024
        %s706 = scalar_lea.vmem [#allocation12], %s705
        %p707 = pneg %p238
        %p708 = pneg %p235
        %s709 = sand.u32 %s40, 1
        %s710 = scalar_lea.sflag [#allocation14], %s709
        %s711 = sand.u32 %s251, 1
        %s712 = smul.addr %s711, 2
        %s713 = scalar_lea.vmem [#allocation13], %s712
        %p714 = pneg %p264
        %p715 = pneg %p261
        %s716 = sand.u32 %s40, 1
        %s717 = scalar_lea.sflag [#allocation14], %s716
        %s718 = sand.u32 %s277, 1
        %s719 = smul.addr %s718, 128
        %s720 = scalar_lea.vmem [#allocation15], %s719
        %p721 = pneg %p290
        %p722 = pneg %p287
        %s723 = sand.u32 %s303, 1
        %s724 = scalar_lea.sflag [#allocation17], %s723
        %s725 = sand.u32 %s303, 1
        %s726 = scalar_lea.vmem [#allocation16], %s725
        %p727 = pneg %p316
        %p728 = pneg %p313
        %p729 = pneg %p342
        %p730 = pneg %p339
        %p731 = scmp.lt.s32.totalorder %s40, 1
        %s732 = scalar_select %p731, %s40, 1
        %s733 = smul.addr %s732, 2
        %s734 = scalar_lea.vmem %s11, %s733
        %p735 = scmp.lt.s32.totalorder %s40, 1
        %s736 = scalar_select %p735, %s40, 1
        %s737 = smul.addr %s736, 2
        %s738 = scalar_lea.vmem %s11, %s737
        %v740 = vld [vmem:[%s0] sm:$0xf]
        %v741 = vld [vmem:[%s0 + $0x4] sm:$0xf]
        %v742 = vld [vmem:[%s0 + $0x8] sm:$0x1]
        %v743 = vld [vmem:[%s573] sm:$0xff]
        %v744 = vld [vmem:[%s573 + $0x8] sm:$0xff]
        %v745 = vld [vmem:[%s582] sm:$0x3]
        %v747 = vlaneseq
        %v748 = vshrl.u32 %v747, 7
        %v749 = vsub.s32 0, %v748
        %v750 = vrot.slane %v745, %v749
        %v751 = vlaneseq
        %v752 = vshrl.u32 %v751, 7
        %v753 = vsub.s32 1, %v752
        %v754 = vrot.slane %v745, %v753
        %v760 = vunpack.c.l.b16 %v740
        %v761 = vunpack.c.l.b16 %v741
        %v762 = vunpack.c.l.b16 %v742
        %v763 = vpack.c.b16 %v761, %v760
        %v764 = vpack.c.b16 %v762, %v762
        %v767 = vunpack.c.l.b16 %v743
        %v768 = vunpack.c.h.b16 %v743
        %v769 = vunpack.c.l.b16 %v744
        %v770 = vunpack.c.h.b16 %v744
        %v771 = vpack.c.b16 %v769, %v767
        %v772 = vpack.c.b16 %v770, %v768
        %vm775 = vcmask 130048
        %v777 = vsel %vm775, %v763, 0
        %v780 = vsel %vm775, %v764, 0
        %782 = vmatprep.subr.bf16.mxu0 %v772
        %783 = vmatpush1.bf16.msra.mxu0 %v771
        %784 = vmatprep.subr.bf16.mxu0 0
        %785 = vmatpush1.bf16.msra.mxu0 0
        %786 = vmatprep.subr.bf16.mxu0 0
        %787 = vmatpush1.bf16.msra.mxu0 0
        %788 = vmatprep.subr.bf16.mxu0 0
        %789 = vmatpush1.bf16.msra.mxu0 0
        %790 = vmatprep.subr.bf16.mxu0 0
        %791 = vmatpush1.bf16.msra.mxu0 0
        %792 = vmatprep.subr.bf16.mxu0 0
        %793 = vmatpush1.bf16.msra.mxu0 0
        %794 = vmatprep.subr.bf16.mxu0 0
        %795 = vmatpush1.bf16.msra.mxu0 0
        %796 = vmatprep.subr.bf16.mxu0 0
        %797 = vmatpush1.bf16.msra.mxu0 0
        %798 = vmatprep.subr.bf16.mxu0 0
        %799 = vmatpush1.bf16.msra.mxu0 0
        %800 = vmatprep.subr.bf16.mxu0 0
        %801 = vmatpush1.bf16.msra.mxu0 0
        %802 = vmatprep.subr.bf16.mxu0 0
        %803 = vmatpush1.bf16.msra.mxu0 0
        %804 = vmatprep.subr.bf16.mxu0 0
        %805 = vmatpush1.bf16.msra.mxu0 0
        %806 = vmatprep.subr.bf16.mxu0 0
        %807 = vmatpush1.bf16.msra.mxu0 0
        %808 = vmatprep.subr.bf16.mxu0 0
        %809 = vmatpush1.bf16.msra.mxu0 0
        %810 = vmatprep.subr.bf16.mxu0 0
        %811 = vmatpush1.bf16.msra.mxu0 0
        %812 = vmatprep.subr.bf16.mxu0 0
        %813 = vmatpush1.bf16.msra.mxu0 0
        %814 = vmatprep.mubr.bf16.mxu0 0
        %815 = vmatmul.mubr.bf16.gmra.mrb[0].mxu0 %v777
        %v816 = vpop.f32.mrb[0].mxu0
        %v817 = vadd.f32 %v750, %v816
        %v818 = vpop.f32.mrb[0].mxu0
        %v819 = vadd.f32 %v754, %v818
        %v820 = vpop.f32.mrb[0].mxu0
        %v821 = vadd.f32 %v750, %v820
        %v822 = vpop.f32.mrb[0].mxu0
        %v823 = vadd.f32 %v754, %v822
        %824 = vmatprep.mubr.bf16.mxu0 0
        %825 = vmatmul.mubr.bf16.gmra.mrb[0].mxu0 %v780
        %v826 = vpop.f32.mrb[0].mxu0
        %v827 = vadd.f32 %v750, %v826
        %v828 = vpop.f32.mrb[0].mxu0
        %v829 = vadd.f32 %v754, %v828
        %v830 = vpop.f32.mrb[0].mxu0
        %v831 = vpop.f32.mrb[0].mxu0
        %832 = vdwg.mxu0
        %v833 = vmax.f32 %v817, 0.0
        %v834 = vmax.f32 %v819, 0.0
        %v835 = vmax.f32 %v821, 0.0
        %v836 = vmax.f32 %v823, 0.0
        %v837 = vmax.f32 %v827, 0.0
        %v838 = vmax.f32 %v829, 0.0
        %v841 = vrot.slane %v833, 1
        %v842 = vrot.slane %v834, 1
        %v847 = vrot.slane %v835, 5
        %v848 = vrot.slane %v836, 5
        %v851 = vrot.slane %v835, 6
        %v852 = vrot.slane %v836, 6
        %vm855 = vcmask 1041408
        %v856 = vsel %vm855, %v833, %v841
        %v857 = vsel %vm855, %v834, %v842
        %vm858 = vcmask 1043456
        %v859 = vsel %vm858, %v856, %v847
        %v860 = vsel %vm858, %v857, %v848
        %vm861 = vcmask 1045504
        %v862 = vsel %vm861, %v859, %v851
        %v863 = vsel %vm861, %v860, %v852
        %v864 = vrot.slane %v833, 2
        %v865 = vrot.slane %v834, 2
        %v868 = vrot.slane %v835, 7
        %v869 = vrot.slane %v836, 7
        %v872 = vsel %vm855, %v841, %v864
        %v873 = vsel %vm855, %v842, %v865
        %v874 = vsel %vm858, %v872, %v851
        %v875 = vsel %vm858, %v873, %v852
        %v876 = vsel %vm861, %v874, %v868
        %v877 = vsel %vm861, %v875, %v869
        %v878 = vrot.slane %v833, 3
        %v879 = vrot.slane %v834, 3
        %v882 = vrot.slane %v833, 4
        %v883 = vrot.slane %v834, 4
        %vm888 = vcmask 1046528
        %v889 = vrot.slane %v835, 1
        %v890 = vrot.slane %v837, 1
        %v891 = vsel %vm888, %v889, %v890
        %v892 = vrot.slane %v836, 1
        %v893 = vrot.slane %v838, 1
        %v894 = vsel %vm888, %v892, %v893
        %v897 = vsel %vm855, %v878, %v882
        %v898 = vsel %vm855, %v879, %v883
        %v899 = vsel %vm858, %v897, %v835
        %v900 = vsel %vm858, %v898, %v836
        %v901 = vsel %vm861, %v899, %v891
        %v902 = vsel %vm861, %v900, %v894
        %vm903 = vcmask 1042432
        %v904 = vrot.slane %v833, 5
        %v905 = vsel %vm903, %v904, %v847
        %v906 = vrot.slane %v834, 5
        %v907 = vsel %vm903, %v906, %v848
        %v912 = vrot.slane %v837, 2
        %v913 = vrot.slane %v838, 2
        %v916 = vsel %vm855, %v882, %v905
        %v917 = vsel %vm855, %v883, %v907
        %v918 = vsel %vm858, %v916, %v889
        %v919 = vsel %vm858, %v917, %v892
        %v920 = vsel %vm861, %v918, %v912
        %v921 = vsel %vm861, %v919, %v913
        %v922 = vld [vmem:[%s591] sm:$0xff]
        %v923 = vld [vmem:[%s591 + $0x8] sm:$0xff]
        %v924 = vld [vmem:[%s591 + $0x10] sm:$0xff]
        %v925 = vld [vmem:[%s591 + $0x18] sm:$0xff]
        %v926 = vld [vmem:[%s591 + $0x20] sm:$0xff]
        %v927 = vld [vmem:[%s591 + $0x28] sm:$0xff]
        %v928 = vld [vmem:[%s591 + $0x30] sm:$0xff]
        %v929 = vld [vmem:[%s591 + $0x38] sm:$0xff]
        %v930 = vld [vmem:[%s591 + $0x40] sm:$0xff]
        %v931 = vld [vmem:[%s591 + $0x48] sm:$0xff]
        %v932 = vld [vmem:[%s591 + $0x50] sm:$0xff]
        %v933 = vld [vmem:[%s591 + $0x58] sm:$0xff]
        %v934 = vld [vmem:[%s591 + $0x60] sm:$0xff]
        %v935 = vld [vmem:[%s591 + $0x68] sm:$0xff]
        %v936 = vld [vmem:[%s591 + $0x70] sm:$0xff]
        %v937 = vld [vmem:[%s591 + $0x78] sm:$0xff]
        %v938 = vld [vmem:[%s591 + $0x80] sm:$0xff]
        %v939 = vld [vmem:[%s591 + $0x88] sm:$0xff]
        %v940 = vld [vmem:[%s591 + $0x90] sm:$0xff]
        %v941 = vld [vmem:[%s591 + $0x98] sm:$0xff]
        %v942 = vld [vmem:[%s591 + $0xa0] sm:$0xff]
        %v943 = vld [vmem:[%s591 + $0xa8] sm:$0xff]
        %v944 = vld [vmem:[%s591 + $0xb0] sm:$0xff]
        %v945 = vld [vmem:[%s591 + $0xb8] sm:$0xff]
        %v946 = vld [vmem:[%s591 + $0xc0] sm:$0xff]
        %v947 = vld [vmem:[%s591 + $0xc8] sm:$0xff]
        %v948 = vld [vmem:[%s591 + $0xd0] sm:$0xff]
        %v949 = vld [vmem:[%s591 + $0xd8] sm:$0xff]
        %v950 = vld [vmem:[%s591 + $0xe0] sm:$0xff]
        %v951 = vld [vmem:[%s591 + $0xe8] sm:$0xff]
        %v952 = vld [vmem:[%s591 + $0xf0] sm:$0xff]
        %v953 = vld [vmem:[%s591 + $0xf8] sm:$0xff]
        %v954 = vld [vmem:[%s591 + $0x100] sm:$0xff]
        %v955 = vld [vmem:[%s591 + $0x108] sm:$0xff]
        %v956 = vld [vmem:[%s591 + $0x110] sm:$0xff]
        %v957 = vld [vmem:[%s591 + $0x118] sm:$0xff]
        %v958 = vld [vmem:[%s591 + $0x120] sm:$0xff]
        %v959 = vld [vmem:[%s591 + $0x128] sm:$0xff]
        %v960 = vld [vmem:[%s591 + $0x130] sm:$0xff]
        %v961 = vld [vmem:[%s591 + $0x138] sm:$0xff]
        %v962 = vld [vmem:[%s591 + $0x140] sm:$0xff]
        %v963 = vld [vmem:[%s591 + $0x148] sm:$0xff]
        %v964 = vld [vmem:[%s591 + $0x150] sm:$0xff]
        %v965 = vld [vmem:[%s591 + $0x158] sm:$0xff]
        %v966 = vld [vmem:[%s591 + $0x160] sm:$0xff]
        %v967 = vld [vmem:[%s591 + $0x168] sm:$0xff]
        %v968 = vld [vmem:[%s591 + $0x170] sm:$0xff]
        %v969 = vld [vmem:[%s591 + $0x178] sm:$0xff]
        %v970 = vld [vmem:[%s591 + $0x180] sm:$0xff]
        %v971 = vld [vmem:[%s591 + $0x188] sm:$0xff]
        %v972 = vld [vmem:[%s591 + $0x190] sm:$0xff]
        %v973 = vld [vmem:[%s591 + $0x198] sm:$0xff]
        %v974 = vld [vmem:[%s591 + $0x1a0] sm:$0xff]
        %v975 = vld [vmem:[%s591 + $0x1a8] sm:$0xff]
        %v976 = vld [vmem:[%s591 + $0x1b0] sm:$0xff]
        %v977 = vld [vmem:[%s591 + $0x1b8] sm:$0xff]
        %v978 = vld [vmem:[%s591 + $0x1c0] sm:$0xff]
        %v979 = vld [vmem:[%s591 + $0x1c8] sm:$0xff]
        %v980 = vld [vmem:[%s591 + $0x1d0] sm:$0xff]
        %v981 = vld [vmem:[%s591 + $0x1d8] sm:$0xff]
        %v982 = vld [vmem:[%s591 + $0x1e0] sm:$0xff]
        %v983 = vld [vmem:[%s591 + $0x1e8] sm:$0xff]
        %v984 = vld [vmem:[%s591 + $0x1f0] sm:$0xff]
        %v985 = vld [vmem:[%s591 + $0x1f8] sm:$0xff]
        %v986 = vld [vmem:[%s591 + $0x200] sm:$0xff]
        %v987 = vld [vmem:[%s591 + $0x208] sm:$0xff]
        %v988 = vld [vmem:[%s591 + $0x210] sm:$0xff]
        %v989 = vld [vmem:[%s591 + $0x218] sm:$0xff]
        %v990 = vld [vmem:[%s591 + $0x220] sm:$0xff]
        %v991 = vld [vmem:[%s591 + $0x228] sm:$0xff]
        %v992 = vld [vmem:[%s591 + $0x230] sm:$0xff]
        %v993 = vld [vmem:[%s591 + $0x238] sm:$0xff]
        %v994 = vld [vmem:[%s591 + $0x240] sm:$0xff]
        %v995 = vld [vmem:[%s591 + $0x248] sm:$0xff]
        %v996 = vld [vmem:[%s591 + $0x250] sm:$0xff]
        %v997 = vld [vmem:[%s591 + $0x258] sm:$0xff]
        %v998 = vld [vmem:[%s591 + $0x260] sm:$0xff]
        %v999 = vld [vmem:[%s591 + $0x268] sm:$0xff]
        %v1000 = vld [vmem:[%s591 + $0x270] sm:$0xff]
        %v1001 = vld [vmem:[%s591 + $0x278] sm:$0xff]
        %v1002 = vld [vmem:[%s591 + $0x280] sm:$0xff]
        %v1003 = vld [vmem:[%s591 + $0x288] sm:$0xff]
        %v1004 = vld [vmem:[%s591 + $0x290] sm:$0xff]
        %v1005 = vld [vmem:[%s591 + $0x298] sm:$0xff]
        %v1006 = vld [vmem:[%s591 + $0x2a0] sm:$0xff]
        %v1007 = vld [vmem:[%s591 + $0x2a8] sm:$0xff]
        %v1008 = vld [vmem:[%s591 + $0x2b0] sm:$0xff]
        %v1009 = vld [vmem:[%s591 + $0x2b8] sm:$0xff]
        %v1010 = vld [vmem:[%s591 + $0x2c0] sm:$0xff]
        %v1011 = vld [vmem:[%s591 + $0x2c8] sm:$0xff]
        %v1012 = vld [vmem:[%s591 + $0x2d0] sm:$0xff]
        %v1013 = vld [vmem:[%s591 + $0x2d8] sm:$0xff]
        %v1014 = vld [vmem:[%s591 + $0x2e0] sm:$0xff]
        %v1015 = vld [vmem:[%s591 + $0x2e8] sm:$0xff]
        %v1016 = vld [vmem:[%s591 + $0x2f0] sm:$0xff]
        %v1017 = vld [vmem:[%s591 + $0x2f8] sm:$0xff]
        %v1018 = vld [vmem:[%s591 + $0x300] sm:$0xff]
        %v1019 = vld [vmem:[%s591 + $0x308] sm:$0xff]
        %v1020 = vld [vmem:[%s591 + $0x310] sm:$0xff]
        %v1021 = vld [vmem:[%s591 + $0x318] sm:$0xff]
        %v1022 = vld [vmem:[%s591 + $0x320] sm:$0xff]
        %v1023 = vld [vmem:[%s591 + $0x328] sm:$0xff]
        %v1024 = vld [vmem:[%s591 + $0x330] sm:$0xff]
        %v1025 = vld [vmem:[%s591 + $0x338] sm:$0xff]
        %v1026 = vld [vmem:[%s591 + $0x340] sm:$0xff]
        %v1027 = vld [vmem:[%s591 + $0x348] sm:$0xff]
        %v1028 = vld [vmem:[%s591 + $0x350] sm:$0xff]
        %v1029 = vld [vmem:[%s591 + $0x358] sm:$0xff]
        %v1030 = vld [vmem:[%s591 + $0x360] sm:$0xff]
        %v1031 = vld [vmem:[%s591 + $0x368] sm:$0xff]
        %v1032 = vld [vmem:[%s591 + $0x370] sm:$0xff]
        %v1033 = vld [vmem:[%s591 + $0x378] sm:$0xff]
        %v1034 = vld [vmem:[%s591 + $0x380] sm:$0xff]
        %v1035 = vld [vmem:[%s591 + $0x388] sm:$0xff]
        %v1036 = vld [vmem:[%s591 + $0x390] sm:$0xff]
        %v1037 = vld [vmem:[%s591 + $0x398] sm:$0xff]
        %v1038 = vld [vmem:[%s591 + $0x3a0] sm:$0xff]
        %v1039 = vld [vmem:[%s591 + $0x3a8] sm:$0xff]
        %v1040 = vld [vmem:[%s591 + $0x3b0] sm:$0xff]
        %v1041 = vld [vmem:[%s591 + $0x3b8] sm:$0xff]
        %v1042 = vld [vmem:[%s591 + $0x3c0] sm:$0xff]
        %v1043 = vld [vmem:[%s591 + $0x3c8] sm:$0xff]
        %v1044 = vld [vmem:[%s591 + $0x3d0] sm:$0xff]
        %v1045 = vld [vmem:[%s591 + $0x3d8] sm:$0xff]
        %v1046 = vld [vmem:[%s591 + $0x3e0] sm:$0xff]
        %v1047 = vld [vmem:[%s591 + $0x3e8] sm:$0xff]
        %v1048 = vld [vmem:[%s591 + $0x3f0] sm:$0xff]
        %v1049 = vld [vmem:[%s591 + $0x3f8] sm:$0xff]
        %v1050 = vld [vmem:[%s591 + $0x400] sm:$0xff]
        %v1051 = vld [vmem:[%s591 + $0x408] sm:$0xff]
        %v1052 = vld [vmem:[%s591 + $0x410] sm:$0xff]
        %v1053 = vld [vmem:[%s591 + $0x418] sm:$0xff]
        %v1054 = vld [vmem:[%s591 + $0x420] sm:$0xff]
        %v1055 = vld [vmem:[%s591 + $0x428] sm:$0xff]
        %v1056 = vld [vmem:[%s591 + $0x430] sm:$0xff]
        %v1057 = vld [vmem:[%s591 + $0x438] sm:$0xff]
        %v1058 = vld [vmem:[%s591 + $0x440] sm:$0xff]
        %v1059 = vld [vmem:[%s591 + $0x448] sm:$0xff]
        %v1060 = vld [vmem:[%s591 + $0x450] sm:$0xff]
        %v1061 = vld [vmem:[%s591 + $0x458] sm:$0xff]
        %v1062 = vld [vmem:[%s591 + $0x460] sm:$0xff]
        %v1063 = vld [vmem:[%s591 + $0x468] sm:$0xff]
        %v1064 = vld [vmem:[%s591 + $0x470] sm:$0xff]
        %v1065 = vld [vmem:[%s591 + $0x478] sm:$0xff]
        %v1066 = vld [vmem:[%s591 + $0x480] sm:$0xff]
        %v1067 = vld [vmem:[%s591 + $0x488] sm:$0xff]
        %v1068 = vld [vmem:[%s591 + $0x490] sm:$0xff]
        %v1069 = vld [vmem:[%s591 + $0x498] sm:$0xff]
        %v1070 = vld [vmem:[%s591 + $0x4a0] sm:$0xff]
        %v1071 = vld [vmem:[%s591 + $0x4a8] sm:$0xff]
        %v1072 = vld [vmem:[%s591 + $0x4b0] sm:$0xff]
        %v1073 = vld [vmem:[%s591 + $0x4b8] sm:$0xff]
        %v1074 = vld [vmem:[%s591 + $0x4c0] sm:$0xff]
        %v1075 = vld [vmem:[%s591 + $0x4c8] sm:$0xff]
        %v1076 = vld [vmem:[%s591 + $0x4d0] sm:$0xff]
        %v1077 = vld [vmem:[%s591 + $0x4d8] sm:$0xff]
        %v1078 = vld [vmem:[%s591 + $0x4e0] sm:$0xff]
        %v1079 = vld [vmem:[%s591 + $0x4e8] sm:$0xff]
        %v1080 = vld [vmem:[%s591 + $0x4f0] sm:$0xff]
        %v1081 = vld [vmem:[%s591 + $0x4f8] sm:$0xff]
        %v1082 = vld [vmem:[%s591 + $0x500] sm:$0xff]
        %v1083 = vld [vmem:[%s591 + $0x508] sm:$0xff]
        %v1084 = vld [vmem:[%s591 + $0x510] sm:$0xff]
        %v1085 = vld [vmem:[%s591 + $0x518] sm:$0xff]
        %v1086 = vld [vmem:[%s591 + $0x520] sm:$0xff]
        %v1087 = vld [vmem:[%s591 + $0x528] sm:$0xff]
        %v1088 = vld [vmem:[%s591 + $0x530] sm:$0xff]
        %v1089 = vld [vmem:[%s591 + $0x538] sm:$0xff]
        %v1090 = vld [vmem:[%s591 + $0x540] sm:$0xff]
        %v1091 = vld [vmem:[%s591 + $0x548] sm:$0xff]
        %v1092 = vld [vmem:[%s591 + $0x550] sm:$0xff]
        %v1093 = vld [vmem:[%s591 + $0x558] sm:$0xff]
        %v1094 = vld [vmem:[%s591 + $0x560] sm:$0xff]
        %v1095 = vld [vmem:[%s591 + $0x568] sm:$0xff]
        %v1096 = vld [vmem:[%s591 + $0x570] sm:$0xff]
        %v1097 = vld [vmem:[%s591 + $0x578] sm:$0xff]
        %v1098 = vld [vmem:[%s591 + $0x580] sm:$0xff]
        %v1099 = vld [vmem:[%s591 + $0x588] sm:$0xff]
        %v1100 = vld [vmem:[%s591 + $0x590] sm:$0xff]
        %v1101 = vld [vmem:[%s591 + $0x598] sm:$0xff]
        %v1102 = vld [vmem:[%s591 + $0x5a0] sm:$0xff]
        %v1103 = vld [vmem:[%s591 + $0x5a8] sm:$0xff]
        %v1104 = vld [vmem:[%s591 + $0x5b0] sm:$0xff]
        %v1105 = vld [vmem:[%s591 + $0x5b8] sm:$0xff]
        %v1106 = vld [vmem:[%s591 + $0x5c0] sm:$0xff]
        %v1107 = vld [vmem:[%s591 + $0x5c8] sm:$0xff]
        %v1108 = vld [vmem:[%s591 + $0x5d0] sm:$0xff]
        %v1109 = vld [vmem:[%s591 + $0x5d8] sm:$0xff]
        %v1110 = vld [vmem:[%s591 + $0x5e0] sm:$0xff]
        %v1111 = vld [vmem:[%s591 + $0x5e8] sm:$0xff]
        %v1112 = vld [vmem:[%s591 + $0x5f0] sm:$0xff]
        %v1113 = vld [vmem:[%s591 + $0x5f8] sm:$0xff]
        %v1114 = vld [vmem:[%s591 + $0x600] sm:$0xff]
        %v1115 = vld [vmem:[%s591 + $0x608] sm:$0xff]
        %v1116 = vld [vmem:[%s591 + $0x610] sm:$0xff]
        %v1117 = vld [vmem:[%s591 + $0x618] sm:$0xff]
        %v1118 = vld [vmem:[%s591 + $0x620] sm:$0xff]
        %v1119 = vld [vmem:[%s591 + $0x628] sm:$0xff]
        %v1120 = vld [vmem:[%s591 + $0x630] sm:$0xff]
        %v1121 = vld [vmem:[%s591 + $0x638] sm:$0xff]
        %v1122 = vld [vmem:[%s591 + $0x640] sm:$0xff]
        %v1123 = vld [vmem:[%s591 + $0x648] sm:$0xff]
        %v1124 = vld [vmem:[%s591 + $0x650] sm:$0xff]
        %v1125 = vld [vmem:[%s591 + $0x658] sm:$0xff]
        %v1126 = vld [vmem:[%s591 + $0x660] sm:$0xff]
        %v1127 = vld [vmem:[%s591 + $0x668] sm:$0xff]
        %v1128 = vld [vmem:[%s591 + $0x670] sm:$0xff]
        %v1129 = vld [vmem:[%s591 + $0x678] sm:$0xff]
        %v1130 = vld [vmem:[%s591 + $0x680] sm:$0xff]
        %v1131 = vld [vmem:[%s591 + $0x688] sm:$0xff]
        %v1132 = vld [vmem:[%s591 + $0x690] sm:$0xff]
        %v1133 = vld [vmem:[%s591 + $0x698] sm:$0xff]
        %v1134 = vld [vmem:[%s591 + $0x6a0] sm:$0xff]
        %v1135 = vld [vmem:[%s591 + $0x6a8] sm:$0xff]
        %v1136 = vld [vmem:[%s591 + $0x6b0] sm:$0xff]
        %v1137 = vld [vmem:[%s591 + $0x6b8] sm:$0xff]
        %v1138 = vld [vmem:[%s591 + $0x6c0] sm:$0xff]
        %v1139 = vld [vmem:[%s591 + $0x6c8] sm:$0xff]
        %v1140 = vld [vmem:[%s591 + $0x6d0] sm:$0xff]
        %v1141 = vld [vmem:[%s591 + $0x6d8] sm:$0xff]
        %v1142 = vld [vmem:[%s591 + $0x6e0] sm:$0xff]
        %v1143 = vld [vmem:[%s591 + $0x6e8] sm:$0xff]
        %v1144 = vld [vmem:[%s591 + $0x6f0] sm:$0xff]
        %v1145 = vld [vmem:[%s591 + $0x6f8] sm:$0xff]
        %v1146 = vld [vmem:[%s591 + $0x700] sm:$0xff]
        %v1147 = vld [vmem:[%s591 + $0x708] sm:$0xff]
        %v1148 = vld [vmem:[%s591 + $0x710] sm:$0xff]
        %v1149 = vld [vmem:[%s591 + $0x718] sm:$0xff]
        %v1150 = vld [vmem:[%s591 + $0x720] sm:$0xff]
        %v1151 = vld [vmem:[%s591 + $0x728] sm:$0xff]
        %v1152 = vld [vmem:[%s591 + $0x730] sm:$0xff]
        %v1153 = vld [vmem:[%s591 + $0x738] sm:$0xff]
        %v1154 = vld [vmem:[%s591 + $0x740] sm:$0xff]
        %v1155 = vld [vmem:[%s591 + $0x748] sm:$0xff]
        %v1156 = vld [vmem:[%s591 + $0x750] sm:$0xff]
        %v1157 = vld [vmem:[%s591 + $0x758] sm:$0xff]
        %v1158 = vld [vmem:[%s591 + $0x760] sm:$0xff]
        %v1159 = vld [vmem:[%s591 + $0x768] sm:$0xff]
        %v1160 = vld [vmem:[%s591 + $0x770] sm:$0xff]
        %v1161 = vld [vmem:[%s591 + $0x778] sm:$0xff]
        %v1162 = vld [vmem:[%s591 + $0x780] sm:$0xff]
        %v1163 = vld [vmem:[%s591 + $0x788] sm:$0xff]
        %v1164 = vld [vmem:[%s591 + $0x790] sm:$0xff]
        %v1165 = vld [vmem:[%s591 + $0x798] sm:$0xff]
        %v1166 = vld [vmem:[%s591 + $0x7a0] sm:$0xff]
        %v1167 = vld [vmem:[%s591 + $0x7a8] sm:$0xff]
        %v1168 = vld [vmem:[%s591 + $0x7b0] sm:$0xff]
        %v1169 = vld [vmem:[%s591 + $0x7b8] sm:$0xff]
        %v1170 = vld [vmem:[%s591 + $0x7c0] sm:$0xff]
        %v1171 = vld [vmem:[%s591 + $0x7c8] sm:$0xff]
        %v1172 = vld [vmem:[%s591 + $0x7d0] sm:$0xff]
        %v1173 = vld [vmem:[%s591 + $0x7d8] sm:$0xff]
        %v1174 = vld [vmem:[%s591 + $0x7e0] sm:$0xff]
        %v1175 = vld [vmem:[%s591 + $0x7e8] sm:$0xff]
        %v1176 = vld [vmem:[%s591 + $0x7f0] sm:$0xff]
        %v1177 = vld [vmem:[%s591 + $0x7f8] sm:$0xff]
        %v1178 = vpack.c.bf16 %v862, %v862
        %v1179 = vpack.c.bf16 %v863, %v863
        %v1180 = vpack.c.bf16 %v876, %v876
        %v1181 = vpack.c.bf16 %v877, %v877
        %v1182 = vpack.c.bf16 %v901, %v901
        %v1183 = vpack.c.bf16 %v902, %v902
        %v1184 = vpack.c.bf16 %v920, %v920
        %v1185 = vpack.c.bf16 %v921, %v921
        %v1186 = vld [vmem:[%s600] sm:$0xf]
        %v1188 = vlaneseq
        %v1189 = vshrl.u32 %v1188, 7
        %v1190 = vsub.s32 0, %v1189
        %v1191 = vrot.slane %v1186, %v1190
        %v1192 = vlaneseq
        %v1193 = vshrl.u32 %v1192, 7
        %v1194 = vsub.s32 1, %v1193
        %v1195 = vrot.slane %v1186, %v1194
        %v1196 = vlaneseq
        %v1197 = vshrl.u32 %v1196, 7
        %v1198 = vsub.s32 2, %v1197
        %v1199 = vrot.slane %v1186, %v1198
        %v1200 = vlaneseq
        %v1201 = vshrl.u32 %v1200, 7
        %v1202 = vsub.s32 3, %v1201
        %v1203 = vrot.slane %v1186, %v1202
        %v1464 = vunpack.c.l.b16 %v922
        %v1465 = vunpack.c.h.b16 %v922
        %v1466 = vunpack.c.l.b16 %v923
        %v1467 = vunpack.c.h.b16 %v923
        %v1468 = vunpack.c.l.b16 %v924
        %v1469 = vunpack.c.h.b16 %v924
        %v1470 = vunpack.c.l.b16 %v925
        %v1471 = vunpack.c.h.b16 %v925
        %v1472 = vunpack.c.l.b16 %v926
        %v1473 = vunpack.c.h.b16 %v926
        %v1474 = vunpack.c.l.b16 %v927
        %v1475 = vunpack.c.h.b16 %v927
        %v1476 = vunpack.c.l.b16 %v928
        %v1477 = vunpack.c.h.b16 %v928
        %v1478 = vunpack.c.l.b16 %v929
        %v1479 = vunpack.c.h.b16 %v929
        %v1480 = vunpack.c.l.b16 %v930
        %v1481 = vunpack.c.h.b16 %v930
        %v1482 = vunpack.c.l.b16 %v931
        %v1483 = vunpack.c.h.b16 %v931
        %v1484 = vunpack.c.l.b16 %v932
        %v1485 = vunpack.c.h.b16 %v932
        %v1486 = vunpack.c.l.b16 %v933
        %v1487 = vunpack.c.h.b16 %v933
        %v1488 = vunpack.c.l.b16 %v934
        %v1489 = vunpack.c.h.b16 %v934
        %v1490 = vunpack.c.l.b16 %v935
        %v1491 = vunpack.c.h.b16 %v935
        %v1492 = vunpack.c.l.b16 %v936
        %v1493 = vunpack.c.h.b16 %v936
        %v1494 = vunpack.c.l.b16 %v937
        %v1495 = vunpack.c.h.b16 %v937
        %v1496 = vunpack.c.l.b16 %v938
        %v1497 = vunpack.c.h.b16 %v938
        %v1498 = vunpack.c.l.b16 %v939
        %v1499 = vunpack.c.h.b16 %v939
        %v1500 = vunpack.c.l.b16 %v940
        %v1501 = vunpack.c.h.b16 %v940
        %v1502 = vunpack.c.l.b16 %v941
        %v1503 = vunpack.c.h.b16 %v941
        %v1504 = vunpack.c.l.b16 %v942
        %v1505 = vunpack.c.h.b16 %v942
        %v1506 = vunpack.c.l.b16 %v943
        %v1507 = vunpack.c.h.b16 %v943
        %v1508 = vunpack.c.l.b16 %v944
        %v1509 = vunpack.c.h.b16 %v944
        %v1510 = vunpack.c.l.b16 %v945
        %v1511 = vunpack.c.h.b16 %v945
        %v1512 = vunpack.c.l.b16 %v946
        %v1513 = vunpack.c.h.b16 %v946
        %v1514 = vunpack.c.l.b16 %v947
        %v1515 = vunpack.c.h.b16 %v947
        %v1516 = vunpack.c.l.b16 %v948
        %v1517 = vunpack.c.h.b16 %v948
        %v1518 = vunpack.c.l.b16 %v949
        %v1519 = vunpack.c.h.b16 %v949
        %v1520 = vunpack.c.l.b16 %v950
        %v1521 = vunpack.c.h.b16 %v950
        %v1522 = vunpack.c.l.b16 %v951
        %v1523 = vunpack.c.h.b16 %v951
        %v1524 = vunpack.c.l.b16 %v952
        %v1525 = vunpack.c.h.b16 %v952
        %v1526 = vunpack.c.l.b16 %v953
        %v1527 = vunpack.c.h.b16 %v953
        %v1528 = vunpack.c.l.b16 %v954
        %v1529 = vunpack.c.h.b16 %v954
        %v1530 = vunpack.c.l.b16 %v955
        %v1531 = vunpack.c.h.b16 %v955
        %v1532 = vunpack.c.l.b16 %v956
        %v1533 = vunpack.c.h.b16 %v956
        %v1534 = vunpack.c.l.b16 %v957
        %v1535 = vunpack.c.h.b16 %v957
        %v1536 = vunpack.c.l.b16 %v958
        %v1537 = vunpack.c.h.b16 %v958
        %v1538 = vunpack.c.l.b16 %v959
        %v1539 = vunpack.c.h.b16 %v959
        %v1540 = vunpack.c.l.b16 %v960
        %v1541 = vunpack.c.h.b16 %v960
        %v1542 = vunpack.c.l.b16 %v961
        %v1543 = vunpack.c.h.b16 %v961
        %v1544 = vunpack.c.l.b16 %v962
        %v1545 = vunpack.c.h.b16 %v962
        %v1546 = vunpack.c.l.b16 %v963
        %v1547 = vunpack.c.h.b16 %v963
        %v1548 = vunpack.c.l.b16 %v964
        %v1549 = vunpack.c.h.b16 %v964
        %v1550 = vunpack.c.l.b16 %v965
        %v1551 = vunpack.c.h.b16 %v965
        %v1552 = vunpack.c.l.b16 %v966
        %v1553 = vunpack.c.h.b16 %v966
        %v1554 = vunpack.c.l.b16 %v967
        %v1555 = vunpack.c.h.b16 %v967
        %v1556 = vunpack.c.l.b16 %v968
        %v1557 = vunpack.c.h.b16 %v968
        %v1558 = vunpack.c.l.b16 %v969
        %v1559 = vunpack.c.h.b16 %v969
        %v1560 = vunpack.c.l.b16 %v970
        %v1561 = vunpack.c.h.b16 %v970
        %v1562 = vunpack.c.l.b16 %v971
        %v1563 = vunpack.c.h.b16 %v971
        %v1564 = vunpack.c.l.b16 %v972
        %v1565 = vunpack.c.h.b16 %v972
        %v1566 = vunpack.c.l.b16 %v973
        %v1567 = vunpack.c.h.b16 %v973
        %v1568 = vunpack.c.l.b16 %v974
        %v1569 = vunpack.c.h.b16 %v974
        %v1570 = vunpack.c.l.b16 %v975
        %v1571 = vunpack.c.h.b16 %v975
        %v1572 = vunpack.c.l.b16 %v976
        %v1573 = vunpack.c.h.b16 %v976
        %v1574 = vunpack.c.l.b16 %v977
        %v1575 = vunpack.c.h.b16 %v977
        %v1576 = vunpack.c.l.b16 %v978
        %v1577 = vunpack.c.h.b16 %v978
        %v1578 = vunpack.c.l.b16 %v979
        %v1579 = vunpack.c.h.b16 %v979
        %v1580 = vunpack.c.l.b16 %v980
        %v1581 = vunpack.c.h.b16 %v980
        %v1582 = vunpack.c.l.b16 %v981
        %v1583 = vunpack.c.h.b16 %v981
        %v1584 = vunpack.c.l.b16 %v982
        %v1585 = vunpack.c.h.b16 %v982
        %v1586 = vunpack.c.l.b16 %v983
        %v1587 = vunpack.c.h.b16 %v983
        %v1588 = vunpack.c.l.b16 %v984
        %v1589 = vunpack.c.h.b16 %v984
        %v1590 = vunpack.c.l.b16 %v985
        %v1591 = vunpack.c.h.b16 %v985
        %v1592 = vunpack.c.l.b16 %v986
        %v1593 = vunpack.c.h.b16 %v986
        %v1594 = vunpack.c.l.b16 %v987
        %v1595 = vunpack.c.h.b16 %v987
        %v1596 = vunpack.c.l.b16 %v988
        %v1597 = vunpack.c.h.b16 %v988
        %v1598 = vunpack.c.l.b16 %v989
        %v1599 = vunpack.c.h.b16 %v989
        %v1600 = vunpack.c.l.b16 %v990
        %v1601 = vunpack.c.h.b16 %v990
        %v1602 = vunpack.c.l.b16 %v991
        %v1603 = vunpack.c.h.b16 %v991
        %v1604 = vunpack.c.l.b16 %v992
        %v1605 = vunpack.c.h.b16 %v992
        %v1606 = vunpack.c.l.b16 %v993
        %v1607 = vunpack.c.h.b16 %v993
        %v1608 = vunpack.c.l.b16 %v994
        %v1609 = vunpack.c.h.b16 %v994
        %v1610 = vunpack.c.l.b16 %v995
        %v1611 = vunpack.c.h.b16 %v995
        %v1612 = vunpack.c.l.b16 %v996
        %v1613 = vunpack.c.h.b16 %v996
        %v1614 = vunpack.c.l.b16 %v997
        %v1615 = vunpack.c.h.b16 %v997
        %v1616 = vunpack.c.l.b16 %v998
        %v1617 = vunpack.c.h.b16 %v998
        %v1618 = vunpack.c.l.b16 %v999
        %v1619 = vunpack.c.h.b16 %v999
        %v1620 = vunpack.c.l.b16 %v1000
        %v1621 = vunpack.c.h.b16 %v1000
        %v1622 = vunpack.c.l.b16 %v1001
        %v1623 = vunpack.c.h.b16 %v1001
        %v1624 = vunpack.c.l.b16 %v1002
        %v1625 = vunpack.c.h.b16 %v1002
        %v1626 = vunpack.c.l.b16 %v1003
        %v1627 = vunpack.c.h.b16 %v1003
        %v1628 = vunpack.c.l.b16 %v1004
        %v1629 = vunpack.c.h.b16 %v1004
        %v1630 = vunpack.c.l.b16 %v1005
        %v1631 = vunpack.c.h.b16 %v1005
        %v1632 = vunpack.c.l.b16 %v1006
        %v1633 = vunpack.c.h.b16 %v1006
        %v1634 = vunpack.c.l.b16 %v1007
        %v1635 = vunpack.c.h.b16 %v1007
        %v1636 = vunpack.c.l.b16 %v1008
        %v1637 = vunpack.c.h.b16 %v1008
        %v1638 = vunpack.c.l.b16 %v1009
        %v1639 = vunpack.c.h.b16 %v1009
        %v1640 = vunpack.c.l.b16 %v1010
        %v1641 = vunpack.c.h.b16 %v1010
        %v1642 = vunpack.c.l.b16 %v1011
        %v1643 = vunpack.c.h.b16 %v1011
        %v1644 = vunpack.c.l.b16 %v1012
        %v1645 = vunpack.c.h.b16 %v1012
        %v1646 = vunpack.c.l.b16 %v1013
        %v1647 = vunpack.c.h.b16 %v1013
        %v1648 = vunpack.c.l.b16 %v1014
        %v1649 = vunpack.c.h.b16 %v1014
        %v1650 = vunpack.c.l.b16 %v1015
        %v1651 = vunpack.c.h.b16 %v1015
        %v1652 = vunpack.c.l.b16 %v1016
        %v1653 = vunpack.c.h.b16 %v1016
        %v1654 = vunpack.c.l.b16 %v1017
        %v1655 = vunpack.c.h.b16 %v1017
        %v1656 = vunpack.c.l.b16 %v1018
        %v1657 = vunpack.c.h.b16 %v1018
        %v1658 = vunpack.c.l.b16 %v1019
        %v1659 = vunpack.c.h.b16 %v1019
        %v1660 = vunpack.c.l.b16 %v1020
        %v1661 = vunpack.c.h.b16 %v1020
        %v1662 = vunpack.c.l.b16 %v1021
        %v1663 = vunpack.c.h.b16 %v1021
        %v1664 = vunpack.c.l.b16 %v1022
        %v1665 = vunpack.c.h.b16 %v1022
        %v1666 = vunpack.c.l.b16 %v1023
        %v1667 = vunpack.c.h.b16 %v1023
        %v1668 = vunpack.c.l.b16 %v1024
        %v1669 = vunpack.c.h.b16 %v1024
        %v1670 = vunpack.c.l.b16 %v1025
        %v1671 = vunpack.c.h.b16 %v1025
        %v1672 = vunpack.c.l.b16 %v1026
        %v1673 = vunpack.c.h.b16 %v1026
        %v1674 = vunpack.c.l.b16 %v1027
        %v1675 = vunpack.c.h.b16 %v1027
        %v1676 = vunpack.c.l.b16 %v1028
        %v1677 = vunpack.c.h.b16 %v1028
        %v1678 = vunpack.c.l.b16 %v1029
        %v1679 = vunpack.c.h.b16 %v1029
        %v1680 = vunpack.c.l.b16 %v1030
        %v1681 = vunpack.c.h.b16 %v1030
        %v1682 = vunpack.c.l.b16 %v1031
        %v1683 = vunpack.c.h.b16 %v1031
        %v1684 = vunpack.c.l.b16 %v1032
        %v1685 = vunpack.c.h.b16 %v1032
        %v1686 = vunpack.c.l.b16 %v1033
        %v1687 = vunpack.c.h.b16 %v1033
        %v1688 = vunpack.c.l.b16 %v1034
        %v1689 = vunpack.c.h.b16 %v1034
        %v1690 = vunpack.c.l.b16 %v1035
        %v1691 = vunpack.c.h.b16 %v1035
        %v1692 = vunpack.c.l.b16 %v1036
        %v1693 = vunpack.c.h.b16 %v1036
        %v1694 = vunpack.c.l.b16 %v1037
        %v1695 = vunpack.c.h.b16 %v1037
        %v1696 = vunpack.c.l.b16 %v1038
        %v1697 = vunpack.c.h.b16 %v1038
        %v1698 = vunpack.c.l.b16 %v1039
        %v1699 = vunpack.c.h.b16 %v1039
        %v1700 = vunpack.c.l.b16 %v1040
        %v1701 = vunpack.c.h.b16 %v1040
        %v1702 = vunpack.c.l.b16 %v1041
        %v1703 = vunpack.c.h.b16 %v1041
        %v1704 = vunpack.c.l.b16 %v1042
        %v1705 = vunpack.c.h.b16 %v1042
        %v1706 = vunpack.c.l.b16 %v1043
        %v1707 = vunpack.c.h.b16 %v1043
        %v1708 = vunpack.c.l.b16 %v1044
        %v1709 = vunpack.c.h.b16 %v1044
        %v1710 = vunpack.c.l.b16 %v1045
        %v1711 = vunpack.c.h.b16 %v1045
        %v1712 = vunpack.c.l.b16 %v1046
        %v1713 = vunpack.c.h.b16 %v1046
        %v1714 = vunpack.c.l.b16 %v1047
        %v1715 = vunpack.c.h.b16 %v1047
        %v1716 = vunpack.c.l.b16 %v1048
        %v1717 = vunpack.c.h.b16 %v1048
        %v1718 = vunpack.c.l.b16 %v1049
        %v1719 = vunpack.c.h.b16 %v1049
        %v1720 = vunpack.c.l.b16 %v1050
        %v1721 = vunpack.c.h.b16 %v1050
        %v1722 = vunpack.c.l.b16 %v1051
        %v1723 = vunpack.c.h.b16 %v1051
        %v1724 = vunpack.c.l.b16 %v1052
        %v1725 = vunpack.c.h.b16 %v1052
        %v1726 = vunpack.c.l.b16 %v1053
        %v1727 = vunpack.c.h.b16 %v1053
        %v1728 = vunpack.c.l.b16 %v1054
        %v1729 = vunpack.c.h.b16 %v1054
        %v1730 = vunpack.c.l.b16 %v1055
        %v1731 = vunpack.c.h.b16 %v1055
        %v1732 = vunpack.c.l.b16 %v1056
        %v1733 = vunpack.c.h.b16 %v1056
        %v1734 = vunpack.c.l.b16 %v1057
        %v1735 = vunpack.c.h.b16 %v1057
        %v1736 = vunpack.c.l.b16 %v1058
        %v1737 = vunpack.c.h.b16 %v1058
        %v1738 = vunpack.c.l.b16 %v1059
        %v1739 = vunpack.c.h.b16 %v1059
        %v1740 = vunpack.c.l.b16 %v1060
        %v1741 = vunpack.c.h.b16 %v1060
        %v1742 = vunpack.c.l.b16 %v1061
        %v1743 = vunpack.c.h.b16 %v1061
        %v1744 = vunpack.c.l.b16 %v1062
        %v1745 = vunpack.c.h.b16 %v1062
        %v1746 = vunpack.c.l.b16 %v1063
        %v1747 = vunpack.c.h.b16 %v1063
        %v1748 = vunpack.c.l.b16 %v1064
        %v1749 = vunpack.c.h.b16 %v1064
        %v1750 = vunpack.c.l.b16 %v1065
        %v1751 = vunpack.c.h.b16 %v1065
        %v1752 = vunpack.c.l.b16 %v1066
        %v1753 = vunpack.c.h.b16 %v1066
        %v1754 = vunpack.c.l.b16 %v1067
        %v1755 = vunpack.c.h.b16 %v1067
        %v1756 = vunpack.c.l.b16 %v1068
        %v1757 = vunpack.c.h.b16 %v1068
        %v1758 = vunpack.c.l.b16 %v1069
        %v1759 = vunpack.c.h.b16 %v1069
        %v1760 = vunpack.c.l.b16 %v1070
        %v1761 = vunpack.c.h.b16 %v1070
        %v1762 = vunpack.c.l.b16 %v1071
        %v1763 = vunpack.c.h.b16 %v1071
        %v1764 = vunpack.c.l.b16 %v1072
        %v1765 = vunpack.c.h.b16 %v1072
        %v1766 = vunpack.c.l.b16 %v1073
        %v1767 = vunpack.c.h.b16 %v1073
        %v1768 = vunpack.c.l.b16 %v1074
        %v1769 = vunpack.c.h.b16 %v1074
        %v1770 = vunpack.c.l.b16 %v1075
        %v1771 = vunpack.c.h.b16 %v1075
        %v1772 = vunpack.c.l.b16 %v1076
        %v1773 = vunpack.c.h.b16 %v1076
        %v1774 = vunpack.c.l.b16 %v1077
        %v1775 = vunpack.c.h.b16 %v1077
        %v1776 = vunpack.c.l.b16 %v1078
        %v1777 = vunpack.c.h.b16 %v1078
        %v1778 = vunpack.c.l.b16 %v1079
        %v1779 = vunpack.c.h.b16 %v1079
        %v1780 = vunpack.c.l.b16 %v1080
        %v1781 = vunpack.c.h.b16 %v1080
        %v1782 = vunpack.c.l.b16 %v1081
        %v1783 = vunpack.c.h.b16 %v1081
        %v1784 = vunpack.c.l.b16 %v1082
        %v1785 = vunpack.c.h.b16 %v1082
        %v1786 = vunpack.c.l.b16 %v1083
        %v1787 = vunpack.c.h.b16 %v1083
        %v1788 = vunpack.c.l.b16 %v1084
        %v1789 = vunpack.c.h.b16 %v1084
        %v1790 = vunpack.c.l.b16 %v1085
        %v1791 = vunpack.c.h.b16 %v1085
        %v1792 = vunpack.c.l.b16 %v1086
        %v1793 = vunpack.c.h.b16 %v1086
        %v1794 = vunpack.c.l.b16 %v1087
        %v1795 = vunpack.c.h.b16 %v1087
        %v1796 = vunpack.c.l.b16 %v1088
        %v1797 = vunpack.c.h.b16 %v1088
        %v1798 = vunpack.c.l.b16 %v1089
        %v1799 = vunpack.c.h.b16 %v1089
        %v1800 = vunpack.c.l.b16 %v1090
        %v1801 = vunpack.c.h.b16 %v1090
        %v1802 = vunpack.c.l.b16 %v1091
        %v1803 = vunpack.c.h.b16 %v1091
        %v1804 = vunpack.c.l.b16 %v1092
        %v1805 = vunpack.c.h.b16 %v1092
        %v1806 = vunpack.c.l.b16 %v1093
        %v1807 = vunpack.c.h.b16 %v1093
        %v1808 = vunpack.c.l.b16 %v1094
        %v1809 = vunpack.c.h.b16 %v1094
        %v1810 = vunpack.c.l.b16 %v1095
        %v1811 = vunpack.c.h.b16 %v1095
        %v1812 = vunpack.c.l.b16 %v1096
        %v1813 = vunpack.c.h.b16 %v1096
        %v1814 = vunpack.c.l.b16 %v1097
        %v1815 = vunpack.c.h.b16 %v1097
        %v1816 = vunpack.c.l.b16 %v1098
        %v1817 = vunpack.c.h.b16 %v1098
        %v1818 = vunpack.c.l.b16 %v1099
        %v1819 = vunpack.c.h.b16 %v1099
        %v1820 = vunpack.c.l.b16 %v1100
        %v1821 = vunpack.c.h.b16 %v1100
        %v1822 = vunpack.c.l.b16 %v1101
        %v1823 = vunpack.c.h.b16 %v1101
        %v1824 = vunpack.c.l.b16 %v1102
        %v1825 = vunpack.c.h.b16 %v1102
        %v1826 = vunpack.c.l.b16 %v1103
        %v1827 = vunpack.c.h.b16 %v1103
        %v1828 = vunpack.c.l.b16 %v1104
        %v1829 = vunpack.c.h.b16 %v1104
        %v1830 = vunpack.c.l.b16 %v1105
        %v1831 = vunpack.c.h.b16 %v1105
        %v1832 = vunpack.c.l.b16 %v1106
        %v1833 = vunpack.c.h.b16 %v1106
        %v1834 = vunpack.c.l.b16 %v1107
        %v1835 = vunpack.c.h.b16 %v1107
        %v1836 = vunpack.c.l.b16 %v1108
        %v1837 = vunpack.c.h.b16 %v1108
        %v1838 = vunpack.c.l.b16 %v1109
        %v1839 = vunpack.c.h.b16 %v1109
        %v1840 = vunpack.c.l.b16 %v1110
        %v1841 = vunpack.c.h.b16 %v1110
        %v1842 = vunpack.c.l.b16 %v1111
        %v1843 = vunpack.c.h.b16 %v1111
        %v1844 = vunpack.c.l.b16 %v1112
        %v1845 = vunpack.c.h.b16 %v1112
        %v1846 = vunpack.c.l.b16 %v1113
        %v1847 = vunpack.c.h.b16 %v1113
        %v1848 = vunpack.c.l.b16 %v1114
        %v1849 = vunpack.c.h.b16 %v1114
        %v1850 = vunpack.c.l.b16 %v1115
        %v1851 = vunpack.c.h.b16 %v1115
        %v1852 = vunpack.c.l.b16 %v1116
        %v1853 = vunpack.c.h.b16 %v1116
        %v1854 = vunpack.c.l.b16 %v1117
        %v1855 = vunpack.c.h.b16 %v1117
        %v1856 = vunpack.c.l.b16 %v1118
        %v1857 = vunpack.c.h.b16 %v1118
        %v1858 = vunpack.c.l.b16 %v1119
        %v1859 = vunpack.c.h.b16 %v1119
        %v1860 = vunpack.c.l.b16 %v1120
        %v1861 = vunpack.c.h.b16 %v1120
        %v1862 = vunpack.c.l.b16 %v1121
        %v1863 = vunpack.c.h.b16 %v1121
        %v1864 = vunpack.c.l.b16 %v1122
        %v1865 = vunpack.c.h.b16 %v1122
        %v1866 = vunpack.c.l.b16 %v1123
        %v1867 = vunpack.c.h.b16 %v1123
        %v1868 = vunpack.c.l.b16 %v1124
        %v1869 = vunpack.c.h.b16 %v1124
        %v1870 = vunpack.c.l.b16 %v1125
        %v1871 = vunpack.c.h.b16 %v1125
        %v1872 = vunpack.c.l.b16 %v1126
        %v1873 = vunpack.c.h.b16 %v1126
        %v1874 = vunpack.c.l.b16 %v1127
        %v1875 = vunpack.c.h.b16 %v1127
        %v1876 = vunpack.c.l.b16 %v1128
        %v1877 = vunpack.c.h.b16 %v1128
        %v1878 = vunpack.c.l.b16 %v1129
        %v1879 = vunpack.c.h.b16 %v1129
        %v1880 = vunpack.c.l.b16 %v1130
        %v1881 = vunpack.c.h.b16 %v1130
        %v1882 = vunpack.c.l.b16 %v1131
        %v1883 = vunpack.c.h.b16 %v1131
        %v1884 = vunpack.c.l.b16 %v1132
        %v1885 = vunpack.c.h.b16 %v1132
        %v1886 = vunpack.c.l.b16 %v1133
        %v1887 = vunpack.c.h.b16 %v1133
        %v1888 = vunpack.c.l.b16 %v1134
        %v1889 = vunpack.c.h.b16 %v1134
        %v1890 = vunpack.c.l.b16 %v1135
        %v1891 = vunpack.c.h.b16 %v1135
        %v1892 = vunpack.c.l.b16 %v1136
        %v1893 = vunpack.c.h.b16 %v1136
        %v1894 = vunpack.c.l.b16 %v1137
        %v1895 = vunpack.c.h.b16 %v1137
        %v1896 = vunpack.c.l.b16 %v1138
        %v1897 = vunpack.c.h.b16 %v1138
        %v1898 = vunpack.c.l.b16 %v1139
        %v1899 = vunpack.c.h.b16 %v1139
        %v1900 = vunpack.c.l.b16 %v1140
        %v1901 = vunpack.c.h.b16 %v1140
        %v1902 = vunpack.c.l.b16 %v1141
        %v1903 = vunpack.c.h.b16 %v1141
        %v1904 = vunpack.c.l.b16 %v1142
        %v1905 = vunpack.c.h.b16 %v1142
        %v1906 = vunpack.c.l.b16 %v1143
        %v1907 = vunpack.c.h.b16 %v1143
        %v1908 = vunpack.c.l.b16 %v1144
        %v1909 = vunpack.c.h.b16 %v1144
        %v1910 = vunpack.c.l.b16 %v1145
        %v1911 = vunpack.c.h.b16 %v1145
        %v1912 = vunpack.c.l.b16 %v1146
        %v1913 = vunpack.c.h.b16 %v1146
        %v1914 = vunpack.c.l.b16 %v1147
        %v1915 = vunpack.c.h.b16 %v1147
        %v1916 = vunpack.c.l.b16 %v1148
        %v1917 = vunpack.c.h.b16 %v1148
        %v1918 = vunpack.c.l.b16 %v1149
        %v1919 = vunpack.c.h.b16 %v1149
        %v1920 = vunpack.c.l.b16 %v1150
        %v1921 = vunpack.c.h.b16 %v1150
        %v1922 = vunpack.c.l.b16 %v1151
        %v1923 = vunpack.c.h.b16 %v1151
        %v1924 = vunpack.c.l.b16 %v1152
        %v1925 = vunpack.c.h.b16 %v1152
        %v1926 = vunpack.c.l.b16 %v1153
        %v1927 = vunpack.c.h.b16 %v1153
        %v1928 = vunpack.c.l.b16 %v1154
        %v1929 = vunpack.c.h.b16 %v1154
        %v1930 = vunpack.c.l.b16 %v1155
        %v1931 = vunpack.c.h.b16 %v1155
        %v1932 = vunpack.c.l.b16 %v1156
        %v1933 = vunpack.c.h.b16 %v1156
        %v1934 = vunpack.c.l.b16 %v1157
        %v1935 = vunpack.c.h.b16 %v1157
        %v1936 = vunpack.c.l.b16 %v1158
        %v1937 = vunpack.c.h.b16 %v1158
        %v1938 = vunpack.c.l.b16 %v1159
        %v1939 = vunpack.c.h.b16 %v1159
        %v1940 = vunpack.c.l.b16 %v1160
        %v1941 = vunpack.c.h.b16 %v1160
        %v1942 = vunpack.c.l.b16 %v1161
        %v1943 = vunpack.c.h.b16 %v1161
        %v1944 = vunpack.c.l.b16 %v1162
        %v1945 = vunpack.c.h.b16 %v1162
        %v1946 = vunpack.c.l.b16 %v1163
        %v1947 = vunpack.c.h.b16 %v1163
        %v1948 = vunpack.c.l.b16 %v1164
        %v1949 = vunpack.c.h.b16 %v1164
        %v1950 = vunpack.c.l.b16 %v1165
        %v1951 = vunpack.c.h.b16 %v1165
        %v1952 = vunpack.c.l.b16 %v1166
        %v1953 = vunpack.c.h.b16 %v1166
        %v1954 = vunpack.c.l.b16 %v1167
        %v1955 = vunpack.c.h.b16 %v1167
        %v1956 = vunpack.c.l.b16 %v1168
        %v1957 = vunpack.c.h.b16 %v1168
        %v1958 = vunpack.c.l.b16 %v1169
        %v1959 = vunpack.c.h.b16 %v1169
        %v1960 = vunpack.c.l.b16 %v1170
        %v1961 = vunpack.c.h.b16 %v1170
        %v1962 = vunpack.c.l.b16 %v1171
        %v1963 = vunpack.c.h.b16 %v1171
        %v1964 = vunpack.c.l.b16 %v1172
        %v1965 = vunpack.c.h.b16 %v1172
        %v1966 = vunpack.c.l.b16 %v1173
        %v1967 = vunpack.c.h.b16 %v1173
        %v1968 = vunpack.c.l.b16 %v1174
        %v1969 = vunpack.c.h.b16 %v1174
        %v1970 = vunpack.c.l.b16 %v1175
        %v1971 = vunpack.c.h.b16 %v1175
        %v1972 = vunpack.c.l.b16 %v1176
        %v1973 = vunpack.c.h.b16 %v1176
        %v1974 = vunpack.c.l.b16 %v1177
        %v1975 = vunpack.c.h.b16 %v1177
        %v1976 = vpack.c.b16 %v1468, %v1464
        %v1977 = vpack.c.b16 %v1469, %v1465
        %v1978 = vpack.c.b16 %v1470, %v1466
        %v1979 = vpack.c.b16 %v1471, %v1467
        %v1980 = vpack.c.b16 %v1476, %v1472
        %v1981 = vpack.c.b16 %v1477, %v1473
        %v1982 = vpack.c.b16 %v1478, %v1474
        %v1983 = vpack.c.b16 %v1479, %v1475
        %v1984 = vpack.c.b16 %v1484, %v1480
        %v1985 = vpack.c.b16 %v1485, %v1481
        %v1986 = vpack.c.b16 %v1486, %v1482
        %v1987 = vpack.c.b16 %v1487, %v1483
        %v1988 = vpack.c.b16 %v1492, %v1488
        %v1989 = vpack.c.b16 %v1493, %v1489
        %v1990 = vpack.c.b16 %v1494, %v1490
        %v1991 = vpack.c.b16 %v1495, %v1491
        %v1992 = vpack.c.b16 %v1500, %v1496
        %v1993 = vpack.c.b16 %v1501, %v1497
        %v1994 = vpack.c.b16 %v1502, %v1498
        %v1995 = vpack.c.b16 %v1503, %v1499
        %v1996 = vpack.c.b16 %v1508, %v1504
        %v1997 = vpack.c.b16 %v1509, %v1505
        %v1998 = vpack.c.b16 %v1510, %v1506
        %v1999 = vpack.c.b16 %v1511, %v1507
        %v2000 = vpack.c.b16 %v1516, %v1512
        %v2001 = vpack.c.b16 %v1517, %v1513
        %v2002 = vpack.c.b16 %v1518, %v1514
        %v2003 = vpack.c.b16 %v1519, %v1515
        %v2004 = vpack.c.b16 %v1524, %v1520
        %v2005 = vpack.c.b16 %v1525, %v1521
        %v2006 = vpack.c.b16 %v1526, %v1522
        %v2007 = vpack.c.b16 %v1527, %v1523
        %v2008 = vpack.c.b16 %v1532, %v1528
        %v2009 = vpack.c.b16 %v1533, %v1529
        %v2010 = vpack.c.b16 %v1534, %v1530
        %v2011 = vpack.c.b16 %v1535, %v1531
        %v2012 = vpack.c.b16 %v1540, %v1536
        %v2013 = vpack.c.b16 %v1541, %v1537
        %v2014 = vpack.c.b16 %v1542, %v1538
        %v2015 = vpack.c.b16 %v1543, %v1539
        %v2016 = vpack.c.b16 %v1548, %v1544
        %v2017 = vpack.c.b16 %v1549, %v1545
        %v2018 = vpack.c.b16 %v1550, %v1546
        %v2019 = vpack.c.b16 %v1551, %v1547
        %v2020 = vpack.c.b16 %v1556, %v1552
        %v2021 = vpack.c.b16 %v1557, %v1553
        %v2022 = vpack.c.b16 %v1558, %v1554
        %v2023 = vpack.c.b16 %v1559, %v1555
        %v2024 = vpack.c.b16 %v1564, %v1560
        %v2025 = vpack.c.b16 %v1565, %v1561
        %v2026 = vpack.c.b16 %v1566, %v1562
        %v2027 = vpack.c.b16 %v1567, %v1563
        %v2028 = vpack.c.b16 %v1572, %v1568
        %v2029 = vpack.c.b16 %v1573, %v1569
        %v2030 = vpack.c.b16 %v1574, %v1570
        %v2031 = vpack.c.b16 %v1575, %v1571
        %v2032 = vpack.c.b16 %v1580, %v1576
        %v2033 = vpack.c.b16 %v1581, %v1577
        %v2034 = vpack.c.b16 %v1582, %v1578
        %v2035 = vpack.c.b16 %v1583, %v1579
        %v2036 = vpack.c.b16 %v1588, %v1584
        %v2037 = vpack.c.b16 %v1589, %v1585
        %v2038 = vpack.c.b16 %v1590, %v1586
        %v2039 = vpack.c.b16 %v1591, %v1587
        %v2040 = vpack.c.b16 %v1596, %v1592
        %v2041 = vpack.c.b16 %v1597, %v1593
        %v2042 = vpack.c.b16 %v1598, %v1594
        %v2043 = vpack.c.b16 %v1599, %v1595
        %v2044 = vpack.c.b16 %v1604, %v1600
        %v2045 = vpack.c.b16 %v1605, %v1601
        %v2046 = vpack.c.b16 %v1606, %v1602
        %v2047 = vpack.c.b16 %v1607, %v1603
        %v2048 = vpack.c.b16 %v1612, %v1608
        %v2049 = vpack.c.b16 %v1613, %v1609
        %v2050 = vpack.c.b16 %v1614, %v1610
        %v2051 = vpack.c.b16 %v1615, %v1611
        %v2052 = vpack.c.b16 %v1620, %v1616
        %v2053 = vpack.c.b16 %v1621, %v1617
        %v2054 = vpack.c.b16 %v1622, %v1618
        %v2055 = vpack.c.b16 %v1623, %v1619
        %v2056 = vpack.c.b16 %v1628, %v1624
        %v2057 = vpack.c.b16 %v1629, %v1625
        %v2058 = vpack.c.b16 %v1630, %v1626
        %v2059 = vpack.c.b16 %v1631, %v1627
        %v2060 = vpack.c.b16 %v1636, %v1632
        %v2061 = vpack.c.b16 %v1637, %v1633
        %v2062 = vpack.c.b16 %v1638, %v1634
        %v2063 = vpack.c.b16 %v1639, %v1635
        %v2064 = vpack.c.b16 %v1644, %v1640
        %v2065 = vpack.c.b16 %v1645, %v1641
        %v2066 = vpack.c.b16 %v1646, %v1642
        %v2067 = vpack.c.b16 %v1647, %v1643
        %v2068 = vpack.c.b16 %v1652, %v1648
        %v2069 = vpack.c.b16 %v1653, %v1649
        %v2070 = vpack.c.b16 %v1654, %v1650
        %v2071 = vpack.c.b16 %v1655, %v1651
        %v2072 = vpack.c.b16 %v1660, %v1656
        %v2073 = vpack.c.b16 %v1661, %v1657
        %v2074 = vpack.c.b16 %v1662, %v1658
        %v2075 = vpack.c.b16 %v1663, %v1659
        %v2076 = vpack.c.b16 %v1668, %v1664
        %v2077 = vpack.c.b16 %v1669, %v1665
        %v2078 = vpack.c.b16 %v1670, %v1666
        %v2079 = vpack.c.b16 %v1671, %v1667
        %v2080 = vpack.c.b16 %v1676, %v1672
        %v2081 = vpack.c.b16 %v1677, %v1673
        %v2082 = vpack.c.b16 %v1678, %v1674
        %v2083 = vpack.c.b16 %v1679, %v1675
        %v2084 = vpack.c.b16 %v1684, %v1680
        %v2085 = vpack.c.b16 %v1685, %v1681
        %v2086 = vpack.c.b16 %v1686, %v1682
        %v2087 = vpack.c.b16 %v1687, %v1683
        %v2088 = vpack.c.b16 %v1692, %v1688
        %v2089 = vpack.c.b16 %v1693, %v1689
        %v2090 = vpack.c.b16 %v1694, %v1690
        %v2091 = vpack.c.b16 %v1695, %v1691
        %v2092 = vpack.c.b16 %v1700, %v1696
        %v2093 = vpack.c.b16 %v1701, %v1697
        %v2094 = vpack.c.b16 %v1702, %v1698
        %v2095 = vpack.c.b16 %v1703, %v1699
        %v2096 = vpack.c.b16 %v1708, %v1704
        %v2097 = vpack.c.b16 %v1709, %v1705
        %v2098 = vpack.c.b16 %v1710, %v1706
        %v2099 = vpack.c.b16 %v1711, %v1707
        %v2100 = vpack.c.b16 %v1716, %v1712
        %v2101 = vpack.c.b16 %v1717, %v1713
        %v2102 = vpack.c.b16 %v1718, %v1714
        %v2103 = vpack.c.b16 %v1719, %v1715
        %v2104 = vpack.c.b16 %v1724, %v1720
        %v2105 = vpack.c.b16 %v1725, %v1721
        %v2106 = vpack.c.b16 %v1726, %v1722
        %v2107 = vpack.c.b16 %v1727, %v1723
        %v2108 = vpack.c.b16 %v1732, %v1728
        %v2109 = vpack.c.b16 %v1733, %v1729
        %v2110 = vpack.c.b16 %v1734, %v1730
        %v2111 = vpack.c.b16 %v1735, %v1731
        %v2112 = vpack.c.b16 %v1740, %v1736
        %v2113 = vpack.c.b16 %v1741, %v1737
        %v2114 = vpack.c.b16 %v1742, %v1738
        %v2115 = vpack.c.b16 %v1743, %v1739
        %v2116 = vpack.c.b16 %v1748, %v1744
        %v2117 = vpack.c.b16 %v1749, %v1745
        %v2118 = vpack.c.b16 %v1750, %v1746
        %v2119 = vpack.c.b16 %v1751, %v1747
        %v2120 = vpack.c.b16 %v1756, %v1752
        %v2121 = vpack.c.b16 %v1757, %v1753
        %v2122 = vpack.c.b16 %v1758, %v1754
        %v2123 = vpack.c.b16 %v1759, %v1755
        %v2124 = vpack.c.b16 %v1764, %v1760
        %v2125 = vpack.c.b16 %v1765, %v1761
        %v2126 = vpack.c.b16 %v1766, %v1762
        %v2127 = vpack.c.b16 %v1767, %v1763
        %v2128 = vpack.c.b16 %v1772, %v1768
        %v2129 = vpack.c.b16 %v1773, %v1769
        %v2130 = vpack.c.b16 %v1774, %v1770
        %v2131 = vpack.c.b16 %v1775, %v1771
        %v2132 = vpack.c.b16 %v1780, %v1776
        %v2133 = vpack.c.b16 %v1781, %v1777
        %v2134 = vpack.c.b16 %v1782, %v1778
        %v2135 = vpack.c.b16 %v1783, %v1779
        %v2136 = vpack.c.b16 %v1788, %v1784
        %v2137 = vpack.c.b16 %v1789, %v1785
        %v2138 = vpack.c.b16 %v1790, %v1786
        %v2139 = vpack.c.b16 %v1791, %v1787
        %v2140 = vpack.c.b16 %v1796, %v1792
        %v2141 = vpack.c.b16 %v1797, %v1793
        %v2142 = vpack.c.b16 %v1798, %v1794
        %v2143 = vpack.c.b16 %v1799, %v1795
        %v2144 = vpack.c.b16 %v1804, %v1800
        %v2145 = vpack.c.b16 %v1805, %v1801
        %v2146 = vpack.c.b16 %v1806, %v1802
        %v2147 = vpack.c.b16 %v1807, %v1803
        %v2148 = vpack.c.b16 %v1812, %v1808
        %v2149 = vpack.c.b16 %v1813, %v1809
        %v2150 = vpack.c.b16 %v1814, %v1810
        %v2151 = vpack.c.b16 %v1815, %v1811
        %v2152 = vpack.c.b16 %v1820, %v1816
        %v2153 = vpack.c.b16 %v1821, %v1817
        %v2154 = vpack.c.b16 %v1822, %v1818
        %v2155 = vpack.c.b16 %v1823, %v1819
        %v2156 = vpack.c.b16 %v1828, %v1824
        %v2157 = vpack.c.b16 %v1829, %v1825
        %v2158 = vpack.c.b16 %v1830, %v1826
        %v2159 = vpack.c.b16 %v1831, %v1827
        %v2160 = vpack.c.b16 %v1836, %v1832
        %v2161 = vpack.c.b16 %v1837, %v1833
        %v2162 = vpack.c.b16 %v1838, %v1834
        %v2163 = vpack.c.b16 %v1839, %v1835
        %v2164 = vpack.c.b16 %v1844, %v1840
        %v2165 = vpack.c.b16 %v1845, %v1841
        %v2166 = vpack.c.b16 %v1846, %v1842
        %v2167 = vpack.c.b16 %v1847, %v1843
        %v2168 = vpack.c.b16 %v1852, %v1848
        %v2169 = vpack.c.b16 %v1853, %v1849
        %v2170 = vpack.c.b16 %v1854, %v1850
        %v2171 = vpack.c.b16 %v1855, %v1851
        %v2172 = vpack.c.b16 %v1860, %v1856
        %v2173 = vpack.c.b16 %v1861, %v1857
        %v2174 = vpack.c.b16 %v1862, %v1858
        %v2175 = vpack.c.b16 %v1863, %v1859
        %v2176 = vpack.c.b16 %v1868, %v1864
        %v2177 = vpack.c.b16 %v1869, %v1865
        %v2178 = vpack.c.b16 %v1870, %v1866
        %v2179 = vpack.c.b16 %v1871, %v1867
        %v2180 = vpack.c.b16 %v1876, %v1872
        %v2181 = vpack.c.b16 %v1877, %v1873
        %v2182 = vpack.c.b16 %v1878, %v1874
        %v2183 = vpack.c.b16 %v1879, %v1875
        %v2184 = vpack.c.b16 %v1884, %v1880
        %v2185 = vpack.c.b16 %v1885, %v1881
        %v2186 = vpack.c.b16 %v1886, %v1882
        %v2187 = vpack.c.b16 %v1887, %v1883
        %v2188 = vpack.c.b16 %v1892, %v1888
        %v2189 = vpack.c.b16 %v1893, %v1889
        %v2190 = vpack.c.b16 %v1894, %v1890
        %v2191 = vpack.c.b16 %v1895, %v1891
        %v2192 = vpack.c.b16 %v1900, %v1896
        %v2193 = vpack.c.b16 %v1901, %v1897
        %v2194 = vpack.c.b16 %v1902, %v1898
        %v2195 = vpack.c.b16 %v1903, %v1899
        %v2196 = vpack.c.b16 %v1908, %v1904
        %v2197 = vpack.c.b16 %v1909, %v1905
        %v2198 = vpack.c.b16 %v1910, %v1906
        %v2199 = vpack.c.b16 %v1911, %v1907
        %v2200 = vpack.c.b16 %v1916, %v1912
        %v2201 = vpack.c.b16 %v1917, %v1913
        %v2202 = vpack.c.b16 %v1918, %v1914
        %v2203 = vpack.c.b16 %v1919, %v1915
        %v2204 = vpack.c.b16 %v1924, %v1920
        %v2205 = vpack.c.b16 %v1925, %v1921
        %v2206 = vpack.c.b16 %v1926, %v1922
        %v2207 = vpack.c.b16 %v1927, %v1923
        %v2208 = vpack.c.b16 %v1932, %v1928
        %v2209 = vpack.c.b16 %v1933, %v1929
        %v2210 = vpack.c.b16 %v1934, %v1930
        %v2211 = vpack.c.b16 %v1935, %v1931
        %v2212 = vpack.c.b16 %v1940, %v1936
        %v2213 = vpack.c.b16 %v1941, %v1937
        %v2214 = vpack.c.b16 %v1942, %v1938
        %v2215 = vpack.c.b16 %v1943, %v1939
        %v2216 = vpack.c.b16 %v1948, %v1944
        %v2217 = vpack.c.b16 %v1949, %v1945
        %v2218 = vpack.c.b16 %v1950, %v1946
        %v2219 = vpack.c.b16 %v1951, %v1947
        %v2220 = vpack.c.b16 %v1956, %v1952
        %v2221 = vpack.c.b16 %v1957, %v1953
        %v2222 = vpack.c.b16 %v1958, %v1954
        %v2223 = vpack.c.b16 %v1959, %v1955
        %v2224 = vpack.c.b16 %v1964, %v1960
        %v2225 = vpack.c.b16 %v1965, %v1961
        %v2226 = vpack.c.b16 %v1966, %v1962
        %v2227 = vpack.c.b16 %v1967, %v1963
        %v2228 = vpack.c.b16 %v1972, %v1968
        %v2229 = vpack.c.b16 %v1973, %v1969
        %v2230 = vpack.c.b16 %v1974, %v1970
        %v2231 = vpack.c.b16 %v1975, %v1971
        %2488 = vmatprep.subr.bf16.mxu0 %v1977
        %2489 = vmatpush1.bf16.msra.mxu0 %v1976
        %2490 = vmatprep.subr.bf16.mxu0 %v1981
        %2491 = vmatpush1.bf16.msra.mxu0 %v1980
        %2492 = vmatprep.subr.bf16.mxu0 %v1985
        %2493 = vmatpush1.bf16.msra.mxu0 %v1984
        %2494 = vmatprep.subr.bf16.mxu0 %v1989
        %2495 = vmatpush1.bf16.msra.mxu0 %v1988
        %2496 = vmatprep.subr.bf16.mxu0 %v1993
        %2497 = vmatpush1.bf16.msra.mxu0 %v1992
        %2498 = vmatprep.subr.bf16.mxu0 %v1997
        %2499 = vmatpush1.bf16.msra.mxu0 %v1996
        %2500 = vmatprep.subr.bf16.mxu0 %v2001
        %2501 = vmatpush1.bf16.msra.mxu0 %v2000
        %2502 = vmatprep.subr.bf16.mxu0 %v2005
        %2503 = vmatpush1.bf16.msra.mxu0 %v2004
        %2504 = vmatprep.subr.bf16.mxu0 %v2009
        %2505 = vmatpush1.bf16.msra.mxu0 %v2008
        %2506 = vmatprep.subr.bf16.mxu0 %v2013
        %2507 = vmatpush1.bf16.msra.mxu0 %v2012
        %2508 = vmatprep.subr.bf16.mxu0 %v2017
        %2509 = vmatpush1.bf16.msra.mxu0 %v2016
        %2510 = vmatprep.subr.bf16.mxu0 %v2021
        %2511 = vmatpush1.bf16.msra.mxu0 %v2020
        %2512 = vmatprep.subr.bf16.mxu0 %v2025
        %2513 = vmatpush1.bf16.msra.mxu0 %v2024
        %2514 = vmatprep.subr.bf16.mxu0 %v2029
        %2515 = vmatpush1.bf16.msra.mxu0 %v2028
        %2516 = vmatprep.subr.bf16.mxu0 %v2033
        %2517 = vmatpush1.bf16.msra.mxu0 %v2032
        %2518 = vmatprep.subr.bf16.mxu0 %v2037
        %2519 = vmatpush1.bf16.msra.mxu0 %v2036
        %2520 = vmatprep.mubr.bf16.mxu0 %v1179
        %2521 = vmatmul.mubr.bf16.gmra.mrb[0].mxu0 %v1178
        %v2522 = vpop.f32.mrb[0].mxu0
        %v2523 = vadd.f32 %v1191, %v2522
        %v2524 = vpop.f32.mrb[0].mxu0
        %v2525 = vadd.f32 %v1195, %v2524
        %v2526 = vpop.f32.mrb[0].mxu0
        %v2527 = vpop.f32.mrb[0].mxu0
        %2528 = vdwg.mxu0
        %2529 = vmatprep.subr.bf16.mxu0 %v2041
        %2530 = vmatpush1.bf16.msra.mxu0 %v2040
        %2531 = vmatprep.subr.bf16.mxu0 %v2045
        %2532 = vmatpush1.bf16.msra.mxu0 %v2044
        %2533 = vmatprep.subr.bf16.mxu0 %v2049
        %2534 = vmatpush1.bf16.msra.mxu0 %v2048
        %2535 = vmatprep.subr.bf16.mxu0 %v2053
        %2536 = vmatpush1.bf16.msra.mxu0 %v2052
        %2537 = vmatprep.subr.bf16.mxu0 %v2057
        %2538 = vmatpush1.bf16.msra.mxu0 %v2056
        %2539 = vmatprep.subr.bf16.mxu0 %v2061
        %2540 = vmatpush1.bf16.msra.mxu0 %v2060
        %2541 = vmatprep.subr.bf16.mxu0 %v2065
        %2542 = vmatpush1.bf16.msra.mxu0 %v2064
        %2543 = vmatprep.subr.bf16.mxu0 %v2069
        %2544 = vmatpush1.bf16.msra.mxu0 %v2068
        %2545 = vmatprep.subr.bf16.mxu0 %v2073
        %2546 = vmatpush1.bf16.msra.mxu0 %v2072
        %2547 = vmatprep.subr.bf16.mxu0 %v2077
        %2548 = vmatpush1.bf16.msra.mxu0 %v2076
        %2549 = vmatprep.subr.bf16.mxu0 %v2081
        %2550 = vmatpush1.bf16.msra.mxu0 %v2080
        %2551 = vmatprep.subr.bf16.mxu0 %v2085
        %2552 = vmatpush1.bf16.msra.mxu0 %v2084
        %2553 = vmatprep.subr.bf16.mxu0 %v2089
        %2554 = vmatpush1.bf16.msra.mxu0 %v2088
        %2555 = vmatprep.subr.bf16.mxu0 %v2093
        %2556 = vmatpush1.bf16.msra.mxu0 %v2092
        %2557 = vmatprep.subr.bf16.mxu0 %v2097
        %2558 = vmatpush1.bf16.msra.mxu0 %v2096
        %2559 = vmatprep.subr.bf16.mxu0 %v2101
        %2560 = vmatpush1.bf16.msra.mxu0 %v2100
        %2561 = vmatprep.mubr.bf16.mxu0 %v1181
        %2562 = vmatmul.mubr.bf16.gmra.mrb[0].mxu0 %v1180
        %v2563 = vpop.f32.mrb[0].mxu0
        %v2564 = vadd.f32 %v2523, %v2563
        %v2565 = vpop.f32.mrb[0].mxu0
        %v2566 = vadd.f32 %v2525, %v2565
        %v2567 = vpop.f32.mrb[0].mxu0
        %v2568 = vpop.f32.mrb[0].mxu0
        %2569 = vdwg.mxu0
        %2570 = vmatprep.subr.bf16.mxu0 %v2105
        %2571 = vmatpush1.bf16.msra.mxu0 %v2104
        %2572 = vmatprep.subr.bf16.mxu0 %v2109
        %2573 = vmatpush1.bf16.msra.mxu0 %v2108
        %2574 = vmatprep.subr.bf16.mxu0 %v2113
        %2575 = vmatpush1.bf16.msra.mxu0 %v2112
        %2576 = vmatprep.subr.bf16.mxu0 %v2117
        %2577 = vmatpush1.bf16.msra.mxu0 %v2116
        %2578 = vmatprep.subr.bf16.mxu0 %v2121
        %2579 = vmatpush1.bf16.msra.mxu0 %v2120
        %2580 = vmatprep.subr.bf16.mxu0 %v2125
        %2581 = vmatpush1.bf16.msra.mxu0 %v2124
        %2582 = vmatprep.subr.bf16.mxu0 %v2129
        %2583 = vmatpush1.bf16.msra.mxu0 %v2128
        %2584 = vmatprep.subr.bf16.mxu0 %v2133
        %2585 = vmatpush1.bf16.msra.mxu0 %v2132
        %2586 = vmatprep.subr.bf16.mxu0 %v2137
        %2587 = vmatpush1.bf16.msra.mxu0 %v2136
        %2588 = vmatprep.subr.bf16.mxu0 %v2141
        %2589 = vmatpush1.bf16.msra.mxu0 %v2140
        %2590 = vmatprep.subr.bf16.mxu0 %v2145
        %2591 = vmatpush1.bf16.msra.mxu0 %v2144
        %2592 = vmatprep.subr.bf16.mxu0 %v2149
        %2593 = vmatpush1.bf16.msra.mxu0 %v2148
        %2594 = vmatprep.subr.bf16.mxu0 %v2153
        %2595 = vmatpush1.bf16.msra.mxu0 %v2152
        %2596 = vmatprep.subr.bf16.mxu0 %v2157
        %2597 = vmatpush1.bf16.msra.mxu0 %v2156
        %2598 = vmatprep.subr.bf16.mxu0 %v2161
        %2599 = vmatpush1.bf16.msra.mxu0 %v2160
        %2600 = vmatprep.subr.bf16.mxu0 %v2165
        %2601 = vmatpush1.bf16.msra.mxu0 %v2164
        %2602 = vmatprep.mubr.bf16.mxu0 %v1183
        %2603 = vmatmul.mubr.bf16.gmra.mrb[0].mxu0 %v1182
        %v2604 = vpop.f32.mrb[0].mxu0
        %v2605 = vadd.f32 %v2564, %v2604
        %v2606 = vpop.f32.mrb[0].mxu0
        %v2607 = vadd.f32 %v2566, %v2606
        %v2608 = vpop.f32.mrb[0].mxu0
        %v2609 = vpop.f32.mrb[0].mxu0
        %2610 = vdwg.mxu0
        %2611 = vmatprep.subr.bf16.mxu0 %v2169
        %2612 = vmatpush1.bf16.msra.mxu0 %v2168
        %2613 = vmatprep.subr.bf16.mxu0 %v2173
        %2614 = vmatpush1.bf16.msra.mxu0 %v2172
        %2615 = vmatprep.subr.bf16.mxu0 %v2177
        %2616 = vmatpush1.bf16.msra.mxu0 %v2176
        %2617 = vmatprep.subr.bf16.mxu0 %v2181
        %2618 = vmatpush1.bf16.msra.mxu0 %v2180
        %2619 = vmatprep.subr.bf16.mxu0 %v2185
        %2620 = vmatpush1.bf16.msra.mxu0 %v2184
        %2621 = vmatprep.subr.bf16.mxu0 %v2189
        %2622 = vmatpush1.bf16.msra.mxu0 %v2188
        %2623 = vmatprep.subr.bf16.mxu0 %v2193
        %2624 = vmatpush1.bf16.msra.mxu0 %v2192
        %2625 = vmatprep.subr.bf16.mxu0 %v2197
        %2626 = vmatpush1.bf16.msra.mxu0 %v2196
        %2627 = vmatprep.subr.bf16.mxu0 %v2201
        %2628 = vmatpush1.bf16.msra.mxu0 %v2200
        %2629 = vmatprep.subr.bf16.mxu0 %v2205
        %2630 = vmatpush1.bf16.msra.mxu0 %v2204
        %2631 = vmatprep.subr.bf16.mxu0 %v2209
        %2632 = vmatpush1.bf16.msra.mxu0 %v2208
        %2633 = vmatprep.subr.bf16.mxu0 %v2213
        %2634 = vmatpush1.bf16.msra.mxu0 %v2212
        %2635 = vmatprep.subr.bf16.mxu0 %v2217
        %2636 = vmatpush1.bf16.msra.mxu0 %v2216
        %2637 = vmatprep.subr.bf16.mxu0 %v2221
        %2638 = vmatpush1.bf16.msra.mxu0 %v2220
        %2639 = vmatprep.subr.bf16.mxu0 %v2225
        %2640 = vmatpush1.bf16.msra.mxu0 %v2224
        %2641 = vmatprep.subr.bf16.mxu0 %v2229
        %2642 = vmatpush1.bf16.msra.mxu0 %v2228
        %2643 = vmatprep.mubr.bf16.mxu0 %v1185
        %2644 = vmatmul.mubr.bf16.gmra.mrb[0].mxu0 %v1184
        %v2645 = vpop.f32.mrb[0].mxu0
        %v2646 = vadd.f32 %v2605, %v2645
        %v2647 = vpop.f32.mrb[0].mxu0
        %v2648 = vadd.f32 %v2607, %v2647
        %v2649 = vpop.f32.mrb[0].mxu0
        %v2650 = vpop.f32.mrb[0].mxu0
        %2651 = vdwg.mxu0
        %2652 = vmatprep.subr.bf16.mxu0 %v1979
        %2653 = vmatpush1.bf16.msra.mxu0 %v1978
        %2654 = vmatprep.subr.bf16.mxu0 %v1983
        %2655 = vmatpush1.bf16.msra.mxu0 %v1982
        %2656 = vmatprep.subr.bf16.mxu0 %v1987
        %2657 = vmatpush1.bf16.msra.mxu0 %v1986
        %2658 = vmatprep.subr.bf16.mxu0 %v1991
        %2659 = vmatpush1.bf16.msra.mxu0 %v1990
        %2660 = vmatprep.subr.bf16.mxu0 %v1995
        %2661 = vmatpush1.bf16.msra.mxu0 %v1994
        %2662 = vmatprep.subr.bf16.mxu0 %v1999
        %2663 = vmatpush1.bf16.msra.mxu0 %v1998
        %2664 = vmatprep.subr.bf16.mxu0 %v2003
        %2665 = vmatpush1.bf16.msra.mxu0 %v2002
        %2666 = vmatprep.subr.bf16.mxu0 %v2007
        %2667 = vmatpush1.bf16.msra.mxu0 %v2006
        %2668 = vmatprep.subr.bf16.mxu0 %v2011
        %2669 = vmatpush1.bf16.msra.mxu0 %v2010
        %2670 = vmatprep.subr.bf16.mxu0 %v2015
        %2671 = vmatpush1.bf16.msra.mxu0 %v2014
        %2672 = vmatprep.subr.bf16.mxu0 %v2019
        %2673 = vmatpush1.bf16.msra.mxu0 %v2018
        %2674 = vmatprep.subr.bf16.mxu0 %v2023
        %2675 = vmatpush1.bf16.msra.mxu0 %v2022
        %2676 = vmatprep.subr.bf16.mxu0 %v2027
        %2677 = vmatpush1.bf16.msra.mxu0 %v2026
        %2678 = vmatprep.subr.bf16.mxu0 %v2031
        %2679 = vmatpush1.bf16.msra.mxu0 %v2030
        %2680 = vmatprep.subr.bf16.mxu0 %v2035
        %2681 = vmatpush1.bf16.msra.mxu0 %v2034
        %2682 = vmatprep.subr.bf16.mxu0 %v2039
        %2683 = vmatpush1.bf16.msra.mxu0 %v2038
        %2684 = vmatprep.mubr.bf16.mxu0 %v1179
        %2685 = vmatmul.mubr.bf16.gmra.mrb[0].mxu0 %v1178
        %v2686 = vpop.f32.mrb[0].mxu0
        %v2687 = vadd.f32 %v1199, %v2686
        %v2688 = vpop.f32.mrb[0].mxu0
        %v2689 = vadd.f32 %v1203, %v2688
        %v2690 = vpop.f32.mrb[0].mxu0
        %v2691 = vpop.f32.mrb[0].mxu0
        %2692 = vdwg.mxu0
        %2693 = vmatprep.subr.bf16.mxu0 %v2043
        %2694 = vmatpush1.bf16.msra.mxu0 %v2042
        %2695 = vmatprep.subr.bf16.mxu0 %v2047
        %2696 = vmatpush1.bf16.msra.mxu0 %v2046
        %2697 = vmatprep.subr.bf16.mxu0 %v2051
        %2698 = vmatpush1.bf16.msra.mxu0 %v2050
        %2699 = vmatprep.subr.bf16.mxu0 %v2055
        %2700 = vmatpush1.bf16.msra.mxu0 %v2054
        %2701 = vmatprep.subr.bf16.mxu0 %v2059
        %2702 = vmatpush1.bf16.msra.mxu0 %v2058
        %2703 = vmatprep.subr.bf16.mxu0 %v2063
        %2704 = vmatpush1.bf16.msra.mxu0 %v2062
        %2705 = vmatprep.subr.bf16.mxu0 %v2067
        %2706 = vmatpush1.bf16.msra.mxu0 %v2066
        %2707 = vmatprep.subr.bf16.mxu0 %v2071
        %2708 = vmatpush1.bf16.msra.mxu0 %v2070
        %2709 = vmatprep.subr.bf16.mxu0 %v2075
        %2710 = vmatpush1.bf16.msra.mxu0 %v2074
        %2711 = vmatprep.subr.bf16.mxu0 %v2079
        %2712 = vmatpush1.bf16.msra.mxu0 %v2078
        %2713 = vmatprep.subr.bf16.mxu0 %v2083
        %2714 = vmatpush1.bf16.msra.mxu0 %v2082
        %2715 = vmatprep.subr.bf16.mxu0 %v2087
        %2716 = vmatpush1.bf16.msra.mxu0 %v2086
        %2717 = vmatprep.subr.bf16.mxu0 %v2091
        %2718 = vmatpush1.bf16.msra.mxu0 %v2090
        %2719 = vmatprep.subr.bf16.mxu0 %v2095
        %2720 = vmatpush1.bf16.msra.mxu0 %v2094
        %2721 = vmatprep.subr.bf16.mxu0 %v2099
        %2722 = vmatpush1.bf16.msra.mxu0 %v2098
        %2723 = vmatprep.subr.bf16.mxu0 %v2103
        %2724 = vmatpush1.bf16.msra.mxu0 %v2102
        %2725 = vmatprep.mubr.bf16.mxu0 %v1181
        %2726 = vmatmul.mubr.bf16.gmra.mrb[0].mxu0 %v1180
        %v2727 = vpop.f32.mrb[0].mxu0
        %v2728 = vadd.f32 %v2687, %v2727
        %v2729 = vpop.f32.mrb[0].mxu0
        %v2730 = vadd.f32 %v2689, %v2729
        %v2731 = vpop.f32.mrb[0].mxu0
        %v2732 = vpop.f32.mrb[0].mxu0
        %2733 = vdwg.mxu0
        %2734 = vmatprep.subr.bf16.mxu0 %v2107
        %2735 = vmatpush1.bf16.msra.mxu0 %v2106
        %2736 = vmatprep.subr.bf16.mxu0 %v2111
        %2737 = vmatpush1.bf16.msra.mxu0 %v2110
        %2738 = vmatprep.subr.bf16.mxu0 %v2115
        %2739 = vmatpush1.bf16.msra.mxu0 %v2114
        %2740 = vmatprep.subr.bf16.mxu0 %v2119
        %2741 = vmatpush1.bf16.msra.mxu0 %v2118
        %2742 = vmatprep.subr.bf16.mxu0 %v2123
        %2743 = vmatpush1.bf16.msra.mxu0 %v2122
        %2744 = vmatprep.subr.bf16.mxu0 %v2127
        %2745 = vmatpush1.bf16.msra.mxu0 %v2126
        %2746 = vmatprep.subr.bf16.mxu0 %v2131
        %2747 = vmatpush1.bf16.msra.mxu0 %v2130
        %2748 = vmatprep.subr.bf16.mxu0 %v2135
        %2749 = vmatpush1.bf16.msra.mxu0 %v2134
        %2750 = vmatprep.subr.bf16.mxu0 %v2139
        %2751 = vmatpush1.bf16.msra.mxu0 %v2138
        %2752 = vmatprep.subr.bf16.mxu0 %v2143
        %2753 = vmatpush1.bf16.msra.mxu0 %v2142
        %2754 = vmatprep.subr.bf16.mxu0 %v2147
        %2755 = vmatpush1.bf16.msra.mxu0 %v2146
        %2756 = vmatprep.subr.bf16.mxu0 %v2151
        %2757 = vmatpush1.bf16.msra.mxu0 %v2150
        %2758 = vmatprep.subr.bf16.mxu0 %v2155
        %2759 = vmatpush1.bf16.msra.mxu0 %v2154
        %2760 = vmatprep.subr.bf16.mxu0 %v2159
        %2761 = vmatpush1.bf16.msra.mxu0 %v2158
        %2762 = vmatprep.subr.bf16.mxu0 %v2163
        %2763 = vmatpush1.bf16.msra.mxu0 %v2162
        %2764 = vmatprep.subr.bf16.mxu0 %v2167
        %2765 = vmatpush1.bf16.msra.mxu0 %v2166
        %2766 = vmatprep.mubr.bf16.mxu0 %v1183
        %2767 = vmatmul.mubr.bf16.gmra.mrb[0].mxu0 %v1182
        %v2768 = vpop.f32.mrb[0].mxu0
        %v2769 = vadd.f32 %v2728, %v2768
        %v2770 = vpop.f32.mrb[0].mxu0
        %v2771 = vadd.f32 %v2730, %v2770
        %v2772 = vpop.f32.mrb[0].mxu0
        %v2773 = vpop.f32.mrb[0].mxu0
        %2774 = vdwg.mxu0
        %2775 = vmatprep.subr.bf16.mxu0 %v2171
        %2776 = vmatpush1.bf16.msra.mxu0 %v2170
        %2777 = vmatprep.subr.bf16.mxu0 %v2175
        %2778 = vmatpush1.bf16.msra.mxu0 %v2174
        %2779 = vmatprep.subr.bf16.mxu0 %v2179
        %2780 = vmatpush1.bf16.msra.mxu0 %v2178
        %2781 = vmatprep.subr.bf16.mxu0 %v2183
        %2782 = vmatpush1.bf16.msra.mxu0 %v2182
        %2783 = vmatprep.subr.bf16.mxu0 %v2187
        %2784 = vmatpush1.bf16.msra.mxu0 %v2186
        %2785 = vmatprep.subr.bf16.mxu0 %v2191
        %2786 = vmatpush1.bf16.msra.mxu0 %v2190
        %2787 = vmatprep.subr.bf16.mxu0 %v2195
        %2788 = vmatpush1.bf16.msra.mxu0 %v2194
        %2789 = vmatprep.subr.bf16.mxu0 %v2199
        %2790 = vmatpush1.bf16.msra.mxu0 %v2198
        %2791 = vmatprep.subr.bf16.mxu0 %v2203
        %2792 = vmatpush1.bf16.msra.mxu0 %v2202
        %2793 = vmatprep.subr.bf16.mxu0 %v2207
        %2794 = vmatpush1.bf16.msra.mxu0 %v2206
        %2795 = vmatprep.subr.bf16.mxu0 %v2211
        %2796 = vmatpush1.bf16.msra.mxu0 %v2210
        %2797 = vmatprep.subr.bf16.mxu0 %v2215
        %2798 = vmatpush1.bf16.msra.mxu0 %v2214
        %2799 = vmatprep.subr.bf16.mxu0 %v2219
        %2800 = vmatpush1.bf16.msra.mxu0 %v2218
        %2801 = vmatprep.subr.bf16.mxu0 %v2223
        %2802 = vmatpush1.bf16.msra.mxu0 %v2222
        %2803 = vmatprep.subr.bf16.mxu0 %v2227
        %2804 = vmatpush1.bf16.msra.mxu0 %v2226
        %2805 = vmatprep.subr.bf16.mxu0 %v2231
        %2806 = vmatpush1.bf16.msra.mxu0 %v2230
        %2807 = vmatprep.mubr.bf16.mxu0 %v1185
        %2808 = vmatmul.mubr.bf16.gmra.mrb[0].mxu0 %v1184
        %v2809 = vpop.f32.mrb[0].mxu0
        %v2810 = vadd.f32 %v2769, %v2809
        %v2811 = vpop.f32.mrb[0].mxu0
        %v2812 = vadd.f32 %v2771, %v2811
        %v2813 = vpop.f32.mrb[0].mxu0
        %v2814 = vpop.f32.mrb[0].mxu0
        %2815 = vdwg.mxu0
        %v2816 = vmax.f32 %v2646, 0.0
        %v2817 = vmax.f32 %v2648, 0.0
        %v2818 = vmax.f32 %v2810, 0.0
        %v2819 = vmax.f32 %v2812, 0.0
        %v2824 = vrot.slane %v2816, 1
        %v2825 = vrot.slane %v2817, 1
        %v2826 = vrot.slane %v2818, 1
        %v2827 = vrot.slane %v2819, 1
        %v2832 = vrot.slane %v2816, 2
        %v2833 = vrot.slane %v2817, 2
        %v2834 = vrot.slane %v2818, 2
        %v2835 = vrot.slane %v2819, 2
        %v2840 = vrot.slane %v2816, 3
        %v2841 = vrot.slane %v2817, 3
        %v2842 = vrot.slane %v2818, 3
        %v2843 = vrot.slane %v2819, 3
        %v2848 = vrot.slane %v2824, 3
        %v2849 = vrot.slane %v2825, 3
        %v2850 = vrot.slane %v2826, 3
        %v2851 = vrot.slane %v2827, 3
        %v2852 = vrot.slane %v2832, 3
        %v2853 = vrot.slane %v2833, 3
        %v2854 = vrot.slane %v2834, 3
        %v2855 = vrot.slane %v2835, 3
        %v2856 = vrot.slane %v2840, 3
        %v2857 = vrot.slane %v2841, 3
        %v2858 = vrot.slane %v2842, 3
        %v2859 = vrot.slane %v2843, 3
        %vm2872 = vcmask 1040384
        %v2873 = vsel %vm2872, %v2816, %v2840
        %v2874 = vsel %vm2872, %v2817, %v2841
        %v2875 = vsel %vm2872, %v2818, %v2842
        %v2876 = vsel %vm2872, %v2819, %v2843
        %v2877 = vsel %vm2872, %v2824, %v2848
        %v2878 = vsel %vm2872, %v2825, %v2849
        %v2879 = vsel %vm2872, %v2826, %v2850
        %v2880 = vsel %vm2872, %v2827, %v2851
        %v2881 = vsel %vm2872, %v2832, %v2852
        %v2882 = vsel %vm2872, %v2833, %v2853
        %v2883 = vsel %vm2872, %v2834, %v2854
        %v2884 = vsel %vm2872, %v2835, %v2855
        %v2885 = vsel %vm2872, %v2840, %v2856
        %v2886 = vsel %vm2872, %v2841, %v2857
        %v2887 = vsel %vm2872, %v2842, %v2858
        %v2888 = vsel %vm2872, %v2843, %v2859
        %v2889 = vld [vmem:[%s609] sm:$0xff]
        %v2890 = vld [vmem:[%s609 + $0x8] sm:$0xff]
        %v2891 = vld [vmem:[%s609 + $0x10] sm:$0xff]
        %v2892 = vld [vmem:[%s609 + $0x18] sm:$0xff]
        %v2893 = vld [vmem:[%s609 + $0x20] sm:$0xff]
        %v2894 = vld [vmem:[%s609 + $0x28] sm:$0xff]
        %v2895 = vld [vmem:[%s609 + $0x30] sm:$0xff]
        %v2896 = vld [vmem:[%s609 + $0x38] sm:$0xff]
        %v2897 = vld [vmem:[%s609 + $0x40] sm:$0xff]
        %v2898 = vld [vmem:[%s609 + $0x48] sm:$0xff]
        %v2899 = vld [vmem:[%s609 + $0x50] sm:$0xff]
        %v2900 = vld [vmem:[%s609 + $0x58] sm:$0xff]
        %v2901 = vld [vmem:[%s609 + $0x60] sm:$0xff]
        %v2902 = vld [vmem:[%s609 + $0x68] sm:$0xff]
        %v2903 = vld [vmem:[%s609 + $0x70] sm:$0xff]
        %v2904 = vld [vmem:[%s609 + $0x78] sm:$0xff]
        %v2905 = vld [vmem:[%s609 + $0x80] sm:$0xff]
        %v2906 = vld [vmem:[%s609 + $0x88] sm:$0xff]
        %v2907 = vld [vmem:[%s609 + $0x90] sm:$0xff]
        %v2908 = vld [vmem:[%s609 + $0x98] sm:$0xff]
        %v2909 = vld [vmem:[%s609 + $0xa0] sm:$0xff]
        %v2910 = vld [vmem:[%s609 + $0xa8] sm:$0xff]
        %v2911 = vld [vmem:[%s609 + $0xb0] sm:$0xff]
        %v2912 = vld [vmem:[%s609 + $0xb8] sm:$0xff]
        %v2913 = vld [vmem:[%s609 + $0xc0] sm:$0xff]
        %v2914 = vld [vmem:[%s609 + $0xc8] sm:$0xff]
        %v2915 = vld [vmem:[%s609 + $0xd0] sm:$0xff]
        %v2916 = vld [vmem:[%s609 + $0xd8] sm:$0xff]
        %v2917 = vld [vmem:[%s609 + $0xe0] sm:$0xff]
        %v2918 = vld [vmem:[%s609 + $0xe8] sm:$0xff]
        %v2919 = vld [vmem:[%s609 + $0xf0] sm:$0xff]
        %v2920 = vld [vmem:[%s609 + $0xf8] sm:$0xff]
        %v2921 = vld [vmem:[%s609 + $0x100] sm:$0xff]
        %v2922 = vld [vmem:[%s609 + $0x108] sm:$0xff]
        %v2923 = vld [vmem:[%s609 + $0x110] sm:$0xff]
        %v2924 = vld [vmem:[%s609 + $0x118] sm:$0xff]
        %v2925 = vld [vmem:[%s609 + $0x120] sm:$0xff]
        %v2926 = vld [vmem:[%s609 + $0x128] sm:$0xff]
        %v2927 = vld [vmem:[%s609 + $0x130] sm:$0xff]
        %v2928 = vld [vmem:[%s609 + $0x138] sm:$0xff]
        %v2929 = vld [vmem:[%s609 + $0x140] sm:$0xff]
        %v2930 = vld [vmem:[%s609 + $0x148] sm:$0xff]
        %v2931 = vld [vmem:[%s609 + $0x150] sm:$0xff]
        %v2932 = vld [vmem:[%s609 + $0x158] sm:$0xff]
        %v2933 = vld [vmem:[%s609 + $0x160] sm:$0xff]
        %v2934 = vld [vmem:[%s609 + $0x168] sm:$0xff]
        %v2935 = vld [vmem:[%s609 + $0x170] sm:$0xff]
        %v2936 = vld [vmem:[%s609 + $0x178] sm:$0xff]
        %v2937 = vld [vmem:[%s609 + $0x180] sm:$0xff]
        %v2938 = vld [vmem:[%s609 + $0x188] sm:$0xff]
        %v2939 = vld [vmem:[%s609 + $0x190] sm:$0xff]
        %v2940 = vld [vmem:[%s609 + $0x198] sm:$0xff]
        %v2941 = vld [vmem:[%s609 + $0x1a0] sm:$0xff]
        %v2942 = vld [vmem:[%s609 + $0x1a8] sm:$0xff]
        %v2943 = vld [vmem:[%s609 + $0x1b0] sm:$0xff]
        %v2944 = vld [vmem:[%s609 + $0x1b8] sm:$0xff]
        %v2945 = vld [vmem:[%s609 + $0x1c0] sm:$0xff]
        %v2946 = vld [vmem:[%s609 + $0x1c8] sm:$0xff]
        %v2947 = vld [vmem:[%s609 + $0x1d0] sm:$0xff]
        %v2948 = vld [vmem:[%s609 + $0x1d8] sm:$0xff]
        %v2949 = vld [vmem:[%s609 + $0x1e0] sm:$0xff]
        %v2950 = vld [vmem:[%s609 + $0x1e8] sm:$0xff]
        %v2951 = vld [vmem:[%s609 + $0x1f0] sm:$0xff]
        %v2952 = vld [vmem:[%s609 + $0x1f8] sm:$0xff]
        %v2953 = vld [vmem:[%s609 + $0x200] sm:$0xff]
        %v2954 = vld [vmem:[%s609 + $0x208] sm:$0xff]
        %v2955 = vld [vmem:[%s609 + $0x210] sm:$0xff]
        %v2956 = vld [vmem:[%s609 + $0x218] sm:$0xff]
        %v2957 = vld [vmem:[%s609 + $0x220] sm:$0xff]
        %v2958 = vld [vmem:[%s609 + $0x228] sm:$0xff]
        %v2959 = vld [vmem:[%s609 + $0x230] sm:$0xff]
        %v2960 = vld [vmem:[%s609 + $0x238] sm:$0xff]
        %v2961 = vld [vmem:[%s609 + $0x240] sm:$0xff]
        %v2962 = vld [vmem:[%s609 + $0x248] sm:$0xff]
        %v2963 = vld [vmem:[%s609 + $0x250] sm:$0xff]
        %v2964 = vld [vmem:[%s609 + $0x258] sm:$0xff]
        %v2965 = vld [vmem:[%s609 + $0x260] sm:$0xff]
        %v2966 = vld [vmem:[%s609 + $0x268] sm:$0xff]
        %v2967 = vld [vmem:[%s609 + $0x270] sm:$0xff]
        %v2968 = vld [vmem:[%s609 + $0x278] sm:$0xff]
        %v2969 = vld [vmem:[%s609 + $0x280] sm:$0xff]
        %v2970 = vld [vmem:[%s609 + $0x288] sm:$0xff]
        %v2971 = vld [vmem:[%s609 + $0x290] sm:$0xff]
        %v2972 = vld [vmem:[%s609 + $0x298] sm:$0xff]
        %v2973 = vld [vmem:[%s609 + $0x2a0] sm:$0xff]
        %v2974 = vld [vmem:[%s609 + $0x2a8] sm:$0xff]
        %v2975 = vld [vmem:[%s609 + $0x2b0] sm:$0xff]
        %v2976 = vld [vmem:[%s609 + $0x2b8] sm:$0xff]
        %v2977 = vld [vmem:[%s609 + $0x2c0] sm:$0xff]
        %v2978 = vld [vmem:[%s609 + $0x2c8] sm:$0xff]
        %v2979 = vld [vmem:[%s609 + $0x2d0] sm:$0xff]
        %v2980 = vld [vmem:[%s609 + $0x2d8] sm:$0xff]
        %v2981 = vld [vmem:[%s609 + $0x2e0] sm:$0xff]
        %v2982 = vld [vmem:[%s609 + $0x2e8] sm:$0xff]
        %v2983 = vld [vmem:[%s609 + $0x2f0] sm:$0xff]
        %v2984 = vld [vmem:[%s609 + $0x2f8] sm:$0xff]
        %v2985 = vld [vmem:[%s609 + $0x300] sm:$0xff]
        %v2986 = vld [vmem:[%s609 + $0x308] sm:$0xff]
        %v2987 = vld [vmem:[%s609 + $0x310] sm:$0xff]
        %v2988 = vld [vmem:[%s609 + $0x318] sm:$0xff]
        %v2989 = vld [vmem:[%s609 + $0x320] sm:$0xff]
        %v2990 = vld [vmem:[%s609 + $0x328] sm:$0xff]
        %v2991 = vld [vmem:[%s609 + $0x330] sm:$0xff]
        %v2992 = vld [vmem:[%s609 + $0x338] sm:$0xff]
        %v2993 = vld [vmem:[%s609 + $0x340] sm:$0xff]
        %v2994 = vld [vmem:[%s609 + $0x348] sm:$0xff]
        %v2995 = vld [vmem:[%s609 + $0x350] sm:$0xff]
        %v2996 = vld [vmem:[%s609 + $0x358] sm:$0xff]
        %v2997 = vld [vmem:[%s609 + $0x360] sm:$0xff]
        %v2998 = vld [vmem:[%s609 + $0x368] sm:$0xff]
        %v2999 = vld [vmem:[%s609 + $0x370] sm:$0xff]
        %v3000 = vld [vmem:[%s609 + $0x378] sm:$0xff]
        %v3001 = vld [vmem:[%s609 + $0x380] sm:$0xff]
        %v3002 = vld [vmem:[%s609 + $0x388] sm:$0xff]
        %v3003 = vld [vmem:[%s609 + $0x390] sm:$0xff]
        %v3004 = vld [vmem:[%s609 + $0x398] sm:$0xff]
        %v3005 = vld [vmem:[%s609 + $0x3a0] sm:$0xff]
        %v3006 = vld [vmem:[%s609 + $0x3a8] sm:$0xff]
        %v3007 = vld [vmem:[%s609 + $0x3b0] sm:$0xff]
        %v3008 = vld [vmem:[%s609 + $0x3b8] sm:$0xff]
        %v3009 = vld [vmem:[%s609 + $0x3c0] sm:$0xff]
        %v3010 = vld [vmem:[%s609 + $0x3c8] sm:$0xff]
        %v3011 = vld [vmem:[%s609 + $0x3d0] sm:$0xff]
        %v3012 = vld [vmem:[%s609 + $0x3d8] sm:$0xff]
        %v3013 = vld [vmem:[%s609 + $0x3e0] sm:$0xff]
        %v3014 = vld [vmem:[%s609 + $0x3e8] sm:$0xff]
        %v3015 = vld [vmem:[%s609 + $0x3f0] sm:$0xff]
        %v3016 = vld [vmem:[%s609 + $0x3f8] sm:$0xff]
        %v3017 = vld [vmem:[%s609 + $0x400] sm:$0xff]
        %v3018 = vld [vmem:[%s609 + $0x408] sm:$0xff]
        %v3019 = vld [vmem:[%s609 + $0x410] sm:$0xff]
        %v3020 = vld [vmem:[%s609 + $0x418] sm:$0xff]
        %v3021 = vld [vmem:[%s609 + $0x420] sm:$0xff]
        %v3022 = vld [vmem:[%s609 + $0x428] sm:$0xff]
        %v3023 = vld [vmem:[%s609 + $0x430] sm:$0xff]
        %v3024 = vld [vmem:[%s609 + $0x438] sm:$0xff]
        %v3025 = vld [vmem:[%s609 + $0x440] sm:$0xff]
        %v3026 = vld [vmem:[%s609 + $0x448] sm:$0xff]
        %v3027 = vld [vmem:[%s609 + $0x450] sm:$0xff]
        %v3028 = vld [vmem:[%s609 + $0x458] sm:$0xff]
        %v3029 = vld [vmem:[%s609 + $0x460] sm:$0xff]
        %v3030 = vld [vmem:[%s609 + $0x468] sm:$0xff]
        %v3031 = vld [vmem:[%s609 + $0x470] sm:$0xff]
        %v3032 = vld [vmem:[%s609 + $0x478] sm:$0xff]
        %v3033 = vld [vmem:[%s609 + $0x480] sm:$0xff]
        %v3034 = vld [vmem:[%s609 + $0x488] sm:$0xff]
        %v3035 = vld [vmem:[%s609 + $0x490] sm:$0xff]
        %v3036 = vld [vmem:[%s609 + $0x498] sm:$0xff]
        %v3037 = vld [vmem:[%s609 + $0x4a0] sm:$0xff]
        %v3038 = vld [vmem:[%s609 + $0x4a8] sm:$0xff]
        %v3039 = vld [vmem:[%s609 + $0x4b0] sm:$0xff]
        %v3040 = vld [vmem:[%s609 + $0x4b8] sm:$0xff]
        %v3041 = vld [vmem:[%s609 + $0x4c0] sm:$0xff]
        %v3042 = vld [vmem:[%s609 + $0x4c8] sm:$0xff]
        %v3043 = vld [vmem:[%s609 + $0x4d0] sm:$0xff]
        %v3044 = vld [vmem:[%s609 + $0x4d8] sm:$0xff]
        %v3045 = vld [vmem:[%s609 + $0x4e0] sm:$0xff]
        %v3046 = vld [vmem:[%s609 + $0x4e8] sm:$0xff]
        %v3047 = vld [vmem:[%s609 + $0x4f0] sm:$0xff]
        %v3048 = vld [vmem:[%s609 + $0x4f8] sm:$0xff]
        %v3049 = vld [vmem:[%s609 + $0x500] sm:$0xff]
        %v3050 = vld [vmem:[%s609 + $0x508] sm:$0xff]
        %v3051 = vld [vmem:[%s609 + $0x510] sm:$0xff]
        %v3052 = vld [vmem:[%s609 + $0x518] sm:$0xff]
        %v3053 = vld [vmem:[%s609 + $0x520] sm:$0xff]
        %v3054 = vld [vmem:[%s609 + $0x528] sm:$0xff]
        %v3055 = vld [vmem:[%s609 + $0x530] sm:$0xff]
        %v3056 = vld [vmem:[%s609 + $0x538] sm:$0xff]
        %v3057 = vld [vmem:[%s609 + $0x540] sm:$0xff]
        %v3058 = vld [vmem:[%s609 + $0x548] sm:$0xff]
        %v3059 = vld [vmem:[%s609 + $0x550] sm:$0xff]
        %v3060 = vld [vmem:[%s609 + $0x558] sm:$0xff]
        %v3061 = vld [vmem:[%s609 + $0x560] sm:$0xff]
        %v3062 = vld [vmem:[%s609 + $0x568] sm:$0xff]
        %v3063 = vld [vmem:[%s609 + $0x570] sm:$0xff]
        %v3064 = vld [vmem:[%s609 + $0x578] sm:$0xff]
        %v3065 = vld [vmem:[%s609 + $0x580] sm:$0xff]
        %v3066 = vld [vmem:[%s609 + $0x588] sm:$0xff]
        %v3067 = vld [vmem:[%s609 + $0x590] sm:$0xff]
        %v3068 = vld [vmem:[%s609 + $0x598] sm:$0xff]
        %v3069 = vld [vmem:[%s609 + $0x5a0] sm:$0xff]
        %v3070 = vld [vmem:[%s609 + $0x5a8] sm:$0xff]
        %v3071 = vld [vmem:[%s609 + $0x5b0] sm:$0xff]
        %v3072 = vld [vmem:[%s609 + $0x5b8] sm:$0xff]
        %v3073 = vld [vmem:[%s609 + $0x5c0] sm:$0xff]
        %v3074 = vld [vmem:[%s609 + $0x5c8] sm:$0xff]
        %v3075 = vld [vmem:[%s609 + $0x5d0] sm:$0xff]
        %v3076 = vld [vmem:[%s609 + $0x5d8] sm:$0xff]
        %v3077 = vld [vmem:[%s609 + $0x5e0] sm:$0xff]
        %v3078 = vld [vmem:[%s609 + $0x5e8] sm:$0xff]
        %v3079 = vld [vmem:[%s609 + $0x5f0] sm:$0xff]
        %v3080 = vld [vmem:[%s609 + $0x5f8] sm:$0xff]
        %v3081 = vld [vmem:[%s609 + $0x600] sm:$0xff]
        %v3082 = vld [vmem:[%s609 + $0x608] sm:$0xff]
        %v3083 = vld [vmem:[%s609 + $0x610] sm:$0xff]
        %v3084 = vld [vmem:[%s609 + $0x618] sm:$0xff]
        %v3085 = vld [vmem:[%s609 + $0x620] sm:$0xff]
        %v3086 = vld [vmem:[%s609 + $0x628] sm:$0xff]
        %v3087 = vld [vmem:[%s609 + $0x630] sm:$0xff]
        %v3088 = vld [vmem:[%s609 + $0x638] sm:$0xff]
        %v3089 = vld [vmem:[%s609 + $0x640] sm:$0xff]
        %v3090 = vld [vmem:[%s609 + $0x648] sm:$0xff]
        %v3091 = vld [vmem:[%s609 + $0x650] sm:$0xff]
        %v3092 = vld [vmem:[%s609 + $0x658] sm:$0xff]
        %v3093 = vld [vmem:[%s609 + $0x660] sm:$0xff]
        %v3094 = vld [vmem:[%s609 + $0x668] sm:$0xff]
        %v3095 = vld [vmem:[%s609 + $0x670] sm:$0xff]
        %v3096 = vld [vmem:[%s609 + $0x678] sm:$0xff]
        %v3097 = vld [vmem:[%s609 + $0x680] sm:$0xff]
        %v3098 = vld [vmem:[%s609 + $0x688] sm:$0xff]
        %v3099 = vld [vmem:[%s609 + $0x690] sm:$0xff]
        %v3100 = vld [vmem:[%s609 + $0x698] sm:$0xff]
        %v3101 = vld [vmem:[%s609 + $0x6a0] sm:$0xff]
        %v3102 = vld [vmem:[%s609 + $0x6a8] sm:$0xff]
        %v3103 = vld [vmem:[%s609 + $0x6b0] sm:$0xff]
        %v3104 = vld [vmem:[%s609 + $0x6b8] sm:$0xff]
        %v3105 = vld [vmem:[%s609 + $0x6c0] sm:$0xff]
        %v3106 = vld [vmem:[%s609 + $0x6c8] sm:$0xff]
        %v3107 = vld [vmem:[%s609 + $0x6d0] sm:$0xff]
        %v3108 = vld [vmem:[%s609 + $0x6d8] sm:$0xff]
        %v3109 = vld [vmem:[%s609 + $0x6e0] sm:$0xff]
        %v3110 = vld [vmem:[%s609 + $0x6e8] sm:$0xff]
        %v3111 = vld [vmem:[%s609 + $0x6f0] sm:$0xff]
        %v3112 = vld [vmem:[%s609 + $0x6f8] sm:$0xff]
        %v3113 = vld [vmem:[%s609 + $0x700] sm:$0xff]
        %v3114 = vld [vmem:[%s609 + $0x708] sm:$0xff]
        %v3115 = vld [vmem:[%s609 + $0x710] sm:$0xff]
        %v3116 = vld [vmem:[%s609 + $0x718] sm:$0xff]
        %v3117 = vld [vmem:[%s609 + $0x720] sm:$0xff]
        %v3118 = vld [vmem:[%s609 + $0x728] sm:$0xff]
        %v3119 = vld [vmem:[%s609 + $0x730] sm:$0xff]
        %v3120 = vld [vmem:[%s609 + $0x738] sm:$0xff]
        %v3121 = vld [vmem:[%s609 + $0x740] sm:$0xff]
        %v3122 = vld [vmem:[%s609 + $0x748] sm:$0xff]
        %v3123 = vld [vmem:[%s609 + $0x750] sm:$0xff]
        %v3124 = vld [vmem:[%s609 + $0x758] sm:$0xff]
        %v3125 = vld [vmem:[%s609 + $0x760] sm:$0xff]
        %v3126 = vld [vmem:[%s609 + $0x768] sm:$0xff]
        %v3127 = vld [vmem:[%s609 + $0x770] sm:$0xff]
        %v3128 = vld [vmem:[%s609 + $0x778] sm:$0xff]
        %v3129 = vld [vmem:[%s609 + $0x780] sm:$0xff]
        %v3130 = vld [vmem:[%s609 + $0x788] sm:$0xff]
        %v3131 = vld [vmem:[%s609 + $0x790] sm:$0xff]
        %v3132 = vld [vmem:[%s609 + $0x798] sm:$0xff]
        %v3133 = vld [vmem:[%s609 + $0x7a0] sm:$0xff]
        %v3134 = vld [vmem:[%s609 + $0x7a8] sm:$0xff]
        %v3135 = vld [vmem:[%s609 + $0x7b0] sm:$0xff]
        %v3136 = vld [vmem:[%s609 + $0x7b8] sm:$0xff]
        %v3137 = vld [vmem:[%s609 + $0x7c0] sm:$0xff]
        %v3138 = vld [vmem:[%s609 + $0x7c8] sm:$0xff]
        %v3139 = vld [vmem:[%s609 + $0x7d0] sm:$0xff]
        %v3140 = vld [vmem:[%s609 + $0x7d8] sm:$0xff]
        %v3141 = vld [vmem:[%s609 + $0x7e0] sm:$0xff]
        %v3142 = vld [vmem:[%s609 + $0x7e8] sm:$0xff]
        %v3143 = vld [vmem:[%s609 + $0x7f0] sm:$0xff]
        %v3144 = vld [vmem:[%s609 + $0x7f8] sm:$0xff]
        %v3145 = vld [vmem:[%s609 + $0x800] sm:$0xff]
        %v3146 = vld [vmem:[%s609 + $0x808] sm:$0xff]
        %v3147 = vld [vmem:[%s609 + $0x810] sm:$0xff]
        %v3148 = vld [vmem:[%s609 + $0x818] sm:$0xff]
        %v3149 = vld [vmem:[%s609 + $0x820] sm:$0xff]
        %v3150 = vld [vmem:[%s609 + $0x828] sm:$0xff]
        %v3151 = vld [vmem:[%s609 + $0x830] sm:$0xff]
        %v3152 = vld [vmem:[%s609 + $0x838] sm:$0xff]
        %v3153 = vld [vmem:[%s609 + $0x840] sm:$0xff]
        %v3154 = vld [vmem:[%s609 + $0x848] sm:$0xff]
        %v3155 = vld [vmem:[%s609 + $0x850] sm:$0xff]
        %v3156 = vld [vmem:[%s609 + $0x858] sm:$0xff]
        %v3157 = vld [vmem:[%s609 + $0x860] sm:$0xff]
        %v3158 = vld [vmem:[%s609 + $0x868] sm:$0xff]
        %v3159 = vld [vmem:[%s609 + $0x870] sm:$0xff]
        %v3160 = vld [vmem:[%s609 + $0x878] sm:$0xff]
        %v3161 = vld [vmem:[%s609 + $0x880] sm:$0xff]
        %v3162 = vld [vmem:[%s609 + $0x888] sm:$0xff]
        %v3163 = vld [vmem:[%s609 + $0x890] sm:$0xff]
        %v3164 = vld [vmem:[%s609 + $0x898] sm:$0xff]
        %v3165 = vld [vmem:[%s609 + $0x8a0] sm:$0xff]
        %v3166 = vld [vmem:[%s609 + $0x8a8] sm:$0xff]
        %v3167 = vld [vmem:[%s609 + $0x8b0] sm:$0xff]
        %v3168 = vld [vmem:[%s609 + $0x8b8] sm:$0xff]
        %v3169 = vld [vmem:[%s609 + $0x8c0] sm:$0xff]
        %v3170 = vld [vmem:[%s609 + $0x8c8] sm:$0xff]
        %v3171 = vld [vmem:[%s609 + $0x8d0] sm:$0xff]
        %v3172 = vld [vmem:[%s609 + $0x8d8] sm:$0xff]
        %v3173 = vld [vmem:[%s609 + $0x8e0] sm:$0xff]
        %v3174 = vld [vmem:[%s609 + $0x8e8] sm:$0xff]
        %v3175 = vld [vmem:[%s609 + $0x8f0] sm:$0xff]
        %v3176 = vld [vmem:[%s609 + $0x8f8] sm:$0xff]
        %v3177 = vld [vmem:[%s609 + $0x900] sm:$0xff]
        %v3178 = vld [vmem:[%s609 + $0x908] sm:$0xff]
        %v3179 = vld [vmem:[%s609 + $0x910] sm:$0xff]
        %v3180 = vld [vmem:[%s609 + $0x918] sm:$0xff]
        %v3181 = vld [vmem:[%s609 + $0x920] sm:$0xff]
        %v3182 = vld [vmem:[%s609 + $0x928] sm:$0xff]
        %v3183 = vld [vmem:[%s609 + $0x930] sm:$0xff]
        %v3184 = vld [vmem:[%s609 + $0x938] sm:$0xff]
        %v3185 = vld [vmem:[%s609 + $0x940] sm:$0xff]
        %v3186 = vld [vmem:[%s609 + $0x948] sm:$0xff]
        %v3187 = vld [vmem:[%s609 + $0x950] sm:$0xff]
        %v3188 = vld [vmem:[%s609 + $0x958] sm:$0xff]
        %v3189 = vld [vmem:[%s609 + $0x960] sm:$0xff]
        %v3190 = vld [vmem:[%s609 + $0x968] sm:$0xff]
        %v3191 = vld [vmem:[%s609 + $0x970] sm:$0xff]
        %v3192 = vld [vmem:[%s609 + $0x978] sm:$0xff]
        %v3193 = vld [vmem:[%s609 + $0x980] sm:$0xff]
        %v3194 = vld [vmem:[%s609 + $0x988] sm:$0xff]
        %v3195 = vld [vmem:[%s609 + $0x990] sm:$0xff]
        %v3196 = vld [vmem:[%s609 + $0x998] sm:$0xff]
        %v3197 = vld [vmem:[%s609 + $0x9a0] sm:$0xff]
        %v3198 = vld [vmem:[%s609 + $0x9a8] sm:$0xff]
        %v3199 = vld [vmem:[%s609 + $0x9b0] sm:$0xff]
        %v3200 = vld [vmem:[%s609 + $0x9b8] sm:$0xff]
        %v3201 = vld [vmem:[%s609 + $0x9c0] sm:$0xff]
        %v3202 = vld [vmem:[%s609 + $0x9c8] sm:$0xff]
        %v3203 = vld [vmem:[%s609 + $0x9d0] sm:$0xff]
        %v3204 = vld [vmem:[%s609 + $0x9d8] sm:$0xff]
        %v3205 = vld [vmem:[%s609 + $0x9e0] sm:$0xff]
        %v3206 = vld [vmem:[%s609 + $0x9e8] sm:$0xff]
        %v3207 = vld [vmem:[%s609 + $0x9f0] sm:$0xff]
        %v3208 = vld [vmem:[%s609 + $0x9f8] sm:$0xff]
        %v3209 = vld [vmem:[%s609 + $0xa00] sm:$0xff]
        %v3210 = vld [vmem:[%s609 + $0xa08] sm:$0xff]
        %v3211 = vld [vmem:[%s609 + $0xa10] sm:$0xff]
        %v3212 = vld [vmem:[%s609 + $0xa18] sm:$0xff]
        %v3213 = vld [vmem:[%s609 + $0xa20] sm:$0xff]
        %v3214 = vld [vmem:[%s609 + $0xa28] sm:$0xff]
        %v3215 = vld [vmem:[%s609 + $0xa30] sm:$0xff]
        %v3216 = vld [vmem:[%s609 + $0xa38] sm:$0xff]
        %v3217 = vld [vmem:[%s609 + $0xa40] sm:$0xff]
        %v3218 = vld [vmem:[%s609 + $0xa48] sm:$0xff]
        %v3219 = vld [vmem:[%s609 + $0xa50] sm:$0xff]
        %v3220 = vld [vmem:[%s609 + $0xa58] sm:$0xff]
        %v3221 = vld [vmem:[%s609 + $0xa60] sm:$0xff]
        %v3222 = vld [vmem:[%s609 + $0xa68] sm:$0xff]
        %v3223 = vld [vmem:[%s609 + $0xa70] sm:$0xff]
        %v3224 = vld [vmem:[%s609 + $0xa78] sm:$0xff]
        %v3225 = vld [vmem:[%s609 + $0xa80] sm:$0xff]
        %v3226 = vld [vmem:[%s609 + $0xa88] sm:$0xff]
        %v3227 = vld [vmem:[%s609 + $0xa90] sm:$0xff]
        %v3228 = vld [vmem:[%s609 + $0xa98] sm:$0xff]
        %v3229 = vld [vmem:[%s609 + $0xaa0] sm:$0xff]
        %v3230 = vld [vmem:[%s609 + $0xaa8] sm:$0xff]
        %v3231 = vld [vmem:[%s609 + $0xab0] sm:$0xff]
        %v3232 = vld [vmem:[%s609 + $0xab8] sm:$0xff]
        %v3233 = vld [vmem:[%s609 + $0xac0] sm:$0xff]
        %v3234 = vld [vmem:[%s609 + $0xac8] sm:$0xff]
        %v3235 = vld [vmem:[%s609 + $0xad0] sm:$0xff]
        %v3236 = vld [vmem:[%s609 + $0xad8] sm:$0xff]
        %v3237 = vld [vmem:[%s609 + $0xae0] sm:$0xff]
        %v3238 = vld [vmem:[%s609 + $0xae8] sm:$0xff]
        %v3239 = vld [vmem:[%s609 + $0xaf0] sm:$0xff]
        %v3240 = vld [vmem:[%s609 + $0xaf8] sm:$0xff]
        %v3241 = vld [vmem:[%s609 + $0xb00] sm:$0xff]
        %v3242 = vld [vmem:[%s609 + $0xb08] sm:$0xff]
        %v3243 = vld [vmem:[%s609 + $0xb10] sm:$0xff]
        %v3244 = vld [vmem:[%s609 + $0xb18] sm:$0xff]
        %v3245 = vld [vmem:[%s609 + $0xb20] sm:$0xff]
        %v3246 = vld [vmem:[%s609 + $0xb28] sm:$0xff]
        %v3247 = vld [vmem:[%s609 + $0xb30] sm:$0xff]
        %v3248 = vld [vmem:[%s609 + $0xb38] sm:$0xff]
        %v3249 = vld [vmem:[%s609 + $0xb40] sm:$0xff]
        %v3250 = vld [vmem:[%s609 + $0xb48] sm:$0xff]
        %v3251 = vld [vmem:[%s609 + $0xb50] sm:$0xff]
        %v3252 = vld [vmem:[%s609 + $0xb58] sm:$0xff]
        %v3253 = vld [vmem:[%s609 + $0xb60] sm:$0xff]
        %v3254 = vld [vmem:[%s609 + $0xb68] sm:$0xff]
        %v3255 = vld [vmem:[%s609 + $0xb70] sm:$0xff]
        %v3256 = vld [vmem:[%s609 + $0xb78] sm:$0xff]
        %v3257 = vld [vmem:[%s609 + $0xb80] sm:$0xff]
        %v3258 = vld [vmem:[%s609 + $0xb88] sm:$0xff]
        %v3259 = vld [vmem:[%s609 + $0xb90] sm:$0xff]
        %v3260 = vld [vmem:[%s609 + $0xb98] sm:$0xff]
        %v3261 = vld [vmem:[%s609 + $0xba0] sm:$0xff]
        %v3262 = vld [vmem:[%s609 + $0xba8] sm:$0xff]
        %v3263 = vld [vmem:[%s609 + $0xbb0] sm:$0xff]
        %v3264 = vld [vmem:[%s609 + $0xbb8] sm:$0xff]
        %v3265 = vld [vmem:[%s609 + $0xbc0] sm:$0xff]
        %v3266 = vld [vmem:[%s609 + $0xbc8] sm:$0xff]
        %v3267 = vld [vmem:[%s609 + $0xbd0] sm:$0xff]
        %v3268 = vld [vmem:[%s609 + $0xbd8] sm:$0xff]
        %v3269 = vld [vmem:[%s609 + $0xbe0] sm:$0xff]
        %v3270 = vld [vmem:[%s609 + $0xbe8] sm:$0xff]
        %v3271 = vld [vmem:[%s609 + $0xbf0] sm:$0xff]
        %v3272 = vld [vmem:[%s609 + $0xbf8] sm:$0xff]
        %v3273 = vld [vmem:[%s609 + $0xc00] sm:$0xff]
        %v3274 = vld [vmem:[%s609 + $0xc08] sm:$0xff]
        %v3275 = vld [vmem:[%s609 + $0xc10] sm:$0xff]
        %v3276 = vld [vmem:[%s609 + $0xc18] sm:$0xff]
        %v3277 = vld [vmem:[%s609 + $0xc20] sm:$0xff]
        %v3278 = vld [vmem:[%s609 + $0xc28] sm:$0xff]
        %v3279 = vld [vmem:[%s609 + $0xc30] sm:$0xff]
        %v3280 = vld [vmem:[%s609 + $0xc38] sm:$0xff]
        %v3281 = vld [vmem:[%s609 + $0xc40] sm:$0xff]
        %v3282 = vld [vmem:[%s609 + $0xc48] sm:$0xff]
        %v3283 = vld [vmem:[%s609 + $0xc50] sm:$0xff]
        %v3284 = vld [vmem:[%s609 + $0xc58] sm:$0xff]
        %v3285 = vld [vmem:[%s609 + $0xc60] sm:$0xff]
        %v3286 = vld [vmem:[%s609 + $0xc68] sm:$0xff]
        %v3287 = vld [vmem:[%s609 + $0xc70] sm:$0xff]
        %v3288 = vld [vmem:[%s609 + $0xc78] sm:$0xff]
        %v3289 = vld [vmem:[%s609 + $0xc80] sm:$0xff]
        %v3290 = vld [vmem:[%s609 + $0xc88] sm:$0xff]
        %v3291 = vld [vmem:[%s609 + $0xc90] sm:$0xff]
        %v3292 = vld [vmem:[%s609 + $0xc98] sm:$0xff]
        %v3293 = vld [vmem:[%s609 + $0xca0] sm:$0xff]
        %v3294 = vld [vmem:[%s609 + $0xca8] sm:$0xff]
        %v3295 = vld [vmem:[%s609 + $0xcb0] sm:$0xff]
        %v3296 = vld [vmem:[%s609 + $0xcb8] sm:$0xff]
        %v3297 = vld [vmem:[%s609 + $0xcc0] sm:$0xff]
        %v3298 = vld [vmem:[%s609 + $0xcc8] sm:$0xff]
        %v3299 = vld [vmem:[%s609 + $0xcd0] sm:$0xff]
        %v3300 = vld [vmem:[%s609 + $0xcd8] sm:$0xff]
        %v3301 = vld [vmem:[%s609 + $0xce0] sm:$0xff]
        %v3302 = vld [vmem:[%s609 + $0xce8] sm:$0xff]
        %v3303 = vld [vmem:[%s609 + $0xcf0] sm:$0xff]
        %v3304 = vld [vmem:[%s609 + $0xcf8] sm:$0xff]
        %v3305 = vld [vmem:[%s609 + $0xd00] sm:$0xff]
        %v3306 = vld [vmem:[%s609 + $0xd08] sm:$0xff]
        %v3307 = vld [vmem:[%s609 + $0xd10] sm:$0xff]
        %v3308 = vld [vmem:[%s609 + $0xd18] sm:$0xff]
        %v3309 = vld [vmem:[%s609 + $0xd20] sm:$0xff]
        %v3310 = vld [vmem:[%s609 + $0xd28] sm:$0xff]
        %v3311 = vld [vmem:[%s609 + $0xd30] sm:$0xff]
        %v3312 = vld [vmem:[%s609 + $0xd38] sm:$0xff]
        %v3313 = vld [vmem:[%s609 + $0xd40] sm:$0xff]
        %v3314 = vld [vmem:[%s609 + $0xd48] sm:$0xff]
        %v3315 = vld [vmem:[%s609 + $0xd50] sm:$0xff]
        %v3316 = vld [vmem:[%s609 + $0xd58] sm:$0xff]
        %v3317 = vld [vmem:[%s609 + $0xd60] sm:$0xff]
        %v3318 = vld [vmem:[%s609 + $0xd68] sm:$0xff]
        %v3319 = vld [vmem:[%s609 + $0xd70] sm:$0xff]
        %v3320 = vld [vmem:[%s609 + $0xd78] sm:$0xff]
        %v3321 = vld [vmem:[%s609 + $0xd80] sm:$0xff]
        %v3322 = vld [vmem:[%s609 + $0xd88] sm:$0xff]
        %v3323 = vld [vmem:[%s609 + $0xd90] sm:$0xff]
        %v3324 = vld [vmem:[%s609 + $0xd98] sm:$0xff]
        %v3325 = vld [vmem:[%s609 + $0xda0] sm:$0xff]
        %v3326 = vld [vmem:[%s609 + $0xda8] sm:$0xff]
        %v3327 = vld [vmem:[%s609 + $0xdb0] sm:$0xff]
        %v3328 = vld [vmem:[%s609 + $0xdb8] sm:$0xff]
        %v3329 = vld [vmem:[%s609 + $0xdc0] sm:$0xff]
        %v3330 = vld [vmem:[%s609 + $0xdc8] sm:$0xff]
        %v3331 = vld [vmem:[%s609 + $0xdd0] sm:$0xff]
        %v3332 = vld [vmem:[%s609 + $0xdd8] sm:$0xff]
        %v3333 = vld [vmem:[%s609 + $0xde0] sm:$0xff]
        %v3334 = vld [vmem:[%s609 + $0xde8] sm:$0xff]
        %v3335 = vld [vmem:[%s609 + $0xdf0] sm:$0xff]
        %v3336 = vld [vmem:[%s609 + $0xdf8] sm:$0xff]
        %v3337 = vld [vmem:[%s609 + $0xe00] sm:$0xff]
        %v3338 = vld [vmem:[%s609 + $0xe08] sm:$0xff]
        %v3339 = vld [vmem:[%s609 + $0xe10] sm:$0xff]
        %v3340 = vld [vmem:[%s609 + $0xe18] sm:$0xff]
        %v3341 = vld [vmem:[%s609 + $0xe20] sm:$0xff]
        %v3342 = vld [vmem:[%s609 + $0xe28] sm:$0xff]
        %v3343 = vld [vmem:[%s609 + $0xe30] sm:$0xff]
        %v3344 = vld [vmem:[%s609 + $0xe38] sm:$0xff]
        %v3345 = vld [vmem:[%s609 + $0xe40] sm:$0xff]
        %v3346 = vld [vmem:[%s609 + $0xe48] sm:$0xff]
        %v3347 = vld [vmem:[%s609 + $0xe50] sm:$0xff]
        %v3348 = vld [vmem:[%s609 + $0xe58] sm:$0xff]
        %v3349 = vld [vmem:[%s609 + $0xe60] sm:$0xff]
        %v3350 = vld [vmem:[%s609 + $0xe68] sm:$0xff]
        %v3351 = vld [vmem:[%s609 + $0xe70] sm:$0xff]
        %v3352 = vld [vmem:[%s609 + $0xe78] sm:$0xff]
        %v3353 = vld [vmem:[%s609 + $0xe80] sm:$0xff]
        %v3354 = vld [vmem:[%s609 + $0xe88] sm:$0xff]
        %v3355 = vld [vmem:[%s609 + $0xe90] sm:$0xff]
        %v3356 = vld [vmem:[%s609 + $0xe98] sm:$0xff]
        %v3357 = vld [vmem:[%s609 + $0xea0] sm:$0xff]
        %v3358 = vld [vmem:[%s609 + $0xea8] sm:$0xff]
        %v3359 = vld [vmem:[%s609 + $0xeb0] sm:$0xff]
        %v3360 = vld [vmem:[%s609 + $0xeb8] sm:$0xff]
        %v3361 = vld [vmem:[%s609 + $0xec0] sm:$0xff]
        %v3362 = vld [vmem:[%s609 + $0xec8] sm:$0xff]
        %v3363 = vld [vmem:[%s609 + $0xed0] sm:$0xff]
        %v3364 = vld [vmem:[%s609 + $0xed8] sm:$0xff]
        %v3365 = vld [vmem:[%s609 + $0xee0] sm:$0xff]
        %v3366 = vld [vmem:[%s609 + $0xee8] sm:$0xff]
        %v3367 = vld [vmem:[%s609 + $0xef0] sm:$0xff]
        %v3368 = vld [vmem:[%s609 + $0xef8] sm:$0xff]
        %v3369 = vld [vmem:[%s609 + $0xf00] sm:$0xff]
        %v3370 = vld [vmem:[%s609 + $0xf08] sm:$0xff]
        %v3371 = vld [vmem:[%s609 + $0xf10] sm:$0xff]
        %v3372 = vld [vmem:[%s609 + $0xf18] sm:$0xff]
        %v3373 = vld [vmem:[%s609 + $0xf20] sm:$0xff]
        %v3374 = vld [vmem:[%s609 + $0xf28] sm:$0xff]
        %v3375 = vld [vmem:[%s609 + $0xf30] sm:$0xff]
        %v3376 = vld [vmem:[%s609 + $0xf38] sm:$0xff]
        %v3377 = vld [vmem:[%s609 + $0xf40] sm:$0xff]
        %v3378 = vld [vmem:[%s609 + $0xf48] sm:$0xff]
        %v3379 = vld [vmem:[%s609 + $0xf50] sm:$0xff]
        %v3380 = vld [vmem:[%s609 + $0xf58] sm:$0xff]
        %v3381 = vld [vmem:[%s609 + $0xf60] sm:$0xff]
        %v3382 = vld [vmem:[%s609 + $0xf68] sm:$0xff]
        %v3383 = vld [vmem:[%s609 + $0xf70] sm:$0xff]
        %v3384 = vld [vmem:[%s609 + $0xf78] sm:$0xff]
        %v3385 = vld [vmem:[%s609 + $0xf80] sm:$0xff]
        %v3386 = vld [vmem:[%s609 + $0xf88] sm:$0xff]
        %v3387 = vld [vmem:[%s609 + $0xf90] sm:$0xff]
        %v3388 = vld [vmem:[%s609 + $0xf98] sm:$0xff]
        %v3389 = vld [vmem:[%s609 + $0xfa0] sm:$0xff]
        %v3390 = vld [vmem:[%s609 + $0xfa8] sm:$0xff]
        %v3391 = vld [vmem:[%s609 + $0xfb0] sm:$0xff]
        %v3392 = vld [vmem:[%s609 + $0xfb8] sm:$0xff]
        %v3393 = vld [vmem:[%s609 + $0xfc0] sm:$0xff]
        %v3394 = vld [vmem:[%s609 + $0xfc8] sm:$0xff]
        %v3395 = vld [vmem:[%s609 + $0xfd0] sm:$0xff]
        %v3396 = vld [vmem:[%s609 + $0xfd8] sm:$0xff]
        %v3397 = vld [vmem:[%s609 + $0xfe0] sm:$0xff]
        %v3398 = vld [vmem:[%s609 + $0xfe8] sm:$0xff]
        %v3399 = vld [vmem:[%s609 + $0xff0] sm:$0xff]
        %v3400 = vld [vmem:[%s609 + $0xff8] sm:$0xff]
        %v3401 = vld [vmem:[%s609 + $0x1000] sm:$0xff]
        %v3402 = vld [vmem:[%s609 + $0x1008] sm:$0xff]
        %v3403 = vld [vmem:[%s609 + $0x1010] sm:$0xff]
        %v3404 = vld [vmem:[%s609 + $0x1018] sm:$0xff]
        %v3405 = vld [vmem:[%s609 + $0x1020] sm:$0xff]
        %v3406 = vld [vmem:[%s609 + $0x1028] sm:$0xff]
        %v3407 = vld [vmem:[%s609 + $0x1030] sm:$0xff]
        %v3408 = vld [vmem:[%s609 + $0x1038] sm:$0xff]
        %v3409 = vld [vmem:[%s609 + $0x1040] sm:$0xff]
        %v3410 = vld [vmem:[%s609 + $0x1048] sm:$0xff]
        %v3411 = vld [vmem:[%s609 + $0x1050] sm:$0xff]
        %v3412 = vld [vmem:[%s609 + $0x1058] sm:$0xff]
        %v3413 = vld [vmem:[%s609 + $0x1060] sm:$0xff]
        %v3414 = vld [vmem:[%s609 + $0x1068] sm:$0xff]
        %v3415 = vld [vmem:[%s609 + $0x1070] sm:$0xff]
        %v3416 = vld [vmem:[%s609 + $0x1078] sm:$0xff]
        %v3417 = vld [vmem:[%s609 + $0x1080] sm:$0xff]
        %v3418 = vld [vmem:[%s609 + $0x1088] sm:$0xff]
        %v3419 = vld [vmem:[%s609 + $0x1090] sm:$0xff]
        %v3420 = vld [vmem:[%s609 + $0x1098] sm:$0xff]
        %v3421 = vld [vmem:[%s609 + $0x10a0] sm:$0xff]
        %v3422 = vld [vmem:[%s609 + $0x10a8] sm:$0xff]
        %v3423 = vld [vmem:[%s609 + $0x10b0] sm:$0xff]
        %v3424 = vld [vmem:[%s609 + $0x10b8] sm:$0xff]
        %v3425 = vld [vmem:[%s609 + $0x10c0] sm:$0xff]
        %v3426 = vld [vmem:[%s609 + $0x10c8] sm:$0xff]
        %v3427 = vld [vmem:[%s609 + $0x10d0] sm:$0xff]
        %v3428 = vld [vmem:[%s609 + $0x10d8] sm:$0xff]
        %v3429 = vld [vmem:[%s609 + $0x10e0] sm:$0xff]
        %v3430 = vld [vmem:[%s609 + $0x10e8] sm:$0xff]
        %v3431 = vld [vmem:[%s609 + $0x10f0] sm:$0xff]
        %v3432 = vld [vmem:[%s609 + $0x10f8] sm:$0xff]
        %v3433 = vld [vmem:[%s609 + $0x1100] sm:$0xff]
        %v3434 = vld [vmem:[%s609 + $0x1108] sm:$0xff]
        %v3435 = vld [vmem:[%s609 + $0x1110] sm:$0xff]
        %v3436 = vld [vmem:[%s609 + $0x1118] sm:$0xff]
        %v3437 = vld [vmem:[%s609 + $0x1120] sm:$0xff]
        %v3438 = vld [vmem:[%s609 + $0x1128] sm:$0xff]
        %v3439 = vld [vmem:[%s609 + $0x1130] sm:$0xff]
        %v3440 = vld [vmem:[%s609 + $0x1138] sm:$0xff]
        %v3441 = vld [vmem:[%s609 + $0x1140] sm:$0xff]
        %v3442 = vld [vmem:[%s609 + $0x1148] sm:$0xff]
        %v3443 = vld [vmem:[%s609 + $0x1150] sm:$0xff]
        %v3444 = vld [vmem:[%s609 + $0x1158] sm:$0xff]
        %v3445 = vld [vmem:[%s609 + $0x1160] sm:$0xff]
        %v3446 = vld [vmem:[%s609 + $0x1168] sm:$0xff]
        %v3447 = vld [vmem:[%s609 + $0x1170] sm:$0xff]
        %v3448 = vld [vmem:[%s609 + $0x1178] sm:$0xff]
        %v3449 = vld [vmem:[%s609 + $0x1180] sm:$0xff]
        %v3450 = vld [vmem:[%s609 + $0x1188] sm:$0xff]
        %v3451 = vld [vmem:[%s609 + $0x1190] sm:$0xff]
        %v3452 = vld [vmem:[%s609 + $0x1198] sm:$0xff]
        %v3453 = vld [vmem:[%s609 + $0x11a0] sm:$0xff]
        %v3454 = vld [vmem:[%s609 + $0x11a8] sm:$0xff]
        %v3455 = vld [vmem:[%s609 + $0x11b0] sm:$0xff]
        %v3456 = vld [vmem:[%s609 + $0x11b8] sm:$0xff]
        %v3457 = vld [vmem:[%s609 + $0x11c0] sm:$0xff]
        %v3458 = vld [vmem:[%s609 + $0x11c8] sm:$0xff]
        %v3459 = vld [vmem:[%s609 + $0x11d0] sm:$0xff]
        %v3460 = vld [vmem:[%s609 + $0x11d8] sm:$0xff]
        %v3461 = vld [vmem:[%s609 + $0x11e0] sm:$0xff]
        %v3462 = vld [vmem:[%s609 + $0x11e8] sm:$0xff]
        %v3463 = vld [vmem:[%s609 + $0x11f0] sm:$0xff]
        %v3464 = vld [vmem:[%s609 + $0x11f8] sm:$0xff]
        %v3465 = vld [vmem:[%s609 + $0x1200] sm:$0xff]
        %v3466 = vld [vmem:[%s609 + $0x1208] sm:$0xff]
        %v3467 = vld [vmem:[%s609 + $0x1210] sm:$0xff]
        %v3468 = vld [vmem:[%s609 + $0x1218] sm:$0xff]
        %v3469 = vld [vmem:[%s609 + $0x1220] sm:$0xff]
        %v3470 = vld [vmem:[%s609 + $0x1228] sm:$0xff]
        %v3471 = vld [vmem:[%s609 + $0x1230] sm:$0xff]
        %v3472 = vld [vmem:[%s609 + $0x1238] sm:$0xff]
        %v3473 = vld [vmem:[%s609 + $0x1240] sm:$0xff]
        %v3474 = vld [vmem:[%s609 + $0x1248] sm:$0xff]
        %v3475 = vld [vmem:[%s609 + $0x1250] sm:$0xff]
        %v3476 = vld [vmem:[%s609 + $0x1258] sm:$0xff]
        %v3477 = vld [vmem:[%s609 + $0x1260] sm:$0xff]
        %v3478 = vld [vmem:[%s609 + $0x1268] sm:$0xff]
        %v3479 = vld [vmem:[%s609 + $0x1270] sm:$0xff]
        %v3480 = vld [vmem:[%s609 + $0x1278] sm:$0xff]
        %v3481 = vld [vmem:[%s609 + $0x1280] sm:$0xff]
        %v3482 = vld [vmem:[%s609 + $0x1288] sm:$0xff]
        %v3483 = vld [vmem:[%s609 + $0x1290] sm:$0xff]
        %v3484 = vld [vmem:[%s609 + $0x1298] sm:$0xff]
        %v3485 = vld [vmem:[%s609 + $0x12a0] sm:$0xff]
        %v3486 = vld [vmem:[%s609 + $0x12a8] sm:$0xff]
        %v3487 = vld [vmem:[%s609 + $0x12b0] sm:$0xff]
        %v3488 = vld [vmem:[%s609 + $0x12b8] sm:$0xff]
        %v3489 = vld [vmem:[%s609 + $0x12c0] sm:$0xff]
        %v3490 = vld [vmem:[%s609 + $0x12c8] sm:$0xff]
        %v3491 = vld [vmem:[%s609 + $0x12d0] sm:$0xff]
        %v3492 = vld [vmem:[%s609 + $0x12d8] sm:$0xff]
        %v3493 = vld [vmem:[%s609 + $0x12e0] sm:$0xff]
        %v3494 = vld [vmem:[%s609 + $0x12e8] sm:$0xff]
        %v3495 = vld [vmem:[%s609 + $0x12f0] sm:$0xff]
        %v3496 = vld [vmem:[%s609 + $0x12f8] sm:$0xff]
        %v3497 = vld [vmem:[%s609 + $0x1300] sm:$0xff]
        %v3498 = vld [vmem:[%s609 + $0x1308] sm:$0xff]
        %v3499 = vld [vmem:[%s609 + $0x1310] sm:$0xff]
        %v3500 = vld [vmem:[%s609 + $0x1318] sm:$0xff]
        %v3501 = vld [vmem:[%s609 + $0x1320] sm:$0xff]
        %v3502 = vld [vmem:[%s609 + $0x1328] sm:$0xff]
        %v3503 = vld [vmem:[%s609 + $0x1330] sm:$0xff]
        %v3504 = vld [vmem:[%s609 + $0x1338] sm:$0xff]
        %v3505 = vld [vmem:[%s609 + $0x1340] sm:$0xff]
        %v3506 = vld [vmem:[%s609 + $0x1348] sm:$0xff]
        %v3507 = vld [vmem:[%s609 + $0x1350] sm:$0xff]
        %v3508 = vld [vmem:[%s609 + $0x1358] sm:$0xff]
        %v3509 = vld [vmem:[%s609 + $0x1360] sm:$0xff]
        %v3510 = vld [vmem:[%s609 + $0x1368] sm:$0xff]
        %v3511 = vld [vmem:[%s609 + $0x1370] sm:$0xff]
        %v3512 = vld [vmem:[%s609 + $0x1378] sm:$0xff]
        %v3513 = vld [vmem:[%s609 + $0x1380] sm:$0xff]
        %v3514 = vld [vmem:[%s609 + $0x1388] sm:$0xff]
        %v3515 = vld [vmem:[%s609 + $0x1390] sm:$0xff]
        %v3516 = vld [vmem:[%s609 + $0x1398] sm:$0xff]
        %v3517 = vld [vmem:[%s609 + $0x13a0] sm:$0xff]
        %v3518 = vld [vmem:[%s609 + $0x13a8] sm:$0xff]
        %v3519 = vld [vmem:[%s609 + $0x13b0] sm:$0xff]
        %v3520 = vld [vmem:[%s609 + $0x13b8] sm:$0xff]
        %v3521 = vld [vmem:[%s609 + $0x13c0] sm:$0xff]
        %v3522 = vld [vmem:[%s609 + $0x13c8] sm:$0xff]
        %v3523 = vld [vmem:[%s609 + $0x13d0] sm:$0xff]
        %v3524 = vld [vmem:[%s609 + $0x13d8] sm:$0xff]
        %v3525 = vld [vmem:[%s609 + $0x13e0] sm:$0xff]
        %v3526 = vld [vmem:[%s609 + $0x13e8] sm:$0xff]
        %v3527 = vld [vmem:[%s609 + $0x13f0] sm:$0xff]
        %v3528 = vld [vmem:[%s609 + $0x13f8] sm:$0xff]
        %v3529 = vld [vmem:[%s609 + $0x1400] sm:$0xff]
        %v3530 = vld [vmem:[%s609 + $0x1408] sm:$0xff]
        %v3531 = vld [vmem:[%s609 + $0x1410] sm:$0xff]
        %v3532 = vld [vmem:[%s609 + $0x1418] sm:$0xff]
        %v3533 = vld [vmem:[%s609 + $0x1420] sm:$0xff]
        %v3534 = vld [vmem:[%s609 + $0x1428] sm:$0xff]
        %v3535 = vld [vmem:[%s609 + $0x1430] sm:$0xff]
        %v3536 = vld [vmem:[%s609 + $0x1438] sm:$0xff]
        %v3537 = vld [vmem:[%s609 + $0x1440] sm:$0xff]
        %v3538 = vld [vmem:[%s609 + $0x1448] sm:$0xff]
        %v3539 = vld [vmem:[%s609 + $0x1450] sm:$0xff]
        %v3540 = vld [vmem:[%s609 + $0x1458] sm:$0xff]
        %v3541 = vld [vmem:[%s609 + $0x1460] sm:$0xff]
        %v3542 = vld [vmem:[%s609 + $0x1468] sm:$0xff]
        %v3543 = vld [vmem:[%s609 + $0x1470] sm:$0xff]
        %v3544 = vld [vmem:[%s609 + $0x1478] sm:$0xff]
        %v3545 = vld [vmem:[%s609 + $0x1480] sm:$0xff]
        %v3546 = vld [vmem:[%s609 + $0x1488] sm:$0xff]
        %v3547 = vld [vmem:[%s609 + $0x1490] sm:$0xff]
        %v3548 = vld [vmem:[%s609 + $0x1498] sm:$0xff]
        %v3549 = vld [vmem:[%s609 + $0x14a0] sm:$0xff]
        %v3550 = vld [vmem:[%s609 + $0x14a8] sm:$0xff]
        %v3551 = vld [vmem:[%s609 + $0x14b0] sm:$0xff]
        %v3552 = vld [vmem:[%s609 + $0x14b8] sm:$0xff]
        %v3553 = vld [vmem:[%s609 + $0x14c0] sm:$0xff]
        %v3554 = vld [vmem:[%s609 + $0x14c8] sm:$0xff]
        %v3555 = vld [vmem:[%s609 + $0x14d0] sm:$0xff]
        %v3556 = vld [vmem:[%s609 + $0x14d8] sm:$0xff]
        %v3557 = vld [vmem:[%s609 + $0x14e0] sm:$0xff]
        %v3558 = vld [vmem:[%s609 + $0x14e8] sm:$0xff]
        %v3559 = vld [vmem:[%s609 + $0x14f0] sm:$0xff]
        %v3560 = vld [vmem:[%s609 + $0x14f8] sm:$0xff]
        %v3561 = vld [vmem:[%s609 + $0x1500] sm:$0xff]
        %v3562 = vld [vmem:[%s609 + $0x1508] sm:$0xff]
        %v3563 = vld [vmem:[%s609 + $0x1510] sm:$0xff]
        %v3564 = vld [vmem:[%s609 + $0x1518] sm:$0xff]
        %v3565 = vld [vmem:[%s609 + $0x1520] sm:$0xff]
        %v3566 = vld [vmem:[%s609 + $0x1528] sm:$0xff]
        %v3567 = vld [vmem:[%s609 + $0x1530] sm:$0xff]
        %v3568 = vld [vmem:[%s609 + $0x1538] sm:$0xff]
        %v3569 = vld [vmem:[%s609 + $0x1540] sm:$0xff]
        %v3570 = vld [vmem:[%s609 + $0x1548] sm:$0xff]
        %v3571 = vld [vmem:[%s609 + $0x1550] sm:$0xff]
        %v3572 = vld [vmem:[%s609 + $0x1558] sm:$0xff]
        %v3573 = vld [vmem:[%s609 + $0x1560] sm:$0xff]
        %v3574 = vld [vmem:[%s609 + $0x1568] sm:$0xff]
        %v3575 = vld [vmem:[%s609 + $0x1570] sm:$0xff]
        %v3576 = vld [vmem:[%s609 + $0x1578] sm:$0xff]
        %v3577 = vld [vmem:[%s609 + $0x1580] sm:$0xff]
        %v3578 = vld [vmem:[%s609 + $0x1588] sm:$0xff]
        %v3579 = vld [vmem:[%s609 + $0x1590] sm:$0xff]
        %v3580 = vld [vmem:[%s609 + $0x1598] sm:$0xff]
        %v3581 = vld [vmem:[%s609 + $0x15a0] sm:$0xff]
        %v3582 = vld [vmem:[%s609 + $0x15a8] sm:$0xff]
        %v3583 = vld [vmem:[%s609 + $0x15b0] sm:$0xff]
        %v3584 = vld [vmem:[%s609 + $0x15b8] sm:$0xff]
        %v3585 = vld [vmem:[%s609 + $0x15c0] sm:$0xff]
        %v3586 = vld [vmem:[%s609 + $0x15c8] sm:$0xff]
        %v3587 = vld [vmem:[%s609 + $0x15d0] sm:$0xff]
        %v3588 = vld [vmem:[%s609 + $0x15d8] sm:$0xff]
        %v3589 = vld [vmem:[%s609 + $0x15e0] sm:$0xff]
        %v3590 = vld [vmem:[%s609 + $0x15e8] sm:$0xff]
        %v3591 = vld [vmem:[%s609 + $0x15f0] sm:$0xff]
        %v3592 = vld [vmem:[%s609 + $0x15f8] sm:$0xff]
        %v3593 = vld [vmem:[%s609 + $0x1600] sm:$0xff]
        %v3594 = vld [vmem:[%s609 + $0x1608] sm:$0xff]
        %v3595 = vld [vmem:[%s609 + $0x1610] sm:$0xff]
        %v3596 = vld [vmem:[%s609 + $0x1618] sm:$0xff]
        %v3597 = vld [vmem:[%s609 + $0x1620] sm:$0xff]
        %v3598 = vld [vmem:[%s609 + $0x1628] sm:$0xff]
        %v3599 = vld [vmem:[%s609 + $0x1630] sm:$0xff]
        %v3600 = vld [vmem:[%s609 + $0x1638] sm:$0xff]
        %v3601 = vld [vmem:[%s609 + $0x1640] sm:$0xff]
        %v3602 = vld [vmem:[%s609 + $0x1648] sm:$0xff]
        %v3603 = vld [vmem:[%s609 + $0x1650] sm:$0xff]
        %v3604 = vld [vmem:[%s609 + $0x1658] sm:$0xff]
        %v3605 = vld [vmem:[%s609 + $0x1660] sm:$0xff]
        %v3606 = vld [vmem:[%s609 + $0x1668] sm:$0xff]
        %v3607 = vld [vmem:[%s609 + $0x1670] sm:$0xff]
        %v3608 = vld [vmem:[%s609 + $0x1678] sm:$0xff]
        %v3609 = vld [vmem:[%s609 + $0x1680] sm:$0xff]
        %v3610 = vld [vmem:[%s609 + $0x1688] sm:$0xff]
        %v3611 = vld [vmem:[%s609 + $0x1690] sm:$0xff]
        %v3612 = vld [vmem:[%s609 + $0x1698] sm:$0xff]
        %v3613 = vld [vmem:[%s609 + $0x16a0] sm:$0xff]
        %v3614 = vld [vmem:[%s609 + $0x16a8] sm:$0xff]
        %v3615 = vld [vmem:[%s609 + $0x16b0] sm:$0xff]
        %v3616 = vld [vmem:[%s609 + $0x16b8] sm:$0xff]
        %v3617 = vld [vmem:[%s609 + $0x16c0] sm:$0xff]
        %v3618 = vld [vmem:[%s609 + $0x16c8] sm:$0xff]
        %v3619 = vld [vmem:[%s609 + $0x16d0] sm:$0xff]
        %v3620 = vld [vmem:[%s609 + $0x16d8] sm:$0xff]
        %v3621 = vld [vmem:[%s609 + $0x16e0] sm:$0xff]
        %v3622 = vld [vmem:[%s609 + $0x16e8] sm:$0xff]
        %v3623 = vld [vmem:[%s609 + $0x16f0] sm:$0xff]
        %v3624 = vld [vmem:[%s609 + $0x16f8] sm:$0xff]
        %v3625 = vld [vmem:[%s609 + $0x1700] sm:$0xff]
        %v3626 = vld [vmem:[%s609 + $0x1708] sm:$0xff]
        %v3627 = vld [vmem:[%s609 + $0x1710] sm:$0xff]
        %v3628 = vld [vmem:[%s609 + $0x1718] sm:$0xff]
        %v3629 = vld [vmem:[%s609 + $0x1720] sm:$0xff]
        %v3630 = vld [vmem:[%s609 + $0x1728] sm:$0xff]
        %v3631 = vld [vmem:[%s609 + $0x1730] sm:$0xff]
        %v3632 = vld [vmem:[%s609 + $0x1738] sm:$0xff]
        %v3633 = vld [vmem:[%s609 + $0x1740] sm:$0xff]
        %v3634 = vld [vmem:[%s609 + $0x1748] sm:$0xff]
        %v3635 = vld [vmem:[%s609 + $0x1750] sm:$0xff]
        %v3636 = vld [vmem:[%s609 + $0x1758] sm:$0xff]
        %v3637 = vld [vmem:[%s609 + $0x1760] sm:$0xff]
        %v3638 = vld [vmem:[%s609 + $0x1768] sm:$0xff]
        %v3639 = vld [vmem:[%s609 + $0x1770] sm:$0xff]
        %v3640 = vld [vmem:[%s609 + $0x1778] sm:$0xff]
        %v3641 = vld [vmem:[%s609 + $0x1780] sm:$0xff]
        %v3642 = vld [vmem:[%s609 + $0x1788] sm:$0xff]
        %v3643 = vld [vmem:[%s609 + $0x1790] sm:$0xff]
        %v3644 = vld [vmem:[%s609 + $0x1798] sm:$0xff]
        %v3645 = vld [vmem:[%s609 + $0x17a0] sm:$0xff]
        %v3646 = vld [vmem:[%s609 + $0x17a8] sm:$0xff]
        %v3647 = vld [vmem:[%s609 + $0x17b0] sm:$0xff]
        %v3648 = vld [vmem:[%s609 + $0x17b8] sm:$0xff]
        %v3649 = vld [vmem:[%s609 + $0x17c0] sm:$0xff]
        %v3650 = vld [vmem:[%s609 + $0x17c8] sm:$0xff]
        %v3651 = vld [vmem:[%s609 + $0x17d0] sm:$0xff]
        %v3652 = vld [vmem:[%s609 + $0x17d8] sm:$0xff]
        %v3653 = vld [vmem:[%s609 + $0x17e0] sm:$0xff]
        %v3654 = vld [vmem:[%s609 + $0x17e8] sm:$0xff]
        %v3655 = vld [vmem:[%s609 + $0x17f0] sm:$0xff]
        %v3656 = vld [vmem:[%s609 + $0x17f8] sm:$0xff]
        %v3657 = vld [vmem:[%s609 + $0x1800] sm:$0xff]
        %v3658 = vld [vmem:[%s609 + $0x1808] sm:$0xff]
        %v3659 = vld [vmem:[%s609 + $0x1810] sm:$0xff]
        %v3660 = vld [vmem:[%s609 + $0x1818] sm:$0xff]
        %v3661 = vld [vmem:[%s609 + $0x1820] sm:$0xff]
        %v3662 = vld [vmem:[%s609 + $0x1828] sm:$0xff]
        %v3663 = vld [vmem:[%s609 + $0x1830] sm:$0xff]
        %v3664 = vld [vmem:[%s609 + $0x1838] sm:$0xff]
        %v3665 = vld [vmem:[%s609 + $0x1840] sm:$0xff]
        %v3666 = vld [vmem:[%s609 + $0x1848] sm:$0xff]
        %v3667 = vld [vmem:[%s609 + $0x1850] sm:$0xff]
        %v3668 = vld [vmem:[%s609 + $0x1858] sm:$0xff]
        %v3669 = vld [vmem:[%s609 + $0x1860] sm:$0xff]
        %v3670 = vld [vmem:[%s609 + $0x1868] sm:$0xff]
        %v3671 = vld [vmem:[%s609 + $0x1870] sm:$0xff]
        %v3672 = vld [vmem:[%s609 + $0x1878] sm:$0xff]
        %v3673 = vld [vmem:[%s609 + $0x1880] sm:$0xff]
        %v3674 = vld [vmem:[%s609 + $0x1888] sm:$0xff]
        %v3675 = vld [vmem:[%s609 + $0x1890] sm:$0xff]
        %v3676 = vld [vmem:[%s609 + $0x1898] sm:$0xff]
        %v3677 = vld [vmem:[%s609 + $0x18a0] sm:$0xff]
        %v3678 = vld [vmem:[%s609 + $0x18a8] sm:$0xff]
        %v3679 = vld [vmem:[%s609 + $0x18b0] sm:$0xff]
        %v3680 = vld [vmem:[%s609 + $0x18b8] sm:$0xff]
        %v3681 = vld [vmem:[%s609 + $0x18c0] sm:$0xff]
        %v3682 = vld [vmem:[%s609 + $0x18c8] sm:$0xff]
        %v3683 = vld [vmem:[%s609 + $0x18d0] sm:$0xff]
        %v3684 = vld [vmem:[%s609 + $0x18d8] sm:$0xff]
        %v3685 = vld [vmem:[%s609 + $0x18e0] sm:$0xff]
        %v3686 = vld [vmem:[%s609 + $0x18e8] sm:$0xff]
        %v3687 = vld [vmem:[%s609 + $0x18f0] sm:$0xff]
        %v3688 = vld [vmem:[%s609 + $0x18f8] sm:$0xff]
        %v3689 = vld [vmem:[%s609 + $0x1900] sm:$0xff]
        %v3690 = vld [vmem:[%s609 + $0x1908] sm:$0xff]
        %v3691 = vld [vmem:[%s609 + $0x1910] sm:$0xff]
        %v3692 = vld [vmem:[%s609 + $0x1918] sm:$0xff]
        %v3693 = vld [vmem:[%s609 + $0x1920] sm:$0xff]
        %v3694 = vld [vmem:[%s609 + $0x1928] sm:$0xff]
        %v3695 = vld [vmem:[%s609 + $0x1930] sm:$0xff]
        %v3696 = vld [vmem:[%s609 + $0x1938] sm:$0xff]
        %v3697 = vld [vmem:[%s609 + $0x1940] sm:$0xff]
        %v3698 = vld [vmem:[%s609 + $0x1948] sm:$0xff]
        %v3699 = vld [vmem:[%s609 + $0x1950] sm:$0xff]
        %v3700 = vld [vmem:[%s609 + $0x1958] sm:$0xff]
        %v3701 = vld [vmem:[%s609 + $0x1960] sm:$0xff]
        %v3702 = vld [vmem:[%s609 + $0x1968] sm:$0xff]
        %v3703 = vld [vmem:[%s609 + $0x1970] sm:$0xff]
        %v3704 = vld [vmem:[%s609 + $0x1978] sm:$0xff]
        %v3705 = vld [vmem:[%s609 + $0x1980] sm:$0xff]
        %v3706 = vld [vmem:[%s609 + $0x1988] sm:$0xff]
        %v3707 = vld [vmem:[%s609 + $0x1990] sm:$0xff]
        %v3708 = vld [vmem:[%s609 + $0x1998] sm:$0xff]
        %v3709 = vld [vmem:[%s609 + $0x19a0] sm:$0xff]
        %v3710 = vld [vmem:[%s609 + $0x19a8] sm:$0xff]
        %v3711 = vld [vmem:[%s609 + $0x19b0] sm:$0xff]
        %v3712 = vld [vmem:[%s609 + $0x19b8] sm:$0xff]
        %v3713 = vld [vmem:[%s609 + $0x19c0] sm:$0xff]
        %v3714 = vld [vmem:[%s609 + $0x19c8] sm:$0xff]
        %v3715 = vld [vmem:[%s609 + $0x19d0] sm:$0xff]
        %v3716 = vld [vmem:[%s609 + $0x19d8] sm:$0xff]
        %v3717 = vld [vmem:[%s609 + $0x19e0] sm:$0xff]
        %v3718 = vld [vmem:[%s609 + $0x19e8] sm:$0xff]
        %v3719 = vld [vmem:[%s609 + $0x19f0] sm:$0xff]
        %v3720 = vld [vmem:[%s609 + $0x19f8] sm:$0xff]
        %v3721 = vld [vmem:[%s609 + $0x1a00] sm:$0xff]
        %v3722 = vld [vmem:[%s609 + $0x1a08] sm:$0xff]
        %v3723 = vld [vmem:[%s609 + $0x1a10] sm:$0xff]
        %v3724 = vld [vmem:[%s609 + $0x1a18] sm:$0xff]
        %v3725 = vld [vmem:[%s609 + $0x1a20] sm:$0xff]
        %v3726 = vld [vmem:[%s609 + $0x1a28] sm:$0xff]
        %v3727 = vld [vmem:[%s609 + $0x1a30] sm:$0xff]
        %v3728 = vld [vmem:[%s609 + $0x1a38] sm:$0xff]
        %v3729 = vld [vmem:[%s609 + $0x1a40] sm:$0xff]
        %v3730 = vld [vmem:[%s609 + $0x1a48] sm:$0xff]
        %v3731 = vld [vmem:[%s609 + $0x1a50] sm:$0xff]
        %v3732 = vld [vmem:[%s609 + $0x1a58] sm:$0xff]
        %v3733 = vld [vmem:[%s609 + $0x1a60] sm:$0xff]
        %v3734 = vld [vmem:[%s609 + $0x1a68] sm:$0xff]
        %v3735 = vld [vmem:[%s609 + $0x1a70] sm:$0xff]
        %v3736 = vld [vmem:[%s609 + $0x1a78] sm:$0xff]
        %v3737 = vld [vmem:[%s609 + $0x1a80] sm:$0xff]
        %v3738 = vld [vmem:[%s609 + $0x1a88] sm:$0xff]
        %v3739 = vld [vmem:[%s609 + $0x1a90] sm:$0xff]
        %v3740 = vld [vmem:[%s609 + $0x1a98] sm:$0xff]
        %v3741 = vld [vmem:[%s609 + $0x1aa0] sm:$0xff]
        %v3742 = vld [vmem:[%s609 + $0x1aa8] sm:$0xff]
        %v3743 = vld [vmem:[%s609 + $0x1ab0] sm:$0xff]
        %v3744 = vld [vmem:[%s609 + $0x1ab8] sm:$0xff]
        %v3745 = vld [vmem:[%s609 + $0x1ac0] sm:$0xff]
        %v3746 = vld [vmem:[%s609 + $0x1ac8] sm:$0xff]
        %v3747 = vld [vmem:[%s609 + $0x1ad0] sm:$0xff]
        %v3748 = vld [vmem:[%s609 + $0x1ad8] sm:$0xff]
        %v3749 = vld [vmem:[%s609 + $0x1ae0] sm:$0xff]
        %v3750 = vld [vmem:[%s609 + $0x1ae8] sm:$0xff]
        %v3751 = vld [vmem:[%s609 + $0x1af0] sm:$0xff]
        %v3752 = vld [vmem:[%s609 + $0x1af8] sm:$0xff]
        %v3753 = vld [vmem:[%s609 + $0x1b00] sm:$0xff]
        %v3754 = vld [vmem:[%s609 + $0x1b08] sm:$0xff]
        %v3755 = vld [vmem:[%s609 + $0x1b10] sm:$0xff]
        %v3756 = vld [vmem:[%s609 + $0x1b18] sm:$0xff]
        %v3757 = vld [vmem:[%s609 + $0x1b20] sm:$0xff]
        %v3758 = vld [vmem:[%s609 + $0x1b28] sm:$0xff]
        %v3759 = vld [vmem:[%s609 + $0x1b30] sm:$0xff]
        %v3760 = vld [vmem:[%s609 + $0x1b38] sm:$0xff]
        %v3761 = vld [vmem:[%s609 + $0x1b40] sm:$0xff]
        %v3762 = vld [vmem:[%s609 + $0x1b48] sm:$0xff]
        %v3763 = vld [vmem:[%s609 + $0x1b50] sm:$0xff]
        %v3764 = vld [vmem:[%s609 + $0x1b58] sm:$0xff]
        %v3765 = vld [vmem:[%s609 + $0x1b60] sm:$0xff]
        %v3766 = vld [vmem:[%s609 + $0x1b68] sm:$0xff]
        %v3767 = vld [vmem:[%s609 + $0x1b70] sm:$0xff]
        %v3768 = vld [vmem:[%s609 + $0x1b78] sm:$0xff]
        %v3769 = vld [vmem:[%s609 + $0x1b80] sm:$0xff]
        %v3770 = vld [vmem:[%s609 + $0x1b88] sm:$0xff]
        %v3771 = vld [vmem:[%s609 + $0x1b90] sm:$0xff]
        %v3772 = vld [vmem:[%s609 + $0x1b98] sm:$0xff]
        %v3773 = vld [vmem:[%s609 + $0x1ba0] sm:$0xff]
        %v3774 = vld [vmem:[%s609 + $0x1ba8] sm:$0xff]
        %v3775 = vld [vmem:[%s609 + $0x1bb0] sm:$0xff]
        %v3776 = vld [vmem:[%s609 + $0x1bb8] sm:$0xff]
        %v3777 = vld [vmem:[%s609 + $0x1bc0] sm:$0xff]
        %v3778 = vld [vmem:[%s609 + $0x1bc8] sm:$0xff]
        %v3779 = vld [vmem:[%s609 + $0x1bd0] sm:$0xff]
        %v3780 = vld [vmem:[%s609 + $0x1bd8] sm:$0xff]
        %v3781 = vld [vmem:[%s609 + $0x1be0] sm:$0xff]
        %v3782 = vld [vmem:[%s609 + $0x1be8] sm:$0xff]
        %v3783 = vld [vmem:[%s609 + $0x1bf0] sm:$0xff]
        %v3784 = vld [vmem:[%s609 + $0x1bf8] sm:$0xff]
        %v3785 = vld [vmem:[%s609 + $0x1c00] sm:$0xff]
        %v3786 = vld [vmem:[%s609 + $0x1c08] sm:$0xff]
        %v3787 = vld [vmem:[%s609 + $0x1c10] sm:$0xff]
        %v3788 = vld [vmem:[%s609 + $0x1c18] sm:$0xff]
        %v3789 = vld [vmem:[%s609 + $0x1c20] sm:$0xff]
        %v3790 = vld [vmem:[%s609 + $0x1c28] sm:$0xff]
        %v3791 = vld [vmem:[%s609 + $0x1c30] sm:$0xff]
        %v3792 = vld [vmem:[%s609 + $0x1c38] sm:$0xff]
        %v3793 = vld [vmem:[%s609 + $0x1c40] sm:$0xff]
        %v3794 = vld [vmem:[%s609 + $0x1c48] sm:$0xff]
        %v3795 = vld [vmem:[%s609 + $0x1c50] sm:$0xff]
        %v3796 = vld [vmem:[%s609 + $0x1c58] sm:$0xff]
        %v3797 = vld [vmem:[%s609 + $0x1c60] sm:$0xff]
        %v3798 = vld [vmem:[%s609 + $0x1c68] sm:$0xff]
        %v3799 = vld [vmem:[%s609 + $0x1c70] sm:$0xff]
        %v3800 = vld [vmem:[%s609 + $0x1c78] sm:$0xff]
        %v3801 = vld [vmem:[%s609 + $0x1c80] sm:$0xff]
        %v3802 = vld [vmem:[%s609 + $0x1c88] sm:$0xff]
        %v3803 = vld [vmem:[%s609 + $0x1c90] sm:$0xff]
        %v3804 = vld [vmem:[%s609 + $0x1c98] sm:$0xff]
        %v3805 = vld [vmem:[%s609 + $0x1ca0] sm:$0xff]
        %v3806 = vld [vmem:[%s609 + $0x1ca8] sm:$0xff]
        %v3807 = vld [vmem:[%s609 + $0x1cb0] sm:$0xff]
        %v3808 = vld [vmem:[%s609 + $0x1cb8] sm:$0xff]
        %v3809 = vld [vmem:[%s609 + $0x1cc0] sm:$0xff]
        %v3810 = vld [vmem:[%s609 + $0x1cc8] sm:$0xff]
        %v3811 = vld [vmem:[%s609 + $0x1cd0] sm:$0xff]
        %v3812 = vld [vmem:[%s609 + $0x1cd8] sm:$0xff]
        %v3813 = vld [vmem:[%s609 + $0x1ce0] sm:$0xff]
        %v3814 = vld [vmem:[%s609 + $0x1ce8] sm:$0xff]
        %v3815 = vld [vmem:[%s609 + $0x1cf0] sm:$0xff]
        %v3816 = vld [vmem:[%s609 + $0x1cf8] sm:$0xff]
        %v3817 = vld [vmem:[%s609 + $0x1d00] sm:$0xff]
        %v3818 = vld [vmem:[%s609 + $0x1d08] sm:$0xff]
        %v3819 = vld [vmem:[%s609 + $0x1d10] sm:$0xff]
        %v3820 = vld [vmem:[%s609 + $0x1d18] sm:$0xff]
        %v3821 = vld [vmem:[%s609 + $0x1d20] sm:$0xff]
        %v3822 = vld [vmem:[%s609 + $0x1d28] sm:$0xff]
        %v3823 = vld [vmem:[%s609 + $0x1d30] sm:$0xff]
        %v3824 = vld [vmem:[%s609 + $0x1d38] sm:$0xff]
        %v3825 = vld [vmem:[%s609 + $0x1d40] sm:$0xff]
        %v3826 = vld [vmem:[%s609 + $0x1d48] sm:$0xff]
        %v3827 = vld [vmem:[%s609 + $0x1d50] sm:$0xff]
        %v3828 = vld [vmem:[%s609 + $0x1d58] sm:$0xff]
        %v3829 = vld [vmem:[%s609 + $0x1d60] sm:$0xff]
        %v3830 = vld [vmem:[%s609 + $0x1d68] sm:$0xff]
        %v3831 = vld [vmem:[%s609 + $0x1d70] sm:$0xff]
        %v3832 = vld [vmem:[%s609 + $0x1d78] sm:$0xff]
        %v3833 = vld [vmem:[%s609 + $0x1d80] sm:$0xff]
        %v3834 = vld [vmem:[%s609 + $0x1d88] sm:$0xff]
        %v3835 = vld [vmem:[%s609 + $0x1d90] sm:$0xff]
        %v3836 = vld [vmem:[%s609 + $0x1d98] sm:$0xff]
        %v3837 = vld [vmem:[%s609 + $0x1da0] sm:$0xff]
        %v3838 = vld [vmem:[%s609 + $0x1da8] sm:$0xff]
        %v3839 = vld [vmem:[%s609 + $0x1db0] sm:$0xff]
        %v3840 = vld [vmem:[%s609 + $0x1db8] sm:$0xff]
        %v3841 = vld [vmem:[%s609 + $0x1dc0] sm:$0xff]
        %v3842 = vld [vmem:[%s609 + $0x1dc8] sm:$0xff]
        %v3843 = vld [vmem:[%s609 + $0x1dd0] sm:$0xff]
        %v3844 = vld [vmem:[%s609 + $0x1dd8] sm:$0xff]
        %v3845 = vld [vmem:[%s609 + $0x1de0] sm:$0xff]
        %v3846 = vld [vmem:[%s609 + $0x1de8] sm:$0xff]
        %v3847 = vld [vmem:[%s609 + $0x1df0] sm:$0xff]
        %v3848 = vld [vmem:[%s609 + $0x1df8] sm:$0xff]
        %v3849 = vld [vmem:[%s609 + $0x1e00] sm:$0xff]
        %v3850 = vld [vmem:[%s609 + $0x1e08] sm:$0xff]
        %v3851 = vld [vmem:[%s609 + $0x1e10] sm:$0xff]
        %v3852 = vld [vmem:[%s609 + $0x1e18] sm:$0xff]
        %v3853 = vld [vmem:[%s609 + $0x1e20] sm:$0xff]
        %v3854 = vld [vmem:[%s609 + $0x1e28] sm:$0xff]
        %v3855 = vld [vmem:[%s609 + $0x1e30] sm:$0xff]
        %v3856 = vld [vmem:[%s609 + $0x1e38] sm:$0xff]
        %v3857 = vld [vmem:[%s609 + $0x1e40] sm:$0xff]
        %v3858 = vld [vmem:[%s609 + $0x1e48] sm:$0xff]
        %v3859 = vld [vmem:[%s609 + $0x1e50] sm:$0xff]
        %v3860 = vld [vmem:[%s609 + $0x1e58] sm:$0xff]
        %v3861 = vld [vmem:[%s609 + $0x1e60] sm:$0xff]
        %v3862 = vld [vmem:[%s609 + $0x1e68] sm:$0xff]
        %v3863 = vld [vmem:[%s609 + $0x1e70] sm:$0xff]
        %v3864 = vld [vmem:[%s609 + $0x1e78] sm:$0xff]
        %v3865 = vld [vmem:[%s609 + $0x1e80] sm:$0xff]
        %v3866 = vld [vmem:[%s609 + $0x1e88] sm:$0xff]
        %v3867 = vld [vmem:[%s609 + $0x1e90] sm:$0xff]
        %v3868 = vld [vmem:[%s609 + $0x1e98] sm:$0xff]
        %v3869 = vld [vmem:[%s609 + $0x1ea0] sm:$0xff]
        %v3870 = vld [vmem:[%s609 + $0x1ea8] sm:$0xff]
        %v3871 = vld [vmem:[%s609 + $0x1eb0] sm:$0xff]
        %v3872 = vld [vmem:[%s609 + $0x1eb8] sm:$0xff]
        %v3873 = vld [vmem:[%s609 + $0x1ec0] sm:$0xff]
        %v3874 = vld [vmem:[%s609 + $0x1ec8] sm:$0xff]
        %v3875 = vld [vmem:[%s609 + $0x1ed0] sm:$0xff]
        %v3876 = vld [vmem:[%s609 + $0x1ed8] sm:$0xff]
        %v3877 = vld [vmem:[%s609 + $0x1ee0] sm:$0xff]
        %v3878 = vld [vmem:[%s609 + $0x1ee8] sm:$0xff]
        %v3879 = vld [vmem:[%s609 + $0x1ef0] sm:$0xff]
        %v3880 = vld [vmem:[%s609 + $0x1ef8] sm:$0xff]
        %v3881 = vld [vmem:[%s609 + $0x1f00] sm:$0xff]
        %v3882 = vld [vmem:[%s609 + $0x1f08] sm:$0xff]
        %v3883 = vld [vmem:[%s609 + $0x1f10] sm:$0xff]
        %v3884 = vld [vmem:[%s609 + $0x1f18] sm:$0xff]
        %v3885 = vld [vmem:[%s609 + $0x1f20] sm:$0xff]
        %v3886 = vld [vmem:[%s609 + $0x1f28] sm:$0xff]
        %v3887 = vld [vmem:[%s609 + $0x1f30] sm:$0xff]
        %v3888 = vld [vmem:[%s609 + $0x1f38] sm:$0xff]
        %v3889 = vld [vmem:[%s609 + $0x1f40] sm:$0xff]
        %v3890 = vld [vmem:[%s609 + $0x1f48] sm:$0xff]
        %v3891 = vld [vmem:[%s609 + $0x1f50] sm:$0xff]
        %v3892 = vld [vmem:[%s609 + $0x1f58] sm:$0xff]
        %v3893 = vld [vmem:[%s609 + $0x1f60] sm:$0xff]
        %v3894 = vld [vmem:[%s609 + $0x1f68] sm:$0xff]
        %v3895 = vld [vmem:[%s609 + $0x1f70] sm:$0xff]
        %v3896 = vld [vmem:[%s609 + $0x1f78] sm:$0xff]
        %v3897 = vld [vmem:[%s609 + $0x1f80] sm:$0xff]
        %v3898 = vld [vmem:[%s609 + $0x1f88] sm:$0xff]
        %v3899 = vld [vmem:[%s609 + $0x1f90] sm:$0xff]
        %v3900 = vld [vmem:[%s609 + $0x1f98] sm:$0xff]
        %v3901 = vld [vmem:[%s609 + $0x1fa0] sm:$0xff]
        %v3902 = vld [vmem:[%s609 + $0x1fa8] sm:$0xff]
        %v3903 = vld [vmem:[%s609 + $0x1fb0] sm:$0xff]
        %v3904 = vld [vmem:[%s609 + $0x1fb8] sm:$0xff]
        %v3905 = vld [vmem:[%s609 + $0x1fc0] sm:$0xff]
        %v3906 = vld [vmem:[%s609 + $0x1fc8] sm:$0xff]
        %v3907 = vld [vmem:[%s609 + $0x1fd0] sm:$0xff]
        %v3908 = vld [vmem:[%s609 + $0x1fd8] sm:$0xff]
        %v3909 = vld [vmem:[%s609 + $0x1fe0] sm:$0xff]
        %v3910 = vld [vmem:[%s609 + $0x1fe8] sm:$0xff]
        %v3911 = vld [vmem:[%s609 + $0x1ff0] sm:$0xff]
        %v3912 = vld [vmem:[%s609 + $0x1ff8] sm:$0xff]
        %v3913 = vpack.c.bf16 %v2873, %v2873
        %v3914 = vpack.c.bf16 %v2874, %v2874
        %v3915 = vpack.c.bf16 %v2875, %v2875
        %v3916 = vpack.c.bf16 %v2876, %v2876
        %v3917 = vpack.c.bf16 %v2877, %v2877
        %v3918 = vpack.c.bf16 %v2878, %v2878
        %v3919 = vpack.c.bf16 %v2879, %v2879
        %v3920 = vpack.c.bf16 %v2880, %v2880
        %v3921 = vpack.c.bf16 %v2881, %v2881
        %v3922 = vpack.c.bf16 %v2882, %v2882
        %v3923 = vpack.c.bf16 %v2883, %v2883
        %v3924 = vpack.c.bf16 %v2884, %v2884
        %v3925 = vpack.c.bf16 %v2885, %v2885
        %v3926 = vpack.c.bf16 %v2886, %v2886
        %v3927 = vpack.c.bf16 %v2887, %v2887
        %v3928 = vpack.c.bf16 %v2888, %v2888
        %v3929 = vld [vmem:[%s618] sm:$0xff]
        %v3931 = vlaneseq
        %v3932 = vshrl.u32 %v3931, 7
        %v3933 = vsub.s32 0, %v3932
        %v3934 = vrot.slane %v3929, %v3933
        %v3935 = vlaneseq
        %v3936 = vshrl.u32 %v3935, 7
        %v3937 = vsub.s32 1, %v3936
        %v3938 = vrot.slane %v3929, %v3937
        %v3939 = vlaneseq
        %v3940 = vshrl.u32 %v3939, 7
        %v3941 = vsub.s32 2, %v3940
        %v3942 = vrot.slane %v3929, %v3941
        %v3943 = vlaneseq
        %v3944 = vshrl.u32 %v3943, 7
        %v3945 = vsub.s32 3, %v3944
        %v3946 = vrot.slane %v3929, %v3945
        %v3947 = vlaneseq
        %v3948 = vshrl.u32 %v3947, 7
        %v3949 = vsub.s32 4, %v3948
        %v3950 = vrot.slane %v3929, %v3949
        %v3951 = vlaneseq
        %v3952 = vshrl.u32 %v3951, 7
        %v3953 = vsub.s32 5, %v3952
        %v3954 = vrot.slane %v3929, %v3953
        %v3955 = vlaneseq
        %v3956 = vshrl.u32 %v3955, 7
        %v3957 = vsub.s32 6, %v3956
        %v3958 = vrot.slane %v3929, %v3957
        %v3959 = vlaneseq
        %v3960 = vshrl.u32 %v3959, 7
        %v3961 = vsub.s32 7, %v3960
        %v3962 = vrot.slane %v3929, %v3961
        %v4995 = vunpack.c.l.b16 %v2889
        %v4996 = vunpack.c.h.b16 %v2889
        %v4997 = vunpack.c.l.b16 %v2890
        %v4998 = vunpack.c.h.b16 %v2890
        %v4999 = vunpack.c.l.b16 %v2891
        %v5000 = vunpack.c.h.b16 %v2891
        %v5001 = vunpack.c.l.b16 %v2892
        %v5002 = vunpack.c.h.b16 %v2892
        %v5003 = vunpack.c.l.b16 %v2893
        %v5004 = vunpack.c.h.b16 %v2893
        %v5005 = vunpack.c.l.b16 %v2894
        %v5006 = vunpack.c.h.b16 %v2894
        %v5007 = vunpack.c.l.b16 %v2895
        %v5008 = vunpack.c.h.b16 %v2895
        %v5009 = vunpack.c.l.b16 %v2896
        %v5010 = vunpack.c.h.b16 %v2896
        %v5011 = vunpack.c.l.b16 %v2897
        %v5012 = vunpack.c.h.b16 %v2897
        %v5013 = vunpack.c.l.b16 %v2898
        %v5014 = vunpack.c.h.b16 %v2898
        %v5015 = vunpack.c.l.b16 %v2899
        %v5016 = vunpack.c.h.b16 %v2899
        %v5017 = vunpack.c.l.b16 %v2900
        %v5018 = vunpack.c.h.b16 %v2900
        %v5019 = vunpack.c.l.b16 %v2901
        %v5020 = vunpack.c.h.b16 %v2901
        %v5021 = vunpack.c.l.b16 %v2902
        %v5022 = vunpack.c.h.b16 %v2902
        %v5023 = vunpack.c.l.b16 %v2903
        %v5024 = vunpack.c.h.b16 %v2903
        %v5025 = vunpack.c.l.b16 %v2904
        %v5026 = vunpack.c.h.b16 %v2904
        %v5027 = vunpack.c.l.b16 %v2905
        %v5028 = vunpack.c.h.b16 %v2905
        %v5029 = vunpack.c.l.b16 %v2906
        %v5030 = vunpack.c.h.b16 %v2906
        %v5031 = vunpack.c.l.b16 %v2907
        %v5032 = vunpack.c.h.b16 %v2907
        %v5033 = vunpack.c.l.b16 %v2908
        %v5034 = vunpack.c.h.b16 %v2908
        %v5035 = vunpack.c.l.b16 %v2909
        %v5036 = vunpack.c.h.b16 %v2909
        %v5037 = vunpack.c.l.b16 %v2910
        %v5038 = vunpack.c.h.b16 %v2910
        %v5039 = vunpack.c.l.b16 %v2911
        %v5040 = vunpack.c.h.b16 %v2911
        %v5041 = vunpack.c.l.b16 %v2912
        %v5042 = vunpack.c.h.b16 %v2912
        %v5043 = vunpack.c.l.b16 %v2913
        %v5044 = vunpack.c.h.b16 %v2913
        %v5045 = vunpack.c.l.b16 %v2914
        %v5046 = vunpack.c.h.b16 %v2914
        %v5047 = vunpack.c.l.b16 %v2915
        %v5048 = vunpack.c.h.b16 %v2915
        %v5049 = vunpack.c.l.b16 %v2916
        %v5050 = vunpack.c.h.b16 %v2916
        %v5051 = vunpack.c.l.b16 %v2917
        %v5052 = vunpack.c.h.b16 %v2917
        %v5053 = vunpack.c.l.b16 %v2918
        %v5054 = vunpack.c.h.b16 %v2918
        %v5055 = vunpack.c.l.b16 %v2919
        %v5056 = vunpack.c.h.b16 %v2919
        %v5057 = vunpack.c.l.b16 %v2920
        %v5058 = vunpack.c.h.b16 %v2920
        %v5059 = vunpack.c.l.b16 %v2921
        %v5060 = vunpack.c.h.b16 %v2921
        %v5061 = vunpack.c.l.b16 %v2922
        %v5062 = vunpack.c.h.b16 %v2922
        %v5063 = vunpack.c.l.b16 %v2923
        %v5064 = vunpack.c.h.b16 %v2923
        %v5065 = vunpack.c.l.b16 %v2924
        %v5066 = vunpack.c.h.b16 %v2924
        %v5067 = vunpack.c.l.b16 %v2925
        %v5068 = vunpack.c.h.b16 %v2925
        %v5069 = vunpack.c.l.b16 %v2926
        %v5070 = vunpack.c.h.b16 %v2926
        %v5071 = vunpack.c.l.b16 %v2927
        %v5072 = vunpack.c.h.b16 %v2927
        %v5073 = vunpack.c.l.b16 %v2928
        %v5074 = vunpack.c.h.b16 %v2928
        %v5075 = vunpack.c.l.b16 %v2929
        %v5076 = vunpack.c.h.b16 %v2929
        %v5077 = vunpack.c.l.b16 %v2930
        %v5078 = vunpack.c.h.b16 %v2930
        %v5079 = vunpack.c.l.b16 %v2931
        %v5080 = vunpack.c.h.b16 %v2931
        %v5081 = vunpack.c.l.b16 %v2932
        %v5082 = vunpack.c.h.b16 %v2932
        %v5083 = vunpack.c.l.b16 %v2933
        %v5084 = vunpack.c.h.b16 %v2933
        %v5085 = vunpack.c.l.b16 %v2934
        %v5086 = vunpack.c.h.b16 %v2934
        %v5087 = vunpack.c.l.b16 %v2935
        %v5088 = vunpack.c.h.b16 %v2935
        %v5089 = vunpack.c.l.b16 %v2936
        %v5090 = vunpack.c.h.b16 %v2936
        %v5091 = vunpack.c.l.b16 %v2937
        %v5092 = vunpack.c.h.b16 %v2937
        %v5093 = vunpack.c.l.b16 %v2938
        %v5094 = vunpack.c.h.b16 %v2938
        %v5095 = vunpack.c.l.b16 %v2939
        %v5096 = vunpack.c.h.b16 %v2939
        %v5097 = vunpack.c.l.b16 %v2940
        %v5098 = vunpack.c.h.b16 %v2940
        %v5099 = vunpack.c.l.b16 %v2941
        %v5100 = vunpack.c.h.b16 %v2941
        %v5101 = vunpack.c.l.b16 %v2942
        %v5102 = vunpack.c.h.b16 %v2942
        %v5103 = vunpack.c.l.b16 %v2943
        %v5104 = vunpack.c.h.b16 %v2943
        %v5105 = vunpack.c.l.b16 %v2944
        %v5106 = vunpack.c.h.b16 %v2944
        %v5107 = vunpack.c.l.b16 %v2945
        %v5108 = vunpack.c.h.b16 %v2945
        %v5109 = vunpack.c.l.b16 %v2946
        %v5110 = vunpack.c.h.b16 %v2946
        %v5111 = vunpack.c.l.b16 %v2947
        %v5112 = vunpack.c.h.b16 %v2947
        %v5113 = vunpack.c.l.b16 %v2948
        %v5114 = vunpack.c.h.b16 %v2948
        %v5115 = vunpack.c.l.b16 %v2949
        %v5116 = vunpack.c.h.b16 %v2949
        %v5117 = vunpack.c.l.b16 %v2950
        %v5118 = vunpack.c.h.b16 %v2950
        %v5119 = vunpack.c.l.b16 %v2951
        %v5120 = vunpack.c.h.b16 %v2951
        %v5121 = vunpack.c.l.b16 %v2952
        %v5122 = vunpack.c.h.b16 %v2952
        %v5123 = vunpack.c.l.b16 %v2953
        %v5124 = vunpack.c.h.b16 %v2953
        %v5125 = vunpack.c.l.b16 %v2954
        %v5126 = vunpack.c.h.b16 %v2954
        %v5127 = vunpack.c.l.b16 %v2955
        %v5128 = vunpack.c.h.b16 %v2955
        %v5129 = vunpack.c.l.b16 %v2956
        %v5130 = vunpack.c.h.b16 %v2956
        %v5131 = vunpack.c.l.b16 %v2957
        %v5132 = vunpack.c.h.b16 %v2957
        %v5133 = vunpack.c.l.b16 %v2958
        %v5134 = vunpack.c.h.b16 %v2958
        %v5135 = vunpack.c.l.b16 %v2959
        %v5136 = vunpack.c.h.b16 %v2959
        %v5137 = vunpack.c.l.b16 %v2960
        %v5138 = vunpack.c.h.b16 %v2960
        %v5139 = vunpack.c.l.b16 %v2961
        %v5140 = vunpack.c.h.b16 %v2961
        %v5141 = vunpack.c.l.b16 %v2962
        %v5142 = vunpack.c.h.b16 %v2962
        %v5143 = vunpack.c.l.b16 %v2963
        %v5144 = vunpack.c.h.b16 %v2963
        %v5145 = vunpack.c.l.b16 %v2964
        %v5146 = vunpack.c.h.b16 %v2964
        %v5147 = vunpack.c.l.b16 %v2965
        %v5148 = vunpack.c.h.b16 %v2965
        %v5149 = vunpack.c.l.b16 %v2966
        %v5150 = vunpack.c.h.b16 %v2966
        %v5151 = vunpack.c.l.b16 %v2967
        %v5152 = vunpack.c.h.b16 %v2967
        %v5153 = vunpack.c.l.b16 %v2968
        %v5154 = vunpack.c.h.b16 %v2968
        %v5155 = vunpack.c.l.b16 %v2969
        %v5156 = vunpack.c.h.b16 %v2969
        %v5157 = vunpack.c.l.b16 %v2970
        %v5158 = vunpack.c.h.b16 %v2970
        %v5159 = vunpack.c.l.b16 %v2971
        %v5160 = vunpack.c.h.b16 %v2971
        %v5161 = vunpack.c.l.b16 %v2972
        %v5162 = vunpack.c.h.b16 %v2972
        %v5163 = vunpack.c.l.b16 %v2973
        %v5164 = vunpack.c.h.b16 %v2973
        %v5165 = vunpack.c.l.b16 %v2974
        %v5166 = vunpack.c.h.b16 %v2974
        %v5167 = vunpack.c.l.b16 %v2975
        %v5168 = vunpack.c.h.b16 %v2975
        %v5169 = vunpack.c.l.b16 %v2976
        %v5170 = vunpack.c.h.b16 %v2976
        %v5171 = vunpack.c.l.b16 %v2977
        %v5172 = vunpack.c.h.b16 %v2977
        %v5173 = vunpack.c.l.b16 %v2978
        %v5174 = vunpack.c.h.b16 %v2978
        %v5175 = vunpack.c.l.b16 %v2979
        %v5176 = vunpack.c.h.b16 %v2979
        %v5177 = vunpack.c.l.b16 %v2980
        %v5178 = vunpack.c.h.b16 %v2980
        %v5179 = vunpack.c.l.b16 %v2981
        %v5180 = vunpack.c.h.b16 %v2981
        %v5181 = vunpack.c.l.b16 %v2982
        %v5182 = vunpack.c.h.b16 %v2982
        %v5183 = vunpack.c.l.b16 %v2983
        %v5184 = vunpack.c.h.b16 %v2983
        %v5185 = vunpack.c.l.b16 %v2984
        %v5186 = vunpack.c.h.b16 %v2984
        %v5187 = vunpack.c.l.b16 %v2985
        %v5188 = vunpack.c.h.b16 %v2985
        %v5189 = vunpack.c.l.b16 %v2986
        %v5190 = vunpack.c.h.b16 %v2986
        %v5191 = vunpack.c.l.b16 %v2987
        %v5192 = vunpack.c.h.b16 %v2987
        %v5193 = vunpack.c.l.b16 %v2988
        %v5194 = vunpack.c.h.b16 %v2988
        %v5195 = vunpack.c.l.b16 %v2989
        %v5196 = vunpack.c.h.b16 %v2989
        %v5197 = vunpack.c.l.b16 %v2990
        %v5198 = vunpack.c.h.b16 %v2990
        %v5199 = vunpack.c.l.b16 %v2991
        %v5200 = vunpack.c.h.b16 %v2991
        %v5201 = vunpack.c.l.b16 %v2992
        %v5202 = vunpack.c.h.b16 %v2992
        %v5203 = vunpack.c.l.b16 %v2993
        %v5204 = vunpack.c.h.b16 %v2993
        %v5205 = vunpack.c.l.b16 %v2994
        %v5206 = vunpack.c.h.b16 %v2994
        %v5207 = vunpack.c.l.b16 %v2995
        %v5208 = vunpack.c.h.b16 %v2995
        %v5209 = vunpack.c.l.b16 %v2996
        %v5210 = vunpack.c.h.b16 %v2996
        %v5211 = vunpack.c.l.b16 %v2997
        %v5212 = vunpack.c.h.b16 %v2997
        %v5213 = vunpack.c.l.b16 %v2998
        %v5214 = vunpack.c.h.b16 %v2998
        %v5215 = vunpack.c.l.b16 %v2999
        %v5216 = vunpack.c.h.b16 %v2999
        %v5217 = vunpack.c.l.b16 %v3000
        %v5218 = vunpack.c.h.b16 %v3000
        %v5219 = vunpack.c.l.b16 %v3001
        %v5220 = vunpack.c.h.b16 %v3001
        %v5221 = vunpack.c.l.b16 %v3002
        %v5222 = vunpack.c.h.b16 %v3002
        %v5223 = vunpack.c.l.b16 %v3003
        %v5224 = vunpack.c.h.b16 %v3003
        %v5225 = vunpack.c.l.b16 %v3004
        %v5226 = vunpack.c.h.b16 %v3004
        %v5227 = vunpack.c.l.b16 %v3005
        %v5228 = vunpack.c.h.b16 %v3005
        %v5229 = vunpack.c.l.b16 %v3006
        %v5230 = vunpack.c.h.b16 %v3006
        %v5231 = vunpack.c.l.b16 %v3007
        %v5232 = vunpack.c.h.b16 %v3007
        %v5233 = vunpack.c.l.b16 %v3008
        %v5234 = vunpack.c.h.b16 %v3008
        %v5235 = vunpack.c.l.b16 %v3009
        %v5236 = vunpack.c.h.b16 %v3009
        %v5237 = vunpack.c.l.b16 %v3010
        %v5238 = vunpack.c.h.b16 %v3010
        %v5239 = vunpack.c.l.b16 %v3011
        %v5240 = vunpack.c.h.b16 %v3011
        %v5241 = vunpack.c.l.b16 %v3012
        %v5242 = vunpack.c.h.b16 %v3012
        %v5243 = vunpack.c.l.b16 %v3013
        %v5244 = vunpack.c.h.b16 %v3013
        %v5245 = vunpack.c.l.b16 %v3014
        %v5246 = vunpack.c.h.b16 %v3014
        %v5247 = vunpack.c.l.b16 %v3015
        %v5248 = vunpack.c.h.b16 %v3015
        %v5249 = vunpack.c.l.b16 %v3016
        %v5250 = vunpack.c.h.b16 %v3016
        %v5251 = vunpack.c.l.b16 %v3017
        %v5252 = vunpack.c.h.b16 %v3017
        %v5253 = vunpack.c.l.b16 %v3018
        %v5254 = vunpack.c.h.b16 %v3018
        %v5255 = vunpack.c.l.b16 %v3019
        %v5256 = vunpack.c.h.b16 %v3019
        %v5257 = vunpack.c.l.b16 %v3020
        %v5258 = vunpack.c.h.b16 %v3020
        %v5259 = vunpack.c.l.b16 %v3021
        %v5260 = vunpack.c.h.b16 %v3021
        %v5261 = vunpack.c.l.b16 %v3022
        %v5262 = vunpack.c.h.b16 %v3022
        %v5263 = vunpack.c.l.b16 %v3023
        %v5264 = vunpack.c.h.b16 %v3023
        %v5265 = vunpack.c.l.b16 %v3024
        %v5266 = vunpack.c.h.b16 %v3024
        %v5267 = vunpack.c.l.b16 %v3025
        %v5268 = vunpack.c.h.b16 %v3025
        %v5269 = vunpack.c.l.b16 %v3026
        %v5270 = vunpack.c.h.b16 %v3026
        %v5271 = vunpack.c.l.b16 %v3027
        %v5272 = vunpack.c.h.b16 %v3027
        %v5273 = vunpack.c.l.b16 %v3028
        %v5274 = vunpack.c.h.b16 %v3028
        %v5275 = vunpack.c.l.b16 %v3029
        %v5276 = vunpack.c.h.b16 %v3029
        %v5277 = vunpack.c.l.b16 %v3030
        %v5278 = vunpack.c.h.b16 %v3030
        %v5279 = vunpack.c.l.b16 %v3031
        %v5280 = vunpack.c.h.b16 %v3031
        %v5281 = vunpack.c.l.b16 %v3032
        %v5282 = vunpack.c.h.b16 %v3032
        %v5283 = vunpack.c.l.b16 %v3033
        %v5284 = vunpack.c.h.b16 %v3033
        %v5285 = vunpack.c.l.b16 %v3034
        %v5286 = vunpack.c.h.b16 %v3034
        %v5287 = vunpack.c.l.b16 %v3035
        %v5288 = vunpack.c.h.b16 %v3035
        %v5289 = vunpack.c.l.b16 %v3036
        %v5290 = vunpack.c.h.b16 %v3036
        %v5291 = vunpack.c.l.b16 %v3037
        %v5292 = vunpack.c.h.b16 %v3037
        %v5293 = vunpack.c.l.b16 %v3038
        %v5294 = vunpack.c.h.b16 %v3038
        %v5295 = vunpack.c.l.b16 %v3039
        %v5296 = vunpack.c.h.b16 %v3039
        %v5297 = vunpack.c.l.b16 %v3040
        %v5298 = vunpack.c.h.b16 %v3040
        %v5299 = vunpack.c.l.b16 %v3041
        %v5300 = vunpack.c.h.b16 %v3041
        %v5301 = vunpack.c.l.b16 %v3042
        %v5302 = vunpack.c.h.b16 %v3042
        %v5303 = vunpack.c.l.b16 %v3043
        %v5304 = vunpack.c.h.b16 %v3043
        %v5305 = vunpack.c.l.b16 %v3044
        %v5306 = vunpack.c.h.b16 %v3044
        %v5307 = vunpack.c.l.b16 %v3045
        %v5308 = vunpack.c.h.b16 %v3045
        %v5309 = vunpack.c.l.b16 %v3046
        %v5310 = vunpack.c.h.b16 %v3046
        %v5311 = vunpack.c.l.b16 %v3047
        %v5312 = vunpack.c.h.b16 %v3047
        %v5313 = vunpack.c.l.b16 %v3048
        %v5314 = vunpack.c.h.b16 %v3048
        %v5315 = vunpack.c.l.b16 %v3049
        %v5316 = vunpack.c.h.b16 %v3049
        %v5317 = vunpack.c.l.b16 %v3050
        %v5318 = vunpack.c.h.b16 %v3050
        %v5319 = vunpack.c.l.b16 %v3051
        %v5320 = vunpack.c.h.b16 %v3051
        %v5321 = vunpack.c.l.b16 %v3052
        %v5322 = vunpack.c.h.b16 %v3052
        %v5323 = vunpack.c.l.b16 %v3053
        %v5324 = vunpack.c.h.b16 %v3053
        %v5325 = vunpack.c.l.b16 %v3054
        %v5326 = vunpack.c.h.b16 %v3054
        %v5327 = vunpack.c.l.b16 %v3055
        %v5328 = vunpack.c.h.b16 %v3055
        %v5329 = vunpack.c.l.b16 %v3056
        %v5330 = vunpack.c.h.b16 %v3056
        %v5331 = vunpack.c.l.b16 %v3057
        %v5332 = vunpack.c.h.b16 %v3057
        %v5333 = vunpack.c.l.b16 %v3058
        %v5334 = vunpack.c.h.b16 %v3058
        %v5335 = vunpack.c.l.b16 %v3059
        %v5336 = vunpack.c.h.b16 %v3059
        %v5337 = vunpack.c.l.b16 %v3060
        %v5338 = vunpack.c.h.b16 %v3060
        %v5339 = vunpack.c.l.b16 %v3061
        %v5340 = vunpack.c.h.b16 %v3061
        %v5341 = vunpack.c.l.b16 %v3062
        %v5342 = vunpack.c.h.b16 %v3062
        %v5343 = vunpack.c.l.b16 %v3063
        %v5344 = vunpack.c.h.b16 %v3063
        %v5345 = vunpack.c.l.b16 %v3064
        %v5346 = vunpack.c.h.b16 %v3064
        %v5347 = vunpack.c.l.b16 %v3065
        %v5348 = vunpack.c.h.b16 %v3065
        %v5349 = vunpack.c.l.b16 %v3066
        %v5350 = vunpack.c.h.b16 %v3066
        %v5351 = vunpack.c.l.b16 %v3067
        %v5352 = vunpack.c.h.b16 %v3067
        %v5353 = vunpack.c.l.b16 %v3068
        %v5354 = vunpack.c.h.b16 %v3068
        %v5355 = vunpack.c.l.b16 %v3069
        %v5356 = vunpack.c.h.b16 %v3069
        %v5357 = vunpack.c.l.b16 %v3070
        %v5358 = vunpack.c.h.b16 %v3070
        %v5359 = vunpack.c.l.b16 %v3071
        %v5360 = vunpack.c.h.b16 %v3071
        %v5361 = vunpack.c.l.b16 %v3072
        %v5362 = vunpack.c.h.b16 %v3072
        %v5363 = vunpack.c.l.b16 %v3073
        %v5364 = vunpack.c.h.b16 %v3073
        %v5365 = vunpack.c.l.b16 %v3074
        %v5366 = vunpack.c.h.b16 %v3074
        %v5367 = vunpack.c.l.b16 %v3075
        %v5368 = vunpack.c.h.b16 %v3075
        %v5369 = vunpack.c.l.b16 %v3076
        %v5370 = vunpack.c.h.b16 %v3076
        %v5371 = vunpack.c.l.b16 %v3077
        %v5372 = vunpack.c.h.b16 %v3077
        %v5373 = vunpack.c.l.b16 %v3078
        %v5374 = vunpack.c.h.b16 %v3078
        %v5375 = vunpack.c.l.b16 %v3079
        %v5376 = vunpack.c.h.b16 %v3079
        %v5377 = vunpack.c.l.b16 %v3080
        %v5378 = vunpack.c.h.b16 %v3080
        %v5379 = vunpack.c.l.b16 %v3081
        %v5380 = vunpack.c.h.b16 %v3081
        %v5381 = vunpack.c.l.b16 %v3082
        %v5382 = vunpack.c.h.b16 %v3082
        %v5383 = vunpack.c.l.b16 %v3083
        %v5384 = vunpack.c.h.b16 %v3083
        %v5385 = vunpack.c.l.b16 %v3084
        %v5386 = vunpack.c.h.b16 %v3084
        %v5387 = vunpack.c.l.b16 %v3085
        %v5388 = vunpack.c.h.b16 %v3085
        %v5389 = vunpack.c.l.b16 %v3086
        %v5390 = vunpack.c.h.b16 %v3086
        %v5391 = vunpack.c.l.b16 %v3087
        %v5392 = vunpack.c.h.b16 %v3087
        %v5393 = vunpack.c.l.b16 %v3088
        %v5394 = vunpack.c.h.b16 %v3088
        %v5395 = vunpack.c.l.b16 %v3089
        %v5396 = vunpack.c.h.b16 %v3089
        %v5397 = vunpack.c.l.b16 %v3090
        %v5398 = vunpack.c.h.b16 %v3090
        %v5399 = vunpack.c.l.b16 %v3091
        %v5400 = vunpack.c.h.b16 %v3091
        %v5401 = vunpack.c.l.b16 %v3092
        %v5402 = vunpack.c.h.b16 %v3092
        %v5403 = vunpack.c.l.b16 %v3093
        %v5404 = vunpack.c.h.b16 %v3093
        %v5405 = vunpack.c.l.b16 %v3094
        %v5406 = vunpack.c.h.b16 %v3094
        %v5407 = vunpack.c.l.b16 %v3095
        %v5408 = vunpack.c.h.b16 %v3095
        %v5409 = vunpack.c.l.b16 %v3096
        %v5410 = vunpack.c.h.b16 %v3096
        %v5411 = vunpack.c.l.b16 %v3097
        %v5412 = vunpack.c.h.b16 %v3097
        %v5413 = vunpack.c.l.b16 %v3098
        %v5414 = vunpack.c.h.b16 %v3098
        %v5415 = vunpack.c.l.b16 %v3099
        %v5416 = vunpack.c.h.b16 %v3099
        %v5417 = vunpack.c.l.b16 %v3100
        %v5418 = vunpack.c.h.b16 %v3100
        %v5419 = vunpack.c.l.b16 %v3101
        %v5420 = vunpack.c.h.b16 %v3101
        %v5421 = vunpack.c.l.b16 %v3102
        %v5422 = vunpack.c.h.b16 %v3102
        %v5423 = vunpack.c.l.b16 %v3103
        %v5424 = vunpack.c.h.b16 %v3103
        %v5425 = vunpack.c.l.b16 %v3104
        %v5426 = vunpack.c.h.b16 %v3104
        %v5427 = vunpack.c.l.b16 %v3105
        %v5428 = vunpack.c.h.b16 %v3105
        %v5429 = vunpack.c.l.b16 %v3106
        %v5430 = vunpack.c.h.b16 %v3106
        %v5431 = vunpack.c.l.b16 %v3107
        %v5432 = vunpack.c.h.b16 %v3107
        %v5433 = vunpack.c.l.b16 %v3108
        %v5434 = vunpack.c.h.b16 %v3108
        %v5435 = vunpack.c.l.b16 %v3109
        %v5436 = vunpack.c.h.b16 %v3109
        %v5437 = vunpack.c.l.b16 %v3110
        %v5438 = vunpack.c.h.b16 %v3110
        %v5439 = vunpack.c.l.b16 %v3111
        %v5440 = vunpack.c.h.b16 %v3111
        %v5441 = vunpack.c.l.b16 %v3112
        %v5442 = vunpack.c.h.b16 %v3112
        %v5443 = vunpack.c.l.b16 %v3113
        %v5444 = vunpack.c.h.b16 %v3113
        %v5445 = vunpack.c.l.b16 %v3114
        %v5446 = vunpack.c.h.b16 %v3114
        %v5447 = vunpack.c.l.b16 %v3115
        %v5448 = vunpack.c.h.b16 %v3115
        %v5449 = vunpack.c.l.b16 %v3116
        %v5450 = vunpack.c.h.b16 %v3116
        %v5451 = vunpack.c.l.b16 %v3117
        %v5452 = vunpack.c.h.b16 %v3117
        %v5453 = vunpack.c.l.b16 %v3118
        %v5454 = vunpack.c.h.b16 %v3118
        %v5455 = vunpack.c.l.b16 %v3119
        %v5456 = vunpack.c.h.b16 %v3119
        %v5457 = vunpack.c.l.b16 %v3120
        %v5458 = vunpack.c.h.b16 %v3120
        %v5459 = vunpack.c.l.b16 %v3121
        %v5460 = vunpack.c.h.b16 %v3121
        %v5461 = vunpack.c.l.b16 %v3122
        %v5462 = vunpack.c.h.b16 %v3122
        %v5463 = vunpack.c.l.b16 %v3123
        %v5464 = vunpack.c.h.b16 %v3123
        %v5465 = vunpack.c.l.b16 %v3124
        %v5466 = vunpack.c.h.b16 %v3124
        %v5467 = vunpack.c.l.b16 %v3125
        %v5468 = vunpack.c.h.b16 %v3125
        %v5469 = vunpack.c.l.b16 %v3126
        %v5470 = vunpack.c.h.b16 %v3126
        %v5471 = vunpack.c.l.b16 %v3127
        %v5472 = vunpack.c.h.b16 %v3127
        %v5473 = vunpack.c.l.b16 %v3128
        %v5474 = vunpack.c.h.b16 %v3128
        %v5475 = vunpack.c.l.b16 %v3129
        %v5476 = vunpack.c.h.b16 %v3129
        %v5477 = vunpack.c.l.b16 %v3130
        %v5478 = vunpack.c.h.b16 %v3130
        %v5479 = vunpack.c.l.b16 %v3131
        %v5480 = vunpack.c.h.b16 %v3131
        %v5481 = vunpack.c.l.b16 %v3132
        %v5482 = vunpack.c.h.b16 %v3132
        %v5483 = vunpack.c.l.b16 %v3133
        %v5484 = vunpack.c.h.b16 %v3133
        %v5485 = vunpack.c.l.b16 %v3134
        %v5486 = vunpack.c.h.b16 %v3134
        %v5487 = vunpack.c.l.b16 %v3135
        %v5488 = vunpack.c.h.b16 %v3135
        %v5489 = vunpack.c.l.b16 %v3136
        %v5490 = vunpack.c.h.b16 %v3136
        %v5491 = vunpack.c.l.b16 %v3137
        %v5492 = vunpack.c.h.b16 %v3137
        %v5493 = vunpack.c.l.b16 %v3138
        %v5494 = vunpack.c.h.b16 %v3138
        %v5495 = vunpack.c.l.b16 %v3139
        %v5496 = vunpack.c.h.b16 %v3139
        %v5497 = vunpack.c.l.b16 %v3140
        %v5498 = vunpack.c.h.b16 %v3140
        %v5499 = vunpack.c.l.b16 %v3141
        %v5500 = vunpack.c.h.b16 %v3141
        %v5501 = vunpack.c.l.b16 %v3142
        %v5502 = vunpack.c.h.b16 %v3142
        %v5503 = vunpack.c.l.b16 %v3143
        %v5504 = vunpack.c.h.b16 %v3143
        %v5505 = vunpack.c.l.b16 %v3144
        %v5506 = vunpack.c.h.b16 %v3144
        %v5507 = vunpack.c.l.b16 %v3145
        %v5508 = vunpack.c.h.b16 %v3145
        %v5509 = vunpack.c.l.b16 %v3146
        %v5510 = vunpack.c.h.b16 %v3146
        %v5511 = vunpack.c.l.b16 %v3147
        %v5512 = vunpack.c.h.b16 %v3147
        %v5513 = vunpack.c.l.b16 %v3148
        %v5514 = vunpack.c.h.b16 %v3148
        %v5515 = vunpack.c.l.b16 %v3149
        %v5516 = vunpack.c.h.b16 %v3149
        %v5517 = vunpack.c.l.b16 %v3150
        %v5518 = vunpack.c.h.b16 %v3150
        %v5519 = vunpack.c.l.b16 %v3151
        %v5520 = vunpack.c.h.b16 %v3151
        %v5521 = vunpack.c.l.b16 %v3152
        %v5522 = vunpack.c.h.b16 %v3152
        %v5523 = vunpack.c.l.b16 %v3153
        %v5524 = vunpack.c.h.b16 %v3153
        %v5525 = vunpack.c.l.b16 %v3154
        %v5526 = vunpack.c.h.b16 %v3154
        %v5527 = vunpack.c.l.b16 %v3155
        %v5528 = vunpack.c.h.b16 %v3155
        %v5529 = vunpack.c.l.b16 %v3156
        %v5530 = vunpack.c.h.b16 %v3156
        %v5531 = vunpack.c.l.b16 %v3157
        %v5532 = vunpack.c.h.b16 %v3157
        %v5533 = vunpack.c.l.b16 %v3158
        %v5534 = vunpack.c.h.b16 %v3158
        %v5535 = vunpack.c.l.b16 %v3159
        %v5536 = vunpack.c.h.b16 %v3159
        %v5537 = vunpack.c.l.b16 %v3160
        %v5538 = vunpack.c.h.b16 %v3160
        %v5539 = vunpack.c.l.b16 %v3161
        %v5540 = vunpack.c.h.b16 %v3161
        %v5541 = vunpack.c.l.b16 %v3162
        %v5542 = vunpack.c.h.b16 %v3162
        %v5543 = vunpack.c.l.b16 %v3163
        %v5544 = vunpack.c.h.b16 %v3163
        %v5545 = vunpack.c.l.b16 %v3164
        %v5546 = vunpack.c.h.b16 %v3164
        %v5547 = vunpack.c.l.b16 %v3165
        %v5548 = vunpack.c.h.b16 %v3165
        %v5549 = vunpack.c.l.b16 %v3166
        %v5550 = vunpack.c.h.b16 %v3166
        %v5551 = vunpack.c.l.b16 %v3167
        %v5552 = vunpack.c.h.b16 %v3167
        %v5553 = vunpack.c.l.b16 %v3168
        %v5554 = vunpack.c.h.b16 %v3168
        %v5555 = vunpack.c.l.b16 %v3169
        %v5556 = vunpack.c.h.b16 %v3169
        %v5557 = vunpack.c.l.b16 %v3170
        %v5558 = vunpack.c.h.b16 %v3170
        %v5559 = vunpack.c.l.b16 %v3171
        %v5560 = vunpack.c.h.b16 %v3171
        %v5561 = vunpack.c.l.b16 %v3172
        %v5562 = vunpack.c.h.b16 %v3172
        %v5563 = vunpack.c.l.b16 %v3173
        %v5564 = vunpack.c.h.b16 %v3173
        %v5565 = vunpack.c.l.b16 %v3174
        %v5566 = vunpack.c.h.b16 %v3174
        %v5567 = vunpack.c.l.b16 %v3175
        %v5568 = vunpack.c.h.b16 %v3175
        %v5569 = vunpack.c.l.b16 %v3176
        %v5570 = vunpack.c.h.b16 %v3176
        %v5571 = vunpack.c.l.b16 %v3177
        %v5572 = vunpack.c.h.b16 %v3177
        %v5573 = vunpack.c.l.b16 %v3178
        %v5574 = vunpack.c.h.b16 %v3178
        %v5575 = vunpack.c.l.b16 %v3179
        %v5576 = vunpack.c.h.b16 %v3179
        %v5577 = vunpack.c.l.b16 %v3180
        %v5578 = vunpack.c.h.b16 %v3180
        %v5579 = vunpack.c.l.b16 %v3181
        %v5580 = vunpack.c.h.b16 %v3181
        %v5581 = vunpack.c.l.b16 %v3182
        %v5582 = vunpack.c.h.b16 %v3182
        %v5583 = vunpack.c.l.b16 %v3183
        %v5584 = vunpack.c.h.b16 %v3183
        %v5585 = vunpack.c.l.b16 %v3184
        %v5586 = vunpack.c.h.b16 %v3184
        %v5587 = vunpack.c.l.b16 %v3185
        %v5588 = vunpack.c.h.b16 %v3185
        %v5589 = vunpack.c.l.b16 %v3186
        %v5590 = vunpack.c.h.b16 %v3186
        %v5591 = vunpack.c.l.b16 %v3187
        %v5592 = vunpack.c.h.b16 %v3187
        %v5593 = vunpack.c.l.b16 %v3188
        %v5594 = vunpack.c.h.b16 %v3188
        %v5595 = vunpack.c.l.b16 %v3189
        %v5596 = vunpack.c.h.b16 %v3189
        %v5597 = vunpack.c.l.b16 %v3190
        %v5598 = vunpack.c.h.b16 %v3190
        %v5599 = vunpack.c.l.b16 %v3191
        %v5600 = vunpack.c.h.b16 %v3191
        %v5601 = vunpack.c.l.b16 %v3192
        %v5602 = vunpack.c.h.b16 %v3192
        %v5603 = vunpack.c.l.b16 %v3193
        %v5604 = vunpack.c.h.b16 %v3193
        %v5605 = vunpack.c.l.b16 %v3194
        %v5606 = vunpack.c.h.b16 %v3194
        %v5607 = vunpack.c.l.b16 %v3195
        %v5608 = vunpack.c.h.b16 %v3195
        %v5609 = vunpack.c.l.b16 %v3196
        %v5610 = vunpack.c.h.b16 %v3196
        %v5611 = vunpack.c.l.b16 %v3197
        %v5612 = vunpack.c.h.b16 %v3197
        %v5613 = vunpack.c.l.b16 %v3198
        %v5614 = vunpack.c.h.b16 %v3198
        %v5615 = vunpack.c.l.b16 %v3199
        %v5616 = vunpack.c.h.b16 %v3199
        %v5617 = vunpack.c.l.b16 %v3200
        %v5618 = vunpack.c.h.b16 %v3200
        %v5619 = vunpack.c.l.b16 %v3201
        %v5620 = vunpack.c.h.b16 %v3201
        %v5621 = vunpack.c.l.b16 %v3202
        %v5622 = vunpack.c.h.b16 %v3202
        %v5623 = vunpack.c.l.b16 %v3203
        %v5624 = vunpack.c.h.b16 %v3203
        %v5625 = vunpack.c.l.b16 %v3204
        %v5626 = vunpack.c.h.b16 %v3204
        %v5627 = vunpack.c.l.b16 %v3205
        %v5628 = vunpack.c.h.b16 %v3205
        %v5629 = vunpack.c.l.b16 %v3206
        %v5630 = vunpack.c.h.b16 %v3206
        %v5631 = vunpack.c.l.b16 %v3207
        %v5632 = vunpack.c.h.b16 %v3207
        %v5633 = vunpack.c.l.b16 %v3208
        %v5634 = vunpack.c.h.b16 %v3208
        %v5635 = vunpack.c.l.b16 %v3209
        %v5636 = vunpack.c.h.b16 %v3209
        %v5637 = vunpack.c.l.b16 %v3210
        %v5638 = vunpack.c.h.b16 %v3210
        %v5639 = vunpack.c.l.b16 %v3211
        %v5640 = vunpack.c.h.b16 %v3211
        %v5641 = vunpack.c.l.b16 %v3212
        %v5642 = vunpack.c.h.b16 %v3212
        %v5643 = vunpack.c.l.b16 %v3213
        %v5644 = vunpack.c.h.b16 %v3213
        %v5645 = vunpack.c.l.b16 %v3214
        %v5646 = vunpack.c.h.b16 %v3214
        %v5647 = vunpack.c.l.b16 %v3215
        %v5648 = vunpack.c.h.b16 %v3215
        %v5649 = vunpack.c.l.b16 %v3216
        %v5650 = vunpack.c.h.b16 %v3216
        %v5651 = vunpack.c.l.b16 %v3217
        %v5652 = vunpack.c.h.b16 %v3217
        %v5653 = vunpack.c.l.b16 %v3218
        %v5654 = vunpack.c.h.b16 %v3218
        %v5655 = vunpack.c.l.b16 %v3219
        %v5656 = vunpack.c.h.b16 %v3219
        %v5657 = vunpack.c.l.b16 %v3220
        %v5658 = vunpack.c.h.b16 %v3220
        %v5659 = vunpack.c.l.b16 %v3221
        %v5660 = vunpack.c.h.b16 %v3221
        %v5661 = vunpack.c.l.b16 %v3222
        %v5662 = vunpack.c.h.b16 %v3222
        %v5663 = vunpack.c.l.b16 %v3223
        %v5664 = vunpack.c.h.b16 %v3223
        %v5665 = vunpack.c.l.b16 %v3224
        %v5666 = vunpack.c.h.b16 %v3224
        %v5667 = vunpack.c.l.b16 %v3225
        %v5668 = vunpack.c.h.b16 %v3225
        %v5669 = vunpack.c.l.b16 %v3226
        %v5670 = vunpack.c.h.b16 %v3226
        %v5671 = vunpack.c.l.b16 %v3227
        %v5672 = vunpack.c.h.b16 %v3227
        %v5673 = vunpack.c.l.b16 %v3228
        %v5674 = vunpack.c.h.b16 %v3228
        %v5675 = vunpack.c.l.b16 %v3229
        %v5676 = vunpack.c.h.b16 %v3229
        %v5677 = vunpack.c.l.b16 %v3230
        %v5678 = vunpack.c.h.b16 %v3230
        %v5679 = vunpack.c.l.b16 %v3231
        %v5680 = vunpack.c.h.b16 %v3231
        %v5681 = vunpack.c.l.b16 %v3232
        %v5682 = vunpack.c.h.b16 %v3232
        %v5683 = vunpack.c.l.b16 %v3233
        %v5684 = vunpack.c.h.b16 %v3233
        %v5685 = vunpack.c.l.b16 %v3234
        %v5686 = vunpack.c.h.b16 %v3234
        %v5687 = vunpack.c.l.b16 %v3235
        %v5688 = vunpack.c.h.b16 %v3235
        %v5689 = vunpack.c.l.b16 %v3236
        %v5690 = vunpack.c.h.b16 %v3236
        %v5691 = vunpack.c.l.b16 %v3237
        %v5692 = vunpack.c.h.b16 %v3237
        %v5693 = vunpack.c.l.b16 %v3238
        %v5694 = vunpack.c.h.b16 %v3238
        %v5695 = vunpack.c.l.b16 %v3239
        %v5696 = vunpack.c.h.b16 %v3239
        %v5697 = vunpack.c.l.b16 %v3240
        %v5698 = vunpack.c.h.b16 %v3240
        %v5699 = vunpack.c.l.b16 %v3241
        %v5700 = vunpack.c.h.b16 %v3241
        %v5701 = vunpack.c.l.b16 %v3242
        %v5702 = vunpack.c.h.b16 %v3242
        %v5703 = vunpack.c.l.b16 %v3243
        %v5704 = vunpack.c.h.b16 %v3243
        %v5705 = vunpack.c.l.b16 %v3244
        %v5706 = vunpack.c.h.b16 %v3244
        %v5707 = vunpack.c.l.b16 %v3245
        %v5708 = vunpack.c.h.b16 %v3245
        %v5709 = vunpack.c.l.b16 %v3246
        %v5710 = vunpack.c.h.b16 %v3246
        %v5711 = vunpack.c.l.b16 %v3247
        %v5712 = vunpack.c.h.b16 %v3247
        %v5713 = vunpack.c.l.b16 %v3248
        %v5714 = vunpack.c.h.b16 %v3248
        %v5715 = vunpack.c.l.b16 %v3249
        %v5716 = vunpack.c.h.b16 %v3249
        %v5717 = vunpack.c.l.b16 %v3250
        %v5718 = vunpack.c.h.b16 %v3250
        %v5719 = vunpack.c.l.b16 %v3251
        %v5720 = vunpack.c.h.b16 %v3251
        %v5721 = vunpack.c.l.b16 %v3252
        %v5722 = vunpack.c.h.b16 %v3252
        %v5723 = vunpack.c.l.b16 %v3253
        %v5724 = vunpack.c.h.b16 %v3253
        %v5725 = vunpack.c.l.b16 %v3254
        %v5726 = vunpack.c.h.b16 %v3254
        %v5727 = vunpack.c.l.b16 %v3255
        %v5728 = vunpack.c.h.b16 %v3255
        %v5729 = vunpack.c.l.b16 %v3256
        %v5730 = vunpack.c.h.b16 %v3256
        %v5731 = vunpack.c.l.b16 %v3257
        %v5732 = vunpack.c.h.b16 %v3257
        %v5733 = vunpack.c.l.b16 %v3258
        %v5734 = vunpack.c.h.b16 %v3258
        %v5735 = vunpack.c.l.b16 %v3259
        %v5736 = vunpack.c.h.b16 %v3259
        %v5737 = vunpack.c.l.b16 %v3260
        %v5738 = vunpack.c.h.b16 %v3260
        %v5739 = vunpack.c.l.b16 %v3261
        %v5740 = vunpack.c.h.b16 %v3261
        %v5741 = vunpack.c.l.b16 %v3262
        %v5742 = vunpack.c.h.b16 %v3262
        %v5743 = vunpack.c.l.b16 %v3263
        %v5744 = vunpack.c.h.b16 %v3263
        %v5745 = vunpack.c.l.b16 %v3264
        %v5746 = vunpack.c.h.b16 %v3264
        %v5747 = vunpack.c.l.b16 %v3265
        %v5748 = vunpack.c.h.b16 %v3265
        %v5749 = vunpack.c.l.b16 %v3266
        %v5750 = vunpack.c.h.b16 %v3266
        %v5751 = vunpack.c.l.b16 %v3267
        %v5752 = vunpack.c.h.b16 %v3267
        %v5753 = vunpack.c.l.b16 %v3268
        %v5754 = vunpack.c.h.b16 %v3268
        %v5755 = vunpack.c.l.b16 %v3269
        %v5756 = vunpack.c.h.b16 %v3269
        %v5757 = vunpack.c.l.b16 %v3270
        %v5758 = vunpack.c.h.b16 %v3270
        %v5759 = vunpack.c.l.b16 %v3271
        %v5760 = vunpack.c.h.b16 %v3271
        %v5761 = vunpack.c.l.b16 %v3272
        %v5762 = vunpack.c.h.b16 %v3272
        %v5763 = vunpack.c.l.b16 %v3273
        %v5764 = vunpack.c.h.b16 %v3273
        %v5765 = vunpack.c.l.b16 %v3274
        %v5766 = vunpack.c.h.b16 %v3274
        %v5767 = vunpack.c.l.b16 %v3275
        %v5768 = vunpack.c.h.b16 %v3275
        %v5769 = vunpack.c.l.b16 %v3276
        %v5770 = vunpack.c.h.b16 %v3276
        %v5771 = vunpack.c.l.b16 %v3277
        %v5772 = vunpack.c.h.b16 %v3277
        %v5773 = vunpack.c.l.b16 %v3278
        %v5774 = vunpack.c.h.b16 %v3278
        %v5775 = vunpack.c.l.b16 %v3279
        %v5776 = vunpack.c.h.b16 %v3279
        %v5777 = vunpack.c.l.b16 %v3280
        %v5778 = vunpack.c.h.b16 %v3280
        %v5779 = vunpack.c.l.b16 %v3281
        %v5780 = vunpack.c.h.b16 %v3281
        %v5781 = vunpack.c.l.b16 %v3282
        %v5782 = vunpack.c.h.b16 %v3282
        %v5783 = vunpack.c.l.b16 %v3283
        %v5784 = vunpack.c.h.b16 %v3283
        %v5785 = vunpack.c.l.b16 %v3284
        %v5786 = vunpack.c.h.b16 %v3284
        %v5787 = vunpack.c.l.b16 %v3285
        %v5788 = vunpack.c.h.b16 %v3285
        %v5789 = vunpack.c.l.b16 %v3286
        %v5790 = vunpack.c.h.b16 %v3286
        %v5791 = vunpack.c.l.b16 %v3287
        %v5792 = vunpack.c.h.b16 %v3287
        %v5793 = vunpack.c.l.b16 %v3288
        %v5794 = vunpack.c.h.b16 %v3288
        %v5795 = vunpack.c.l.b16 %v3289
        %v5796 = vunpack.c.h.b16 %v3289
        %v5797 = vunpack.c.l.b16 %v3290
        %v5798 = vunpack.c.h.b16 %v3290
        %v5799 = vunpack.c.l.b16 %v3291
        %v5800 = vunpack.c.h.b16 %v3291
        %v5801 = vunpack.c.l.b16 %v3292
        %v5802 = vunpack.c.h.b16 %v3292
        %v5803 = vunpack.c.l.b16 %v3293
        %v5804 = vunpack.c.h.b16 %v3293
        %v5805 = vunpack.c.l.b16 %v3294
        %v5806 = vunpack.c.h.b16 %v3294
        %v5807 = vunpack.c.l.b16 %v3295
        %v5808 = vunpack.c.h.b16 %v3295
        %v5809 = vunpack.c.l.b16 %v3296
        %v5810 = vunpack.c.h.b16 %v3296
        %v5811 = vunpack.c.l.b16 %v3297
        %v5812 = vunpack.c.h.b16 %v3297
        %v5813 = vunpack.c.l.b16 %v3298
        %v5814 = vunpack.c.h.b16 %v3298
        %v5815 = vunpack.c.l.b16 %v3299
        %v5816 = vunpack.c.h.b16 %v3299
        %v5817 = vunpack.c.l.b16 %v3300
        %v5818 = vunpack.c.h.b16 %v3300
        %v5819 = vunpack.c.l.b16 %v3301
        %v5820 = vunpack.c.h.b16 %v3301
        %v5821 = vunpack.c.l.b16 %v3302
        %v5822 = vunpack.c.h.b16 %v3302
        %v5823 = vunpack.c.l.b16 %v3303
        %v5824 = vunpack.c.h.b16 %v3303
        %v5825 = vunpack.c.l.b16 %v3304
        %v5826 = vunpack.c.h.b16 %v3304
        %v5827 = vunpack.c.l.b16 %v3305
        %v5828 = vunpack.c.h.b16 %v3305
        %v5829 = vunpack.c.l.b16 %v3306
        %v5830 = vunpack.c.h.b16 %v3306
        %v5831 = vunpack.c.l.b16 %v3307
        %v5832 = vunpack.c.h.b16 %v3307
        %v5833 = vunpack.c.l.b16 %v3308
        %v5834 = vunpack.c.h.b16 %v3308
        %v5835 = vunpack.c.l.b16 %v3309
        %v5836 = vunpack.c.h.b16 %v3309
        %v5837 = vunpack.c.l.b16 %v3310
        %v5838 = vunpack.c.h.b16 %v3310
        %v5839 = vunpack.c.l.b16 %v3311
        %v5840 = vunpack.c.h.b16 %v3311
        %v5841 = vunpack.c.l.b16 %v3312
        %v5842 = vunpack.c.h.b16 %v3312
        %v5843 = vunpack.c.l.b16 %v3313
        %v5844 = vunpack.c.h.b16 %v3313
        %v5845 = vunpack.c.l.b16 %v3314
        %v5846 = vunpack.c.h.b16 %v3314
        %v5847 = vunpack.c.l.b16 %v3315
        %v5848 = vunpack.c.h.b16 %v3315
        %v5849 = vunpack.c.l.b16 %v3316
        %v5850 = vunpack.c.h.b16 %v3316
        %v5851 = vunpack.c.l.b16 %v3317
        %v5852 = vunpack.c.h.b16 %v3317
        %v5853 = vunpack.c.l.b16 %v3318
        %v5854 = vunpack.c.h.b16 %v3318
        %v5855 = vunpack.c.l.b16 %v3319
        %v5856 = vunpack.c.h.b16 %v3319
        %v5857 = vunpack.c.l.b16 %v3320
        %v5858 = vunpack.c.h.b16 %v3320
        %v5859 = vunpack.c.l.b16 %v3321
        %v5860 = vunpack.c.h.b16 %v3321
        %v5861 = vunpack.c.l.b16 %v3322
        %v5862 = vunpack.c.h.b16 %v3322
        %v5863 = vunpack.c.l.b16 %v3323
        %v5864 = vunpack.c.h.b16 %v3323
        %v5865 = vunpack.c.l.b16 %v3324
        %v5866 = vunpack.c.h.b16 %v3324
        %v5867 = vunpack.c.l.b16 %v3325
        %v5868 = vunpack.c.h.b16 %v3325
        %v5869 = vunpack.c.l.b16 %v3326
        %v5870 = vunpack.c.h.b16 %v3326
        %v5871 = vunpack.c.l.b16 %v3327
        %v5872 = vunpack.c.h.b16 %v3327
        %v5873 = vunpack.c.l.b16 %v3328
        %v5874 = vunpack.c.h.b16 %v3328
        %v5875 = vunpack.c.l.b16 %v3329
        %v5876 = vunpack.c.h.b16 %v3329
        %v5877 = vunpack.c.l.b16 %v3330
        %v5878 = vunpack.c.h.b16 %v3330
        %v5879 = vunpack.c.l.b16 %v3331
        %v5880 = vunpack.c.h.b16 %v3331
        %v5881 = vunpack.c.l.b16 %v3332
        %v5882 = vunpack.c.h.b16 %v3332
        %v5883 = vunpack.c.l.b16 %v3333
        %v5884 = vunpack.c.h.b16 %v3333
        %v5885 = vunpack.c.l.b16 %v3334
        %v5886 = vunpack.c.h.b16 %v3334
        %v5887 = vunpack.c.l.b16 %v3335
        %v5888 = vunpack.c.h.b16 %v3335
        %v5889 = vunpack.c.l.b16 %v3336
        %v5890 = vunpack.c.h.b16 %v3336
        %v5891 = vunpack.c.l.b16 %v3337
        %v5892 = vunpack.c.h.b16 %v3337
        %v5893 = vunpack.c.l.b16 %v3338
        %v5894 = vunpack.c.h.b16 %v3338
        %v5895 = vunpack.c.l.b16 %v3339
        %v5896 = vunpack.c.h.b16 %v3339
        %v5897 = vunpack.c.l.b16 %v3340
        %v5898 = vunpack.c.h.b16 %v3340
        %v5899 = vunpack.c.l.b16 %v3341
        %v5900 = vunpack.c.h.b16 %v3341
        %v5901 = vunpack.c.l.b16 %v3342
        %v5902 = vunpack.c.h.b16 %v3342
        %v5903 = vunpack.c.l.b16 %v3343
        %v5904 = vunpack.c.h.b16 %v3343
        %v5905 = vunpack.c.l.b16 %v3344
        %v5906 = vunpack.c.h.b16 %v3344
        %v5907 = vunpack.c.l.b16 %v3345
        %v5908 = vunpack.c.h.b16 %v3345
        %v5909 = vunpack.c.l.b16 %v3346
        %v5910 = vunpack.c.h.b16 %v3346
        %v5911 = vunpack.c.l.b16 %v3347
        %v5912 = vunpack.c.h.b16 %v3347
        %v5913 = vunpack.c.l.b16 %v3348
        %v5914 = vunpack.c.h.b16 %v3348
        %v5915 = vunpack.c.l.b16 %v3349
        %v5916 = vunpack.c.h.b16 %v3349
        %v5917 = vunpack.c.l.b16 %v3350
        %v5918 = vunpack.c.h.b16 %v3350
        %v5919 = vunpack.c.l.b16 %v3351
        %v5920 = vunpack.c.h.b16 %v3351
        %v5921 = vunpack.c.l.b16 %v3352
        %v5922 = vunpack.c.h.b16 %v3352
        %v5923 = vunpack.c.l.b16 %v3353
        %v5924 = vunpack.c.h.b16 %v3353
        %v5925 = vunpack.c.l.b16 %v3354
        %v5926 = vunpack.c.h.b16 %v3354
        %v5927 = vunpack.c.l.b16 %v3355
        %v5928 = vunpack.c.h.b16 %v3355
        %v5929 = vunpack.c.l.b16 %v3356
        %v5930 = vunpack.c.h.b16 %v3356
        %v5931 = vunpack.c.l.b16 %v3357
        %v5932 = vunpack.c.h.b16 %v3357
        %v5933 = vunpack.c.l.b16 %v3358
        %v5934 = vunpack.c.h.b16 %v3358
        %v5935 = vunpack.c.l.b16 %v3359
        %v5936 = vunpack.c.h.b16 %v3359
        %v5937 = vunpack.c.l.b16 %v3360
        %v5938 = vunpack.c.h.b16 %v3360
        %v5939 = vunpack.c.l.b16 %v3361
        %v5940 = vunpack.c.h.b16 %v3361
        %v5941 = vunpack.c.l.b16 %v3362
        %v5942 = vunpack.c.h.b16 %v3362
        %v5943 = vunpack.c.l.b16 %v3363
        %v5944 = vunpack.c.h.b16 %v3363
        %v5945 = vunpack.c.l.b16 %v3364
        %v5946 = vunpack.c.h.b16 %v3364
        %v5947 = vunpack.c.l.b16 %v3365
        %v5948 = vunpack.c.h.b16 %v3365
        %v5949 = vunpack.c.l.b16 %v3366
        %v5950 = vunpack.c.h.b16 %v3366
        %v5951 = vunpack.c.l.b16 %v3367
        %v5952 = vunpack.c.h.b16 %v3367
        %v5953 = vunpack.c.l.b16 %v3368
        %v5954 = vunpack.c.h.b16 %v3368
        %v5955 = vunpack.c.l.b16 %v3369
        %v5956 = vunpack.c.h.b16 %v3369
        %v5957 = vunpack.c.l.b16 %v3370
        %v5958 = vunpack.c.h.b16 %v3370
        %v5959 = vunpack.c.l.b16 %v3371
        %v5960 = vunpack.c.h.b16 %v3371
        %v5961 = vunpack.c.l.b16 %v3372
        %v5962 = vunpack.c.h.b16 %v3372
        %v5963 = vunpack.c.l.b16 %v3373
        %v5964 = vunpack.c.h.b16 %v3373
        %v5965 = vunpack.c.l.b16 %v3374
        %v5966 = vunpack.c.h.b16 %v3374
        %v5967 = vunpack.c.l.b16 %v3375
        %v5968 = vunpack.c.h.b16 %v3375
        %v5969 = vunpack.c.l.b16 %v3376
        %v5970 = vunpack.c.h.b16 %v3376
        %v5971 = vunpack.c.l.b16 %v3377
        %v5972 = vunpack.c.h.b16 %v3377
        %v5973 = vunpack.c.l.b16 %v3378
        %v5974 = vunpack.c.h.b16 %v3378
        %v5975 = vunpack.c.l.b16 %v3379
        %v5976 = vunpack.c.h.b16 %v3379
        %v5977 = vunpack.c.l.b16 %v3380
        %v5978 = vunpack.c.h.b16 %v3380
        %v5979 = vunpack.c.l.b16 %v3381
        %v5980 = vunpack.c.h.b16 %v3381
        %v5981 = vunpack.c.l.b16 %v3382
        %v5982 = vunpack.c.h.b16 %v3382
        %v5983 = vunpack.c.l.b16 %v3383
        %v5984 = vunpack.c.h.b16 %v3383
        %v5985 = vunpack.c.l.b16 %v3384
        %v5986 = vunpack.c.h.b16 %v3384
        %v5987 = vunpack.c.l.b16 %v3385
        %v5988 = vunpack.c.h.b16 %v3385
        %v5989 = vunpack.c.l.b16 %v3386
        %v5990 = vunpack.c.h.b16 %v3386
        %v5991 = vunpack.c.l.b16 %v3387
        %v5992 = vunpack.c.h.b16 %v3387
        %v5993 = vunpack.c.l.b16 %v3388
        %v5994 = vunpack.c.h.b16 %v3388
        %v5995 = vunpack.c.l.b16 %v3389
        %v5996 = vunpack.c.h.b16 %v3389
        %v5997 = vunpack.c.l.b16 %v3390
        %v5998 = vunpack.c.h.b16 %v3390
        %v5999 = vunpack.c.l.b16 %v3391
        %v6000 = vunpack.c.h.b16 %v3391
        %v6001 = vunpack.c.l.b16 %v3392
        %v6002 = vunpack.c.h.b16 %v3392
        %v6003 = vunpack.c.l.b16 %v3393
        %v6004 = vunpack.c.h.b16 %v3393
        %v6005 = vunpack.c.l.b16 %v3394
        %v6006 = vunpack.c.h.b16 %v3394
        %v6007 = vunpack.c.l.b16 %v3395
        %v6008 = vunpack.c.h.b16 %v3395
        %v6009 = vunpack.c.l.b16 %v3396
        %v6010 = vunpack.c.h.b16 %v3396
        %v6011 = vunpack.c.l.b16 %v3397
        %v6012 = vunpack.c.h.b16 %v3397
        %v6013 = vunpack.c.l.b16 %v3398
        %v6014 = vunpack.c.h.b16 %v3398
        %v6015 = vunpack.c.l.b16 %v3399
        %v6016 = vunpack.c.h.b16 %v3399
        %v6017 = vunpack.c.l.b16 %v3400
        %v6018 = vunpack.c.h.b16 %v3400
        %v6019 = vunpack.c.l.b16 %v3401
        %v6020 = vunpack.c.h.b16 %v3401
        %v6021 = vunpack.c.l.b16 %v3402
        %v6022 = vunpack.c.h.b16 %v3402
        %v6023 = vunpack.c.l.b16 %v3403
        %v6024 = vunpack.c.h.b16 %v3403
        %v6025 = vunpack.c.l.b16 %v3404
        %v6026 = vunpack.c.h.b16 %v3404
        %v6027 = vunpack.c.l.b16 %v3405
        %v6028 = vunpack.c.h.b16 %v3405
        %v6029 = vunpack.c.l.b16 %v3406
        %v6030 = vunpack.c.h.b16 %v3406
        %v6031 = vunpack.c.l.b16 %v3407
        %v6032 = vunpack.c.h.b16 %v3407
        %v6033 = vunpack.c.l.b16 %v3408
        %v6034 = vunpack.c.h.b16 %v3408
        %v6035 = vunpack.c.l.b16 %v3409
        %v6036 = vunpack.c.h.b16 %v3409
        %v6037 = vunpack.c.l.b16 %v3410
        %v6038 = vunpack.c.h.b16 %v3410
        %v6039 = vunpack.c.l.b16 %v3411
        %v6040 = vunpack.c.h.b16 %v3411
        %v6041 = vunpack.c.l.b16 %v3412
        %v6042 = vunpack.c.h.b16 %v3412
        %v6043 = vunpack.c.l.b16 %v3413
        %v6044 = vunpack.c.h.b16 %v3413
        %v6045 = vunpack.c.l.b16 %v3414
        %v6046 = vunpack.c.h.b16 %v3414
        %v6047 = vunpack.c.l.b16 %v3415
        %v6048 = vunpack.c.h.b16 %v3415
        %v6049 = vunpack.c.l.b16 %v3416
        %v6050 = vunpack.c.h.b16 %v3416
        %v6051 = vunpack.c.l.b16 %v3417
        %v6052 = vunpack.c.h.b16 %v3417
        %v6053 = vunpack.c.l.b16 %v3418
        %v6054 = vunpack.c.h.b16 %v3418
        %v6055 = vunpack.c.l.b16 %v3419
        %v6056 = vunpack.c.h.b16 %v3419
        %v6057 = vunpack.c.l.b16 %v3420
        %v6058 = vunpack.c.h.b16 %v3420
        %v6059 = vunpack.c.l.b16 %v3421
        %v6060 = vunpack.c.h.b16 %v3421
        %v6061 = vunpack.c.l.b16 %v3422
        %v6062 = vunpack.c.h.b16 %v3422
        %v6063 = vunpack.c.l.b16 %v3423
        %v6064 = vunpack.c.h.b16 %v3423
        %v6065 = vunpack.c.l.b16 %v3424
        %v6066 = vunpack.c.h.b16 %v3424
        %v6067 = vunpack.c.l.b16 %v3425
        %v6068 = vunpack.c.h.b16 %v3425
        %v6069 = vunpack.c.l.b16 %v3426
        %v6070 = vunpack.c.h.b16 %v3426
        %v6071 = vunpack.c.l.b16 %v3427
        %v6072 = vunpack.c.h.b16 %v3427
        %v6073 = vunpack.c.l.b16 %v3428
        %v6074 = vunpack.c.h.b16 %v3428
        %v6075 = vunpack.c.l.b16 %v3429
        %v6076 = vunpack.c.h.b16 %v3429
        %v6077 = vunpack.c.l.b16 %v3430
        %v6078 = vunpack.c.h.b16 %v3430
        %v6079 = vunpack.c.l.b16 %v3431
        %v6080 = vunpack.c.h.b16 %v3431
        %v6081 = vunpack.c.l.b16 %v3432
        %v6082 = vunpack.c.h.b16 %v3432
        %v6083 = vunpack.c.l.b16 %v3433
        %v6084 = vunpack.c.h.b16 %v3433
        %v6085 = vunpack.c.l.b16 %v3434
        %v6086 = vunpack.c.h.b16 %v3434
        %v6087 = vunpack.c.l.b16 %v3435
        %v6088 = vunpack.c.h.b16 %v3435
        %v6089 = vunpack.c.l.b16 %v3436
        %v6090 = vunpack.c.h.b16 %v3436
        %v6091 = vunpack.c.l.b16 %v3437
        %v6092 = vunpack.c.h.b16 %v3437
        %v6093 = vunpack.c.l.b16 %v3438
        %v6094 = vunpack.c.h.b16 %v3438
        %v6095 = vunpack.c.l.b16 %v3439
        %v6096 = vunpack.c.h.b16 %v3439
        %v6097 = vunpack.c.l.b16 %v3440
        %v6098 = vunpack.c.h.b16 %v3440
        %v6099 = vunpack.c.l.b16 %v3441
        %v6100 = vunpack.c.h.b16 %v3441
        %v6101 = vunpack.c.l.b16 %v3442
        %v6102 = vunpack.c.h.b16 %v3442
        %v6103 = vunpack.c.l.b16 %v3443
        %v6104 = vunpack.c.h.b16 %v3443
        %v6105 = vunpack.c.l.b16 %v3444
        %v6106 = vunpack.c.h.b16 %v3444
        %v6107 = vunpack.c.l.b16 %v3445
        %v6108 = vunpack.c.h.b16 %v3445
        %v6109 = vunpack.c.l.b16 %v3446
        %v6110 = vunpack.c.h.b16 %v3446
        %v6111 = vunpack.c.l.b16 %v3447
        %v6112 = vunpack.c.h.b16 %v3447
        %v6113 = vunpack.c.l.b16 %v3448
        %v6114 = vunpack.c.h.b16 %v3448
        %v6115 = vunpack.c.l.b16 %v3449
        %v6116 = vunpack.c.h.b16 %v3449
        %v6117 = vunpack.c.l.b16 %v3450
        %v6118 = vunpack.c.h.b16 %v3450
        %v6119 = vunpack.c.l.b16 %v3451
        %v6120 = vunpack.c.h.b16 %v3451
        %v6121 = vunpack.c.l.b16 %v3452
        %v6122 = vunpack.c.h.b16 %v3452
        %v6123 = vunpack.c.l.b16 %v3453
        %v6124 = vunpack.c.h.b16 %v3453
        %v6125 = vunpack.c.l.b16 %v3454
        %v6126 = vunpack.c.h.b16 %v3454
        %v6127 = vunpack.c.l.b16 %v3455
        %v6128 = vunpack.c.h.b16 %v3455
        %v6129 = vunpack.c.l.b16 %v3456
        %v6130 = vunpack.c.h.b16 %v3456
        %v6131 = vunpack.c.l.b16 %v3457
        %v6132 = vunpack.c.h.b16 %v3457
        %v6133 = vunpack.c.l.b16 %v3458
        %v6134 = vunpack.c.h.b16 %v3458
        %v6135 = vunpack.c.l.b16 %v3459
        %v6136 = vunpack.c.h.b16 %v3459
        %v6137 = vunpack.c.l.b16 %v3460
        %v6138 = vunpack.c.h.b16 %v3460
        %v6139 = vunpack.c.l.b16 %v3461
        %v6140 = vunpack.c.h.b16 %v3461
        %v6141 = vunpack.c.l.b16 %v3462
        %v6142 = vunpack.c.h.b16 %v3462
        %v6143 = vunpack.c.l.b16 %v3463
        %v6144 = vunpack.c.h.b16 %v3463
        %v6145 = vunpack.c.l.b16 %v3464
        %v6146 = vunpack.c.h.b16 %v3464
        %v6147 = vunpack.c.l.b16 %v3465
        %v6148 = vunpack.c.h.b16 %v3465
        %v6149 = vunpack.c.l.b16 %v3466
        %v6150 = vunpack.c.h.b16 %v3466
        %v6151 = vunpack.c.l.b16 %v3467
        %v6152 = vunpack.c.h.b16 %v3467
        %v6153 = vunpack.c.l.b16 %v3468
        %v6154 = vunpack.c.h.b16 %v3468
        %v6155 = vunpack.c.l.b16 %v3469
        %v6156 = vunpack.c.h.b16 %v3469
        %v6157 = vunpack.c.l.b16 %v3470
        %v6158 = vunpack.c.h.b16 %v3470
        %v6159 = vunpack.c.l.b16 %v3471
        %v6160 = vunpack.c.h.b16 %v3471
        %v6161 = vunpack.c.l.b16 %v3472
        %v6162 = vunpack.c.h.b16 %v3472
        %v6163 = vunpack.c.l.b16 %v3473
        %v6164 = vunpack.c.h.b16 %v3473
        %v6165 = vunpack.c.l.b16 %v3474
        %v6166 = vunpack.c.h.b16 %v3474
        %v6167 = vunpack.c.l.b16 %v3475
        %v6168 = vunpack.c.h.b16 %v3475
        %v6169 = vunpack.c.l.b16 %v3476
        %v6170 = vunpack.c.h.b16 %v3476
        %v6171 = vunpack.c.l.b16 %v3477
        %v6172 = vunpack.c.h.b16 %v3477
        %v6173 = vunpack.c.l.b16 %v3478
        %v6174 = vunpack.c.h.b16 %v3478
        %v6175 = vunpack.c.l.b16 %v3479
        %v6176 = vunpack.c.h.b16 %v3479
        %v6177 = vunpack.c.l.b16 %v3480
        %v6178 = vunpack.c.h.b16 %v3480
        %v6179 = vunpack.c.l.b16 %v3481
        %v6180 = vunpack.c.h.b16 %v3481
        %v6181 = vunpack.c.l.b16 %v3482
        %v6182 = vunpack.c.h.b16 %v3482
        %v6183 = vunpack.c.l.b16 %v3483
        %v6184 = vunpack.c.h.b16 %v3483
        %v6185 = vunpack.c.l.b16 %v3484
        %v6186 = vunpack.c.h.b16 %v3484
        %v6187 = vunpack.c.l.b16 %v3485
        %v6188 = vunpack.c.h.b16 %v3485
        %v6189 = vunpack.c.l.b16 %v3486
        %v6190 = vunpack.c.h.b16 %v3486
        %v6191 = vunpack.c.l.b16 %v3487
        %v6192 = vunpack.c.h.b16 %v3487
        %v6193 = vunpack.c.l.b16 %v3488
        %v6194 = vunpack.c.h.b16 %v3488
        %v6195 = vunpack.c.l.b16 %v3489
        %v6196 = vunpack.c.h.b16 %v3489
        %v6197 = vunpack.c.l.b16 %v3490
        %v6198 = vunpack.c.h.b16 %v3490
        %v6199 = vunpack.c.l.b16 %v3491
        %v6200 = vunpack.c.h.b16 %v3491
        %v6201 = vunpack.c.l.b16 %v3492
        %v6202 = vunpack.c.h.b16 %v3492
        %v6203 = vunpack.c.l.b16 %v3493
        %v6204 = vunpack.c.h.b16 %v3493
        %v6205 = vunpack.c.l.b16 %v3494
        %v6206 = vunpack.c.h.b16 %v3494
        %v6207 = vunpack.c.l.b16 %v3495
        %v6208 = vunpack.c.h.b16 %v3495
        %v6209 = vunpack.c.l.b16 %v3496
        %v6210 = vunpack.c.h.b16 %v3496
        %v6211 = vunpack.c.l.b16 %v3497
        %v6212 = vunpack.c.h.b16 %v3497
        %v6213 = vunpack.c.l.b16 %v3498
        %v6214 = vunpack.c.h.b16 %v3498
        %v6215 = vunpack.c.l.b16 %v3499
        %v6216 = vunpack.c.h.b16 %v3499
        %v6217 = vunpack.c.l.b16 %v3500
        %v6218 = vunpack.c.h.b16 %v3500
        %v6219 = vunpack.c.l.b16 %v3501
        %v6220 = vunpack.c.h.b16 %v3501
        %v6221 = vunpack.c.l.b16 %v3502
        %v6222 = vunpack.c.h.b16 %v3502
        %v6223 = vunpack.c.l.b16 %v3503
        %v6224 = vunpack.c.h.b16 %v3503
        %v6225 = vunpack.c.l.b16 %v3504
        %v6226 = vunpack.c.h.b16 %v3504
        %v6227 = vunpack.c.l.b16 %v3505
        %v6228 = vunpack.c.h.b16 %v3505
        %v6229 = vunpack.c.l.b16 %v3506
        %v6230 = vunpack.c.h.b16 %v3506
        %v6231 = vunpack.c.l.b16 %v3507
        %v6232 = vunpack.c.h.b16 %v3507
        %v6233 = vunpack.c.l.b16 %v3508
        %v6234 = vunpack.c.h.b16 %v3508
        %v6235 = vunpack.c.l.b16 %v3509
        %v6236 = vunpack.c.h.b16 %v3509
        %v6237 = vunpack.c.l.b16 %v3510
        %v6238 = vunpack.c.h.b16 %v3510
        %v6239 = vunpack.c.l.b16 %v3511
        %v6240 = vunpack.c.h.b16 %v3511
        %v6241 = vunpack.c.l.b16 %v3512
        %v6242 = vunpack.c.h.b16 %v3512
        %v6243 = vunpack.c.l.b16 %v3513
        %v6244 = vunpack.c.h.b16 %v3513
        %v6245 = vunpack.c.l.b16 %v3514
        %v6246 = vunpack.c.h.b16 %v3514
        %v6247 = vunpack.c.l.b16 %v3515
        %v6248 = vunpack.c.h.b16 %v3515
        %v6249 = vunpack.c.l.b16 %v3516
        %v6250 = vunpack.c.h.b16 %v3516
        %v6251 = vunpack.c.l.b16 %v3517
        %v6252 = vunpack.c.h.b16 %v3517
        %v6253 = vunpack.c.l.b16 %v3518
        %v6254 = vunpack.c.h.b16 %v3518
        %v6255 = vunpack.c.l.b16 %v3519
        %v6256 = vunpack.c.h.b16 %v3519
        %v6257 = vunpack.c.l.b16 %v3520
        %v6258 = vunpack.c.h.b16 %v3520
        %v6259 = vunpack.c.l.b16 %v3521
        %v6260 = vunpack.c.h.b16 %v3521
        %v6261 = vunpack.c.l.b16 %v3522
        %v6262 = vunpack.c.h.b16 %v3522
        %v6263 = vunpack.c.l.b16 %v3523
        %v6264 = vunpack.c.h.b16 %v3523
        %v6265 = vunpack.c.l.b16 %v3524
        %v6266 = vunpack.c.h.b16 %v3524
        %v6267 = vunpack.c.l.b16 %v3525
        %v6268 = vunpack.c.h.b16 %v3525
        %v6269 = vunpack.c.l.b16 %v3526
        %v6270 = vunpack.c.h.b16 %v3526
        %v6271 = vunpack.c.l.b16 %v3527
        %v6272 = vunpack.c.h.b16 %v3527
        %v6273 = vunpack.c.l.b16 %v3528
        %v6274 = vunpack.c.h.b16 %v3528
        %v6275 = vunpack.c.l.b16 %v3529
        %v6276 = vunpack.c.h.b16 %v3529
        %v6277 = vunpack.c.l.b16 %v3530
        %v6278 = vunpack.c.h.b16 %v3530
        %v6279 = vunpack.c.l.b16 %v3531
        %v6280 = vunpack.c.h.b16 %v3531
        %v6281 = vunpack.c.l.b16 %v3532
        %v6282 = vunpack.c.h.b16 %v3532
        %v6283 = vunpack.c.l.b16 %v3533
        %v6284 = vunpack.c.h.b16 %v3533
        %v6285 = vunpack.c.l.b16 %v3534
        %v6286 = vunpack.c.h.b16 %v3534
        %v6287 = vunpack.c.l.b16 %v3535
        %v6288 = vunpack.c.h.b16 %v3535
        %v6289 = vunpack.c.l.b16 %v3536
        %v6290 = vunpack.c.h.b16 %v3536
        %v6291 = vunpack.c.l.b16 %v3537
        %v6292 = vunpack.c.h.b16 %v3537
        %v6293 = vunpack.c.l.b16 %v3538
        %v6294 = vunpack.c.h.b16 %v3538
        %v6295 = vunpack.c.l.b16 %v3539
        %v6296 = vunpack.c.h.b16 %v3539
        %v6297 = vunpack.c.l.b16 %v3540
        %v6298 = vunpack.c.h.b16 %v3540
        %v6299 = vunpack.c.l.b16 %v3541
        %v6300 = vunpack.c.h.b16 %v3541
        %v6301 = vunpack.c.l.b16 %v3542
        %v6302 = vunpack.c.h.b16 %v3542
        %v6303 = vunpack.c.l.b16 %v3543
        %v6304 = vunpack.c.h.b16 %v3543
        %v6305 = vunpack.c.l.b16 %v3544
        %v6306 = vunpack.c.h.b16 %v3544
        %v6307 = vunpack.c.l.b16 %v3545
        %v6308 = vunpack.c.h.b16 %v3545
        %v6309 = vunpack.c.l.b16 %v3546
        %v6310 = vunpack.c.h.b16 %v3546
        %v6311 = vunpack.c.l.b16 %v3547
        %v6312 = vunpack.c.h.b16 %v3547
        %v6313 = vunpack.c.l.b16 %v3548
        %v6314 = vunpack.c.h.b16 %v3548
        %v6315 = vunpack.c.l.b16 %v3549
        %v6316 = vunpack.c.h.b16 %v3549
        %v6317 = vunpack.c.l.b16 %v3550
        %v6318 = vunpack.c.h.b16 %v3550
        %v6319 = vunpack.c.l.b16 %v3551
        %v6320 = vunpack.c.h.b16 %v3551
        %v6321 = vunpack.c.l.b16 %v3552
        %v6322 = vunpack.c.h.b16 %v3552
        %v6323 = vunpack.c.l.b16 %v3553
        %v6324 = vunpack.c.h.b16 %v3553
        %v6325 = vunpack.c.l.b16 %v3554
        %v6326 = vunpack.c.h.b16 %v3554
        %v6327 = vunpack.c.l.b16 %v3555
        %v6328 = vunpack.c.h.b16 %v3555
        %v6329 = vunpack.c.l.b16 %v3556
        %v6330 = vunpack.c.h.b16 %v3556
        %v6331 = vunpack.c.l.b16 %v3557
        %v6332 = vunpack.c.h.b16 %v3557
        %v6333 = vunpack.c.l.b16 %v3558
        %v6334 = vunpack.c.h.b16 %v3558
        %v6335 = vunpack.c.l.b16 %v3559
        %v6336 = vunpack.c.h.b16 %v3559
        %v6337 = vunpack.c.l.b16 %v3560
        %v6338 = vunpack.c.h.b16 %v3560
        %v6339 = vunpack.c.l.b16 %v3561
        %v6340 = vunpack.c.h.b16 %v3561
        %v6341 = vunpack.c.l.b16 %v3562
        %v6342 = vunpack.c.h.b16 %v3562
        %v6343 = vunpack.c.l.b16 %v3563
        %v6344 = vunpack.c.h.b16 %v3563
        %v6345 = vunpack.c.l.b16 %v3564
        %v6346 = vunpack.c.h.b16 %v3564
        %v6347 = vunpack.c.l.b16 %v3565
        %v6348 = vunpack.c.h.b16 %v3565
        %v6349 = vunpack.c.l.b16 %v3566
        %v6350 = vunpack.c.h.b16 %v3566
        %v6351 = vunpack.c.l.b16 %v3567
        %v6352 = vunpack.c.h.b16 %v3567
        %v6353 = vunpack.c.l.b16 %v3568
        %v6354 = vunpack.c.h.b16 %v3568
        %v6355 = vunpack.c.l.b16 %v3569
        %v6356 = vunpack.c.h.b16 %v3569
        %v6357 = vunpack.c.l.b16 %v3570
        %v6358 = vunpack.c.h.b16 %v3570
        %v6359 = vunpack.c.l.b16 %v3571
        %v6360 = vunpack.c.h.b16 %v3571
        %v6361 = vunpack.c.l.b16 %v3572
        %v6362 = vunpack.c.h.b16 %v3572
        %v6363 = vunpack.c.l.b16 %v3573
        %v6364 = vunpack.c.h.b16 %v3573
        %v6365 = vunpack.c.l.b16 %v3574
        %v6366 = vunpack.c.h.b16 %v3574
        %v6367 = vunpack.c.l.b16 %v3575
        %v6368 = vunpack.c.h.b16 %v3575
        %v6369 = vunpack.c.l.b16 %v3576
        %v6370 = vunpack.c.h.b16 %v3576
        %v6371 = vunpack.c.l.b16 %v3577
        %v6372 = vunpack.c.h.b16 %v3577
        %v6373 = vunpack.c.l.b16 %v3578
        %v6374 = vunpack.c.h.b16 %v3578
        %v6375 = vunpack.c.l.b16 %v3579
        %v6376 = vunpack.c.h.b16 %v3579
        %v6377 = vunpack.c.l.b16 %v3580
        %v6378 = vunpack.c.h.b16 %v3580
        %v6379 = vunpack.c.l.b16 %v3581
        %v6380 = vunpack.c.h.b16 %v3581
        %v6381 = vunpack.c.l.b16 %v3582
        %v6382 = vunpack.c.h.b16 %v3582
        %v6383 = vunpack.c.l.b16 %v3583
        %v6384 = vunpack.c.h.b16 %v3583
        %v6385 = vunpack.c.l.b16 %v3584
        %v6386 = vunpack.c.h.b16 %v3584
        %v6387 = vunpack.c.l.b16 %v3585
        %v6388 = vunpack.c.h.b16 %v3585
        %v6389 = vunpack.c.l.b16 %v3586
        %v6390 = vunpack.c.h.b16 %v3586
        %v6391 = vunpack.c.l.b16 %v3587
        %v6392 = vunpack.c.h.b16 %v3587
        %v6393 = vunpack.c.l.b16 %v3588
        %v6394 = vunpack.c.h.b16 %v3588
        %v6395 = vunpack.c.l.b16 %v3589
        %v6396 = vunpack.c.h.b16 %v3589
        %v6397 = vunpack.c.l.b16 %v3590
        %v6398 = vunpack.c.h.b16 %v3590
        %v6399 = vunpack.c.l.b16 %v3591
        %v6400 = vunpack.c.h.b16 %v3591
        %v6401 = vunpack.c.l.b16 %v3592
        %v6402 = vunpack.c.h.b16 %v3592
        %v6403 = vunpack.c.l.b16 %v3593
        %v6404 = vunpack.c.h.b16 %v3593
        %v6405 = vunpack.c.l.b16 %v3594
        %v6406 = vunpack.c.h.b16 %v3594
        %v6407 = vunpack.c.l.b16 %v3595
        %v6408 = vunpack.c.h.b16 %v3595
        %v6409 = vunpack.c.l.b16 %v3596
        %v6410 = vunpack.c.h.b16 %v3596
        %v6411 = vunpack.c.l.b16 %v3597
        %v6412 = vunpack.c.h.b16 %v3597
        %v6413 = vunpack.c.l.b16 %v3598
        %v6414 = vunpack.c.h.b16 %v3598
        %v6415 = vunpack.c.l.b16 %v3599
        %v6416 = vunpack.c.h.b16 %v3599
        %v6417 = vunpack.c.l.b16 %v3600
        %v6418 = vunpack.c.h.b16 %v3600
        %v6419 = vunpack.c.l.b16 %v3601
        %v6420 = vunpack.c.h.b16 %v3601
        %v6421 = vunpack.c.l.b16 %v3602
        %v6422 = vunpack.c.h.b16 %v3602
        %v6423 = vunpack.c.l.b16 %v3603
        %v6424 = vunpack.c.h.b16 %v3603
        %v6425 = vunpack.c.l.b16 %v3604
        %v6426 = vunpack.c.h.b16 %v3604
        %v6427 = vunpack.c.l.b16 %v3605
        %v6428 = vunpack.c.h.b16 %v3605
        %v6429 = vunpack.c.l.b16 %v3606
        %v6430 = vunpack.c.h.b16 %v3606
        %v6431 = vunpack.c.l.b16 %v3607
        %v6432 = vunpack.c.h.b16 %v3607
        %v6433 = vunpack.c.l.b16 %v3608
        %v6434 = vunpack.c.h.b16 %v3608
        %v6435 = vunpack.c.l.b16 %v3609
        %v6436 = vunpack.c.h.b16 %v3609
        %v6437 = vunpack.c.l.b16 %v3610
        %v6438 = vunpack.c.h.b16 %v3610
        %v6439 = vunpack.c.l.b16 %v3611
        %v6440 = vunpack.c.h.b16 %v3611
        %v6441 = vunpack.c.l.b16 %v3612
        %v6442 = vunpack.c.h.b16 %v3612
        %v6443 = vunpack.c.l.b16 %v3613
        %v6444 = vunpack.c.h.b16 %v3613
        %v6445 = vunpack.c.l.b16 %v3614
        %v6446 = vunpack.c.h.b16 %v3614
        %v6447 = vunpack.c.l.b16 %v3615
        %v6448 = vunpack.c.h.b16 %v3615
        %v6449 = vunpack.c.l.b16 %v3616
        %v6450 = vunpack.c.h.b16 %v3616
        %v6451 = vunpack.c.l.b16 %v3617
        %v6452 = vunpack.c.h.b16 %v3617
        %v6453 = vunpack.c.l.b16 %v3618
        %v6454 = vunpack.c.h.b16 %v3618
        %v6455 = vunpack.c.l.b16 %v3619
        %v6456 = vunpack.c.h.b16 %v3619
        %v6457 = vunpack.c.l.b16 %v3620
        %v6458 = vunpack.c.h.b16 %v3620
        %v6459 = vunpack.c.l.b16 %v3621
        %v6460 = vunpack.c.h.b16 %v3621
        %v6461 = vunpack.c.l.b16 %v3622
        %v6462 = vunpack.c.h.b16 %v3622
        %v6463 = vunpack.c.l.b16 %v3623
        %v6464 = vunpack.c.h.b16 %v3623
        %v6465 = vunpack.c.l.b16 %v3624
        %v6466 = vunpack.c.h.b16 %v3624
        %v6467 = vunpack.c.l.b16 %v3625
        %v6468 = vunpack.c.h.b16 %v3625
        %v6469 = vunpack.c.l.b16 %v3626
        %v6470 = vunpack.c.h.b16 %v3626
        %v6471 = vunpack.c.l.b16 %v3627
        %v6472 = vunpack.c.h.b16 %v3627
        %v6473 = vunpack.c.l.b16 %v3628
        %v6474 = vunpack.c.h.b16 %v3628
        %v6475 = vunpack.c.l.b16 %v3629
        %v6476 = vunpack.c.h.b16 %v3629
        %v6477 = vunpack.c.l.b16 %v3630
        %v6478 = vunpack.c.h.b16 %v3630
        %v6479 = vunpack.c.l.b16 %v3631
        %v6480 = vunpack.c.h.b16 %v3631
        %v6481 = vunpack.c.l.b16 %v3632
        %v6482 = vunpack.c.h.b16 %v3632
        %v6483 = vunpack.c.l.b16 %v3633
        %v6484 = vunpack.c.h.b16 %v3633
        %v6485 = vunpack.c.l.b16 %v3634
        %v6486 = vunpack.c.h.b16 %v3634
        %v6487 = vunpack.c.l.b16 %v3635
        %v6488 = vunpack.c.h.b16 %v3635
        %v6489 = vunpack.c.l.b16 %v3636
        %v6490 = vunpack.c.h.b16 %v3636
        %v6491 = vunpack.c.l.b16 %v3637
        %v6492 = vunpack.c.h.b16 %v3637
        %v6493 = vunpack.c.l.b16 %v3638
        %v6494 = vunpack.c.h.b16 %v3638
        %v6495 = vunpack.c.l.b16 %v3639
        %v6496 = vunpack.c.h.b16 %v3639
        %v6497 = vunpack.c.l.b16 %v3640
        %v6498 = vunpack.c.h.b16 %v3640
        %v6499 = vunpack.c.l.b16 %v3641
        %v6500 = vunpack.c.h.b16 %v3641
        %v6501 = vunpack.c.l.b16 %v3642
        %v6502 = vunpack.c.h.b16 %v3642
        %v6503 = vunpack.c.l.b16 %v3643
        %v6504 = vunpack.c.h.b16 %v3643
        %v6505 = vunpack.c.l.b16 %v3644
        %v6506 = vunpack.c.h.b16 %v3644
        %v6507 = vunpack.c.l.b16 %v3645
        %v6508 = vunpack.c.h.b16 %v3645
        %v6509 = vunpack.c.l.b16 %v3646
        %v6510 = vunpack.c.h.b16 %v3646
        %v6511 = vunpack.c.l.b16 %v3647
        %v6512 = vunpack.c.h.b16 %v3647
        %v6513 = vunpack.c.l.b16 %v3648
        %v6514 = vunpack.c.h.b16 %v3648
        %v6515 = vunpack.c.l.b16 %v3649
        %v6516 = vunpack.c.h.b16 %v3649
        %v6517 = vunpack.c.l.b16 %v3650
        %v6518 = vunpack.c.h.b16 %v3650
        %v6519 = vunpack.c.l.b16 %v3651
        %v6520 = vunpack.c.h.b16 %v3651
        %v6521 = vunpack.c.l.b16 %v3652
        %v6522 = vunpack.c.h.b16 %v3652
        %v6523 = vunpack.c.l.b16 %v3653
        %v6524 = vunpack.c.h.b16 %v3653
        %v6525 = vunpack.c.l.b16 %v3654
        %v6526 = vunpack.c.h.b16 %v3654
        %v6527 = vunpack.c.l.b16 %v3655
        %v6528 = vunpack.c.h.b16 %v3655
        %v6529 = vunpack.c.l.b16 %v3656
        %v6530 = vunpack.c.h.b16 %v3656
        %v6531 = vunpack.c.l.b16 %v3657
        %v6532 = vunpack.c.h.b16 %v3657
        %v6533 = vunpack.c.l.b16 %v3658
        %v6534 = vunpack.c.h.b16 %v3658
        %v6535 = vunpack.c.l.b16 %v3659
        %v6536 = vunpack.c.h.b16 %v3659
        %v6537 = vunpack.c.l.b16 %v3660
        %v6538 = vunpack.c.h.b16 %v3660
        %v6539 = vunpack.c.l.b16 %v3661
        %v6540 = vunpack.c.h.b16 %v3661
        %v6541 = vunpack.c.l.b16 %v3662
        %v6542 = vunpack.c.h.b16 %v3662
        %v6543 = vunpack.c.l.b16 %v3663
        %v6544 = vunpack.c.h.b16 %v3663
        %v6545 = vunpack.c.l.b16 %v3664
        %v6546 = vunpack.c.h.b16 %v3664
        %v6547 = vunpack.c.l.b16 %v3665
        %v6548 = vunpack.c.h.b16 %v3665
        %v6549 = vunpack.c.l.b16 %v3666
        %v6550 = vunpack.c.h.b16 %v3666
        %v6551 = vunpack.c.l.b16 %v3667
        %v6552 = vunpack.c.h.b16 %v3667
        %v6553 = vunpack.c.l.b16 %v3668
        %v6554 = vunpack.c.h.b16 %v3668
        %v6555 = vunpack.c.l.b16 %v3669
        %v6556 = vunpack.c.h.b16 %v3669
        %v6557 = vunpack.c.l.b16 %v3670
        %v6558 = vunpack.c.h.b16 %v3670
        %v6559 = vunpack.c.l.b16 %v3671
        %v6560 = vunpack.c.h.b16 %v3671
        %v6561 = vunpack.c.l.b16 %v3672
        %v6562 = vunpack.c.h.b16 %v3672
        %v6563 = vunpack.c.l.b16 %v3673
        %v6564 = vunpack.c.h.b16 %v3673
        %v6565 = vunpack.c.l.b16 %v3674
        %v6566 = vunpack.c.h.b16 %v3674
        %v6567 = vunpack.c.l.b16 %v3675
        %v6568 = vunpack.c.h.b16 %v3675
        %v6569 = vunpack.c.l.b16 %v3676
        %v6570 = vunpack.c.h.b16 %v3676
        %v6571 = vunpack.c.l.b16 %v3677
        %v6572 = vunpack.c.h.b16 %v3677
        %v6573 = vunpack.c.l.b16 %v3678
        %v6574 = vunpack.c.h.b16 %v3678
        %v6575 = vunpack.c.l.b16 %v3679
        %v6576 = vunpack.c.h.b16 %v3679
        %v6577 = vunpack.c.l.b16 %v3680
        %v6578 = vunpack.c.h.b16 %v3680
        %v6579 = vunpack.c.l.b16 %v3681
        %v6580 = vunpack.c.h.b16 %v3681
        %v6581 = vunpack.c.l.b16 %v3682
        %v6582 = vunpack.c.h.b16 %v3682
        %v6583 = vunpack.c.l.b16 %v3683
        %v6584 = vunpack.c.h.b16 %v3683
        %v6585 = vunpack.c.l.b16 %v3684
        %v6586 = vunpack.c.h.b16 %v3684
        %v6587 = vunpack.c.l.b16 %v3685
        %v6588 = vunpack.c.h.b16 %v3685
        %v6589 = vunpack.c.l.b16 %v3686
        %v6590 = vunpack.c.h.b16 %v3686
        %v6591 = vunpack.c.l.b16 %v3687
        %v6592 = vunpack.c.h.b16 %v3687
        %v6593 = vunpack.c.l.b16 %v3688
        %v6594 = vunpack.c.h.b16 %v3688
        %v6595 = vunpack.c.l.b16 %v3689
        %v6596 = vunpack.c.h.b16 %v3689
        %v6597 = vunpack.c.l.b16 %v3690
        %v6598 = vunpack.c.h.b16 %v3690
        %v6599 = vunpack.c.l.b16 %v3691
        %v6600 = vunpack.c.h.b16 %v3691
        %v6601 = vunpack.c.l.b16 %v3692
        %v6602 = vunpack.c.h.b16 %v3692
        %v6603 = vunpack.c.l.b16 %v3693
        %v6604 = vunpack.c.h.b16 %v3693
        %v6605 = vunpack.c.l.b16 %v3694
        %v6606 = vunpack.c.h.b16 %v3694
        %v6607 = vunpack.c.l.b16 %v3695
        %v6608 = vunpack.c.h.b16 %v3695
        %v6609 = vunpack.c.l.b16 %v3696
        %v6610 = vunpack.c.h.b16 %v3696
        %v6611 = vunpack.c.l.b16 %v3697
        %v6612 = vunpack.c.h.b16 %v3697
        %v6613 = vunpack.c.l.b16 %v3698
        %v6614 = vunpack.c.h.b16 %v3698
        %v6615 = vunpack.c.l.b16 %v3699
        %v6616 = vunpack.c.h.b16 %v3699
        %v6617 = vunpack.c.l.b16 %v3700
        %v6618 = vunpack.c.h.b16 %v3700
        %v6619 = vunpack.c.l.b16 %v3701
        %v6620 = vunpack.c.h.b16 %v3701
        %v6621 = vunpack.c.l.b16 %v3702
        %v6622 = vunpack.c.h.b16 %v3702
        %v6623 = vunpack.c.l.b16 %v3703
        %v6624 = vunpack.c.h.b16 %v3703
        %v6625 = vunpack.c.l.b16 %v3704
        %v6626 = vunpack.c.h.b16 %v3704
        %v6627 = vunpack.c.l.b16 %v3705
        %v6628 = vunpack.c.h.b16 %v3705
        %v6629 = vunpack.c.l.b16 %v3706
        %v6630 = vunpack.c.h.b16 %v3706
        %v6631 = vunpack.c.l.b16 %v3707
        %v6632 = vunpack.c.h.b16 %v3707
        %v6633 = vunpack.c.l.b16 %v3708
        %v6634 = vunpack.c.h.b16 %v3708
        %v6635 = vunpack.c.l.b16 %v3709
        %v6636 = vunpack.c.h.b16 %v3709
        %v6637 = vunpack.c.l.b16 %v3710
        %v6638 = vunpack.c.h.b16 %v3710
        %v6639 = vunpack.c.l.b16 %v3711
        %v6640 = vunpack.c.h.b16 %v3711
        %v6641 = vunpack.c.l.b16 %v3712
        %v6642 = vunpack.c.h.b16 %v3712
        %v6643 = vunpack.c.l.b16 %v3713
        %v6644 = vunpack.c.h.b16 %v3713
        %v6645 = vunpack.c.l.b16 %v3714
        %v6646 = vunpack.c.h.b16 %v3714
        %v6647 = vunpack.c.l.b16 %v3715
        %v6648 = vunpack.c.h.b16 %v3715
        %v6649 = vunpack.c.l.b16 %v3716
        %v6650 = vunpack.c.h.b16 %v3716
        %v6651 = vunpack.c.l.b16 %v3717
        %v6652 = vunpack.c.h.b16 %v3717
        %v6653 = vunpack.c.l.b16 %v3718
        %v6654 = vunpack.c.h.b16 %v3718
        %v6655 = vunpack.c.l.b16 %v3719
        %v6656 = vunpack.c.h.b16 %v3719
        %v6657 = vunpack.c.l.b16 %v3720
        %v6658 = vunpack.c.h.b16 %v3720
        %v6659 = vunpack.c.l.b16 %v3721
        %v6660 = vunpack.c.h.b16 %v3721
        %v6661 = vunpack.c.l.b16 %v3722
        %v6662 = vunpack.c.h.b16 %v3722
        %v6663 = vunpack.c.l.b16 %v3723
        %v6664 = vunpack.c.h.b16 %v3723
        %v6665 = vunpack.c.l.b16 %v3724
        %v6666 = vunpack.c.h.b16 %v3724
        %v6667 = vunpack.c.l.b16 %v3725
        %v6668 = vunpack.c.h.b16 %v3725
        %v6669 = vunpack.c.l.b16 %v3726
        %v6670 = vunpack.c.h.b16 %v3726
        %v6671 = vunpack.c.l.b16 %v3727
        %v6672 = vunpack.c.h.b16 %v3727
        %v6673 = vunpack.c.l.b16 %v3728
        %v6674 = vunpack.c.h.b16 %v3728
        %v6675 = vunpack.c.l.b16 %v3729
        %v6676 = vunpack.c.h.b16 %v3729
        %v6677 = vunpack.c.l.b16 %v3730
        %v6678 = vunpack.c.h.b16 %v3730
        %v6679 = vunpack.c.l.b16 %v3731
        %v6680 = vunpack.c.h.b16 %v3731
        %v6681 = vunpack.c.l.b16 %v3732
        %v6682 = vunpack.c.h.b16 %v3732
        %v6683 = vunpack.c.l.b16 %v3733
        %v6684 = vunpack.c.h.b16 %v3733
        %v6685 = vunpack.c.l.b16 %v3734
        %v6686 = vunpack.c.h.b16 %v3734
        %v6687 = vunpack.c.l.b16 %v3735
        %v6688 = vunpack.c.h.b16 %v3735
        %v6689 = vunpack.c.l.b16 %v3736
        %v6690 = vunpack.c.h.b16 %v3736
        %v6691 = vunpack.c.l.b16 %v3737
        %v6692 = vunpack.c.h.b16 %v3737
        %v6693 = vunpack.c.l.b16 %v3738
        %v6694 = vunpack.c.h.b16 %v3738
        %v6695 = vunpack.c.l.b16 %v3739
        %v6696 = vunpack.c.h.b16 %v3739
        %v6697 = vunpack.c.l.b16 %v3740
        %v6698 = vunpack.c.h.b16 %v3740
        %v6699 = vunpack.c.l.b16 %v3741
        %v6700 = vunpack.c.h.b16 %v3741
        %v6701 = vunpack.c.l.b16 %v3742
        %v6702 = vunpack.c.h.b16 %v3742
        %v6703 = vunpack.c.l.b16 %v3743
        %v6704 = vunpack.c.h.b16 %v3743
        %v6705 = vunpack.c.l.b16 %v3744
        %v6706 = vunpack.c.h.b16 %v3744
        %v6707 = vunpack.c.l.b16 %v3745
        %v6708 = vunpack.c.h.b16 %v3745
        %v6709 = vunpack.c.l.b16 %v3746
        %v6710 = vunpack.c.h.b16 %v3746
        %v6711 = vunpack.c.l.b16 %v3747
        %v6712 = vunpack.c.h.b16 %v3747
        %v6713 = vunpack.c.l.b16 %v3748
        %v6714 = vunpack.c.h.b16 %v3748
        %v6715 = vunpack.c.l.b16 %v3749
        %v6716 = vunpack.c.h.b16 %v3749
        %v6717 = vunpack.c.l.b16 %v3750
        %v6718 = vunpack.c.h.b16 %v3750
        %v6719 = vunpack.c.l.b16 %v3751
        %v6720 = vunpack.c.h.b16 %v3751
        %v6721 = vunpack.c.l.b16 %v3752
        %v6722 = vunpack.c.h.b16 %v3752
        %v6723 = vunpack.c.l.b16 %v3753
        %v6724 = vunpack.c.h.b16 %v3753
        %v6725 = vunpack.c.l.b16 %v3754
        %v6726 = vunpack.c.h.b16 %v3754
        %v6727 = vunpack.c.l.b16 %v3755
        %v6728 = vunpack.c.h.b16 %v3755
        %v6729 = vunpack.c.l.b16 %v3756
        %v6730 = vunpack.c.h.b16 %v3756
        %v6731 = vunpack.c.l.b16 %v3757
        %v6732 = vunpack.c.h.b16 %v3757
        %v6733 = vunpack.c.l.b16 %v3758
        %v6734 = vunpack.c.h.b16 %v3758
        %v6735 = vunpack.c.l.b16 %v3759
        %v6736 = vunpack.c.h.b16 %v3759
        %v6737 = vunpack.c.l.b16 %v3760
        %v6738 = vunpack.c.h.b16 %v3760
        %v6739 = vunpack.c.l.b16 %v3761
        %v6740 = vunpack.c.h.b16 %v3761
        %v6741 = vunpack.c.l.b16 %v3762
        %v6742 = vunpack.c.h.b16 %v3762
        %v6743 = vunpack.c.l.b16 %v3763
        %v6744 = vunpack.c.h.b16 %v3763
        %v6745 = vunpack.c.l.b16 %v3764
        %v6746 = vunpack.c.h.b16 %v3764
        %v6747 = vunpack.c.l.b16 %v3765
        %v6748 = vunpack.c.h.b16 %v3765
        %v6749 = vunpack.c.l.b16 %v3766
        %v6750 = vunpack.c.h.b16 %v3766
        %v6751 = vunpack.c.l.b16 %v3767
        %v6752 = vunpack.c.h.b16 %v3767
        %v6753 = vunpack.c.l.b16 %v3768
        %v6754 = vunpack.c.h.b16 %v3768
        %v6755 = vunpack.c.l.b16 %v3769
        %v6756 = vunpack.c.h.b16 %v3769
        %v6757 = vunpack.c.l.b16 %v3770
        %v6758 = vunpack.c.h.b16 %v3770
        %v6759 = vunpack.c.l.b16 %v3771
        %v6760 = vunpack.c.h.b16 %v3771
        %v6761 = vunpack.c.l.b16 %v3772
        %v6762 = vunpack.c.h.b16 %v3772
        %v6763 = vunpack.c.l.b16 %v3773
        %v6764 = vunpack.c.h.b16 %v3773
        %v6765 = vunpack.c.l.b16 %v3774
        %v6766 = vunpack.c.h.b16 %v3774
        %v6767 = vunpack.c.l.b16 %v3775
        %v6768 = vunpack.c.h.b16 %v3775
        %v6769 = vunpack.c.l.b16 %v3776
        %v6770 = vunpack.c.h.b16 %v3776
        %v6771 = vunpack.c.l.b16 %v3777
        %v6772 = vunpack.c.h.b16 %v3777
        %v6773 = vunpack.c.l.b16 %v3778
        %v6774 = vunpack.c.h.b16 %v3778
        %v6775 = vunpack.c.l.b16 %v3779
        %v6776 = vunpack.c.h.b16 %v3779
        %v6777 = vunpack.c.l.b16 %v3780
        %v6778 = vunpack.c.h.b16 %v3780
        %v6779 = vunpack.c.l.b16 %v3781
        %v6780 = vunpack.c.h.b16 %v3781
        %v6781 = vunpack.c.l.b16 %v3782
        %v6782 = vunpack.c.h.b16 %v3782
        %v6783 = vunpack.c.l.b16 %v3783
        %v6784 = vunpack.c.h.b16 %v3783
        %v6785 = vunpack.c.l.b16 %v3784
        %v6786 = vunpack.c.h.b16 %v3784
        %v6787 = vunpack.c.l.b16 %v3785
        %v6788 = vunpack.c.h.b16 %v3785
        %v6789 = vunpack.c.l.b16 %v3786
        %v6790 = vunpack.c.h.b16 %v3786
        %v6791 = vunpack.c.l.b16 %v3787
        %v6792 = vunpack.c.h.b16 %v3787
        %v6793 = vunpack.c.l.b16 %v3788
        %v6794 = vunpack.c.h.b16 %v3788
        %v6795 = vunpack.c.l.b16 %v3789
        %v6796 = vunpack.c.h.b16 %v3789
        %v6797 = vunpack.c.l.b16 %v3790
        %v6798 = vunpack.c.h.b16 %v3790
        %v6799 = vunpack.c.l.b16 %v3791
        %v6800 = vunpack.c.h.b16 %v3791
        %v6801 = vunpack.c.l.b16 %v3792
        %v6802 = vunpack.c.h.b16 %v3792
        %v6803 = vunpack.c.l.b16 %v3793
        %v6804 = vunpack.c.h.b16 %v3793
        %v6805 = vunpack.c.l.b16 %v3794
        %v6806 = vunpack.c.h.b16 %v3794
        %v6807 = vunpack.c.l.b16 %v3795
        %v6808 = vunpack.c.h.b16 %v3795
        %v6809 = vunpack.c.l.b16 %v3796
        %v6810 = vunpack.c.h.b16 %v3796
        %v6811 = vunpack.c.l.b16 %v3797
        %v6812 = vunpack.c.h.b16 %v3797
        %v6813 = vunpack.c.l.b16 %v3798
        %v6814 = vunpack.c.h.b16 %v3798
        %v6815 = vunpack.c.l.b16 %v3799
        %v6816 = vunpack.c.h.b16 %v3799
        %v6817 = vunpack.c.l.b16 %v3800
        %v6818 = vunpack.c.h.b16 %v3800
        %v6819 = vunpack.c.l.b16 %v3801
        %v6820 = vunpack.c.h.b16 %v3801
        %v6821 = vunpack.c.l.b16 %v3802
        %v6822 = vunpack.c.h.b16 %v3802
        %v6823 = vunpack.c.l.b16 %v3803
        %v6824 = vunpack.c.h.b16 %v3803
        %v6825 = vunpack.c.l.b16 %v3804
        %v6826 = vunpack.c.h.b16 %v3804
        %v6827 = vunpack.c.l.b16 %v3805
        %v6828 = vunpack.c.h.b16 %v3805
        %v6829 = vunpack.c.l.b16 %v3806
        %v6830 = vunpack.c.h.b16 %v3806
        %v6831 = vunpack.c.l.b16 %v3807
        %v6832 = vunpack.c.h.b16 %v3807
        %v6833 = vunpack.c.l.b16 %v3808
        %v6834 = vunpack.c.h.b16 %v3808
        %v6835 = vunpack.c.l.b16 %v3809
        %v6836 = vunpack.c.h.b16 %v3809
        %v6837 = vunpack.c.l.b16 %v3810
        %v6838 = vunpack.c.h.b16 %v3810
        %v6839 = vunpack.c.l.b16 %v3811
        %v6840 = vunpack.c.h.b16 %v3811
        %v6841 = vunpack.c.l.b16 %v3812
        %v6842 = vunpack.c.h.b16 %v3812
        %v6843 = vunpack.c.l.b16 %v3813
        %v6844 = vunpack.c.h.b16 %v3813
        %v6845 = vunpack.c.l.b16 %v3814
        %v6846 = vunpack.c.h.b16 %v3814
        %v6847 = vunpack.c.l.b16 %v3815
        %v6848 = vunpack.c.h.b16 %v3815
        %v6849 = vunpack.c.l.b16 %v3816
        %v6850 = vunpack.c.h.b16 %v3816
        %v6851 = vunpack.c.l.b16 %v3817
        %v6852 = vunpack.c.h.b16 %v3817
        %v6853 = vunpack.c.l.b16 %v3818
        %v6854 = vunpack.c.h.b16 %v3818
        %v6855 = vunpack.c.l.b16 %v3819
        %v6856 = vunpack.c.h.b16 %v3819
        %v6857 = vunpack.c.l.b16 %v3820
        %v6858 = vunpack.c.h.b16 %v3820
        %v6859 = vunpack.c.l.b16 %v3821
        %v6860 = vunpack.c.h.b16 %v3821
        %v6861 = vunpack.c.l.b16 %v3822
        %v6862 = vunpack.c.h.b16 %v3822
        %v6863 = vunpack.c.l.b16 %v3823
        %v6864 = vunpack.c.h.b16 %v3823
        %v6865 = vunpack.c.l.b16 %v3824
        %v6866 = vunpack.c.h.b16 %v3824
        %v6867 = vunpack.c.l.b16 %v3825
        %v6868 = vunpack.c.h.b16 %v3825
        %v6869 = vunpack.c.l.b16 %v3826
        %v6870 = vunpack.c.h.b16 %v3826
        %v6871 = vunpack.c.l.b16 %v3827
        %v6872 = vunpack.c.h.b16 %v3827
        %v6873 = vunpack.c.l.b16 %v3828
        %v6874 = vunpack.c.h.b16 %v3828
        %v6875 = vunpack.c.l.b16 %v3829
        %v6876 = vunpack.c.h.b16 %v3829
        %v6877 = vunpack.c.l.b16 %v3830
        %v6878 = vunpack.c.h.b16 %v3830
        %v6879 = vunpack.c.l.b16 %v3831
        %v6880 = vunpack.c.h.b16 %v3831
        %v6881 = vunpack.c.l.b16 %v3832
        %v6882 = vunpack.c.h.b16 %v3832
        %v6883 = vunpack.c.l.b16 %v3833
        %v6884 = vunpack.c.h.b16 %v3833
        %v6885 = vunpack.c.l.b16 %v3834
        %v6886 = vunpack.c.h.b16 %v3834
        %v6887 = vunpack.c.l.b16 %v3835
        %v6888 = vunpack.c.h.b16 %v3835
        %v6889 = vunpack.c.l.b16 %v3836
        %v6890 = vunpack.c.h.b16 %v3836
        %v6891 = vunpack.c.l.b16 %v3837
        %v6892 = vunpack.c.h.b16 %v3837
        %v6893 = vunpack.c.l.b16 %v3838
        %v6894 = vunpack.c.h.b16 %v3838
        %v6895 = vunpack.c.l.b16 %v3839
        %v6896 = vunpack.c.h.b16 %v3839
        %v6897 = vunpack.c.l.b16 %v3840
        %v6898 = vunpack.c.h.b16 %v3840
        %v6899 = vunpack.c.l.b16 %v3841
        %v6900 = vunpack.c.h.b16 %v3841
        %v6901 = vunpack.c.l.b16 %v3842
        %v6902 = vunpack.c.h.b16 %v3842
        %v6903 = vunpack.c.l.b16 %v3843
        %v6904 = vunpack.c.h.b16 %v3843
        %v6905 = vunpack.c.l.b16 %v3844
        %v6906 = vunpack.c.h.b16 %v3844
        %v6907 = vunpack.c.l.b16 %v3845
        %v6908 = vunpack.c.h.b16 %v3845
        %v6909 = vunpack.c.l.b16 %v3846
        %v6910 = vunpack.c.h.b16 %v3846
        %v6911 = vunpack.c.l.b16 %v3847
        %v6912 = vunpack.c.h.b16 %v3847
        %v6913 = vunpack.c.l.b16 %v3848
        %v6914 = vunpack.c.h.b16 %v3848
        %v6915 = vunpack.c.l.b16 %v3849
        %v6916 = vunpack.c.h.b16 %v3849
        %v6917 = vunpack.c.l.b16 %v3850
        %v6918 = vunpack.c.h.b16 %v3850
        %v6919 = vunpack.c.l.b16 %v3851
        %v6920 = vunpack.c.h.b16 %v3851
        %v6921 = vunpack.c.l.b16 %v3852
        %v6922 = vunpack.c.h.b16 %v3852
        %v6923 = vunpack.c.l.b16 %v3853
        %v6924 = vunpack.c.h.b16 %v3853
        %v6925 = vunpack.c.l.b16 %v3854
        %v6926 = vunpack.c.h.b16 %v3854
        %v6927 = vunpack.c.l.b16 %v3855
        %v6928 = vunpack.c.h.b16 %v3855
        %v6929 = vunpack.c.l.b16 %v3856
        %v6930 = vunpack.c.h.b16 %v3856
        %v6931 = vunpack.c.l.b16 %v3857
        %v6932 = vunpack.c.h.b16 %v3857
        %v6933 = vunpack.c.l.b16 %v3858
        %v6934 = vunpack.c.h.b16 %v3858
        %v6935 = vunpack.c.l.b16 %v3859
        %v6936 = vunpack.c.h.b16 %v3859
        %v6937 = vunpack.c.l.b16 %v3860
        %v6938 = vunpack.c.h.b16 %v3860
        %v6939 = vunpack.c.l.b16 %v3861
        %v6940 = vunpack.c.h.b16 %v3861
        %v6941 = vunpack.c.l.b16 %v3862
        %v6942 = vunpack.c.h.b16 %v3862
        %v6943 = vunpack.c.l.b16 %v3863
        %v6944 = vunpack.c.h.b16 %v3863
        %v6945 = vunpack.c.l.b16 %v3864
        %v6946 = vunpack.c.h.b16 %v3864
        %v6947 = vunpack.c.l.b16 %v3865
        %v6948 = vunpack.c.h.b16 %v3865
        %v6949 = vunpack.c.l.b16 %v3866
        %v6950 = vunpack.c.h.b16 %v3866
        %v6951 = vunpack.c.l.b16 %v3867
        %v6952 = vunpack.c.h.b16 %v3867
        %v6953 = vunpack.c.l.b16 %v3868
        %v6954 = vunpack.c.h.b16 %v3868
        %v6955 = vunpack.c.l.b16 %v3869
        %v6956 = vunpack.c.h.b16 %v3869
        %v6957 = vunpack.c.l.b16 %v3870
        %v6958 = vunpack.c.h.b16 %v3870
        %v6959 = vunpack.c.l.b16 %v3871
        %v6960 = vunpack.c.h.b16 %v3871
        %v6961 = vunpack.c.l.b16 %v3872
        %v6962 = vunpack.c.h.b16 %v3872
        %v6963 = vunpack.c.l.b16 %v3873
        %v6964 = vunpack.c.h.b16 %v3873
        %v6965 = vunpack.c.l.b16 %v3874
        %v6966 = vunpack.c.h.b16 %v3874
        %v6967 = vunpack.c.l.b16 %v3875
        %v6968 = vunpack.c.h.b16 %v3875
        %v6969 = vunpack.c.l.b16 %v3876
        %v6970 = vunpack.c.h.b16 %v3876
        %v6971 = vunpack.c.l.b16 %v3877
        %v6972 = vunpack.c.h.b16 %v3877
        %v6973 = vunpack.c.l.b16 %v3878
        %v6974 = vunpack.c.h.b16 %v3878
        %v6975 = vunpack.c.l.b16 %v3879
        %v6976 = vunpack.c.h.b16 %v3879
        %v6977 = vunpack.c.l.b16 %v3880
        %v6978 = vunpack.c.h.b16 %v3880
        %v6979 = vunpack.c.l.b16 %v3881
        %v6980 = vunpack.c.h.b16 %v3881
        %v6981 = vunpack.c.l.b16 %v3882
        %v6982 = vunpack.c.h.b16 %v3882
        %v6983 = vunpack.c.l.b16 %v3883
        %v6984 = vunpack.c.h.b16 %v3883
        %v6985 = vunpack.c.l.b16 %v3884
        %v6986 = vunpack.c.h.b16 %v3884
        %v6987 = vunpack.c.l.b16 %v3885
        %v6988 = vunpack.c.h.b16 %v3885
        %v6989 = vunpack.c.l.b16 %v3886
        %v6990 = vunpack.c.h.b16 %v3886
        %v6991 = vunpack.c.l.b16 %v3887
        %v6992 = vunpack.c.h.b16 %v3887
        %v6993 = vunpack.c.l.b16 %v3888
        %v6994 = vunpack.c.h.b16 %v3888
        %v6995 = vunpack.c.l.b16 %v3889
        %v6996 = vunpack.c.h.b16 %v3889
        %v6997 = vunpack.c.l.b16 %v3890
        %v6998 = vunpack.c.h.b16 %v3890
        %v6999 = vunpack.c.l.b16 %v3891
        %v7000 = vunpack.c.h.b16 %v3891
        %v7001 = vunpack.c.l.b16 %v3892
        %v7002 = vunpack.c.h.b16 %v3892
        %v7003 = vunpack.c.l.b16 %v3893
        %v7004 = vunpack.c.h.b16 %v3893
        %v7005 = vunpack.c.l.b16 %v3894
        %v7006 = vunpack.c.h.b16 %v3894
        %v7007 = vunpack.c.l.b16 %v3895
        %v7008 = vunpack.c.h.b16 %v3895
        %v7009 = vunpack.c.l.b16 %v3896
        %v7010 = vunpack.c.h.b16 %v3896
        %v7011 = vunpack.c.l.b16 %v3897
        %v7012 = vunpack.c.h.b16 %v3897
        %v7013 = vunpack.c.l.b16 %v3898
        %v7014 = vunpack.c.h.b16 %v3898
        %v7015 = vunpack.c.l.b16 %v3899
        %v7016 = vunpack.c.h.b16 %v3899
        %v7017 = vunpack.c.l.b16 %v3900
        %v7018 = vunpack.c.h.b16 %v3900
        %v7019 = vunpack.c.l.b16 %v3901
        %v7020 = vunpack.c.h.b16 %v3901
        %v7021 = vunpack.c.l.b16 %v3902
        %v7022 = vunpack.c.h.b16 %v3902
        %v7023 = vunpack.c.l.b16 %v3903
        %v7024 = vunpack.c.h.b16 %v3903
        %v7025 = vunpack.c.l.b16 %v3904
        %v7026 = vunpack.c.h.b16 %v3904
        %v7027 = vunpack.c.l.b16 %v3905
        %v7028 = vunpack.c.h.b16 %v3905
        %v7029 = vunpack.c.l.b16 %v3906
        %v7030 = vunpack.c.h.b16 %v3906
        %v7031 = vunpack.c.l.b16 %v3907
        %v7032 = vunpack.c.h.b16 %v3907
        %v7033 = vunpack.c.l.b16 %v3908
        %v7034 = vunpack.c.h.b16 %v3908
        %v7035 = vunpack.c.l.b16 %v3909
        %v7036 = vunpack.c.h.b16 %v3909
        %v7037 = vunpack.c.l.b16 %v3910
        %v7038 = vunpack.c.h.b16 %v3910
        %v7039 = vunpack.c.l.b16 %v3911
        %v7040 = vunpack.c.h.b16 %v3911
        %v7041 = vunpack.c.l.b16 %v3912
        %v7042 = vunpack.c.h.b16 %v3912
        %v7043 = vpack.c.b16 %v5003, %v4995
        %v7044 = vpack.c.b16 %v5004, %v4996
        %v7045 = vpack.c.b16 %v5005, %v4997
        %v7046 = vpack.c.b16 %v5006, %v4998
        %v7047 = vpack.c.b16 %v5007, %v4999
        %v7048 = vpack.c.b16 %v5008, %v5000
        %v7049 = vpack.c.b16 %v5009, %v5001
        %v7050 = vpack.c.b16 %v5010, %v5002
        %v7051 = vpack.c.b16 %v5019, %v5011
        %v7052 = vpack.c.b16 %v5020, %v5012
        %v7053 = vpack.c.b16 %v5021, %v5013
        %v7054 = vpack.c.b16 %v5022, %v5014
        %v7055 = vpack.c.b16 %v5023, %v5015
        %v7056 = vpack.c.b16 %v5024, %v5016
        %v7057 = vpack.c.b16 %v5025, %v5017
        %v7058 = vpack.c.b16 %v5026, %v5018
        %v7059 = vpack.c.b16 %v5035, %v5027
        %v7060 = vpack.c.b16 %v5036, %v5028
        %v7061 = vpack.c.b16 %v5037, %v5029
        %v7062 = vpack.c.b16 %v5038, %v5030
        %v7063 = vpack.c.b16 %v5039, %v5031
        %v7064 = vpack.c.b16 %v5040, %v5032
        %v7065 = vpack.c.b16 %v5041, %v5033
        %v7066 = vpack.c.b16 %v5042, %v5034
        %v7067 = vpack.c.b16 %v5051, %v5043
        %v7068 = vpack.c.b16 %v5052, %v5044
        %v7069 = vpack.c.b16 %v5053, %v5045
        %v7070 = vpack.c.b16 %v5054, %v5046
        %v7071 = vpack.c.b16 %v5055, %v5047
        %v7072 = vpack.c.b16 %v5056, %v5048
        %v7073 = vpack.c.b16 %v5057, %v5049
        %v7074 = vpack.c.b16 %v5058, %v5050
        %v7075 = vpack.c.b16 %v5067, %v5059
        %v7076 = vpack.c.b16 %v5068, %v5060
        %v7077 = vpack.c.b16 %v5069, %v5061
        %v7078 = vpack.c.b16 %v5070, %v5062
        %v7079 = vpack.c.b16 %v5071, %v5063
        %v7080 = vpack.c.b16 %v5072, %v5064
        %v7081 = vpack.c.b16 %v5073, %v5065
        %v7082 = vpack.c.b16 %v5074, %v5066
        %v7083 = vpack.c.b16 %v5083, %v5075
        %v7084 = vpack.c.b16 %v5084, %v5076
        %v7085 = vpack.c.b16 %v5085, %v5077
        %v7086 = vpack.c.b16 %v5086, %v5078
        %v7087 = vpack.c.b16 %v5087, %v5079
        %v7088 = vpack.c.b16 %v5088, %v5080
        %v7089 = vpack.c.b16 %v5089, %v5081
        %v7090 = vpack.c.b16 %v5090, %v5082
        %v7091 = vpack.c.b16 %v5099, %v5091
        %v7092 = vpack.c.b16 %v5100, %v5092
        %v7093 = vpack.c.b16 %v5101, %v5093
        %v7094 = vpack.c.b16 %v5102, %v5094
        %v7095 = vpack.c.b16 %v5103, %v5095
        %v7096 = vpack.c.b16 %v5104, %v5096
        %v7097 = vpack.c.b16 %v5105, %v5097
        %v7098 = vpack.c.b16 %v5106, %v5098
        %v7099 = vpack.c.b16 %v5115, %v5107
        %v7100 = vpack.c.b16 %v5116, %v5108
        %v7101 = vpack.c.b16 %v5117, %v5109
        %v7102 = vpack.c.b16 %v5118, %v5110
        %v7103 = vpack.c.b16 %v5119, %v5111
        %v7104 = vpack.c.b16 %v5120, %v5112
        %v7105 = vpack.c.b16 %v5121, %v5113
        %v7106 = vpack.c.b16 %v5122, %v5114
        %v7107 = vpack.c.b16 %v5131, %v5123
        %v7108 = vpack.c.b16 %v5132, %v5124
        %v7109 = vpack.c.b16 %v5133, %v5125
        %v7110 = vpack.c.b16 %v5134, %v5126
        %v7111 = vpack.c.b16 %v5135, %v5127
        %v7112 = vpack.c.b16 %v5136, %v5128
        %v7113 = vpack.c.b16 %v5137, %v5129
        %v7114 = vpack.c.b16 %v5138, %v5130
        %v7115 = vpack.c.b16 %v5147, %v5139
        %v7116 = vpack.c.b16 %v5148, %v5140
        %v7117 = vpack.c.b16 %v5149, %v5141
        %v7118 = vpack.c.b16 %v5150, %v5142
        %v7119 = vpack.c.b16 %v5151, %v5143
        %v7120 = vpack.c.b16 %v5152, %v5144
        %v7121 = vpack.c.b16 %v5153, %v5145
        %v7122 = vpack.c.b16 %v5154, %v5146
        %v7123 = vpack.c.b16 %v5163, %v5155
        %v7124 = vpack.c.b16 %v5164, %v5156
        %v7125 = vpack.c.b16 %v5165, %v5157
        %v7126 = vpack.c.b16 %v5166, %v5158
        %v7127 = vpack.c.b16 %v5167, %v5159
        %v7128 = vpack.c.b16 %v5168, %v5160
        %v7129 = vpack.c.b16 %v5169, %v5161
        %v7130 = vpack.c.b16 %v5170, %v5162
        %v7131 = vpack.c.b16 %v5179, %v5171
        %v7132 = vpack.c.b16 %v5180, %v5172
        %v7133 = vpack.c.b16 %v5181, %v5173
        %v7134 = vpack.c.b16 %v5182, %v5174
        %v7135 = vpack.c.b16 %v5183, %v5175
        %v7136 = vpack.c.b16 %v5184, %v5176
        %v7137 = vpack.c.b16 %v5185, %v5177
        %v7138 = vpack.c.b16 %v5186, %v5178
        %v7139 = vpack.c.b16 %v5195, %v5187
        %v7140 = vpack.c.b16 %v5196, %v5188
        %v7141 = vpack.c.b16 %v5197, %v5189
        %v7142 = vpack.c.b16 %v5198, %v5190
        %v7143 = vpack.c.b16 %v5199, %v5191
        %v7144 = vpack.c.b16 %v5200, %v5192
        %v7145 = vpack.c.b16 %v5201, %v5193
        %v7146 = vpack.c.b16 %v5202, %v5194
        %v7147 = vpack.c.b16 %v5211, %v5203
        %v7148 = vpack.c.b16 %v5212, %v5204
        %v7149 = vpack.c.b16 %v5213, %v5205
        %v7150 = vpack.c.b16 %v5214, %v5206
        %v7151 = vpack.c.b16 %v5215, %v5207
        %v7152 = vpack.c.b16 %v5216, %v5208
        %v7153 = vpack.c.b16 %v5217, %v5209
        %v7154 = vpack.c.b16 %v5218, %v5210
        %v7155 = vpack.c.b16 %v5227, %v5219
        %v7156 = vpack.c.b16 %v5228, %v5220
        %v7157 = vpack.c.b16 %v5229, %v5221
        %v7158 = vpack.c.b16 %v5230, %v5222
        %v7159 = vpack.c.b16 %v5231, %v5223
        %v7160 = vpack.c.b16 %v5232, %v5224
        %v7161 = vpack.c.b16 %v5233, %v5225
        %v7162 = vpack.c.b16 %v5234, %v5226
        %v7163 = vpack.c.b16 %v5243, %v5235
        %v7164 = vpack.c.b16 %v5244, %v5236
        %v7165 = vpack.c.b16 %v5245, %v5237
        %v7166 = vpack.c.b16 %v5246, %v5238
        %v7167 = vpack.c.b16 %v5247, %v5239
        %v7168 = vpack.c.b16 %v5248, %v5240
        %v7169 = vpack.c.b16 %v5249, %v5241
        %v7170 = vpack.c.b16 %v5250, %v5242
        %v7171 = vpack.c.b16 %v5259, %v5251
        %v7172 = vpack.c.b16 %v5260, %v5252
        %v7173 = vpack.c.b16 %v5261, %v5253
        %v7174 = vpack.c.b16 %v5262, %v5254
        %v7175 = vpack.c.b16 %v5263, %v5255
        %v7176 = vpack.c.b16 %v5264, %v5256
        %v7177 = vpack.c.b16 %v5265, %v5257
        %v7178 = vpack.c.b16 %v5266, %v5258
        %v7179 = vpack.c.b16 %v5275, %v5267
        %v7180 = vpack.c.b16 %v5276, %v5268
        %v7181 = vpack.c.b16 %v5277, %v5269
        %v7182 = vpack.c.b16 %v5278, %v5270
        %v7183 = vpack.c.b16 %v5279, %v5271
        %v7184 = vpack.c.b16 %v5280, %v5272
        %v7185 = vpack.c.b16 %v5281, %v5273
        %v7186 = vpack.c.b16 %v5282, %v5274
        %v7187 = vpack.c.b16 %v5291, %v5283
        %v7188 = vpack.c.b16 %v5292, %v5284
        %v7189 = vpack.c.b16 %v5293, %v5285
        %v7190 = vpack.c.b16 %v5294, %v5286
        %v7191 = vpack.c.b16 %v5295, %v5287
        %v7192 = vpack.c.b16 %v5296, %v5288
        %v7193 = vpack.c.b16 %v5297, %v5289
        %v7194 = vpack.c.b16 %v5298, %v5290
        %v7195 = vpack.c.b16 %v5307, %v5299
        %v7196 = vpack.c.b16 %v5308, %v5300
        %v7197 = vpack.c.b16 %v5309, %v5301
        %v7198 = vpack.c.b16 %v5310, %v5302
        %v7199 = vpack.c.b16 %v5311, %v5303
        %v7200 = vpack.c.b16 %v5312, %v5304
        %v7201 = vpack.c.b16 %v5313, %v5305
        %v7202 = vpack.c.b16 %v5314, %v5306
        %v7203 = vpack.c.b16 %v5323, %v5315
        %v7204 = vpack.c.b16 %v5324, %v5316
        %v7205 = vpack.c.b16 %v5325, %v5317
        %v7206 = vpack.c.b16 %v5326, %v5318
        %v7207 = vpack.c.b16 %v5327, %v5319
        %v7208 = vpack.c.b16 %v5328, %v5320
        %v7209 = vpack.c.b16 %v5329, %v5321
        %v7210 = vpack.c.b16 %v5330, %v5322
        %v7211 = vpack.c.b16 %v5339, %v5331
        %v7212 = vpack.c.b16 %v5340, %v5332
        %v7213 = vpack.c.b16 %v5341, %v5333
        %v7214 = vpack.c.b16 %v5342, %v5334
        %v7215 = vpack.c.b16 %v5343, %v5335
        %v7216 = vpack.c.b16 %v5344, %v5336
        %v7217 = vpack.c.b16 %v5345, %v5337
        %v7218 = vpack.c.b16 %v5346, %v5338
        %v7219 = vpack.c.b16 %v5355, %v5347
        %v7220 = vpack.c.b16 %v5356, %v5348
        %v7221 = vpack.c.b16 %v5357, %v5349
        %v7222 = vpack.c.b16 %v5358, %v5350
        %v7223 = vpack.c.b16 %v5359, %v5351
        %v7224 = vpack.c.b16 %v5360, %v5352
        %v7225 = vpack.c.b16 %v5361, %v5353
        %v7226 = vpack.c.b16 %v5362, %v5354
        %v7227 = vpack.c.b16 %v5371, %v5363
        %v7228 = vpack.c.b16 %v5372, %v5364
        %v7229 = vpack.c.b16 %v5373, %v5365
        %v7230 = vpack.c.b16 %v5374, %v5366
        %v7231 = vpack.c.b16 %v5375, %v5367
        %v7232 = vpack.c.b16 %v5376, %v5368
        %v7233 = vpack.c.b16 %v5377, %v5369
        %v7234 = vpack.c.b16 %v5378, %v5370
        %v7235 = vpack.c.b16 %v5387, %v5379
        %v7236 = vpack.c.b16 %v5388, %v5380
        %v7237 = vpack.c.b16 %v5389, %v5381
        %v7238 = vpack.c.b16 %v5390, %v5382
        %v7239 = vpack.c.b16 %v5391, %v5383
        %v7240 = vpack.c.b16 %v5392, %v5384
        %v7241 = vpack.c.b16 %v5393, %v5385
        %v7242 = vpack.c.b16 %v5394, %v5386
        %v7243 = vpack.c.b16 %v5403, %v5395
        %v7244 = vpack.c.b16 %v5404, %v5396
        %v7245 = vpack.c.b16 %v5405, %v5397
        %v7246 = vpack.c.b16 %v5406, %v5398
        %v7247 = vpack.c.b16 %v5407, %v5399
        %v7248 = vpack.c.b16 %v5408, %v5400
        %v7249 = vpack.c.b16 %v5409, %v5401
        %v7250 = vpack.c.b16 %v5410, %v5402
        %v7251 = vpack.c.b16 %v5419, %v5411
        %v7252 = vpack.c.b16 %v5420, %v5412
        %v7253 = vpack.c.b16 %v5421, %v5413
        %v7254 = vpack.c.b16 %v5422, %v5414
        %v7255 = vpack.c.b16 %v5423, %v5415
        %v7256 = vpack.c.b16 %v5424, %v5416
        %v7257 = vpack.c.b16 %v5425, %v5417
        %v7258 = vpack.c.b16 %v5426, %v5418
        %v7259 = vpack.c.b16 %v5435, %v5427
        %v7260 = vpack.c.b16 %v5436, %v5428
        %v7261 = vpack.c.b16 %v5437, %v5429
        %v7262 = vpack.c.b16 %v5438, %v5430
        %v7263 = vpack.c.b16 %v5439, %v5431
        %v7264 = vpack.c.b16 %v5440, %v5432
        %v7265 = vpack.c.b16 %v5441, %v5433
        %v7266 = vpack.c.b16 %v5442, %v5434
        %v7267 = vpack.c.b16 %v5451, %v5443
        %v7268 = vpack.c.b16 %v5452, %v5444
        %v7269 = vpack.c.b16 %v5453, %v5445
        %v7270 = vpack.c.b16 %v5454, %v5446
        %v7271 = vpack.c.b16 %v5455, %v5447
        %v7272 = vpack.c.b16 %v5456, %v5448
        %v7273 = vpack.c.b16 %v5457, %v5449
        %v7274 = vpack.c.b16 %v5458, %v5450
        %v7275 = vpack.c.b16 %v5467, %v5459
        %v7276 = vpack.c.b16 %v5468, %v5460
        %v7277 = vpack.c.b16 %v5469, %v5461
        %v7278 = vpack.c.b16 %v5470, %v5462
        %v7279 = vpack.c.b16 %v5471, %v5463
        %v7280 = vpack.c.b16 %v5472, %v5464
        %v7281 = vpack.c.b16 %v5473, %v5465
        %v7282 = vpack.c.b16 %v5474, %v5466
        %v7283 = vpack.c.b16 %v5483, %v5475
        %v7284 = vpack.c.b16 %v5484, %v5476
        %v7285 = vpack.c.b16 %v5485, %v5477
        %v7286 = vpack.c.b16 %v5486, %v5478
        %v7287 = vpack.c.b16 %v5487, %v5479
        %v7288 = vpack.c.b16 %v5488, %v5480
        %v7289 = vpack.c.b16 %v5489, %v5481
        %v7290 = vpack.c.b16 %v5490, %v5482
        %v7291 = vpack.c.b16 %v5499, %v5491
        %v7292 = vpack.c.b16 %v5500, %v5492
        %v7293 = vpack.c.b16 %v5501, %v5493
        %v7294 = vpack.c.b16 %v5502, %v5494
        %v7295 = vpack.c.b16 %v5503, %v5495
        %v7296 = vpack.c.b16 %v5504, %v5496
        %v7297 = vpack.c.b16 %v5505, %v5497
        %v7298 = vpack.c.b16 %v5506, %v5498
        %v7299 = vpack.c.b16 %v5515, %v5507
        %v7300 = vpack.c.b16 %v5516, %v5508
        %v7301 = vpack.c.b16 %v5517, %v5509
        %v7302 = vpack.c.b16 %v5518, %v5510
        %v7303 = vpack.c.b16 %v5519, %v5511
        %v7304 = vpack.c.b16 %v5520, %v5512
        %v7305 = vpack.c.b16 %v5521, %v5513
        %v7306 = vpack.c.b16 %v5522, %v5514
        %v7307 = vpack.c.b16 %v5531, %v5523
        %v7308 = vpack.c.b16 %v5532, %v5524
        %v7309 = vpack.c.b16 %v5533, %v5525
        %v7310 = vpack.c.b16 %v5534, %v5526
        %v7311 = vpack.c.b16 %v5535, %v5527
        %v7312 = vpack.c.b16 %v5536, %v5528
        %v7313 = vpack.c.b16 %v5537, %v5529
        %v7314 = vpack.c.b16 %v5538, %v5530
        %v7315 = vpack.c.b16 %v5547, %v5539
        %v7316 = vpack.c.b16 %v5548, %v5540
        %v7317 = vpack.c.b16 %v5549, %v5541
        %v7318 = vpack.c.b16 %v5550, %v5542
        %v7319 = vpack.c.b16 %v5551, %v5543
        %v7320 = vpack.c.b16 %v5552, %v5544
        %v7321 = vpack.c.b16 %v5553, %v5545
        %v7322 = vpack.c.b16 %v5554, %v5546
        %v7323 = vpack.c.b16 %v5563, %v5555
        %v7324 = vpack.c.b16 %v5564, %v5556
        %v7325 = vpack.c.b16 %v5565, %v5557
        %v7326 = vpack.c.b16 %v5566, %v5558
        %v7327 = vpack.c.b16 %v5567, %v5559
        %v7328 = vpack.c.b16 %v5568, %v5560
        %v7329 = vpack.c.b16 %v5569, %v5561
        %v7330 = vpack.c.b16 %v5570, %v5562
        %v7331 = vpack.c.b16 %v5579, %v5571
        %v7332 = vpack.c.b16 %v5580, %v5572
        %v7333 = vpack.c.b16 %v5581, %v5573
        %v7334 = vpack.c.b16 %v5582, %v5574
        %v7335 = vpack.c.b16 %v5583, %v5575
        %v7336 = vpack.c.b16 %v5584, %v5576
        %v7337 = vpack.c.b16 %v5585, %v5577
        %v7338 = vpack.c.b16 %v5586, %v5578
        %v7339 = vpack.c.b16 %v5595, %v5587
        %v7340 = vpack.c.b16 %v5596, %v5588
        %v7341 = vpack.c.b16 %v5597, %v5589
        %v7342 = vpack.c.b16 %v5598, %v5590
        %v7343 = vpack.c.b16 %v5599, %v5591
        %v7344 = vpack.c.b16 %v5600, %v5592
        %v7345 = vpack.c.b16 %v5601, %v5593
        %v7346 = vpack.c.b16 %v5602, %v5594
        %v7347 = vpack.c.b16 %v5611, %v5603
        %v7348 = vpack.c.b16 %v5612, %v5604
        %v7349 = vpack.c.b16 %v5613, %v5605
        %v7350 = vpack.c.b16 %v5614, %v5606
        %v7351 = vpack.c.b16 %v5615, %v5607
        %v7352 = vpack.c.b16 %v5616, %v5608
        %v7353 = vpack.c.b16 %v5617, %v5609
        %v7354 = vpack.c.b16 %v5618, %v5610
        %v7355 = vpack.c.b16 %v5627, %v5619
        %v7356 = vpack.c.b16 %v5628, %v5620
        %v7357 = vpack.c.b16 %v5629, %v5621
        %v7358 = vpack.c.b16 %v5630, %v5622
        %v7359 = vpack.c.b16 %v5631, %v5623
        %v7360 = vpack.c.b16 %v5632, %v5624
        %v7361 = vpack.c.b16 %v5633, %v5625
        %v7362 = vpack.c.b16 %v5634, %v5626
        %v7363 = vpack.c.b16 %v5643, %v5635
        %v7364 = vpack.c.b16 %v5644, %v5636
        %v7365 = vpack.c.b16 %v5645, %v5637
        %v7366 = vpack.c.b16 %v5646, %v5638
        %v7367 = vpack.c.b16 %v5647, %v5639
        %v7368 = vpack.c.b16 %v5648, %v5640
        %v7369 = vpack.c.b16 %v5649, %v5641
        %v7370 = vpack.c.b16 %v5650, %v5642
        %v7371 = vpack.c.b16 %v5659, %v5651
        %v7372 = vpack.c.b16 %v5660, %v5652
        %v7373 = vpack.c.b16 %v5661, %v5653
        %v7374 = vpack.c.b16 %v5662, %v5654
        %v7375 = vpack.c.b16 %v5663, %v5655
        %v7376 = vpack.c.b16 %v5664, %v5656
        %v7377 = vpack.c.b16 %v5665, %v5657
        %v7378 = vpack.c.b16 %v5666, %v5658
        %v7379 = vpack.c.b16 %v5675, %v5667
        %v7380 = vpack.c.b16 %v5676, %v5668
        %v7381 = vpack.c.b16 %v5677, %v5669
        %v7382 = vpack.c.b16 %v5678, %v5670
        %v7383 = vpack.c.b16 %v5679, %v5671
        %v7384 = vpack.c.b16 %v5680, %v5672
        %v7385 = vpack.c.b16 %v5681, %v5673
        %v7386 = vpack.c.b16 %v5682, %v5674
        %v7387 = vpack.c.b16 %v5691, %v5683
        %v7388 = vpack.c.b16 %v5692, %v5684
        %v7389 = vpack.c.b16 %v5693, %v5685
        %v7390 = vpack.c.b16 %v5694, %v5686
        %v7391 = vpack.c.b16 %v5695, %v5687
        %v7392 = vpack.c.b16 %v5696, %v5688
        %v7393 = vpack.c.b16 %v5697, %v5689
        %v7394 = vpack.c.b16 %v5698, %v5690
        %v7395 = vpack.c.b16 %v5707, %v5699
        %v7396 = vpack.c.b16 %v5708, %v5700
        %v7397 = vpack.c.b16 %v5709, %v5701
        %v7398 = vpack.c.b16 %v5710, %v5702
        %v7399 = vpack.c.b16 %v5711, %v5703
        %v7400 = vpack.c.b16 %v5712, %v5704
        %v7401 = vpack.c.b16 %v5713, %v5705
        %v7402 = vpack.c.b16 %v5714, %v5706
        %v7403 = vpack.c.b16 %v5723, %v5715
        %v7404 = vpack.c.b16 %v5724, %v5716
        %v7405 = vpack.c.b16 %v5725, %v5717
        %v7406 = vpack.c.b16 %v5726, %v5718
        %v7407 = vpack.c.b16 %v5727, %v5719
        %v7408 = vpack.c.b16 %v5728, %v5720
        %v7409 = vpack.c.b16 %v5729, %v5721
        %v7410 = vpack.c.b16 %v5730, %v5722
        %v7411 = vpack.c.b16 %v5739, %v5731
        %v7412 = vpack.c.b16 %v5740, %v5732
        %v7413 = vpack.c.b16 %v5741, %v5733
        %v7414 = vpack.c.b16 %v5742, %v5734
        %v7415 = vpack.c.b16 %v5743, %v5735
        %v7416 = vpack.c.b16 %v5744, %v5736
        %v7417 = vpack.c.b16 %v5745, %v5737
        %v7418 = vpack.c.b16 %v5746, %v5738
        %v7419 = vpack.c.b16 %v5755, %v5747
        %v7420 = vpack.c.b16 %v5756, %v5748
        %v7421 = vpack.c.b16 %v5757, %v5749
        %v7422 = vpack.c.b16 %v5758, %v5750
        %v7423 = vpack.c.b16 %v5759, %v5751
        %v7424 = vpack.c.b16 %v5760, %v5752
        %v7425 = vpack.c.b16 %v5761, %v5753
        %v7426 = vpack.c.b16 %v5762, %v5754
        %v7427 = vpack.c.b16 %v5771, %v5763
        %v7428 = vpack.c.b16 %v5772, %v5764
        %v7429 = vpack.c.b16 %v5773, %v5765
        %v7430 = vpack.c.b16 %v5774, %v5766
        %v7431 = vpack.c.b16 %v5775, %v5767
        %v7432 = vpack.c.b16 %v5776, %v5768
        %v7433 = vpack.c.b16 %v5777, %v5769
        %v7434 = vpack.c.b16 %v5778, %v5770
        %v7435 = vpack.c.b16 %v5787, %v5779
        %v7436 = vpack.c.b16 %v5788, %v5780
        %v7437 = vpack.c.b16 %v5789, %v5781
        %v7438 = vpack.c.b16 %v5790, %v5782
        %v7439 = vpack.c.b16 %v5791, %v5783
        %v7440 = vpack.c.b16 %v5792, %v5784
        %v7441 = vpack.c.b16 %v5793, %v5785
        %v7442 = vpack.c.b16 %v5794, %v5786
        %v7443 = vpack.c.b16 %v5803, %v5795
        %v7444 = vpack.c.b16 %v5804, %v5796
        %v7445 = vpack.c.b16 %v5805, %v5797
        %v7446 = vpack.c.b16 %v5806, %v5798
        %v7447 = vpack.c.b16 %v5807, %v5799
        %v7448 = vpack.c.b16 %v5808, %v5800
        %v7449 = vpack.c.b16 %v5809, %v5801
        %v7450 = vpack.c.b16 %v5810, %v5802
        %v7451 = vpack.c.b16 %v5819, %v5811
        %v7452 = vpack.c.b16 %v5820, %v5812
        %v7453 = vpack.c.b16 %v5821, %v5813
        %v7454 = vpack.c.b16 %v5822, %v5814
        %v7455 = vpack.c.b16 %v5823, %v5815
        %v7456 = vpack.c.b16 %v5824, %v5816
        %v7457 = vpack.c.b16 %v5825, %v5817
        %v7458 = vpack.c.b16 %v5826, %v5818
        %v7459 = vpack.c.b16 %v5835, %v5827
        %v7460 = vpack.c.b16 %v5836, %v5828
        %v7461 = vpack.c.b16 %v5837, %v5829
        %v7462 = vpack.c.b16 %v5838, %v5830
        %v7463 = vpack.c.b16 %v5839, %v5831
        %v7464 = vpack.c.b16 %v5840, %v5832
        %v7465 = vpack.c.b16 %v5841, %v5833
        %v7466 = vpack.c.b16 %v5842, %v5834
        %v7467 = vpack.c.b16 %v5851, %v5843
        %v7468 = vpack.c.b16 %v5852, %v5844
        %v7469 = vpack.c.b16 %v5853, %v5845
        %v7470 = vpack.c.b16 %v5854, %v5846
        %v7471 = vpack.c.b16 %v5855, %v5847
        %v7472 = vpack.c.b16 %v5856, %v5848
        %v7473 = vpack.c.b16 %v5857, %v5849
        %v7474 = vpack.c.b16 %v5858, %v5850
        %v7475 = vpack.c.b16 %v5867, %v5859
        %v7476 = vpack.c.b16 %v5868, %v5860
        %v7477 = vpack.c.b16 %v5869, %v5861
        %v7478 = vpack.c.b16 %v5870, %v5862
        %v7479 = vpack.c.b16 %v5871, %v5863
        %v7480 = vpack.c.b16 %v5872, %v5864
        %v7481 = vpack.c.b16 %v5873, %v5865
        %v7482 = vpack.c.b16 %v5874, %v5866
        %v7483 = vpack.c.b16 %v5883, %v5875
        %v7484 = vpack.c.b16 %v5884, %v5876
        %v7485 = vpack.c.b16 %v5885, %v5877
        %v7486 = vpack.c.b16 %v5886, %v5878
        %v7487 = vpack.c.b16 %v5887, %v5879
        %v7488 = vpack.c.b16 %v5888, %v5880
        %v7489 = vpack.c.b16 %v5889, %v5881
        %v7490 = vpack.c.b16 %v5890, %v5882
        %v7491 = vpack.c.b16 %v5899, %v5891
        %v7492 = vpack.c.b16 %v5900, %v5892
        %v7493 = vpack.c.b16 %v5901, %v5893
        %v7494 = vpack.c.b16 %v5902, %v5894
        %v7495 = vpack.c.b16 %v5903, %v5895
        %v7496 = vpack.c.b16 %v5904, %v5896
        %v7497 = vpack.c.b16 %v5905, %v5897
        %v7498 = vpack.c.b16 %v5906, %v5898
        %v7499 = vpack.c.b16 %v5915, %v5907
        %v7500 = vpack.c.b16 %v5916, %v5908
        %v7501 = vpack.c.b16 %v5917, %v5909
        %v7502 = vpack.c.b16 %v5918, %v5910
        %v7503 = vpack.c.b16 %v5919, %v5911
        %v7504 = vpack.c.b16 %v5920, %v5912
        %v7505 = vpack.c.b16 %v5921, %v5913
        %v7506 = vpack.c.b16 %v5922, %v5914
        %v7507 = vpack.c.b16 %v5931, %v5923
        %v7508 = vpack.c.b16 %v5932, %v5924
        %v7509 = vpack.c.b16 %v5933, %v5925
        %v7510 = vpack.c.b16 %v5934, %v5926
        %v7511 = vpack.c.b16 %v5935, %v5927
        %v7512 = vpack.c.b16 %v5936, %v5928
        %v7513 = vpack.c.b16 %v5937, %v5929
        %v7514 = vpack.c.b16 %v5938, %v5930
        %v7515 = vpack.c.b16 %v5947, %v5939
        %v7516 = vpack.c.b16 %v5948, %v5940
        %v7517 = vpack.c.b16 %v5949, %v5941
        %v7518 = vpack.c.b16 %v5950, %v5942
        %v7519 = vpack.c.b16 %v5951, %v5943
        %v7520 = vpack.c.b16 %v5952, %v5944
        %v7521 = vpack.c.b16 %v5953, %v5945
        %v7522 = vpack.c.b16 %v5954, %v5946
        %v7523 = vpack.c.b16 %v5963, %v5955
        %v7524 = vpack.c.b16 %v5964, %v5956
        %v7525 = vpack.c.b16 %v5965, %v5957
        %v7526 = vpack.c.b16 %v5966, %v5958
        %v7527 = vpack.c.b16 %v5967, %v5959
        %v7528 = vpack.c.b16 %v5968, %v5960
        %v7529 = vpack.c.b16 %v5969, %v5961
        %v7530 = vpack.c.b16 %v5970, %v5962
        %v7531 = vpack.c.b16 %v5979, %v5971
        %v7532 = vpack.c.b16 %v5980, %v5972
        %v7533 = vpack.c.b16 %v5981, %v5973
        %v7534 = vpack.c.b16 %v5982, %v5974
        %v7535 = vpack.c.b16 %v5983, %v5975
        %v7536 = vpack.c.b16 %v5984, %v5976
        %v7537 = vpack.c.b16 %v5985, %v5977
        %v7538 = vpack.c.b16 %v5986, %v5978
        %v7539 = vpack.c.b16 %v5995, %v5987
        %v7540 = vpack.c.b16 %v5996, %v5988
        %v7541 = vpack.c.b16 %v5997, %v5989
        %v7542 = vpack.c.b16 %v5998, %v5990
        %v7543 = vpack.c.b16 %v5999, %v5991
        %v7544 = vpack.c.b16 %v6000, %v5992
        %v7545 = vpack.c.b16 %v6001, %v5993
        %v7546 = vpack.c.b16 %v6002, %v5994
        %v7547 = vpack.c.b16 %v6011, %v6003
        %v7548 = vpack.c.b16 %v6012, %v6004
        %v7549 = vpack.c.b16 %v6013, %v6005
        %v7550 = vpack.c.b16 %v6014, %v6006
        %v7551 = vpack.c.b16 %v6015, %v6007
        %v7552 = vpack.c.b16 %v6016, %v6008
        %v7553 = vpack.c.b16 %v6017, %v6009
        %v7554 = vpack.c.b16 %v6018, %v6010
        %v7555 = vpack.c.b16 %v6027, %v6019
        %v7556 = vpack.c.b16 %v6028, %v6020
        %v7557 = vpack.c.b16 %v6029, %v6021
        %v7558 = vpack.c.b16 %v6030, %v6022
        %v7559 = vpack.c.b16 %v6031, %v6023
        %v7560 = vpack.c.b16 %v6032, %v6024
        %v7561 = vpack.c.b16 %v6033, %v6025
        %v7562 = vpack.c.b16 %v6034, %v6026
        %v7563 = vpack.c.b16 %v6043, %v6035
        %v7564 = vpack.c.b16 %v6044, %v6036
        %v7565 = vpack.c.b16 %v6045, %v6037
        %v7566 = vpack.c.b16 %v6046, %v6038
        %v7567 = vpack.c.b16 %v6047, %v6039
        %v7568 = vpack.c.b16 %v6048, %v6040
        %v7569 = vpack.c.b16 %v6049, %v6041
        %v7570 = vpack.c.b16 %v6050, %v6042
        %v7571 = vpack.c.b16 %v6059, %v6051
        %v7572 = vpack.c.b16 %v6060, %v6052
        %v7573 = vpack.c.b16 %v6061, %v6053
        %v7574 = vpack.c.b16 %v6062, %v6054
        %v7575 = vpack.c.b16 %v6063, %v6055
        %v7576 = vpack.c.b16 %v6064, %v6056
        %v7577 = vpack.c.b16 %v6065, %v6057
        %v7578 = vpack.c.b16 %v6066, %v6058
        %v7579 = vpack.c.b16 %v6075, %v6067
        %v7580 = vpack.c.b16 %v6076, %v6068
        %v7581 = vpack.c.b16 %v6077, %v6069
        %v7582 = vpack.c.b16 %v6078, %v6070
        %v7583 = vpack.c.b16 %v6079, %v6071
        %v7584 = vpack.c.b16 %v6080, %v6072
        %v7585 = vpack.c.b16 %v6081, %v6073
        %v7586 = vpack.c.b16 %v6082, %v6074
        %v7587 = vpack.c.b16 %v6091, %v6083
        %v7588 = vpack.c.b16 %v6092, %v6084
        %v7589 = vpack.c.b16 %v6093, %v6085
        %v7590 = vpack.c.b16 %v6094, %v6086
        %v7591 = vpack.c.b16 %v6095, %v6087
        %v7592 = vpack.c.b16 %v6096, %v6088
        %v7593 = vpack.c.b16 %v6097, %v6089
        %v7594 = vpack.c.b16 %v6098, %v6090
        %v7595 = vpack.c.b16 %v6107, %v6099
        %v7596 = vpack.c.b16 %v6108, %v6100
        %v7597 = vpack.c.b16 %v6109, %v6101
        %v7598 = vpack.c.b16 %v6110, %v6102
        %v7599 = vpack.c.b16 %v6111, %v6103
        %v7600 = vpack.c.b16 %v6112, %v6104
        %v7601 = vpack.c.b16 %v6113, %v6105
        %v7602 = vpack.c.b16 %v6114, %v6106
        %v7603 = vpack.c.b16 %v6123, %v6115
        %v7604 = vpack.c.b16 %v6124, %v6116
        %v7605 = vpack.c.b16 %v6125, %v6117
        %v7606 = vpack.c.b16 %v6126, %v6118
        %v7607 = vpack.c.b16 %v6127, %v6119
        %v7608 = vpack.c.b16 %v6128, %v6120
        %v7609 = vpack.c.b16 %v6129, %v6121
        %v7610 = vpack.c.b16 %v6130, %v6122
        %v7611 = vpack.c.b16 %v6139, %v6131
        %v7612 = vpack.c.b16 %v6140, %v6132
        %v7613 = vpack.c.b16 %v6141, %v6133
        %v7614 = vpack.c.b16 %v6142, %v6134
        %v7615 = vpack.c.b16 %v6143, %v6135
        %v7616 = vpack.c.b16 %v6144, %v6136
        %v7617 = vpack.c.b16 %v6145, %v6137
        %v7618 = vpack.c.b16 %v6146, %v6138
        %v7619 = vpack.c.b16 %v6155, %v6147
        %v7620 = vpack.c.b16 %v6156, %v6148
        %v7621 = vpack.c.b16 %v6157, %v6149
        %v7622 = vpack.c.b16 %v6158, %v6150
        %v7623 = vpack.c.b16 %v6159, %v6151
        %v7624 = vpack.c.b16 %v6160, %v6152
        %v7625 = vpack.c.b16 %v6161, %v6153
        %v7626 = vpack.c.b16 %v6162, %v6154
        %v7627 = vpack.c.b16 %v6171, %v6163
        %v7628 = vpack.c.b16 %v6172, %v6164
        %v7629 = vpack.c.b16 %v6173, %v6165
        %v7630 = vpack.c.b16 %v6174, %v6166
        %v7631 = vpack.c.b16 %v6175, %v6167
        %v7632 = vpack.c.b16 %v6176, %v6168
        %v7633 = vpack.c.b16 %v6177, %v6169
        %v7634 = vpack.c.b16 %v6178, %v6170
        %v7635 = vpack.c.b16 %v6187, %v6179
        %v7636 = vpack.c.b16 %v6188, %v6180
        %v7637 = vpack.c.b16 %v6189, %v6181
        %v7638 = vpack.c.b16 %v6190, %v6182
        %v7639 = vpack.c.b16 %v6191, %v6183
        %v7640 = vpack.c.b16 %v6192, %v6184
        %v7641 = vpack.c.b16 %v6193, %v6185
        %v7642 = vpack.c.b16 %v6194, %v6186
        %v7643 = vpack.c.b16 %v6203, %v6195
        %v7644 = vpack.c.b16 %v6204, %v6196
        %v7645 = vpack.c.b16 %v6205, %v6197
        %v7646 = vpack.c.b16 %v6206, %v6198
        %v7647 = vpack.c.b16 %v6207, %v6199
        %v7648 = vpack.c.b16 %v6208, %v6200
        %v7649 = vpack.c.b16 %v6209, %v6201
        %v7650 = vpack.c.b16 %v6210, %v6202
        %v7651 = vpack.c.b16 %v6219, %v6211
        %v7652 = vpack.c.b16 %v6220, %v6212
        %v7653 = vpack.c.b16 %v6221, %v6213
        %v7654 = vpack.c.b16 %v6222, %v6214
        %v7655 = vpack.c.b16 %v6223, %v6215
        %v7656 = vpack.c.b16 %v6224, %v6216
        %v7657 = vpack.c.b16 %v6225, %v6217
        %v7658 = vpack.c.b16 %v6226, %v6218
        %v7659 = vpack.c.b16 %v6235, %v6227
        %v7660 = vpack.c.b16 %v6236, %v6228
        %v7661 = vpack.c.b16 %v6237, %v6229
        %v7662 = vpack.c.b16 %v6238, %v6230
        %v7663 = vpack.c.b16 %v6239, %v6231
        %v7664 = vpack.c.b16 %v6240, %v6232
        %v7665 = vpack.c.b16 %v6241, %v6233
        %v7666 = vpack.c.b16 %v6242, %v6234
        %v7667 = vpack.c.b16 %v6251, %v6243
        %v7668 = vpack.c.b16 %v6252, %v6244
        %v7669 = vpack.c.b16 %v6253, %v6245
        %v7670 = vpack.c.b16 %v6254, %v6246
        %v7671 = vpack.c.b16 %v6255, %v6247
        %v7672 = vpack.c.b16 %v6256, %v6248
        %v7673 = vpack.c.b16 %v6257, %v6249
        %v7674 = vpack.c.b16 %v6258, %v6250
        %v7675 = vpack.c.b16 %v6267, %v6259
        %v7676 = vpack.c.b16 %v6268, %v6260
        %v7677 = vpack.c.b16 %v6269, %v6261
        %v7678 = vpack.c.b16 %v6270, %v6262
        %v7679 = vpack.c.b16 %v6271, %v6263
        %v7680 = vpack.c.b16 %v6272, %v6264
        %v7681 = vpack.c.b16 %v6273, %v6265
        %v7682 = vpack.c.b16 %v6274, %v6266
        %v7683 = vpack.c.b16 %v6283, %v6275
        %v7684 = vpack.c.b16 %v6284, %v6276
        %v7685 = vpack.c.b16 %v6285, %v6277
        %v7686 = vpack.c.b16 %v6286, %v6278
        %v7687 = vpack.c.b16 %v6287, %v6279
        %v7688 = vpack.c.b16 %v6288, %v6280
        %v7689 = vpack.c.b16 %v6289, %v6281
        %v7690 = vpack.c.b16 %v6290, %v6282
        %v7691 = vpack.c.b16 %v6299, %v6291
        %v7692 = vpack.c.b16 %v6300, %v6292
        %v7693 = vpack.c.b16 %v6301, %v6293
        %v7694 = vpack.c.b16 %v6302, %v6294
        %v7695 = vpack.c.b16 %v6303, %v6295
        %v7696 = vpack.c.b16 %v6304, %v6296
        %v7697 = vpack.c.b16 %v6305, %v6297
        %v7698 = vpack.c.b16 %v6306, %v6298
        %v7699 = vpack.c.b16 %v6315, %v6307
        %v7700 = vpack.c.b16 %v6316, %v6308
        %v7701 = vpack.c.b16 %v6317, %v6309
        %v7702 = vpack.c.b16 %v6318, %v6310
        %v7703 = vpack.c.b16 %v6319, %v6311
        %v7704 = vpack.c.b16 %v6320, %v6312
        %v7705 = vpack.c.b16 %v6321, %v6313
        %v7706 = vpack.c.b16 %v6322, %v6314
        %v7707 = vpack.c.b16 %v6331, %v6323
        %v7708 = vpack.c.b16 %v6332, %v6324
        %v7709 = vpack.c.b16 %v6333, %v6325
        %v7710 = vpack.c.b16 %v6334, %v6326
        %v7711 = vpack.c.b16 %v6335, %v6327
        %v7712 = vpack.c.b16 %v6336, %v6328
        %v7713 = vpack.c.b16 %v6337, %v6329
        %v7714 = vpack.c.b16 %v6338, %v6330
        %v7715 = vpack.c.b16 %v6347, %v6339
        %v7716 = vpack.c.b16 %v6348, %v6340
        %v7717 = vpack.c.b16 %v6349, %v6341
        %v7718 = vpack.c.b16 %v6350, %v6342
        %v7719 = vpack.c.b16 %v6351, %v6343
        %v7720 = vpack.c.b16 %v6352, %v6344
        %v7721 = vpack.c.b16 %v6353, %v6345
        %v7722 = vpack.c.b16 %v6354, %v6346
        %v7723 = vpack.c.b16 %v6363, %v6355
        %v7724 = vpack.c.b16 %v6364, %v6356
        %v7725 = vpack.c.b16 %v6365, %v6357
        %v7726 = vpack.c.b16 %v6366, %v6358
        %v7727 = vpack.c.b16 %v6367, %v6359
        %v7728 = vpack.c.b16 %v6368, %v6360
        %v7729 = vpack.c.b16 %v6369, %v6361
        %v7730 = vpack.c.b16 %v6370, %v6362
        %v7731 = vpack.c.b16 %v6379, %v6371
        %v7732 = vpack.c.b16 %v6380, %v6372
        %v7733 = vpack.c.b16 %v6381, %v6373
        %v7734 = vpack.c.b16 %v6382, %v6374
        %v7735 = vpack.c.b16 %v6383, %v6375
        %v7736 = vpack.c.b16 %v6384, %v6376
        %v7737 = vpack.c.b16 %v6385, %v6377
        %v7738 = vpack.c.b16 %v6386, %v6378
        %v7739 = vpack.c.b16 %v6395, %v6387
        %v7740 = vpack.c.b16 %v6396, %v6388
        %v7741 = vpack.c.b16 %v6397, %v6389
        %v7742 = vpack.c.b16 %v6398, %v6390
        %v7743 = vpack.c.b16 %v6399, %v6391
        %v7744 = vpack.c.b16 %v6400, %v6392
        %v7745 = vpack.c.b16 %v6401, %v6393
        %v7746 = vpack.c.b16 %v6402, %v6394
        %v7747 = vpack.c.b16 %v6411, %v6403
        %v7748 = vpack.c.b16 %v6412, %v6404
        %v7749 = vpack.c.b16 %v6413, %v6405
        %v7750 = vpack.c.b16 %v6414, %v6406
        %v7751 = vpack.c.b16 %v6415, %v6407
        %v7752 = vpack.c.b16 %v6416, %v6408
        %v7753 = vpack.c.b16 %v6417, %v6409
        %v7754 = vpack.c.b16 %v6418, %v6410
        %v7755 = vpack.c.b16 %v6427, %v6419
        %v7756 = vpack.c.b16 %v6428, %v6420
        %v7757 = vpack.c.b16 %v6429, %v6421
        %v7758 = vpack.c.b16 %v6430, %v6422
        %v7759 = vpack.c.b16 %v6431, %v6423
        %v7760 = vpack.c.b16 %v6432, %v6424
        %v7761 = vpack.c.b16 %v6433, %v6425
        %v7762 = vpack.c.b16 %v6434, %v6426
        %v7763 = vpack.c.b16 %v6443, %v6435
        %v7764 = vpack.c.b16 %v6444, %v6436
        %v7765 = vpack.c.b16 %v6445, %v6437
        %v7766 = vpack.c.b16 %v6446, %v6438
        %v7767 = vpack.c.b16 %v6447, %v6439
        %v7768 = vpack.c.b16 %v6448, %v6440
        %v7769 = vpack.c.b16 %v6449, %v6441
        %v7770 = vpack.c.b16 %v6450, %v6442
        %v7771 = vpack.c.b16 %v6459, %v6451
        %v7772 = vpack.c.b16 %v6460, %v6452
        %v7773 = vpack.c.b16 %v6461, %v6453
        %v7774 = vpack.c.b16 %v6462, %v6454
        %v7775 = vpack.c.b16 %v6463, %v6455
        %v7776 = vpack.c.b16 %v6464, %v6456
        %v7777 = vpack.c.b16 %v6465, %v6457
        %v7778 = vpack.c.b16 %v6466, %v6458
        %v7779 = vpack.c.b16 %v6475, %v6467
        %v7780 = vpack.c.b16 %v6476, %v6468
        %v7781 = vpack.c.b16 %v6477, %v6469
        %v7782 = vpack.c.b16 %v6478, %v6470
        %v7783 = vpack.c.b16 %v6479, %v6471
        %v7784 = vpack.c.b16 %v6480, %v6472
        %v7785 = vpack.c.b16 %v6481, %v6473
        %v7786 = vpack.c.b16 %v6482, %v6474
        %v7787 = vpack.c.b16 %v6491, %v6483
        %v7788 = vpack.c.b16 %v6492, %v6484
        %v7789 = vpack.c.b16 %v6493, %v6485
        %v7790 = vpack.c.b16 %v6494, %v6486
        %v7791 = vpack.c.b16 %v6495, %v6487
        %v7792 = vpack.c.b16 %v6496, %v6488
        %v7793 = vpack.c.b16 %v6497, %v6489
        %v7794 = vpack.c.b16 %v6498, %v6490
        %v7795 = vpack.c.b16 %v6507, %v6499
        %v7796 = vpack.c.b16 %v6508, %v6500
        %v7797 = vpack.c.b16 %v6509, %v6501
        %v7798 = vpack.c.b16 %v6510, %v6502
        %v7799 = vpack.c.b16 %v6511, %v6503
        %v7800 = vpack.c.b16 %v6512, %v6504
        %v7801 = vpack.c.b16 %v6513, %v6505
        %v7802 = vpack.c.b16 %v6514, %v6506
        %v7803 = vpack.c.b16 %v6523, %v6515
        %v7804 = vpack.c.b16 %v6524, %v6516
        %v7805 = vpack.c.b16 %v6525, %v6517
        %v7806 = vpack.c.b16 %v6526, %v6518
        %v7807 = vpack.c.b16 %v6527, %v6519
        %v7808 = vpack.c.b16 %v6528, %v6520
        %v7809 = vpack.c.b16 %v6529, %v6521
        %v7810 = vpack.c.b16 %v6530, %v6522
        %v7811 = vpack.c.b16 %v6539, %v6531
        %v7812 = vpack.c.b16 %v6540, %v6532
        %v7813 = vpack.c.b16 %v6541, %v6533
        %v7814 = vpack.c.b16 %v6542, %v6534
        %v7815 = vpack.c.b16 %v6543, %v6535
        %v7816 = vpack.c.b16 %v6544, %v6536
        %v7817 = vpack.c.b16 %v6545, %v6537
        %v7818 = vpack.c.b16 %v6546, %v6538
        %v7819 = vpack.c.b16 %v6555, %v6547
        %v7820 = vpack.c.b16 %v6556, %v6548
        %v7821 = vpack.c.b16 %v6557, %v6549
        %v7822 = vpack.c.b16 %v6558, %v6550
        %v7823 = vpack.c.b16 %v6559, %v6551
        %v7824 = vpack.c.b16 %v6560, %v6552
        %v7825 = vpack.c.b16 %v6561, %v6553
        %v7826 = vpack.c.b16 %v6562, %v6554
        %v7827 = vpack.c.b16 %v6571, %v6563
        %v7828 = vpack.c.b16 %v6572, %v6564
        %v7829 = vpack.c.b16 %v6573, %v6565
        %v7830 = vpack.c.b16 %v6574, %v6566
        %v7831 = vpack.c.b16 %v6575, %v6567
        %v7832 = vpack.c.b16 %v6576, %v6568
        %v7833 = vpack.c.b16 %v6577, %v6569
        %v7834 = vpack.c.b16 %v6578, %v6570
        %v7835 = vpack.c.b16 %v6587, %v6579
        %v7836 = vpack.c.b16 %v6588, %v6580
        %v7837 = vpack.c.b16 %v6589, %v6581
        %v7838 = vpack.c.b16 %v6590, %v6582
        %v7839 = vpack.c.b16 %v6591, %v6583
        %v7840 = vpack.c.b16 %v6592, %v6584
        %v7841 = vpack.c.b16 %v6593, %v6585
        %v7842 = vpack.c.b16 %v6594, %v6586
        %v7843 = vpack.c.b16 %v6603, %v6595
        %v7844 = vpack.c.b16 %v6604, %v6596
        %v7845 = vpack.c.b16 %v6605, %v6597
        %v7846 = vpack.c.b16 %v6606, %v6598
        %v7847 = vpack.c.b16 %v6607, %v6599
        %v7848 = vpack.c.b16 %v6608, %v6600
        %v7849 = vpack.c.b16 %v6609, %v6601
        %v7850 = vpack.c.b16 %v6610, %v6602
        %v7851 = vpack.c.b16 %v6619, %v6611
        %v7852 = vpack.c.b16 %v6620, %v6612
        %v7853 = vpack.c.b16 %v6621, %v6613
        %v7854 = vpack.c.b16 %v6622, %v6614
        %v7855 = vpack.c.b16 %v6623, %v6615
        %v7856 = vpack.c.b16 %v6624, %v6616
        %v7857 = vpack.c.b16 %v6625, %v6617
        %v7858 = vpack.c.b16 %v6626, %v6618
        %v7859 = vpack.c.b16 %v6635, %v6627
        %v7860 = vpack.c.b16 %v6636, %v6628
        %v7861 = vpack.c.b16 %v6637, %v6629
        %v7862 = vpack.c.b16 %v6638, %v6630
        %v7863 = vpack.c.b16 %v6639, %v6631
        %v7864 = vpack.c.b16 %v6640, %v6632
        %v7865 = vpack.c.b16 %v6641, %v6633
        %v7866 = vpack.c.b16 %v6642, %v6634
        %v7867 = vpack.c.b16 %v6651, %v6643
        %v7868 = vpack.c.b16 %v6652, %v6644
        %v7869 = vpack.c.b16 %v6653, %v6645
        %v7870 = vpack.c.b16 %v6654, %v6646
        %v7871 = vpack.c.b16 %v6655, %v6647
        %v7872 = vpack.c.b16 %v6656, %v6648
        %v7873 = vpack.c.b16 %v6657, %v6649
        %v7874 = vpack.c.b16 %v6658, %v6650
        %v7875 = vpack.c.b16 %v6667, %v6659
        %v7876 = vpack.c.b16 %v6668, %v6660
        %v7877 = vpack.c.b16 %v6669, %v6661
        %v7878 = vpack.c.b16 %v6670, %v6662
        %v7879 = vpack.c.b16 %v6671, %v6663
        %v7880 = vpack.c.b16 %v6672, %v6664
        %v7881 = vpack.c.b16 %v6673, %v6665
        %v7882 = vpack.c.b16 %v6674, %v6666
        %v7883 = vpack.c.b16 %v6683, %v6675
        %v7884 = vpack.c.b16 %v6684, %v6676
        %v7885 = vpack.c.b16 %v6685, %v6677
        %v7886 = vpack.c.b16 %v6686, %v6678
        %v7887 = vpack.c.b16 %v6687, %v6679
        %v7888 = vpack.c.b16 %v6688, %v6680
        %v7889 = vpack.c.b16 %v6689, %v6681
        %v7890 = vpack.c.b16 %v6690, %v6682
        %v7891 = vpack.c.b16 %v6699, %v6691
        %v7892 = vpack.c.b16 %v6700, %v6692
        %v7893 = vpack.c.b16 %v6701, %v6693
        %v7894 = vpack.c.b16 %v6702, %v6694
        %v7895 = vpack.c.b16 %v6703, %v6695
        %v7896 = vpack.c.b16 %v6704, %v6696
        %v7897 = vpack.c.b16 %v6705, %v6697
        %v7898 = vpack.c.b16 %v6706, %v6698
        %v7899 = vpack.c.b16 %v6715, %v6707
        %v7900 = vpack.c.b16 %v6716, %v6708
        %v7901 = vpack.c.b16 %v6717, %v6709
        %v7902 = vpack.c.b16 %v6718, %v6710
        %v7903 = vpack.c.b16 %v6719, %v6711
        %v7904 = vpack.c.b16 %v6720, %v6712
        %v7905 = vpack.c.b16 %v6721, %v6713
        %v7906 = vpack.c.b16 %v6722, %v6714
        %v7907 = vpack.c.b16 %v6731, %v6723
        %v7908 = vpack.c.b16 %v6732, %v6724
        %v7909 = vpack.c.b16 %v6733, %v6725
        %v7910 = vpack.c.b16 %v6734, %v6726
        %v7911 = vpack.c.b16 %v6735, %v6727
        %v7912 = vpack.c.b16 %v6736, %v6728
        %v7913 = vpack.c.b16 %v6737, %v6729
        %v7914 = vpack.c.b16 %v6738, %v6730
        %v7915 = vpack.c.b16 %v6747, %v6739
        %v7916 = vpack.c.b16 %v6748, %v6740
        %v7917 = vpack.c.b16 %v6749, %v6741
        %v7918 = vpack.c.b16 %v6750, %v6742
        %v7919 = vpack.c.b16 %v6751, %v6743
        %v7920 = vpack.c.b16 %v6752, %v6744
        %v7921 = vpack.c.b16 %v6753, %v6745
        %v7922 = vpack.c.b16 %v6754, %v6746
        %v7923 = vpack.c.b16 %v6763, %v6755
        %v7924 = vpack.c.b16 %v6764, %v6756
        %v7925 = vpack.c.b16 %v6765, %v6757
        %v7926 = vpack.c.b16 %v6766, %v6758
        %v7927 = vpack.c.b16 %v6767, %v6759
        %v7928 = vpack.c.b16 %v6768, %v6760
        %v7929 = vpack.c.b16 %v6769, %v6761
        %v7930 = vpack.c.b16 %v6770, %v6762
        %v7931 = vpack.c.b16 %v6779, %v6771
        %v7932 = vpack.c.b16 %v6780, %v6772
        %v7933 = vpack.c.b16 %v6781, %v6773
        %v7934 = vpack.c.b16 %v6782, %v6774
        %v7935 = vpack.c.b16 %v6783, %v6775
        %v7936 = vpack.c.b16 %v6784, %v6776
        %v7937 = vpack.c.b16 %v6785, %v6777
        %v7938 = vpack.c.b16 %v6786, %v6778
        %v7939 = vpack.c.b16 %v6795, %v6787
        %v7940 = vpack.c.b16 %v6796, %v6788
        %v7941 = vpack.c.b16 %v6797, %v6789
        %v7942 = vpack.c.b16 %v6798, %v6790
        %v7943 = vpack.c.b16 %v6799, %v6791
        %v7944 = vpack.c.b16 %v6800, %v6792
        %v7945 = vpack.c.b16 %v6801, %v6793
        %v7946 = vpack.c.b16 %v6802, %v6794
        %v7947 = vpack.c.b16 %v6811, %v6803
        %v7948 = vpack.c.b16 %v6812, %v6804
        %v7949 = vpack.c.b16 %v6813, %v6805
        %v7950 = vpack.c.b16 %v6814, %v6806
        %v7951 = vpack.c.b16 %v6815, %v6807
        %v7952 = vpack.c.b16 %v6816, %v6808
        %v7953 = vpack.c.b16 %v6817, %v6809
        %v7954 = vpack.c.b16 %v6818, %v6810
        %v7955 = vpack.c.b16 %v6827, %v6819
        %v7956 = vpack.c.b16 %v6828, %v6820
        %v7957 = vpack.c.b16 %v6829, %v6821
        %v7958 = vpack.c.b16 %v6830, %v6822
        %v7959 = vpack.c.b16 %v6831, %v6823
        %v7960 = vpack.c.b16 %v6832, %v6824
        %v7961 = vpack.c.b16 %v6833, %v6825
        %v7962 = vpack.c.b16 %v6834, %v6826
        %v7963 = vpack.c.b16 %v6843, %v6835
        %v7964 = vpack.c.b16 %v6844, %v6836
        %v7965 = vpack.c.b16 %v6845, %v6837
        %v7966 = vpack.c.b16 %v6846, %v6838
        %v7967 = vpack.c.b16 %v6847, %v6839
        %v7968 = vpack.c.b16 %v6848, %v6840
        %v7969 = vpack.c.b16 %v6849, %v6841
        %v7970 = vpack.c.b16 %v6850, %v6842
        %v7971 = vpack.c.b16 %v6859, %v6851
        %v7972 = vpack.c.b16 %v6860, %v6852
        %v7973 = vpack.c.b16 %v6861, %v6853
        %v7974 = vpack.c.b16 %v6862, %v6854
        %v7975 = vpack.c.b16 %v6863, %v6855
        %v7976 = vpack.c.b16 %v6864, %v6856
        %v7977 = vpack.c.b16 %v6865, %v6857
        %v7978 = vpack.c.b16 %v6866, %v6858
        %v7979 = vpack.c.b16 %v6875, %v6867
        %v7980 = vpack.c.b16 %v6876, %v6868
        %v7981 = vpack.c.b16 %v6877, %v6869
        %v7982 = vpack.c.b16 %v6878, %v6870
        %v7983 = vpack.c.b16 %v6879, %v6871
        %v7984 = vpack.c.b16 %v6880, %v6872
        %v7985 = vpack.c.b16 %v6881, %v6873
        %v7986 = vpack.c.b16 %v6882, %v6874
        %v7987 = vpack.c.b16 %v6891, %v6883
        %v7988 = vpack.c.b16 %v6892, %v6884
        %v7989 = vpack.c.b16 %v6893, %v6885
        %v7990 = vpack.c.b16 %v6894, %v6886
        %v7991 = vpack.c.b16 %v6895, %v6887
        %v7992 = vpack.c.b16 %v6896, %v6888
        %v7993 = vpack.c.b16 %v6897, %v6889
        %v7994 = vpack.c.b16 %v6898, %v6890
        %v7995 = vpack.c.b16 %v6907, %v6899
        %v7996 = vpack.c.b16 %v6908, %v6900
        %v7997 = vpack.c.b16 %v6909, %v6901
        %v7998 = vpack.c.b16 %v6910, %v6902
        %v7999 = vpack.c.b16 %v6911, %v6903
        %v8000 = vpack.c.b16 %v6912, %v6904
        %v8001 = vpack.c.b16 %v6913, %v6905
        %v8002 = vpack.c.b16 %v6914, %v6906
        %v8003 = vpack.c.b16 %v6923, %v6915
        %v8004 = vpack.c.b16 %v6924, %v6916
        %v8005 = vpack.c.b16 %v6925, %v6917
        %v8006 = vpack.c.b16 %v6926, %v6918
        %v8007 = vpack.c.b16 %v6927, %v6919
        %v8008 = vpack.c.b16 %v6928, %v6920
        %v8009 = vpack.c.b16 %v6929, %v6921
        %v8010 = vpack.c.b16 %v6930, %v6922
        %v8011 = vpack.c.b16 %v6939, %v6931
        %v8012 = vpack.c.b16 %v6940, %v6932
        %v8013 = vpack.c.b16 %v6941, %v6933
        %v8014 = vpack.c.b16 %v6942, %v6934
        %v8015 = vpack.c.b16 %v6943, %v6935
        %v8016 = vpack.c.b16 %v6944, %v6936
        %v8017 = vpack.c.b16 %v6945, %v6937
        %v8018 = vpack.c.b16 %v6946, %v6938
        %v8019 = vpack.c.b16 %v6955, %v6947
        %v8020 = vpack.c.b16 %v6956, %v6948
        %v8021 = vpack.c.b16 %v6957, %v6949
        %v8022 = vpack.c.b16 %v6958, %v6950
        %v8023 = vpack.c.b16 %v6959, %v6951
        %v8024 = vpack.c.b16 %v6960, %v6952
        %v8025 = vpack.c.b16 %v6961, %v6953
        %v8026 = vpack.c.b16 %v6962, %v6954
        %v8027 = vpack.c.b16 %v6971, %v6963
        %v8028 = vpack.c.b16 %v6972, %v6964
        %v8029 = vpack.c.b16 %v6973, %v6965
        %v8030 = vpack.c.b16 %v6974, %v6966
        %v8031 = vpack.c.b16 %v6975, %v6967
        %v8032 = vpack.c.b16 %v6976, %v6968
        %v8033 = vpack.c.b16 %v6977, %v6969
        %v8034 = vpack.c.b16 %v6978, %v6970
        %v8035 = vpack.c.b16 %v6987, %v6979
        %v8036 = vpack.c.b16 %v6988, %v6980
        %v8037 = vpack.c.b16 %v6989, %v6981
        %v8038 = vpack.c.b16 %v6990, %v6982
        %v8039 = vpack.c.b16 %v6991, %v6983
        %v8040 = vpack.c.b16 %v6992, %v6984
        %v8041 = vpack.c.b16 %v6993, %v6985
        %v8042 = vpack.c.b16 %v6994, %v6986
        %v8043 = vpack.c.b16 %v7003, %v6995
        %v8044 = vpack.c.b16 %v7004, %v6996
        %v8045 = vpack.c.b16 %v7005, %v6997
        %v8046 = vpack.c.b16 %v7006, %v6998
        %v8047 = vpack.c.b16 %v7007, %v6999
        %v8048 = vpack.c.b16 %v7008, %v7000
        %v8049 = vpack.c.b16 %v7009, %v7001
        %v8050 = vpack.c.b16 %v7010, %v7002
        %v8051 = vpack.c.b16 %v7019, %v7011
        %v8052 = vpack.c.b16 %v7020, %v7012
        %v8053 = vpack.c.b16 %v7021, %v7013
        %v8054 = vpack.c.b16 %v7022, %v7014
        %v8055 = vpack.c.b16 %v7023, %v7015
        %v8056 = vpack.c.b16 %v7024, %v7016
        %v8057 = vpack.c.b16 %v7025, %v7017
        %v8058 = vpack.c.b16 %v7026, %v7018
        %v8059 = vpack.c.b16 %v7035, %v7027
        %v8060 = vpack.c.b16 %v7036, %v7028
        %v8061 = vpack.c.b16 %v7037, %v7029
        %v8062 = vpack.c.b16 %v7038, %v7030
        %v8063 = vpack.c.b16 %v7039, %v7031
        %v8064 = vpack.c.b16 %v7040, %v7032
        %v8065 = vpack.c.b16 %v7041, %v7033
        %v8066 = vpack.c.b16 %v7042, %v7034
        %9091 = vmatprep.subr.bf16.mxu0 %v7044
        %9092 = vmatpush1.bf16.msra.mxu0 %v7043
        %9093 = vmatprep.subr.bf16.mxu0 %v7052
        %9094 = vmatpush1.bf16.msra.mxu0 %v7051
        %9095 = vmatprep.subr.bf16.mxu0 %v7060
        %9096 = vmatpush1.bf16.msra.mxu0 %v7059
        %9097 = vmatprep.subr.bf16.mxu0 %v7068
        %9098 = vmatpush1.bf16.msra.mxu0 %v7067
        %9099 = vmatprep.subr.bf16.mxu0 %v7076
        %9100 = vmatpush1.bf16.msra.mxu0 %v7075
        %9101 = vmatprep.subr.bf16.mxu0 %v7084
        %9102 = vmatpush1.bf16.msra.mxu0 %v7083
        %9103 = vmatprep.subr.bf16.mxu0 %v7092
        %9104 = vmatpush1.bf16.msra.mxu0 %v7091
        %9105 = vmatprep.subr.bf16.mxu0 %v7100
        %9106 = vmatpush1.bf16.msra.mxu0 %v7099
        %9107 = vmatprep.subr.bf16.mxu0 %v7108
        %9108 = vmatpush1.bf16.msra.mxu0 %v7107
        %9109 = vmatprep.subr.bf16.mxu0 %v7116
        %9110 = vmatpush1.bf16.msra.mxu0 %v7115
        %9111 = vmatprep.subr.bf16.mxu0 %v7124
        %9112 = vmatpush1.bf16.msra.mxu0 %v7123
        %9113 = vmatprep.subr.bf16.mxu0 %v7132
        %9114 = vmatpush1.bf16.msra.mxu0 %v7131
        %9115 = vmatprep.subr.bf16.mxu0 %v7140
        %9116 = vmatpush1.bf16.msra.mxu0 %v7139
        %9117 = vmatprep.subr.bf16.mxu0 %v7148
        %9118 = vmatpush1.bf16.msra.mxu0 %v7147
        %9119 = vmatprep.subr.bf16.mxu0 %v7156
        %9120 = vmatpush1.bf16.msra.mxu0 %v7155
        %9121 = vmatprep.subr.bf16.mxu0 %v7164
        %9122 = vmatpush1.bf16.msra.mxu0 %v7163
        %9123 = vmatprep.mubr.bf16.mxu0 %v3914
        %9124 = vmatmul.mubr.bf16.gmra.mrb[0].mxu0 %v3913
        %v9125 = vpop.f32.mrb[0].mxu0
        %v9126 = vadd.f32 %v3934, %v9125
        %v9127 = vpop.f32.mrb[0].mxu0
        %v9128 = vadd.f32 %v3938, %v9127
        %v9129 = vpop.f32.mrb[0].mxu0
        %v9130 = vpop.f32.mrb[0].mxu0
        %9131 = vdwg.mxu0
        %9132 = vmatprep.subr.bf16.mxu0 %v7172
        %9133 = vmatpush1.bf16.msra.mxu0 %v7171
        %9134 = vmatprep.subr.bf16.mxu0 %v7180
        %9135 = vmatpush1.bf16.msra.mxu0 %v7179
        %9136 = vmatprep.subr.bf16.mxu0 %v7188
        %9137 = vmatpush1.bf16.msra.mxu0 %v7187
        %9138 = vmatprep.subr.bf16.mxu0 %v7196
        %9139 = vmatpush1.bf16.msra.mxu0 %v7195
        %9140 = vmatprep.subr.bf16.mxu0 %v7204
        %9141 = vmatpush1.bf16.msra.mxu0 %v7203
        %9142 = vmatprep.subr.bf16.mxu0 %v7212
        %9143 = vmatpush1.bf16.msra.mxu0 %v7211
        %9144 = vmatprep.subr.bf16.mxu0 %v7220
        %9145 = vmatpush1.bf16.msra.mxu0 %v7219
        %9146 = vmatprep.subr.bf16.mxu0 %v7228
        %9147 = vmatpush1.bf16.msra.mxu0 %v7227
        %9148 = vmatprep.subr.bf16.mxu0 %v7236
        %9149 = vmatpush1.bf16.msra.mxu0 %v7235
        %9150 = vmatprep.subr.bf16.mxu0 %v7244
        %9151 = vmatpush1.bf16.msra.mxu0 %v7243
        %9152 = vmatprep.subr.bf16.mxu0 %v7252
        %9153 = vmatpush1.bf16.msra.mxu0 %v7251
        %9154 = vmatprep.subr.bf16.mxu0 %v7260
        %9155 = vmatpush1.bf16.msra.mxu0 %v7259
        %9156 = vmatprep.subr.bf16.mxu0 %v7268
        %9157 = vmatpush1.bf16.msra.mxu0 %v7267
        %9158 = vmatprep.subr.bf16.mxu0 %v7276
        %9159 = vmatpush1.bf16.msra.mxu0 %v7275
        %9160 = vmatprep.subr.bf16.mxu0 %v7284
        %9161 = vmatpush1.bf16.msra.mxu0 %v7283
        %9162 = vmatprep.subr.bf16.mxu0 %v7292
        %9163 = vmatpush1.bf16.msra.mxu0 %v7291
        %9164 = vmatprep.mubr.bf16.mxu0 %v3916
        %9165 = vmatmul.mubr.bf16.gmra.mrb[0].mxu0 %v3915
        %v9166 = vpop.f32.mrb[0].mxu0
        %v9167 = vadd.f32 %v9126, %v9166
        %v9168 = vpop.f32.mrb[0].mxu0
        %v9169 = vadd.f32 %v9128, %v9168
        %v9170 = vpop.f32.mrb[0].mxu0
        %v9171 = vpop.f32.mrb[0].mxu0
        %9172 = vdwg.mxu0
        %9173 = vmatprep.subr.bf16.mxu0 %v7300
        %9174 = vmatpush1.bf16.msra.mxu0 %v7299
        %9175 = vmatprep.subr.bf16.mxu0 %v7308
        %9176 = vmatpush1.bf16.msra.mxu0 %v7307
        %9177 = vmatprep.subr.bf16.mxu0 %v7316
        %9178 = vmatpush1.bf16.msra.mxu0 %v7315
        %9179 = vmatprep.subr.bf16.mxu0 %v7324
        %9180 = vmatpush1.bf16.msra.mxu0 %v7323
        %9181 = vmatprep.subr.bf16.mxu0 %v7332
        %9182 = vmatpush1.bf16.msra.mxu0 %v7331
        %9183 = vmatprep.subr.bf16.mxu0 %v7340
        %9184 = vmatpush1.bf16.msra.mxu0 %v7339
        %9185 = vmatprep.subr.bf16.mxu0 %v7348
        %9186 = vmatpush1.bf16.msra.mxu0 %v7347
        %9187 = vmatprep.subr.bf16.mxu0 %v7356
        %9188 = vmatpush1.bf16.msra.mxu0 %v7355
        %9189 = vmatprep.subr.bf16.mxu0 %v7364
        %9190 = vmatpush1.bf16.msra.mxu0 %v7363
        %9191 = vmatprep.subr.bf16.mxu0 %v7372
        %9192 = vmatpush1.bf16.msra.mxu0 %v7371
        %9193 = vmatprep.subr.bf16.mxu0 %v7380
        %9194 = vmatpush1.bf16.msra.mxu0 %v7379
        %9195 = vmatprep.subr.bf16.mxu0 %v7388
        %9196 = vmatpush1.bf16.msra.mxu0 %v7387
        %9197 = vmatprep.subr.bf16.mxu0 %v7396
        %9198 = vmatpush1.bf16.msra.mxu0 %v7395
        %9199 = vmatprep.subr.bf16.mxu0 %v7404
        %9200 = vmatpush1.bf16.msra.mxu0 %v7403
        %9201 = vmatprep.subr.bf16.mxu0 %v7412
        %9202 = vmatpush1.bf16.msra.mxu0 %v7411
        %9203 = vmatprep.subr.bf16.mxu0 %v7420
        %9204 = vmatpush1.bf16.msra.mxu0 %v7419
        %9205 = vmatprep.mubr.bf16.mxu0 %v3918
        %9206 = vmatmul.mubr.bf16.gmra.mrb[0].mxu0 %v3917
        %v9207 = vpop.f32.mrb[0].mxu0
        %v9208 = vadd.f32 %v9167, %v9207
        %v9209 = vpop.f32.mrb[0].mxu0
        %v9210 = vadd.f32 %v9169, %v9209
        %v9211 = vpop.f32.mrb[0].mxu0
        %v9212 = vpop.f32.mrb[0].mxu0
        %9213 = vdwg.mxu0
        %9214 = vmatprep.subr.bf16.mxu0 %v7428
        %9215 = vmatpush1.bf16.msra.mxu0 %v7427
        %9216 = vmatprep.subr.bf16.mxu0 %v7436
        %9217 = vmatpush1.bf16.msra.mxu0 %v7435
        %9218 = vmatprep.subr.bf16.mxu0 %v7444
        %9219 = vmatpush1.bf16.msra.mxu0 %v7443
        %9220 = vmatprep.subr.bf16.mxu0 %v7452
        %9221 = vmatpush1.bf16.msra.mxu0 %v7451
        %9222 = vmatprep.subr.bf16.mxu0 %v7460
        %9223 = vmatpush1.bf16.msra.mxu0 %v7459
        %9224 = vmatprep.subr.bf16.mxu0 %v7468
        %9225 = vmatpush1.bf16.msra.mxu0 %v7467
        %9226 = vmatprep.subr.bf16.mxu0 %v7476
        %9227 = vmatpush1.bf16.msra.mxu0 %v7475
        %9228 = vmatprep.subr.bf16.mxu0 %v7484
        %9229 = vmatpush1.bf16.msra.mxu0 %v7483
        %9230 = vmatprep.subr.bf16.mxu0 %v7492
        %9231 = vmatpush1.bf16.msra.mxu0 %v7491
        %9232 = vmatprep.subr.bf16.mxu0 %v7500
        %9233 = vmatpush1.bf16.msra.mxu0 %v7499
        %9234 = vmatprep.subr.bf16.mxu0 %v7508
        %9235 = vmatpush1.bf16.msra.mxu0 %v7507
        %9236 = vmatprep.subr.bf16.mxu0 %v7516
        %9237 = vmatpush1.bf16.msra.mxu0 %v7515
        %9238 = vmatprep.subr.bf16.mxu0 %v7524
        %9239 = vmatpush1.bf16.msra.mxu0 %v7523
        %9240 = vmatprep.subr.bf16.mxu0 %v7532
        %9241 = vmatpush1.bf16.msra.mxu0 %v7531
        %9242 = vmatprep.subr.bf16.mxu0 %v7540
        %9243 = vmatpush1.bf16.msra.mxu0 %v7539
        %9244 = vmatprep.subr.bf16.mxu0 %v7548
        %9245 = vmatpush1.bf16.msra.mxu0 %v7547
        %9246 = vmatprep.mubr.bf16.mxu0 %v3920
        %9247 = vmatmul.mubr.bf16.gmra.mrb[0].mxu0 %v3919
        %v9248 = vpop.f32.mrb[0].mxu0
        %v9249 = vadd.f32 %v9208, %v9248
        %v9250 = vpop.f32.mrb[0].mxu0
        %v9251 = vadd.f32 %v9210, %v9250
        %v9252 = vpop.f32.mrb[0].mxu0
        %v9253 = vpop.f32.mrb[0].mxu0
        %9254 = vdwg.mxu0
        %9255 = vmatprep.subr.bf16.mxu0 %v7556
        %9256 = vmatpush1.bf16.msra.mxu0 %v7555
        %9257 = vmatprep.subr.bf16.mxu0 %v7564
        %9258 = vmatpush1.bf16.msra.mxu0 %v7563
        %9259 = vmatprep.subr.bf16.mxu0 %v7572
        %9260 = vmatpush1.bf16.msra.mxu0 %v7571
        %9261 = vmatprep.subr.bf16.mxu0 %v7580
        %9262 = vmatpush1.bf16.msra.mxu0 %v7579
        %9263 = vmatprep.subr.bf16.mxu0 %v7588
        %9264 = vmatpush1.bf16.msra.mxu0 %v7587
        %9265 = vmatprep.subr.bf16.mxu0 %v7596
        %9266 = vmatpush1.bf16.msra.mxu0 %v7595
        %9267 = vmatprep.subr.bf16.mxu0 %v7604
        %9268 = vmatpush1.bf16.msra.mxu0 %v7603
        %9269 = vmatprep.subr.bf16.mxu0 %v7612
        %9270 = vmatpush1.bf16.msra.mxu0 %v7611
        %9271 = vmatprep.subr.bf16.mxu0 %v7620
        %9272 = vmatpush1.bf16.msra.mxu0 %v7619
        %9273 = vmatprep.subr.bf16.mxu0 %v7628
        %9274 = vmatpush1.bf16.msra.mxu0 %v7627
        %9275 = vmatprep.subr.bf16.mxu0 %v7636
        %9276 = vmatpush1.bf16.msra.mxu0 %v7635
        %9277 = vmatprep.subr.bf16.mxu0 %v7644
        %9278 = vmatpush1.bf16.msra.mxu0 %v7643
        %9279 = vmatprep.subr.bf16.mxu0 %v7652
        %9280 = vmatpush1.bf16.msra.mxu0 %v7651
        %9281 = vmatprep.subr.bf16.mxu0 %v7660
        %9282 = vmatpush1.bf16.msra.mxu0 %v7659
        %9283 = vmatprep.subr.bf16.mxu0 %v7668
        %9284 = vmatpush1.bf16.msra.mxu0 %v7667
        %9285 = vmatprep.subr.bf16.mxu0 %v7676
        %9286 = vmatpush1.bf16.msra.mxu0 %v7675
        %9287 = vmatprep.mubr.bf16.mxu0 %v3922
        %9288 = vmatmul.mubr.bf16.gmra.mrb[0].mxu0 %v3921
        %v9289 = vpop.f32.mrb[0].mxu0
        %v9290 = vadd.f32 %v9249, %v9289
        %v9291 = vpop.f32.mrb[0].mxu0
        %v9292 = vadd.f32 %v9251, %v9291
        %v9293 = vpop.f32.mrb[0].mxu0
        %v9294 = vpop.f32.mrb[0].mxu0
        %9295 = vdwg.mxu0
        %9296 = vmatprep.subr.bf16.mxu0 %v7684
        %9297 = vmatpush1.bf16.msra.mxu0 %v7683
        %9298 = vmatprep.subr.bf16.mxu0 %v7692
        %9299 = vmatpush1.bf16.msra.mxu0 %v7691
        %9300 = vmatprep.subr.bf16.mxu0 %v7700
        %9301 = vmatpush1.bf16.msra.mxu0 %v7699
        %9302 = vmatprep.subr.bf16.mxu0 %v7708
        %9303 = vmatpush1.bf16.msra.mxu0 %v7707
        %9304 = vmatprep.subr.bf16.mxu0 %v7716
        %9305 = vmatpush1.bf16.msra.mxu0 %v7715
        %9306 = vmatprep.subr.bf16.mxu0 %v7724
        %9307 = vmatpush1.bf16.msra.mxu0 %v7723
        %9308 = vmatprep.subr.bf16.mxu0 %v7732
        %9309 = vmatpush1.bf16.msra.mxu0 %v7731
        %9310 = vmatprep.subr.bf16.mxu0 %v7740
        %9311 = vmatpush1.bf16.msra.mxu0 %v7739
        %9312 = vmatprep.subr.bf16.mxu0 %v7748
        %9313 = vmatpush1.bf16.msra.mxu0 %v7747
        %9314 = vmatprep.subr.bf16.mxu0 %v7756
        %9315 = vmatpush1.bf16.msra.mxu0 %v7755
        %9316 = vmatprep.subr.bf16.mxu0 %v7764
        %9317 = vmatpush1.bf16.msra.mxu0 %v7763
        %9318 = vmatprep.subr.bf16.mxu0 %v7772
        %9319 = vmatpush1.bf16.msra.mxu0 %v7771
        %9320 = vmatprep.subr.bf16.mxu0 %v7780
        %9321 = vmatpush1.bf16.msra.mxu0 %v7779
        %9322 = vmatprep.subr.bf16.mxu0 %v7788
        %9323 = vmatpush1.bf16.msra.mxu0 %v7787
        %9324 = vmatprep.subr.bf16.mxu0 %v7796
        %9325 = vmatpush1.bf16.msra.mxu0 %v7795
        %9326 = vmatprep.subr.bf16.mxu0 %v7804
        %9327 = vmatpush1.bf16.msra.mxu0 %v7803
        %9328 = vmatprep.mubr.bf16.mxu0 %v3924
        %9329 = vmatmul.mubr.bf16.gmra.mrb[0].mxu0 %v3923
        %v9330 = vpop.f32.mrb[0].mxu0
        %v9331 = vadd.f32 %v9290, %v9330
        %v9332 = vpop.f32.mrb[0].mxu0
        %v9333 = vadd.f32 %v9292, %v9332
        %v9334 = vpop.f32.mrb[0].mxu0
        %v9335 = vpop.f32.mrb[0].mxu0
        %9336 = vdwg.mxu0
        %9337 = vmatprep.subr.bf16.mxu0 %v7812
        %9338 = vmatpush1.bf16.msra.mxu0 %v7811
        %9339 = vmatprep.subr.bf16.mxu0 %v7820
        %9340 = vmatpush1.bf16.msra.mxu0 %v7819
        %9341 = vmatprep.subr.bf16.mxu0 %v7828
        %9342 = vmatpush1.bf16.msra.mxu0 %v7827
        %9343 = vmatprep.subr.bf16.mxu0 %v7836
        %9344 = vmatpush1.bf16.msra.mxu0 %v7835
        %9345 = vmatprep.subr.bf16.mxu0 %v7844
        %9346 = vmatpush1.bf16.msra.mxu0 %v7843
        %9347 = vmatprep.subr.bf16.mxu0 %v7852
        %9348 = vmatpush1.bf16.msra.mxu0 %v7851
        %9349 = vmatprep.subr.bf16.mxu0 %v7860
        %9350 = vmatpush1.bf16.msra.mxu0 %v7859
        %9351 = vmatprep.subr.bf16.mxu0 %v7868
        %9352 = vmatpush1.bf16.msra.mxu0 %v7867
        %9353 = vmatprep.subr.bf16.mxu0 %v7876
        %9354 = vmatpush1.bf16.msra.mxu0 %v7875
        %9355 = vmatprep.subr.bf16.mxu0 %v7884
        %9356 = vmatpush1.bf16.msra.mxu0 %v7883
        %9357 = vmatprep.subr.bf16.mxu0 %v7892
        %9358 = vmatpush1.bf16.msra.mxu0 %v7891
        %9359 = vmatprep.subr.bf16.mxu0 %v7900
        %9360 = vmatpush1.bf16.msra.mxu0 %v7899
        %9361 = vmatprep.subr.bf16.mxu0 %v7908
        %9362 = vmatpush1.bf16.msra.mxu0 %v7907
        %9363 = vmatprep.subr.bf16.mxu0 %v7916
        %9364 = vmatpush1.bf16.msra.mxu0 %v7915
        %9365 = vmatprep.subr.bf16.mxu0 %v7924
        %9366 = vmatpush1.bf16.msra.mxu0 %v7923
        %9367 = vmatprep.subr.bf16.mxu0 %v7932
        %9368 = vmatpush1.bf16.msra.mxu0 %v7931
        %9369 = vmatprep.mubr.bf16.mxu0 %v3926
        %9370 = vmatmul.mubr.bf16.gmra.mrb[0].mxu0 %v3925
        %v9371 = vpop.f32.mrb[0].mxu0
        %v9372 = vadd.f32 %v9331, %v9371
        %v9373 = vpop.f32.mrb[0].mxu0
        %v9374 = vadd.f32 %v9333, %v9373
        %v9375 = vpop.f32.mrb[0].mxu0
        %v9376 = vpop.f32.mrb[0].mxu0
        %9377 = vdwg.mxu0
        %9378 = vmatprep.subr.bf16.mxu0 %v7940
        %9379 = vmatpush1.bf16.msra.mxu0 %v7939
        %9380 = vmatprep.subr.bf16.mxu0 %v7948
        %9381 = vmatpush1.bf16.msra.mxu0 %v7947
        %9382 = vmatprep.subr.bf16.mxu0 %v7956
        %9383 = vmatpush1.bf16.msra.mxu0 %v7955
        %9384 = vmatprep.subr.bf16.mxu0 %v7964
        %9385 = vmatpush1.bf16.msra.mxu0 %v7963
        %9386 = vmatprep.subr.bf16.mxu0 %v7972
        %9387 = vmatpush1.bf16.msra.mxu0 %v7971
        %9388 = vmatprep.subr.bf16.mxu0 %v7980
        %9389 = vmatpush1.bf16.msra.mxu0 %v7979
        %9390 = vmatprep.subr.bf16.mxu0 %v7988
        %9391 = vmatpush1.bf16.msra.mxu0 %v7987
        %9392 = vmatprep.subr.bf16.mxu0 %v7996
        %9393 = vmatpush1.bf16.msra.mxu0 %v7995
        %9394 = vmatprep.subr.bf16.mxu0 %v8004
        %9395 = vmatpush1.bf16.msra.mxu0 %v8003
        %9396 = vmatprep.subr.bf16.mxu0 %v8012
        %9397 = vmatpush1.bf16.msra.mxu0 %v8011
        %9398 = vmatprep.subr.bf16.mxu0 %v8020
        %9399 = vmatpush1.bf16.msra.mxu0 %v8019
        %9400 = vmatprep.subr.bf16.mxu0 %v8028
        %9401 = vmatpush1.bf16.msra.mxu0 %v8027
        %9402 = vmatprep.subr.bf16.mxu0 %v8036
        %9403 = vmatpush1.bf16.msra.mxu0 %v8035
        %9404 = vmatprep.subr.bf16.mxu0 %v8044
        %9405 = vmatpush1.bf16.msra.mxu0 %v8043
        %9406 = vmatprep.subr.bf16.mxu0 %v8052
        %9407 = vmatpush1.bf16.msra.mxu0 %v8051
        %9408 = vmatprep.subr.bf16.mxu0 %v8060
        %9409 = vmatpush1.bf16.msra.mxu0 %v8059
        %9410 = vmatprep.mubr.bf16.mxu0 %v3928
        %9411 = vmatmul.mubr.bf16.gmra.mrb[0].mxu0 %v3927
        %v9412 = vpop.f32.mrb[0].mxu0
        %v9413 = vadd.f32 %v9372, %v9412
        %v9414 = vpop.f32.mrb[0].mxu0
        %v9415 = vadd.f32 %v9374, %v9414
        %v9416 = vpop.f32.mrb[0].mxu0
        %v9417 = vpop.f32.mrb[0].mxu0
        %9418 = vdwg.mxu0
        %9419 = vmatprep.subr.bf16.mxu0 %v7046
        %9420 = vmatpush1.bf16.msra.mxu0 %v7045
        %9421 = vmatprep.subr.bf16.mxu0 %v7054
        %9422 = vmatpush1.bf16.msra.mxu0 %v7053
        %9423 = vmatprep.subr.bf16.mxu0 %v7062
        %9424 = vmatpush1.bf16.msra.mxu0 %v7061
        %9425 = vmatprep.subr.bf16.mxu0 %v7070
        %9426 = vmatpush1.bf16.msra.mxu0 %v7069
        %9427 = vmatprep.subr.bf16.mxu0 %v7078
        %9428 = vmatpush1.bf16.msra.mxu0 %v7077
        %9429 = vmatprep.subr.bf16.mxu0 %v7086
        %9430 = vmatpush1.bf16.msra.mxu0 %v7085
        %9431 = vmatprep.subr.bf16.mxu0 %v7094
        %9432 = vmatpush1.bf16.msra.mxu0 %v7093
        %9433 = vmatprep.subr.bf16.mxu0 %v7102
        %9434 = vmatpush1.bf16.msra.mxu0 %v7101
        %9435 = vmatprep.subr.bf16.mxu0 %v7110
        %9436 = vmatpush1.bf16.msra.mxu0 %v7109
        %9437 = vmatprep.subr.bf16.mxu0 %v7118
        %9438 = vmatpush1.bf16.msra.mxu0 %v7117
        %9439 = vmatprep.subr.bf16.mxu0 %v7126
        %9440 = vmatpush1.bf16.msra.mxu0 %v7125
        %9441 = vmatprep.subr.bf16.mxu0 %v7134
        %9442 = vmatpush1.bf16.msra.mxu0 %v7133
        %9443 = vmatprep.subr.bf16.mxu0 %v7142
        %9444 = vmatpush1.bf16.msra.mxu0 %v7141
        %9445 = vmatprep.subr.bf16.mxu0 %v7150
        %9446 = vmatpush1.bf16.msra.mxu0 %v7149
        %9447 = vmatprep.subr.bf16.mxu0 %v7158
        %9448 = vmatpush1.bf16.msra.mxu0 %v7157
        %9449 = vmatprep.subr.bf16.mxu0 %v7166
        %9450 = vmatpush1.bf16.msra.mxu0 %v7165
        %9451 = vmatprep.mubr.bf16.mxu0 %v3914
        %9452 = vmatmul.mubr.bf16.gmra.mrb[0].mxu0 %v3913
        %v9453 = vpop.f32.mrb[0].mxu0
        %v9454 = vadd.f32 %v3942, %v9453
        %v9455 = vpop.f32.mrb[0].mxu0
        %v9456 = vadd.f32 %v3946, %v9455
        %v9457 = vpop.f32.mrb[0].mxu0
        %v9458 = vpop.f32.mrb[0].mxu0
        %9459 = vdwg.mxu0
        %9460 = vmatprep.subr.bf16.mxu0 %v7174
        %9461 = vmatpush1.bf16.msra.mxu0 %v7173
        %9462 = vmatprep.subr.bf16.mxu0 %v7182
        %9463 = vmatpush1.bf16.msra.mxu0 %v7181
        %9464 = vmatprep.subr.bf16.mxu0 %v7190
        %9465 = vmatpush1.bf16.msra.mxu0 %v7189
        %9466 = vmatprep.subr.bf16.mxu0 %v7198
        %9467 = vmatpush1.bf16.msra.mxu0 %v7197
        %9468 = vmatprep.subr.bf16.mxu0 %v7206
        %9469 = vmatpush1.bf16.msra.mxu0 %v7205
        %9470 = vmatprep.subr.bf16.mxu0 %v7214
        %9471 = vmatpush1.bf16.msra.mxu0 %v7213
        %9472 = vmatprep.subr.bf16.mxu0 %v7222
        %9473 = vmatpush1.bf16.msra.mxu0 %v7221
        %9474 = vmatprep.subr.bf16.mxu0 %v7230
        %9475 = vmatpush1.bf16.msra.mxu0 %v7229
        %9476 = vmatprep.subr.bf16.mxu0 %v7238
        %9477 = vmatpush1.bf16.msra.mxu0 %v7237
        %9478 = vmatprep.subr.bf16.mxu0 %v7246
        %9479 = vmatpush1.bf16.msra.mxu0 %v7245
        %9480 = vmatprep.subr.bf16.mxu0 %v7254
        %9481 = vmatpush1.bf16.msra.mxu0 %v7253
        %9482 = vmatprep.subr.bf16.mxu0 %v7262
        %9483 = vmatpush1.bf16.msra.mxu0 %v7261
        %9484 = vmatprep.subr.bf16.mxu0 %v7270
        %9485 = vmatpush1.bf16.msra.mxu0 %v7269
        %9486 = vmatprep.subr.bf16.mxu0 %v7278
        %9487 = vmatpush1.bf16.msra.mxu0 %v7277
        %9488 = vmatprep.subr.bf16.mxu0 %v7286
        %9489 = vmatpush1.bf16.msra.mxu0 %v7285
        %9490 = vmatprep.subr.bf16.mxu0 %v7294
        %9491 = vmatpush1.bf16.msra.mxu0 %v7293
        %9492 = vmatprep.mubr.bf16.mxu0 %v3916
        %9493 = vmatmul.mubr.bf16.gmra.mrb[0].mxu0 %v3915
        %v9494 = vpop.f32.mrb[0].mxu0
        %v9495 = vadd.f32 %v9454, %v9494
        %v9496 = vpop.f32.mrb[0].mxu0
        %v9497 = vadd.f32 %v9456, %v9496
        %v9498 = vpop.f32.mrb[0].mxu0
        %v9499 = vpop.f32.mrb[0].mxu0
        %9500 = vdwg.mxu0
        %9501 = vmatprep.subr.bf16.mxu0 %v7302
        %9502 = vmatpush1.bf16.msra.mxu0 %v7301
        %9503 = vmatprep.subr.bf16.mxu0 %v7310
        %9504 = vmatpush1.bf16.msra.mxu0 %v7309
        %9505 = vmatprep.subr.bf16.mxu0 %v7318
        %9506 = vmatpush1.bf16.msra.mxu0 %v7317
        %9507 = vmatprep.subr.bf16.mxu0 %v7326
        %9508 = vmatpush1.bf16.msra.mxu0 %v7325
        %9509 = vmatprep.subr.bf16.mxu0 %v7334
        %9510 = vmatpush1.bf16.msra.mxu0 %v7333
        %9511 = vmatprep.subr.bf16.mxu0 %v7342
        %9512 = vmatpush1.bf16.msra.mxu0 %v7341
        %9513 = vmatprep.subr.bf16.mxu0 %v7350
        %9514 = vmatpush1.bf16.msra.mxu0 %v7349
        %9515 = vmatprep.subr.bf16.mxu0 %v7358
        %9516 = vmatpush1.bf16.msra.mxu0 %v7357
        %9517 = vmatprep.subr.bf16.mxu0 %v7366
        %9518 = vmatpush1.bf16.msra.mxu0 %v7365
        %9519 = vmatprep.subr.bf16.mxu0 %v7374
        %9520 = vmatpush1.bf16.msra.mxu0 %v7373
        %9521 = vmatprep.subr.bf16.mxu0 %v7382
        %9522 = vmatpush1.bf16.msra.mxu0 %v7381
        %9523 = vmatprep.subr.bf16.mxu0 %v7390
        %9524 = vmatpush1.bf16.msra.mxu0 %v7389
        %9525 = vmatprep.subr.bf16.mxu0 %v7398
        %9526 = vmatpush1.bf16.msra.mxu0 %v7397
        %9527 = vmatprep.subr.bf16.mxu0 %v7406
        %9528 = vmatpush1.bf16.msra.mxu0 %v7405
        %9529 = vmatprep.subr.bf16.mxu0 %v7414
        %9530 = vmatpush1.bf16.msra.mxu0 %v7413
        %9531 = vmatprep.subr.bf16.mxu0 %v7422
        %9532 = vmatpush1.bf16.msra.mxu0 %v7421
        %9533 = vmatprep.mubr.bf16.mxu0 %v3918
        %9534 = vmatmul.mubr.bf16.gmra.mrb[0].mxu0 %v3917
        %v9535 = vpop.f32.mrb[0].mxu0
        %v9536 = vadd.f32 %v9495, %v9535
        %v9537 = vpop.f32.mrb[0].mxu0
        %v9538 = vadd.f32 %v9497, %v9537
        %v9539 = vpop.f32.mrb[0].mxu0
        %v9540 = vpop.f32.mrb[0].mxu0
        %9541 = vdwg.mxu0
        %9542 = vmatprep.subr.bf16.mxu0 %v7430
        %9543 = vmatpush1.bf16.msra.mxu0 %v7429
        %9544 = vmatprep.subr.bf16.mxu0 %v7438
        %9545 = vmatpush1.bf16.msra.mxu0 %v7437
        %9546 = vmatprep.subr.bf16.mxu0 %v7446
        %9547 = vmatpush1.bf16.msra.mxu0 %v7445
        %9548 = vmatprep.subr.bf16.mxu0 %v7454
        %9549 = vmatpush1.bf16.msra.mxu0 %v7453
        %9550 = vmatprep.subr.bf16.mxu0 %v7462
        %9551 = vmatpush1.bf16.msra.mxu0 %v7461
        %9552 = vmatprep.subr.bf16.mxu0 %v7470
        %9553 = vmatpush1.bf16.msra.mxu0 %v7469
        %9554 = vmatprep.subr.bf16.mxu0 %v7478
        %9555 = vmatpush1.bf16.msra.mxu0 %v7477
        %9556 = vmatprep.subr.bf16.mxu0 %v7486
        %9557 = vmatpush1.bf16.msra.mxu0 %v7485
        %9558 = vmatprep.subr.bf16.mxu0 %v7494
        %9559 = vmatpush1.bf16.msra.mxu0 %v7493
        %9560 = vmatprep.subr.bf16.mxu0 %v7502
        %9561 = vmatpush1.bf16.msra.mxu0 %v7501
        %9562 = vmatprep.subr.bf16.mxu0 %v7510
        %9563 = vmatpush1.bf16.msra.mxu0 %v7509
        %9564 = vmatprep.subr.bf16.mxu0 %v7518
        %9565 = vmatpush1.bf16.msra.mxu0 %v7517
        %9566 = vmatprep.subr.bf16.mxu0 %v7526
        %9567 = vmatpush1.bf16.msra.mxu0 %v7525
        %9568 = vmatprep.subr.bf16.mxu0 %v7534
        %9569 = vmatpush1.bf16.msra.mxu0 %v7533
        %9570 = vmatprep.subr.bf16.mxu0 %v7542
        %9571 = vmatpush1.bf16.msra.mxu0 %v7541
        %9572 = vmatprep.subr.bf16.mxu0 %v7550
        %9573 = vmatpush1.bf16.msra.mxu0 %v7549
        %9574 = vmatprep.mubr.bf16.mxu0 %v3920
        %9575 = vmatmul.mubr.bf16.gmra.mrb[0].mxu0 %v3919
        %v9576 = vpop.f32.mrb[0].mxu0
        %v9577 = vadd.f32 %v9536, %v9576
        %v9578 = vpop.f32.mrb[0].mxu0
        %v9579 = vadd.f32 %v9538, %v9578
        %v9580 = vpop.f32.mrb[0].mxu0
        %v9581 = vpop.f32.mrb[0].mxu0
        %9582 = vdwg.mxu0
        %9583 = vmatprep.subr.bf16.mxu0 %v7558
        %9584 = vmatpush1.bf16.msra.mxu0 %v7557
        %9585 = vmatprep.subr.bf16.mxu0 %v7566
        %9586 = vmatpush1.bf16.msra.mxu0 %v7565
        %9587 = vmatprep.subr.bf16.mxu0 %v7574
        %9588 = vmatpush1.bf16.msra.mxu0 %v7573
        %9589 = vmatprep.subr.bf16.mxu0 %v7582
        %9590 = vmatpush1.bf16.msra.mxu0 %v7581
        %9591 = vmatprep.subr.bf16.mxu0 %v7590
        %9592 = vmatpush1.bf16.msra.mxu0 %v7589
        %9593 = vmatprep.subr.bf16.mxu0 %v7598
        %9594 = vmatpush1.bf16.msra.mxu0 %v7597
        %9595 = vmatprep.subr.bf16.mxu0 %v7606
        %9596 = vmatpush1.bf16.msra.mxu0 %v7605
        %9597 = vmatprep.subr.bf16.mxu0 %v7614
        %9598 = vmatpush1.bf16.msra.mxu0 %v7613
        %9599 = vmatprep.subr.bf16.mxu0 %v7622
        %9600 = vmatpush1.bf16.msra.mxu0 %v7621
        %9601 = vmatprep.subr.bf16.mxu0 %v7630
        %9602 = vmatpush1.bf16.msra.mxu0 %v7629
        %9603 = vmatprep.subr.bf16.mxu0 %v7638
        %9604 = vmatpush1.bf16.msra.mxu0 %v7637
        %9605 = vmatprep.subr.bf16.mxu0 %v7646
        %9606 = vmatpush1.bf16.msra.mxu0 %v7645
        %9607 = vmatprep.subr.bf16.mxu0 %v7654
        %9608 = vmatpush1.bf16.msra.mxu0 %v7653
        %9609 = vmatprep.subr.bf16.mxu0 %v7662
        %9610 = vmatpush1.bf16.msra.mxu0 %v7661
        %9611 = vmatprep.subr.bf16.mxu0 %v7670
        %9612 = vmatpush1.bf16.msra.mxu0 %v7669
        %9613 = vmatprep.subr.bf16.mxu0 %v7678
        %9614 = vmatpush1.bf16.msra.mxu0 %v7677
        %9615 = vmatprep.mubr.bf16.mxu0 %v3922
        %9616 = vmatmul.mubr.bf16.gmra.mrb[0].mxu0 %v3921
        %v9617 = vpop.f32.mrb[0].mxu0
        %v9618 = vadd.f32 %v9577, %v9617
        %v9619 = vpop.f32.mrb[0].mxu0
        %v9620 = vadd.f32 %v9579, %v9619
        %v9621 = vpop.f32.mrb[0].mxu0
        %v9622 = vpop.f32.mrb[0].mxu0
        %9623 = vdwg.mxu0
        %9624 = vmatprep.subr.bf16.mxu0 %v7686
        %9625 = vmatpush1.bf16.msra.mxu0 %v7685
        %9626 = vmatprep.subr.bf16.mxu0 %v7694
        %9627 = vmatpush1.bf16.msra.mxu0 %v7693
        %9628 = vmatprep.subr.bf16.mxu0 %v7702
        %9629 = vmatpush1.bf16.msra.mxu0 %v7701
        %9630 = vmatprep.subr.bf16.mxu0 %v7710
        %9631 = vmatpush1.bf16.msra.mxu0 %v7709
        %9632 = vmatprep.subr.bf16.mxu0 %v7718
        %9633 = vmatpush1.bf16.msra.mxu0 %v7717
        %9634 = vmatprep.subr.bf16.mxu0 %v7726
        %9635 = vmatpush1.bf16.msra.mxu0 %v7725
        %9636 = vmatprep.subr.bf16.mxu0 %v7734
        %9637 = vmatpush1.bf16.msra.mxu0 %v7733
        %9638 = vmatprep.subr.bf16.mxu0 %v7742
        %9639 = vmatpush1.bf16.msra.mxu0 %v7741
        %9640 = vmatprep.subr.bf16.mxu0 %v7750
        %9641 = vmatpush1.bf16.msra.mxu0 %v7749
        %9642 = vmatprep.subr.bf16.mxu0 %v7758
        %9643 = vmatpush1.bf16.msra.mxu0 %v7757
        %9644 = vmatprep.subr.bf16.mxu0 %v7766
        %9645 = vmatpush1.bf16.msra.mxu0 %v7765
        %9646 = vmatprep.subr.bf16.mxu0 %v7774
        %9647 = vmatpush1.bf16.msra.mxu0 %v7773
        %9648 = vmatprep.subr.bf16.mxu0 %v7782
        %9649 = vmatpush1.bf16.msra.mxu0 %v7781
        %9650 = vmatprep.subr.bf16.mxu0 %v7790
        %9651 = vmatpush1.bf16.msra.mxu0 %v7789
        %9652 = vmatprep.subr.bf16.mxu0 %v7798
        %9653 = vmatpush1.bf16.msra.mxu0 %v7797
        %9654 = vmatprep.subr.bf16.mxu0 %v7806
        %9655 = vmatpush1.bf16.msra.mxu0 %v7805
        %9656 = vmatprep.mubr.bf16.mxu0 %v3924
        %9657 = vmatmul.mubr.bf16.gmra.mrb[0].mxu0 %v3923
        %v9658 = vpop.f32.mrb[0].mxu0
        %v9659 = vadd.f32 %v9618, %v9658
        %v9660 = vpop.f32.mrb[0].mxu0
        %v9661 = vadd.f32 %v9620, %v9660
        %v9662 = vpop.f32.mrb[0].mxu0
        %v9663 = vpop.f32.mrb[0].mxu0
        %9664 = vdwg.mxu0
        %9665 = vmatprep.subr.bf16.mxu0 %v7814
        %9666 = vmatpush1.bf16.msra.mxu0 %v7813
        %9667 = vmatprep.subr.bf16.mxu0 %v7822
        %9668 = vmatpush1.bf16.msra.mxu0 %v7821
        %9669 = vmatprep.subr.bf16.mxu0 %v7830
        %9670 = vmatpush1.bf16.msra.mxu0 %v7829
        %9671 = vmatprep.subr.bf16.mxu0 %v7838
        %9672 = vmatpush1.bf16.msra.mxu0 %v7837
        %9673 = vmatprep.subr.bf16.mxu0 %v7846
        %9674 = vmatpush1.bf16.msra.mxu0 %v7845
        %9675 = vmatprep.subr.bf16.mxu0 %v7854
        %9676 = vmatpush1.bf16.msra.mxu0 %v7853
        %9677 = vmatprep.subr.bf16.mxu0 %v7862
        %9678 = vmatpush1.bf16.msra.mxu0 %v7861
        %9679 = vmatprep.subr.bf16.mxu0 %v7870
        %9680 = vmatpush1.bf16.msra.mxu0 %v7869
        %9681 = vmatprep.subr.bf16.mxu0 %v7878
        %9682 = vmatpush1.bf16.msra.mxu0 %v7877
        %9683 = vmatprep.subr.bf16.mxu0 %v7886
        %9684 = vmatpush1.bf16.msra.mxu0 %v7885
        %9685 = vmatprep.subr.bf16.mxu0 %v7894
        %9686 = vmatpush1.bf16.msra.mxu0 %v7893
        %9687 = vmatprep.subr.bf16.mxu0 %v7902
        %9688 = vmatpush1.bf16.msra.mxu0 %v7901
        %9689 = vmatprep.subr.bf16.mxu0 %v7910
        %9690 = vmatpush1.bf16.msra.mxu0 %v7909
        %9691 = vmatprep.subr.bf16.mxu0 %v7918
        %9692 = vmatpush1.bf16.msra.mxu0 %v7917
        %9693 = vmatprep.subr.bf16.mxu0 %v7926
        %9694 = vmatpush1.bf16.msra.mxu0 %v7925
        %9695 = vmatprep.subr.bf16.mxu0 %v7934
        %9696 = vmatpush1.bf16.msra.mxu0 %v7933
        %9697 = vmatprep.mubr.bf16.mxu0 %v3926
        %9698 = vmatmul.mubr.bf16.gmra.mrb[0].mxu0 %v3925
        %v9699 = vpop.f32.mrb[0].mxu0
        %v9700 = vadd.f32 %v9659, %v9699
        %v9701 = vpop.f32.mrb[0].mxu0
        %v9702 = vadd.f32 %v9661, %v9701
        %v9703 = vpop.f32.mrb[0].mxu0
        %v9704 = vpop.f32.mrb[0].mxu0
        %9705 = vdwg.mxu0
        %9706 = vmatprep.subr.bf16.mxu0 %v7942
        %9707 = vmatpush1.bf16.msra.mxu0 %v7941
        %9708 = vmatprep.subr.bf16.mxu0 %v7950
        %9709 = vmatpush1.bf16.msra.mxu0 %v7949
        %9710 = vmatprep.subr.bf16.mxu0 %v7958
        %9711 = vmatpush1.bf16.msra.mxu0 %v7957
        %9712 = vmatprep.subr.bf16.mxu0 %v7966
        %9713 = vmatpush1.bf16.msra.mxu0 %v7965
        %9714 = vmatprep.subr.bf16.mxu0 %v7974
        %9715 = vmatpush1.bf16.msra.mxu0 %v7973
        %9716 = vmatprep.subr.bf16.mxu0 %v7982
        %9717 = vmatpush1.bf16.msra.mxu0 %v7981
        %9718 = vmatprep.subr.bf16.mxu0 %v7990
        %9719 = vmatpush1.bf16.msra.mxu0 %v7989
        %9720 = vmatprep.subr.bf16.mxu0 %v7998
        %9721 = vmatpush1.bf16.msra.mxu0 %v7997
        %9722 = vmatprep.subr.bf16.mxu0 %v8006
        %9723 = vmatpush1.bf16.msra.mxu0 %v8005
        %9724 = vmatprep.subr.bf16.mxu0 %v8014
        %9725 = vmatpush1.bf16.msra.mxu0 %v8013
        %9726 = vmatprep.subr.bf16.mxu0 %v8022
        %9727 = vmatpush1.bf16.msra.mxu0 %v8021
        %9728 = vmatprep.subr.bf16.mxu0 %v8030
        %9729 = vmatpush1.bf16.msra.mxu0 %v8029
        %9730 = vmatprep.subr.bf16.mxu0 %v8038
        %9731 = vmatpush1.bf16.msra.mxu0 %v8037
        %9732 = vmatprep.subr.bf16.mxu0 %v8046
        %9733 = vmatpush1.bf16.msra.mxu0 %v8045
        %9734 = vmatprep.subr.bf16.mxu0 %v8054
        %9735 = vmatpush1.bf16.msra.mxu0 %v8053
        %9736 = vmatprep.subr.bf16.mxu0 %v8062
        %9737 = vmatpush1.bf16.msra.mxu0 %v8061
        %9738 = vmatprep.mubr.bf16.mxu0 %v3928
        %9739 = vmatmul.mubr.bf16.gmra.mrb[0].mxu0 %v3927
        %v9740 = vpop.f32.mrb[0].mxu0
        %v9741 = vadd.f32 %v9700, %v9740
        %v9742 = vpop.f32.mrb[0].mxu0
        %v9743 = vadd.f32 %v9702, %v9742
        %v9744 = vpop.f32.mrb[0].mxu0
        %v9745 = vpop.f32.mrb[0].mxu0
        %9746 = vdwg.mxu0
        %9747 = vmatprep.subr.bf16.mxu0 %v7048
        %9748 = vmatpush1.bf16.msra.mxu0 %v7047
        %9749 = vmatprep.subr.bf16.mxu0 %v7056
        %9750 = vmatpush1.bf16.msra.mxu0 %v7055
        %9751 = vmatprep.subr.bf16.mxu0 %v7064
        %9752 = vmatpush1.bf16.msra.mxu0 %v7063
        %9753 = vmatprep.subr.bf16.mxu0 %v7072
        %9754 = vmatpush1.bf16.msra.mxu0 %v7071
        %9755 = vmatprep.subr.bf16.mxu0 %v7080
        %9756 = vmatpush1.bf16.msra.mxu0 %v7079
        %9757 = vmatprep.subr.bf16.mxu0 %v7088
        %9758 = vmatpush1.bf16.msra.mxu0 %v7087
        %9759 = vmatprep.subr.bf16.mxu0 %v7096
        %9760 = vmatpush1.bf16.msra.mxu0 %v7095
        %9761 = vmatprep.subr.bf16.mxu0 %v7104
        %9762 = vmatpush1.bf16.msra.mxu0 %v7103
        %9763 = vmatprep.subr.bf16.mxu0 %v7112
        %9764 = vmatpush1.bf16.msra.mxu0 %v7111
        %9765 = vmatprep.subr.bf16.mxu0 %v7120
        %9766 = vmatpush1.bf16.msra.mxu0 %v7119
        %9767 = vmatprep.subr.bf16.mxu0 %v7128
        %9768 = vmatpush1.bf16.msra.mxu0 %v7127
        %9769 = vmatprep.subr.bf16.mxu0 %v7136
        %9770 = vmatpush1.bf16.msra.mxu0 %v7135
        %9771 = vmatprep.subr.bf16.mxu0 %v7144
        %9772 = vmatpush1.bf16.msra.mxu0 %v7143
        %9773 = vmatprep.subr.bf16.mxu0 %v7152
        %9774 = vmatpush1.bf16.msra.mxu0 %v7151
        %9775 = vmatprep.subr.bf16.mxu0 %v7160
        %9776 = vmatpush1.bf16.msra.mxu0 %v7159
        %9777 = vmatprep.subr.bf16.mxu0 %v7168
        %9778 = vmatpush1.bf16.msra.mxu0 %v7167
        %9779 = vmatprep.mubr.bf16.mxu0 %v3914
        %9780 = vmatmul.mubr.bf16.gmra.mrb[0].mxu0 %v3913
        %v9781 = vpop.f32.mrb[0].mxu0
        %v9782 = vadd.f32 %v3950, %v9781
        %v9783 = vpop.f32.mrb[0].mxu0
        %v9784 = vadd.f32 %v3954, %v9783
        %v9785 = vpop.f32.mrb[0].mxu0
        %v9786 = vpop.f32.mrb[0].mxu0
        %9787 = vdwg.mxu0
        %9788 = vmatprep.subr.bf16.mxu0 %v7176
        %9789 = vmatpush1.bf16.msra.mxu0 %v7175
        %9790 = vmatprep.subr.bf16.mxu0 %v7184
        %9791 = vmatpush1.bf16.msra.mxu0 %v7183
        %9792 = vmatprep.subr.bf16.mxu0 %v7192
        %9793 = vmatpush1.bf16.msra.mxu0 %v7191
        %9794 = vmatprep.subr.bf16.mxu0 %v7200
        %9795 = vmatpush1.bf16.msra.mxu0 %v7199
        %9796 = vmatprep.subr.bf16.mxu0 %v7208
        %9797 = vmatpush1.bf16.msra.mxu0 %v7207
        %9798 = vmatprep.subr.bf16.mxu0 %v7216
        %9799 = vmatpush1.bf16.msra.mxu0 %v7215
        %9800 = vmatprep.subr.bf16.mxu0 %v7224
        %9801 = vmatpush1.bf16.msra.mxu0 %v7223
        %9802 = vmatprep.subr.bf16.mxu0 %v7232
        %9803 = vmatpush1.bf16.msra.mxu0 %v7231
        %9804 = vmatprep.subr.bf16.mxu0 %v7240
        %9805 = vmatpush1.bf16.msra.mxu0 %v7239
        %9806 = vmatprep.subr.bf16.mxu0 %v7248
        %9807 = vmatpush1.bf16.msra.mxu0 %v7247
        %9808 = vmatprep.subr.bf16.mxu0 %v7256
        %9809 = vmatpush1.bf16.msra.mxu0 %v7255
        %9810 = vmatprep.subr.bf16.mxu0 %v7264
        %9811 = vmatpush1.bf16.msra.mxu0 %v7263
        %9812 = vmatprep.subr.bf16.mxu0 %v7272
        %9813 = vmatpush1.bf16.msra.mxu0 %v7271
        %9814 = vmatprep.subr.bf16.mxu0 %v7280
        %9815 = vmatpush1.bf16.msra.mxu0 %v7279
        %9816 = vmatprep.subr.bf16.mxu0 %v7288
        %9817 = vmatpush1.bf16.msra.mxu0 %v7287
        %9818 = vmatprep.subr.bf16.mxu0 %v7296
        %9819 = vmatpush1.bf16.msra.mxu0 %v7295
        %9820 = vmatprep.mubr.bf16.mxu0 %v3916
        %9821 = vmatmul.mubr.bf16.gmra.mrb[0].mxu0 %v3915
        %v9822 = vpop.f32.mrb[0].mxu0
        %v9823 = vadd.f32 %v9782, %v9822
        %v9824 = vpop.f32.mrb[0].mxu0
        %v9825 = vadd.f32 %v9784, %v9824
        %v9826 = vpop.f32.mrb[0].mxu0
        %v9827 = vpop.f32.mrb[0].mxu0
        %9828 = vdwg.mxu0
        %9829 = vmatprep.subr.bf16.mxu0 %v7304
        %9830 = vmatpush1.bf16.msra.mxu0 %v7303
        %9831 = vmatprep.subr.bf16.mxu0 %v7312
        %9832 = vmatpush1.bf16.msra.mxu0 %v7311
        %9833 = vmatprep.subr.bf16.mxu0 %v7320
        %9834 = vmatpush1.bf16.msra.mxu0 %v7319
        %9835 = vmatprep.subr.bf16.mxu0 %v7328
        %9836 = vmatpush1.bf16.msra.mxu0 %v7327
        %9837 = vmatprep.subr.bf16.mxu0 %v7336
        %9838 = vmatpush1.bf16.msra.mxu0 %v7335
        %9839 = vmatprep.subr.bf16.mxu0 %v7344
        %9840 = vmatpush1.bf16.msra.mxu0 %v7343
        %9841 = vmatprep.subr.bf16.mxu0 %v7352
        %9842 = vmatpush1.bf16.msra.mxu0 %v7351
        %9843 = vmatprep.subr.bf16.mxu0 %v7360
        %9844 = vmatpush1.bf16.msra.mxu0 %v7359
        %9845 = vmatprep.subr.bf16.mxu0 %v7368
        %9846 = vmatpush1.bf16.msra.mxu0 %v7367
        %9847 = vmatprep.subr.bf16.mxu0 %v7376
        %9848 = vmatpush1.bf16.msra.mxu0 %v7375
        %9849 = vmatprep.subr.bf16.mxu0 %v7384
        %9850 = vmatpush1.bf16.msra.mxu0 %v7383
        %9851 = vmatprep.subr.bf16.mxu0 %v7392
        %9852 = vmatpush1.bf16.msra.mxu0 %v7391
        %9853 = vmatprep.subr.bf16.mxu0 %v7400
        %9854 = vmatpush1.bf16.msra.mxu0 %v7399
        %9855 = vmatprep.subr.bf16.mxu0 %v7408
        %9856 = vmatpush1.bf16.msra.mxu0 %v7407
        %9857 = vmatprep.subr.bf16.mxu0 %v7416
        %9858 = vmatpush1.bf16.msra.mxu0 %v7415
        %9859 = vmatprep.subr.bf16.mxu0 %v7424
        %9860 = vmatpush1.bf16.msra.mxu0 %v7423
        %9861 = vmatprep.mubr.bf16.mxu0 %v3918
        %9862 = vmatmul.mubr.bf16.gmra.mrb[0].mxu0 %v3917
        %v9863 = vpop.f32.mrb[0].mxu0
        %v9864 = vadd.f32 %v9823, %v9863
        %v9865 = vpop.f32.mrb[0].mxu0
        %v9866 = vadd.f32 %v9825, %v9865
        %v9867 = vpop.f32.mrb[0].mxu0
        %v9868 = vpop.f32.mrb[0].mxu0
        %9869 = vdwg.mxu0
        %9870 = vmatprep.subr.bf16.mxu0 %v7432
        %9871 = vmatpush1.bf16.msra.mxu0 %v7431
        %9872 = vmatprep.subr.bf16.mxu0 %v7440
        %9873 = vmatpush1.bf16.msra.mxu0 %v7439
        %9874 = vmatprep.subr.bf16.mxu0 %v7448
        %9875 = vmatpush1.bf16.msra.mxu0 %v7447
        %9876 = vmatprep.subr.bf16.mxu0 %v7456
        %9877 = vmatpush1.bf16.msra.mxu0 %v7455
        %9878 = vmatprep.subr.bf16.mxu0 %v7464
        %9879 = vmatpush1.bf16.msra.mxu0 %v7463
        %9880 = vmatprep.subr.bf16.mxu0 %v7472
        %9881 = vmatpush1.bf16.msra.mxu0 %v7471
        %9882 = vmatprep.subr.bf16.mxu0 %v7480
        %9883 = vmatpush1.bf16.msra.mxu0 %v7479
        %9884 = vmatprep.subr.bf16.mxu0 %v7488
        %9885 = vmatpush1.bf16.msra.mxu0 %v7487
        %9886 = vmatprep.subr.bf16.mxu0 %v7496
        %9887 = vmatpush1.bf16.msra.mxu0 %v7495
        %9888 = vmatprep.subr.bf16.mxu0 %v7504
        %9889 = vmatpush1.bf16.msra.mxu0 %v7503
        %9890 = vmatprep.subr.bf16.mxu0 %v7512
        %9891 = vmatpush1.bf16.msra.mxu0 %v7511
        %9892 = vmatprep.subr.bf16.mxu0 %v7520
        %9893 = vmatpush1.bf16.msra.mxu0 %v7519
        %9894 = vmatprep.subr.bf16.mxu0 %v7528
        %9895 = vmatpush1.bf16.msra.mxu0 %v7527
        %9896 = vmatprep.subr.bf16.mxu0 %v7536
        %9897 = vmatpush1.bf16.msra.mxu0 %v7535
        %9898 = vmatprep.subr.bf16.mxu0 %v7544
        %9899 = vmatpush1.bf16.msra.mxu0 %v7543
        %9900 = vmatprep.subr.bf16.mxu0 %v7552
        %9901 = vmatpush1.bf16.msra.mxu0 %v7551
        %9902 = vmatprep.mubr.bf16.mxu0 %v3920
        %9903 = vmatmul.mubr.bf16.gmra.mrb[0].mxu0 %v3919
        %v9904 = vpop.f32.mrb[0].mxu0
        %v9905 = vadd.f32 %v9864, %v9904
        %v9906 = vpop.f32.mrb[0].mxu0
        %v9907 = vadd.f32 %v9866, %v9906
        %v9908 = vpop.f32.mrb[0].mxu0
        %v9909 = vpop.f32.mrb[0].mxu0
        %9910 = vdwg.mxu0
        %9911 = vmatprep.subr.bf16.mxu0 %v7560
        %9912 = vmatpush1.bf16.msra.mxu0 %v7559
        %9913 = vmatprep.subr.bf16.mxu0 %v7568
        %9914 = vmatpush1.bf16.msra.mxu0 %v7567
        %9915 = vmatprep.subr.bf16.mxu0 %v7576
        %9916 = vmatpush1.bf16.msra.mxu0 %v7575
        %9917 = vmatprep.subr.bf16.mxu0 %v7584
        %9918 = vmatpush1.bf16.msra.mxu0 %v7583
        %9919 = vmatprep.subr.bf16.mxu0 %v7592
        %9920 = vmatpush1.bf16.msra.mxu0 %v7591
        %9921 = vmatprep.subr.bf16.mxu0 %v7600
        %9922 = vmatpush1.bf16.msra.mxu0 %v7599
        %9923 = vmatprep.subr.bf16.mxu0 %v7608
        %9924 = vmatpush1.bf16.msra.mxu0 %v7607
        %9925 = vmatprep.subr.bf16.mxu0 %v7616
        %9926 = vmatpush1.bf16.msra.mxu0 %v7615
        %9927 = vmatprep.subr.bf16.mxu0 %v7624
        %9928 = vmatpush1.bf16.msra.mxu0 %v7623
        %9929 = vmatprep.subr.bf16.mxu0 %v7632
        %9930 = vmatpush1.bf16.msra.mxu0 %v7631
        %9931 = vmatprep.subr.bf16.mxu0 %v7640
        %9932 = vmatpush1.bf16.msra.mxu0 %v7639
        %9933 = vmatprep.subr.bf16.mxu0 %v7648
        %9934 = vmatpush1.bf16.msra.mxu0 %v7647
        %9935 = vmatprep.subr.bf16.mxu0 %v7656
        %9936 = vmatpush1.bf16.msra.mxu0 %v7655
        %9937 = vmatprep.subr.bf16.mxu0 %v7664
        %9938 = vmatpush1.bf16.msra.mxu0 %v7663
        %9939 = vmatprep.subr.bf16.mxu0 %v7672
        %9940 = vmatpush1.bf16.msra.mxu0 %v7671
        %9941 = vmatprep.subr.bf16.mxu0 %v7680
        %9942 = vmatpush1.bf16.msra.mxu0 %v7679
        %9943 = vmatprep.mubr.bf16.mxu0 %v3922
        %9944 = vmatmul.mubr.bf16.gmra.mrb[0].mxu0 %v3921
        %v9945 = vpop.f32.mrb[0].mxu0
        %v9946 = vadd.f32 %v9905, %v9945
        %v9947 = vpop.f32.mrb[0].mxu0
        %v9948 = vadd.f32 %v9907, %v9947
        %v9949 = vpop.f32.mrb[0].mxu0
        %v9950 = vpop.f32.mrb[0].mxu0
        %9951 = vdwg.mxu0
        %9952 = vmatprep.subr.bf16.mxu0 %v7688
        %9953 = vmatpush1.bf16.msra.mxu0 %v7687
        %9954 = vmatprep.subr.bf16.mxu0 %v7696
        %9955 = vmatpush1.bf16.msra.mxu0 %v7695
        %9956 = vmatprep.subr.bf16.mxu0 %v7704
        %9957 = vmatpush1.bf16.msra.mxu0 %v7703
        %9958 = vmatprep.subr.bf16.mxu0 %v7712
        %9959 = vmatpush1.bf16.msra.mxu0 %v7711
        %9960 = vmatprep.subr.bf16.mxu0 %v7720
        %9961 = vmatpush1.bf16.msra.mxu0 %v7719
        %9962 = vmatprep.subr.bf16.mxu0 %v7728
        %9963 = vmatpush1.bf16.msra.mxu0 %v7727
        %9964 = vmatprep.subr.bf16.mxu0 %v7736
        %9965 = vmatpush1.bf16.msra.mxu0 %v7735
        %9966 = vmatprep.subr.bf16.mxu0 %v7744
        %9967 = vmatpush1.bf16.msra.mxu0 %v7743
        %9968 = vmatprep.subr.bf16.mxu0 %v7752
        %9969 = vmatpush1.bf16.msra.mxu0 %v7751
        %9970 = vmatprep.subr.bf16.mxu0 %v7760
        %9971 = vmatpush1.bf16.msra.mxu0 %v7759
        %9972 = vmatprep.subr.bf16.mxu0 %v7768
        %9973 = vmatpush1.bf16.msra.mxu0 %v7767
        %9974 = vmatprep.subr.bf16.mxu0 %v7776
        %9975 = vmatpush1.bf16.msra.mxu0 %v7775
        %9976 = vmatprep.subr.bf16.mxu0 %v7784
        %9977 = vmatpush1.bf16.msra.mxu0 %v7783
        %9978 = vmatprep.subr.bf16.mxu0 %v7792
        %9979 = vmatpush1.bf16.msra.mxu0 %v7791
        %9980 = vmatprep.subr.bf16.mxu0 %v7800
        %9981 = vmatpush1.bf16.msra.mxu0 %v7799
        %9982 = vmatprep.subr.bf16.mxu0 %v7808
        %9983 = vmatpush1.bf16.msra.mxu0 %v7807
        %9984 = vmatprep.mubr.bf16.mxu0 %v3924
        %9985 = vmatmul.mubr.bf16.gmra.mrb[0].mxu0 %v3923
        %v9986 = vpop.f32.mrb[0].mxu0
        %v9987 = vadd.f32 %v9946, %v9986
        %v9988 = vpop.f32.mrb[0].mxu0
        %v9989 = vadd.f32 %v9948, %v9988
        %v9990 = vpop.f32.mrb[0].mxu0
        %v9991 = vpop.f32.mrb[0].mxu0
        %9992 = vdwg.mxu0
        %9993 = vmatprep.subr.bf16.mxu0 %v7816
        %9994 = vmatpush1.bf16.msra.mxu0 %v7815
        %9995 = vmatprep.subr.bf16.mxu0 %v7824
        %9996 = vmatpush1.bf16.msra.mxu0 %v7823
        %9997 = vmatprep.subr.bf16.mxu0 %v7832
        %9998 = vmatpush1.bf16.msra.mxu0 %v7831
        %9999 = vmatprep.subr.bf16.mxu0 %v7840
        %10000 = vmatpush1.bf16.msra.mxu0 %v7839
        %10001 = vmatprep.subr.bf16.mxu0 %v7848
        %10002 = vmatpush1.bf16.msra.mxu0 %v7847
        %10003 = vmatprep.subr.bf16.mxu0 %v7856
        %10004 = vmatpush1.bf16.msra.mxu0 %v7855
        %10005 = vmatprep.subr.bf16.mxu0 %v7864
        %10006 = vmatpush1.bf16.msra.mxu0 %v7863
        %10007 = vmatprep.subr.bf16.mxu0 %v7872
        %10008 = vmatpush1.bf16.msra.mxu0 %v7871
        %10009 = vmatprep.subr.bf16.mxu0 %v7880
        %10010 = vmatpush1.bf16.msra.mxu0 %v7879
        %10011 = vmatprep.subr.bf16.mxu0 %v7888
        %10012 = vmatpush1.bf16.msra.mxu0 %v7887
        %10013 = vmatprep.subr.bf16.mxu0 %v7896
        %10014 = vmatpush1.bf16.msra.mxu0 %v7895
        %10015 = vmatprep.subr.bf16.mxu0 %v7904
        %10016 = vmatpush1.bf16.msra.mxu0 %v7903
        %10017 = vmatprep.subr.bf16.mxu0 %v7912
        %10018 = vmatpush1.bf16.msra.mxu0 %v7911
        %10019 = vmatprep.subr.bf16.mxu0 %v7920
        %10020 = vmatpush1.bf16.msra.mxu0 %v7919
        %10021 = vmatprep.subr.bf16.mxu0 %v7928
        %10022 = vmatpush1.bf16.msra.mxu0 %v7927
        %10023 = vmatprep.subr.bf16.mxu0 %v7936
        %10024 = vmatpush1.bf16.msra.mxu0 %v7935
        %10025 = vmatprep.mubr.bf16.mxu0 %v3926
        %10026 = vmatmul.mubr.bf16.gmra.mrb[0].mxu0 %v3925
        %v10027 = vpop.f32.mrb[0].mxu0
        %v10028 = vadd.f32 %v9987, %v10027
        %v10029 = vpop.f32.mrb[0].mxu0
        %v10030 = vadd.f32 %v9989, %v10029
        %v10031 = vpop.f32.mrb[0].mxu0
        %v10032 = vpop.f32.mrb[0].mxu0
        %10033 = vdwg.mxu0
        %10034 = vmatprep.subr.bf16.mxu0 %v7944
        %10035 = vmatpush1.bf16.msra.mxu0 %v7943
        %10036 = vmatprep.subr.bf16.mxu0 %v7952
        %10037 = vmatpush1.bf16.msra.mxu0 %v7951
        %10038 = vmatprep.subr.bf16.mxu0 %v7960
        %10039 = vmatpush1.bf16.msra.mxu0 %v7959
        %10040 = vmatprep.subr.bf16.mxu0 %v7968
        %10041 = vmatpush1.bf16.msra.mxu0 %v7967
        %10042 = vmatprep.subr.bf16.mxu0 %v7976
        %10043 = vmatpush1.bf16.msra.mxu0 %v7975
        %10044 = vmatprep.subr.bf16.mxu0 %v7984
        %10045 = vmatpush1.bf16.msra.mxu0 %v7983
        %10046 = vmatprep.subr.bf16.mxu0 %v7992
        %10047 = vmatpush1.bf16.msra.mxu0 %v7991
        %10048 = vmatprep.subr.bf16.mxu0 %v8000
        %10049 = vmatpush1.bf16.msra.mxu0 %v7999
        %10050 = vmatprep.subr.bf16.mxu0 %v8008
        %10051 = vmatpush1.bf16.msra.mxu0 %v8007
        %10052 = vmatprep.subr.bf16.mxu0 %v8016
        %10053 = vmatpush1.bf16.msra.mxu0 %v8015
        %10054 = vmatprep.subr.bf16.mxu0 %v8024
        %10055 = vmatpush1.bf16.msra.mxu0 %v8023
        %10056 = vmatprep.subr.bf16.mxu0 %v8032
        %10057 = vmatpush1.bf16.msra.mxu0 %v8031
        %10058 = vmatprep.subr.bf16.mxu0 %v8040
        %10059 = vmatpush1.bf16.msra.mxu0 %v8039
        %10060 = vmatprep.subr.bf16.mxu0 %v8048
        %10061 = vmatpush1.bf16.msra.mxu0 %v8047
        %10062 = vmatprep.subr.bf16.mxu0 %v8056
        %10063 = vmatpush1.bf16.msra.mxu0 %v8055
        %10064 = vmatprep.subr.bf16.mxu0 %v8064
        %10065 = vmatpush1.bf16.msra.mxu0 %v8063
        %10066 = vmatprep.mubr.bf16.mxu0 %v3928
        %10067 = vmatmul.mubr.bf16.gmra.mrb[0].mxu0 %v3927
        %v10068 = vpop.f32.mrb[0].mxu0
        %v10069 = vadd.f32 %v10028, %v10068
        %v10070 = vpop.f32.mrb[0].mxu0
        %v10071 = vadd.f32 %v10030, %v10070
        %v10072 = vpop.f32.mrb[0].mxu0
        %v10073 = vpop.f32.mrb[0].mxu0
        %10074 = vdwg.mxu0
        %10075 = vmatprep.subr.bf16.mxu0 %v7050
        %10076 = vmatpush1.bf16.msra.mxu0 %v7049
        %10077 = vmatprep.subr.bf16.mxu0 %v7058
        %10078 = vmatpush1.bf16.msra.mxu0 %v7057
        %10079 = vmatprep.subr.bf16.mxu0 %v7066
        %10080 = vmatpush1.bf16.msra.mxu0 %v7065
        %10081 = vmatprep.subr.bf16.mxu0 %v7074
        %10082 = vmatpush1.bf16.msra.mxu0 %v7073
        %10083 = vmatprep.subr.bf16.mxu0 %v7082
        %10084 = vmatpush1.bf16.msra.mxu0 %v7081
        %10085 = vmatprep.subr.bf16.mxu0 %v7090
        %10086 = vmatpush1.bf16.msra.mxu0 %v7089
        %10087 = vmatprep.subr.bf16.mxu0 %v7098
        %10088 = vmatpush1.bf16.msra.mxu0 %v7097
        %10089 = vmatprep.subr.bf16.mxu0 %v7106
        %10090 = vmatpush1.bf16.msra.mxu0 %v7105
        %10091 = vmatprep.subr.bf16.mxu0 %v7114
        %10092 = vmatpush1.bf16.msra.mxu0 %v7113
        %10093 = vmatprep.subr.bf16.mxu0 %v7122
        %10094 = vmatpush1.bf16.msra.mxu0 %v7121
        %10095 = vmatprep.subr.bf16.mxu0 %v7130
        %10096 = vmatpush1.bf16.msra.mxu0 %v7129
        %10097 = vmatprep.subr.bf16.mxu0 %v7138
        %10098 = vmatpush1.bf16.msra.mxu0 %v7137
        %10099 = vmatprep.subr.bf16.mxu0 %v7146
        %10100 = vmatpush1.bf16.msra.mxu0 %v7145
        %10101 = vmatprep.subr.bf16.mxu0 %v7154
        %10102 = vmatpush1.bf16.msra.mxu0 %v7153
        %10103 = vmatprep.subr.bf16.mxu0 %v7162
        %10104 = vmatpush1.bf16.msra.mxu0 %v7161
        %10105 = vmatprep.subr.bf16.mxu0 %v7170
        %10106 = vmatpush1.bf16.msra.mxu0 %v7169
        %10107 = vmatprep.mubr.bf16.mxu0 %v3914
        %10108 = vmatmul.mubr.bf16.gmra.mrb[0].mxu0 %v3913
        %v10109 = vpop.f32.mrb[0].mxu0
        %v10110 = vadd.f32 %v3958, %v10109
        %v10111 = vpop.f32.mrb[0].mxu0
        %v10112 = vadd.f32 %v3962, %v10111
        %v10113 = vpop.f32.mrb[0].mxu0
        %v10114 = vpop.f32.mrb[0].mxu0
        %10115 = vdwg.mxu0
        %10116 = vmatprep.subr.bf16.mxu0 %v7178
        %10117 = vmatpush1.bf16.msra.mxu0 %v7177
        %10118 = vmatprep.subr.bf16.mxu0 %v7186
        %10119 = vmatpush1.bf16.msra.mxu0 %v7185
        %10120 = vmatprep.subr.bf16.mxu0 %v7194
        %10121 = vmatpush1.bf16.msra.mxu0 %v7193
        %10122 = vmatprep.subr.bf16.mxu0 %v7202
        %10123 = vmatpush1.bf16.msra.mxu0 %v7201
        %10124 = vmatprep.subr.bf16.mxu0 %v7210
        %10125 = vmatpush1.bf16.msra.mxu0 %v7209
        %10126 = vmatprep.subr.bf16.mxu0 %v7218
        %10127 = vmatpush1.bf16.msra.mxu0 %v7217
        %10128 = vmatprep.subr.bf16.mxu0 %v7226
        %10129 = vmatpush1.bf16.msra.mxu0 %v7225
        %10130 = vmatprep.subr.bf16.mxu0 %v7234
        %10131 = vmatpush1.bf16.msra.mxu0 %v7233
        %10132 = vmatprep.subr.bf16.mxu0 %v7242
        %10133 = vmatpush1.bf16.msra.mxu0 %v7241
        %10134 = vmatprep.subr.bf16.mxu0 %v7250
        %10135 = vmatpush1.bf16.msra.mxu0 %v7249
        %10136 = vmatprep.subr.bf16.mxu0 %v7258
        %10137 = vmatpush1.bf16.msra.mxu0 %v7257
        %10138 = vmatprep.subr.bf16.mxu0 %v7266
        %10139 = vmatpush1.bf16.msra.mxu0 %v7265
        %10140 = vmatprep.subr.bf16.mxu0 %v7274
        %10141 = vmatpush1.bf16.msra.mxu0 %v7273
        %10142 = vmatprep.subr.bf16.mxu0 %v7282
        %10143 = vmatpush1.bf16.msra.mxu0 %v7281
        %10144 = vmatprep.subr.bf16.mxu0 %v7290
        %10145 = vmatpush1.bf16.msra.mxu0 %v7289
        %10146 = vmatprep.subr.bf16.mxu0 %v7298
        %10147 = vmatpush1.bf16.msra.mxu0 %v7297
        %10148 = vmatprep.mubr.bf16.mxu0 %v3916
        %10149 = vmatmul.mubr.bf16.gmra.mrb[0].mxu0 %v3915
        %v10150 = vpop.f32.mrb[0].mxu0
        %v10151 = vadd.f32 %v10110, %v10150
        %v10152 = vpop.f32.mrb[0].mxu0
        %v10153 = vadd.f32 %v10112, %v10152
        %v10154 = vpop.f32.mrb[0].mxu0
        %v10155 = vpop.f32.mrb[0].mxu0
        %10156 = vdwg.mxu0
        %10157 = vmatprep.subr.bf16.mxu0 %v7306
        %10158 = vmatpush1.bf16.msra.mxu0 %v7305
        %10159 = vmatprep.subr.bf16.mxu0 %v7314
        %10160 = vmatpush1.bf16.msra.mxu0 %v7313
        %10161 = vmatprep.subr.bf16.mxu0 %v7322
        %10162 = vmatpush1.bf16.msra.mxu0 %v7321
        %10163 = vmatprep.subr.bf16.mxu0 %v7330
        %10164 = vmatpush1.bf16.msra.mxu0 %v7329
        %10165 = vmatprep.subr.bf16.mxu0 %v7338
        %10166 = vmatpush1.bf16.msra.mxu0 %v7337
        %10167 = vmatprep.subr.bf16.mxu0 %v7346
        %10168 = vmatpush1.bf16.msra.mxu0 %v7345
        %10169 = vmatprep.subr.bf16.mxu0 %v7354
        %10170 = vmatpush1.bf16.msra.mxu0 %v7353
        %10171 = vmatprep.subr.bf16.mxu0 %v7362
        %10172 = vmatpush1.bf16.msra.mxu0 %v7361
        %10173 = vmatprep.subr.bf16.mxu0 %v7370
        %10174 = vmatpush1.bf16.msra.mxu0 %v7369
        %10175 = vmatprep.subr.bf16.mxu0 %v7378
        %10176 = vmatpush1.bf16.msra.mxu0 %v7377
        %10177 = vmatprep.subr.bf16.mxu0 %v7386
        %10178 = vmatpush1.bf16.msra.mxu0 %v7385
        %10179 = vmatprep.subr.bf16.mxu0 %v7394
        %10180 = vmatpush1.bf16.msra.mxu0 %v7393
        %10181 = vmatprep.subr.bf16.mxu0 %v7402
        %10182 = vmatpush1.bf16.msra.mxu0 %v7401
        %10183 = vmatprep.subr.bf16.mxu0 %v7410
        %10184 = vmatpush1.bf16.msra.mxu0 %v7409
        %10185 = vmatprep.subr.bf16.mxu0 %v7418
        %10186 = vmatpush1.bf16.msra.mxu0 %v7417
        %10187 = vmatprep.subr.bf16.mxu0 %v7426
        %10188 = vmatpush1.bf16.msra.mxu0 %v7425
        %10189 = vmatprep.mubr.bf16.mxu0 %v3918
        %10190 = vmatmul.mubr.bf16.gmra.mrb[0].mxu0 %v3917
        %v10191 = vpop.f32.mrb[0].mxu0
        %v10192 = vadd.f32 %v10151, %v10191
        %v10193 = vpop.f32.mrb[0].mxu0
        %v10194 = vadd.f32 %v10153, %v10193
        %v10195 = vpop.f32.mrb[0].mxu0
        %v10196 = vpop.f32.mrb[0].mxu0
        %10197 = vdwg.mxu0
        %10198 = vmatprep.subr.bf16.mxu0 %v7434
        %10199 = vmatpush1.bf16.msra.mxu0 %v7433
        %10200 = vmatprep.subr.bf16.mxu0 %v7442
        %10201 = vmatpush1.bf16.msra.mxu0 %v7441
        %10202 = vmatprep.subr.bf16.mxu0 %v7450
        %10203 = vmatpush1.bf16.msra.mxu0 %v7449
        %10204 = vmatprep.subr.bf16.mxu0 %v7458
        %10205 = vmatpush1.bf16.msra.mxu0 %v7457
        %10206 = vmatprep.subr.bf16.mxu0 %v7466
        %10207 = vmatpush1.bf16.msra.mxu0 %v7465
        %10208 = vmatprep.subr.bf16.mxu0 %v7474
        %10209 = vmatpush1.bf16.msra.mxu0 %v7473
        %10210 = vmatprep.subr.bf16.mxu0 %v7482
        %10211 = vmatpush1.bf16.msra.mxu0 %v7481
        %10212 = vmatprep.subr.bf16.mxu0 %v7490
        %10213 = vmatpush1.bf16.msra.mxu0 %v7489
        %10214 = vmatprep.subr.bf16.mxu0 %v7498
        %10215 = vmatpush1.bf16.msra.mxu0 %v7497
        %10216 = vmatprep.subr.bf16.mxu0 %v7506
        %10217 = vmatpush1.bf16.msra.mxu0 %v7505
        %10218 = vmatprep.subr.bf16.mxu0 %v7514
        %10219 = vmatpush1.bf16.msra.mxu0 %v7513
        %10220 = vmatprep.subr.bf16.mxu0 %v7522
        %10221 = vmatpush1.bf16.msra.mxu0 %v7521
        %10222 = vmatprep.subr.bf16.mxu0 %v7530
        %10223 = vmatpush1.bf16.msra.mxu0 %v7529
        %10224 = vmatprep.subr.bf16.mxu0 %v7538
        %10225 = vmatpush1.bf16.msra.mxu0 %v7537
        %10226 = vmatprep.subr.bf16.mxu0 %v7546
        %10227 = vmatpush1.bf16.msra.mxu0 %v7545
        %10228 = vmatprep.subr.bf16.mxu0 %v7554
        %10229 = vmatpush1.bf16.msra.mxu0 %v7553
        %10230 = vmatprep.mubr.bf16.mxu0 %v3920
        %10231 = vmatmul.mubr.bf16.gmra.mrb[0].mxu0 %v3919
        %v10232 = vpop.f32.mrb[0].mxu0
        %v10233 = vadd.f32 %v10192, %v10232
        %v10234 = vpop.f32.mrb[0].mxu0
        %v10235 = vadd.f32 %v10194, %v10234
        %v10236 = vpop.f32.mrb[0].mxu0
        %v10237 = vpop.f32.mrb[0].mxu0
        %10238 = vdwg.mxu0
        %10239 = vmatprep.subr.bf16.mxu0 %v7562
        %10240 = vmatpush1.bf16.msra.mxu0 %v7561
        %10241 = vmatprep.subr.bf16.mxu0 %v7570
        %10242 = vmatpush1.bf16.msra.mxu0 %v7569
        %10243 = vmatprep.subr.bf16.mxu0 %v7578
        %10244 = vmatpush1.bf16.msra.mxu0 %v7577
        %10245 = vmatprep.subr.bf16.mxu0 %v7586
        %10246 = vmatpush1.bf16.msra.mxu0 %v7585
        %10247 = vmatprep.subr.bf16.mxu0 %v7594
        %10248 = vmatpush1.bf16.msra.mxu0 %v7593
        %10249 = vmatprep.subr.bf16.mxu0 %v7602
        %10250 = vmatpush1.bf16.msra.mxu0 %v7601
        %10251 = vmatprep.subr.bf16.mxu0 %v7610
        %10252 = vmatpush1.bf16.msra.mxu0 %v7609
        %10253 = vmatprep.subr.bf16.mxu0 %v7618
        %10254 = vmatpush1.bf16.msra.mxu0 %v7617
        %10255 = vmatprep.subr.bf16.mxu0 %v7626
        %10256 = vmatpush1.bf16.msra.mxu0 %v7625
        %10257 = vmatprep.subr.bf16.mxu0 %v7634
        %10258 = vmatpush1.bf16.msra.mxu0 %v7633
        %10259 = vmatprep.subr.bf16.mxu0 %v7642
        %10260 = vmatpush1.bf16.msra.mxu0 %v7641
        %10261 = vmatprep.subr.bf16.mxu0 %v7650
        %10262 = vmatpush1.bf16.msra.mxu0 %v7649
        %10263 = vmatprep.subr.bf16.mxu0 %v7658
        %10264 = vmatpush1.bf16.msra.mxu0 %v7657
        %10265 = vmatprep.subr.bf16.mxu0 %v7666
        %10266 = vmatpush1.bf16.msra.mxu0 %v7665
        %10267 = vmatprep.subr.bf16.mxu0 %v7674
        %10268 = vmatpush1.bf16.msra.mxu0 %v7673
        %10269 = vmatprep.subr.bf16.mxu0 %v7682
        %10270 = vmatpush1.bf16.msra.mxu0 %v7681
        %10271 = vmatprep.mubr.bf16.mxu0 %v3922
        %10272 = vmatmul.mubr.bf16.gmra.mrb[0].mxu0 %v3921
        %v10273 = vpop.f32.mrb[0].mxu0
        %v10274 = vadd.f32 %v10233, %v10273
        %v10275 = vpop.f32.mrb[0].mxu0
        %v10276 = vadd.f32 %v10235, %v10275
        %v10277 = vpop.f32.mrb[0].mxu0
        %v10278 = vpop.f32.mrb[0].mxu0
        %10279 = vdwg.mxu0
        %10280 = vmatprep.subr.bf16.mxu0 %v7690
        %10281 = vmatpush1.bf16.msra.mxu0 %v7689
        %10282 = vmatprep.subr.bf16.mxu0 %v7698
        %10283 = vmatpush1.bf16.msra.mxu0 %v7697
        %10284 = vmatprep.subr.bf16.mxu0 %v7706
        %10285 = vmatpush1.bf16.msra.mxu0 %v7705
        %10286 = vmatprep.subr.bf16.mxu0 %v7714
        %10287 = vmatpush1.bf16.msra.mxu0 %v7713
        %10288 = vmatprep.subr.bf16.mxu0 %v7722
        %10289 = vmatpush1.bf16.msra.mxu0 %v7721
        %10290 = vmatprep.subr.bf16.mxu0 %v7730
        %10291 = vmatpush1.bf16.msra.mxu0 %v7729
        %10292 = vmatprep.subr.bf16.mxu0 %v7738
        %10293 = vmatpush1.bf16.msra.mxu0 %v7737
        %10294 = vmatprep.subr.bf16.mxu0 %v7746
        %10295 = vmatpush1.bf16.msra.mxu0 %v7745
        %10296 = vmatprep.subr.bf16.mxu0 %v7754
        %10297 = vmatpush1.bf16.msra.mxu0 %v7753
        %10298 = vmatprep.subr.bf16.mxu0 %v7762
        %10299 = vmatpush1.bf16.msra.mxu0 %v7761
        %10300 = vmatprep.subr.bf16.mxu0 %v7770
        %10301 = vmatpush1.bf16.msra.mxu0 %v7769
        %10302 = vmatprep.subr.bf16.mxu0 %v7778
        %10303 = vmatpush1.bf16.msra.mxu0 %v7777
        %10304 = vmatprep.subr.bf16.mxu0 %v7786
        %10305 = vmatpush1.bf16.msra.mxu0 %v7785
        %10306 = vmatprep.subr.bf16.mxu0 %v7794
        %10307 = vmatpush1.bf16.msra.mxu0 %v7793
        %10308 = vmatprep.subr.bf16.mxu0 %v7802
        %10309 = vmatpush1.bf16.msra.mxu0 %v7801
        %10310 = vmatprep.subr.bf16.mxu0 %v7810
        %10311 = vmatpush1.bf16.msra.mxu0 %v7809
        %10312 = vmatprep.mubr.bf16.mxu0 %v3924
        %10313 = vmatmul.mubr.bf16.gmra.mrb[0].mxu0 %v3923
        %v10314 = vpop.f32.mrb[0].mxu0
        %v10315 = vadd.f32 %v10274, %v10314
        %v10316 = vpop.f32.mrb[0].mxu0
        %v10317 = vadd.f32 %v10276, %v10316
        %v10318 = vpop.f32.mrb[0].mxu0
        %v10319 = vpop.f32.mrb[0].mxu0
        %10320 = vdwg.mxu0
        %10321 = vmatprep.subr.bf16.mxu0 %v7818
        %10322 = vmatpush1.bf16.msra.mxu0 %v7817
        %10323 = vmatprep.subr.bf16.mxu0 %v7826
        %10324 = vmatpush1.bf16.msra.mxu0 %v7825
        %10325 = vmatprep.subr.bf16.mxu0 %v7834
        %10326 = vmatpush1.bf16.msra.mxu0 %v7833
        %10327 = vmatprep.subr.bf16.mxu0 %v7842
        %10328 = vmatpush1.bf16.msra.mxu0 %v7841
        %10329 = vmatprep.subr.bf16.mxu0 %v7850
        %10330 = vmatpush1.bf16.msra.mxu0 %v7849
        %10331 = vmatprep.subr.bf16.mxu0 %v7858
        %10332 = vmatpush1.bf16.msra.mxu0 %v7857
        %10333 = vmatprep.subr.bf16.mxu0 %v7866
        %10334 = vmatpush1.bf16.msra.mxu0 %v7865
        %10335 = vmatprep.subr.bf16.mxu0 %v7874
        %10336 = vmatpush1.bf16.msra.mxu0 %v7873
        %10337 = vmatprep.subr.bf16.mxu0 %v7882
        %10338 = vmatpush1.bf16.msra.mxu0 %v7881
        %10339 = vmatprep.subr.bf16.mxu0 %v7890
        %10340 = vmatpush1.bf16.msra.mxu0 %v7889
        %10341 = vmatprep.subr.bf16.mxu0 %v7898
        %10342 = vmatpush1.bf16.msra.mxu0 %v7897
        %10343 = vmatprep.subr.bf16.mxu0 %v7906
        %10344 = vmatpush1.bf16.msra.mxu0 %v7905
        %10345 = vmatprep.subr.bf16.mxu0 %v7914
        %10346 = vmatpush1.bf16.msra.mxu0 %v7913
        %10347 = vmatprep.subr.bf16.mxu0 %v7922
        %10348 = vmatpush1.bf16.msra.mxu0 %v7921
        %10349 = vmatprep.subr.bf16.mxu0 %v7930
        %10350 = vmatpush1.bf16.msra.mxu0 %v7929
        %10351 = vmatprep.subr.bf16.mxu0 %v7938
        %10352 = vmatpush1.bf16.msra.mxu0 %v7937
        %10353 = vmatprep.mubr.bf16.mxu0 %v3926
        %10354 = vmatmul.mubr.bf16.gmra.mrb[0].mxu0 %v3925
        %v10355 = vpop.f32.mrb[0].mxu0
        %v10356 = vadd.f32 %v10315, %v10355
        %v10357 = vpop.f32.mrb[0].mxu0
        %v10358 = vadd.f32 %v10317, %v10357
        %v10359 = vpop.f32.mrb[0].mxu0
        %v10360 = vpop.f32.mrb[0].mxu0
        %10361 = vdwg.mxu0
        %10362 = vmatprep.subr.bf16.mxu0 %v7946
        %10363 = vmatpush1.bf16.msra.mxu0 %v7945
        %10364 = vmatprep.subr.bf16.mxu0 %v7954
        %10365 = vmatpush1.bf16.msra.mxu0 %v7953
        %10366 = vmatprep.subr.bf16.mxu0 %v7962
        %10367 = vmatpush1.bf16.msra.mxu0 %v7961
        %10368 = vmatprep.subr.bf16.mxu0 %v7970
        %10369 = vmatpush1.bf16.msra.mxu0 %v7969
        %10370 = vmatprep.subr.bf16.mxu0 %v7978
        %10371 = vmatpush1.bf16.msra.mxu0 %v7977
        %10372 = vmatprep.subr.bf16.mxu0 %v7986
        %10373 = vmatpush1.bf16.msra.mxu0 %v7985
        %10374 = vmatprep.subr.bf16.mxu0 %v7994
        %10375 = vmatpush1.bf16.msra.mxu0 %v7993
        %10376 = vmatprep.subr.bf16.mxu0 %v8002
        %10377 = vmatpush1.bf16.msra.mxu0 %v8001
        %10378 = vmatprep.subr.bf16.mxu0 %v8010
        %10379 = vmatpush1.bf16.msra.mxu0 %v8009
        %10380 = vmatprep.subr.bf16.mxu0 %v8018
        %10381 = vmatpush1.bf16.msra.mxu0 %v8017
        %10382 = vmatprep.subr.bf16.mxu0 %v8026
        %10383 = vmatpush1.bf16.msra.mxu0 %v8025
        %10384 = vmatprep.subr.bf16.mxu0 %v8034
        %10385 = vmatpush1.bf16.msra.mxu0 %v8033
        %10386 = vmatprep.subr.bf16.mxu0 %v8042
        %10387 = vmatpush1.bf16.msra.mxu0 %v8041
        %10388 = vmatprep.subr.bf16.mxu0 %v8050
        %10389 = vmatpush1.bf16.msra.mxu0 %v8049
        %10390 = vmatprep.subr.bf16.mxu0 %v8058
        %10391 = vmatpush1.bf16.msra.mxu0 %v8057
        %10392 = vmatprep.subr.bf16.mxu0 %v8066
        %10393 = vmatpush1.bf16.msra.mxu0 %v8065
        %10394 = vmatprep.mubr.bf16.mxu0 %v3928
        %10395 = vmatmul.mubr.bf16.gmra.mrb[0].mxu0 %v3927
        %v10396 = vpop.f32.mrb[0].mxu0
        %v10397 = vadd.f32 %v10356, %v10396
        %v10398 = vpop.f32.mrb[0].mxu0
        %v10399 = vadd.f32 %v10358, %v10398
        %v10400 = vpop.f32.mrb[0].mxu0
        %v10401 = vpop.f32.mrb[0].mxu0
        %10402 = vdwg.mxu0
        %v10403 = vmax.f32 %v9413, 0.0
        %v10404 = vmax.f32 %v9415, 0.0
        %v10405 = vmax.f32 %v9741, 0.0
        %v10406 = vmax.f32 %v9743, 0.0
        %v10407 = vmax.f32 %v10069, 0.0
        %v10408 = vmax.f32 %v10071, 0.0
        %v10409 = vmax.f32 %v10397, 0.0
        %v10410 = vmax.f32 %v10399, 0.0
        %v10411 = vld [vmem:[%s627] sm:$0xff]
        %v10412 = vld [vmem:[%s627 + $0x8] sm:$0xff]
        %v10413 = vld [vmem:[%s627 + $0x10] sm:$0xff]
        %v10414 = vld [vmem:[%s627 + $0x18] sm:$0xff]
        %v10415 = vld [vmem:[%s627 + $0x20] sm:$0xff]
        %v10416 = vld [vmem:[%s627 + $0x28] sm:$0xff]
        %v10417 = vld [vmem:[%s627 + $0x30] sm:$0xff]
        %v10418 = vld [vmem:[%s627 + $0x38] sm:$0xff]
        %v10419 = vld [vmem:[%s627 + $0x40] sm:$0xff]
        %v10420 = vld [vmem:[%s627 + $0x48] sm:$0xff]
        %v10421 = vld [vmem:[%s627 + $0x50] sm:$0xff]
        %v10422 = vld [vmem:[%s627 + $0x58] sm:$0xff]
        %v10423 = vld [vmem:[%s627 + $0x60] sm:$0xff]
        %v10424 = vld [vmem:[%s627 + $0x68] sm:$0xff]
        %v10425 = vld [vmem:[%s627 + $0x70] sm:$0xff]
        %v10426 = vld [vmem:[%s627 + $0x78] sm:$0xff]
        %v10427 = vld [vmem:[%s627 + $0x80] sm:$0xff]
        %v10428 = vld [vmem:[%s627 + $0x88] sm:$0xff]
        %v10429 = vld [vmem:[%s627 + $0x90] sm:$0xff]
        %v10430 = vld [vmem:[%s627 + $0x98] sm:$0xff]
        %v10431 = vld [vmem:[%s627 + $0xa0] sm:$0xff]
        %v10432 = vld [vmem:[%s627 + $0xa8] sm:$0xff]
        %v10433 = vld [vmem:[%s627 + $0xb0] sm:$0xff]
        %v10434 = vld [vmem:[%s627 + $0xb8] sm:$0xff]
        %v10435 = vld [vmem:[%s627 + $0xc0] sm:$0xff]
        %v10436 = vld [vmem:[%s627 + $0xc8] sm:$0xff]
        %v10437 = vld [vmem:[%s627 + $0xd0] sm:$0xff]
        %v10438 = vld [vmem:[%s627 + $0xd8] sm:$0xff]
        %v10439 = vld [vmem:[%s627 + $0xe0] sm:$0xff]
        %v10440 = vld [vmem:[%s627 + $0xe8] sm:$0xff]
        %v10441 = vld [vmem:[%s627 + $0xf0] sm:$0xff]
        %v10442 = vld [vmem:[%s627 + $0xf8] sm:$0xff]
        %v10443 = vld [vmem:[%s627 + $0x100] sm:$0xff]
        %v10444 = vld [vmem:[%s627 + $0x108] sm:$0xff]
        %v10445 = vld [vmem:[%s627 + $0x110] sm:$0xff]
        %v10446 = vld [vmem:[%s627 + $0x118] sm:$0xff]
        %v10447 = vld [vmem:[%s627 + $0x120] sm:$0xff]
        %v10448 = vld [vmem:[%s627 + $0x128] sm:$0xff]
        %v10449 = vld [vmem:[%s627 + $0x130] sm:$0xff]
        %v10450 = vld [vmem:[%s627 + $0x138] sm:$0xff]
        %v10451 = vld [vmem:[%s627 + $0x140] sm:$0xff]
        %v10452 = vld [vmem:[%s627 + $0x148] sm:$0xff]
        %v10453 = vld [vmem:[%s627 + $0x150] sm:$0xff]
        %v10454 = vld [vmem:[%s627 + $0x158] sm:$0xff]
        %v10455 = vld [vmem:[%s627 + $0x160] sm:$0xff]
        %v10456 = vld [vmem:[%s627 + $0x168] sm:$0xff]
        %v10457 = vld [vmem:[%s627 + $0x170] sm:$0xff]
        %v10458 = vld [vmem:[%s627 + $0x178] sm:$0xff]
        %v10459 = vld [vmem:[%s627 + $0x180] sm:$0xff]
        %v10460 = vld [vmem:[%s627 + $0x188] sm:$0xff]
        %v10461 = vld [vmem:[%s627 + $0x190] sm:$0xff]
        %v10462 = vld [vmem:[%s627 + $0x198] sm:$0xff]
        %v10463 = vld [vmem:[%s627 + $0x1a0] sm:$0xff]
        %v10464 = vld [vmem:[%s627 + $0x1a8] sm:$0xff]
        %v10465 = vld [vmem:[%s627 + $0x1b0] sm:$0xff]
        %v10466 = vld [vmem:[%s627 + $0x1b8] sm:$0xff]
        %v10467 = vld [vmem:[%s627 + $0x1c0] sm:$0xff]
        %v10468 = vld [vmem:[%s627 + $0x1c8] sm:$0xff]
        %v10469 = vld [vmem:[%s627 + $0x1d0] sm:$0xff]
        %v10470 = vld [vmem:[%s627 + $0x1d8] sm:$0xff]
        %v10471 = vld [vmem:[%s627 + $0x1e0] sm:$0xff]
        %v10472 = vld [vmem:[%s627 + $0x1e8] sm:$0xff]
        %v10473 = vld [vmem:[%s627 + $0x1f0] sm:$0xff]
        %v10474 = vld [vmem:[%s627 + $0x1f8] sm:$0xff]
        %v10475 = vld [vmem:[%s627 + $0x200] sm:$0xff]
        %v10476 = vld [vmem:[%s627 + $0x208] sm:$0xff]
        %v10477 = vld [vmem:[%s627 + $0x210] sm:$0xff]
        %v10478 = vld [vmem:[%s627 + $0x218] sm:$0xff]
        %v10479 = vld [vmem:[%s627 + $0x220] sm:$0xff]
        %v10480 = vld [vmem:[%s627 + $0x228] sm:$0xff]
        %v10481 = vld [vmem:[%s627 + $0x230] sm:$0xff]
        %v10482 = vld [vmem:[%s627 + $0x238] sm:$0xff]
        %v10483 = vld [vmem:[%s627 + $0x240] sm:$0xff]
        %v10484 = vld [vmem:[%s627 + $0x248] sm:$0xff]
        %v10485 = vld [vmem:[%s627 + $0x250] sm:$0xff]
        %v10486 = vld [vmem:[%s627 + $0x258] sm:$0xff]
        %v10487 = vld [vmem:[%s627 + $0x260] sm:$0xff]
        %v10488 = vld [vmem:[%s627 + $0x268] sm:$0xff]
        %v10489 = vld [vmem:[%s627 + $0x270] sm:$0xff]
        %v10490 = vld [vmem:[%s627 + $0x278] sm:$0xff]
        %v10491 = vld [vmem:[%s627 + $0x280] sm:$0xff]
        %v10492 = vld [vmem:[%s627 + $0x288] sm:$0xff]
        %v10493 = vld [vmem:[%s627 + $0x290] sm:$0xff]
        %v10494 = vld [vmem:[%s627 + $0x298] sm:$0xff]
        %v10495 = vld [vmem:[%s627 + $0x2a0] sm:$0xff]
        %v10496 = vld [vmem:[%s627 + $0x2a8] sm:$0xff]
        %v10497 = vld [vmem:[%s627 + $0x2b0] sm:$0xff]
        %v10498 = vld [vmem:[%s627 + $0x2b8] sm:$0xff]
        %v10499 = vld [vmem:[%s627 + $0x2c0] sm:$0xff]
        %v10500 = vld [vmem:[%s627 + $0x2c8] sm:$0xff]
        %v10501 = vld [vmem:[%s627 + $0x2d0] sm:$0xff]
        %v10502 = vld [vmem:[%s627 + $0x2d8] sm:$0xff]
        %v10503 = vld [vmem:[%s627 + $0x2e0] sm:$0xff]
        %v10504 = vld [vmem:[%s627 + $0x2e8] sm:$0xff]
        %v10505 = vld [vmem:[%s627 + $0x2f0] sm:$0xff]
        %v10506 = vld [vmem:[%s627 + $0x2f8] sm:$0xff]
        %v10507 = vld [vmem:[%s627 + $0x300] sm:$0xff]
        %v10508 = vld [vmem:[%s627 + $0x308] sm:$0xff]
        %v10509 = vld [vmem:[%s627 + $0x310] sm:$0xff]
        %v10510 = vld [vmem:[%s627 + $0x318] sm:$0xff]
        %v10511 = vld [vmem:[%s627 + $0x320] sm:$0xff]
        %v10512 = vld [vmem:[%s627 + $0x328] sm:$0xff]
        %v10513 = vld [vmem:[%s627 + $0x330] sm:$0xff]
        %v10514 = vld [vmem:[%s627 + $0x338] sm:$0xff]
        %v10515 = vld [vmem:[%s627 + $0x340] sm:$0xff]
        %v10516 = vld [vmem:[%s627 + $0x348] sm:$0xff]
        %v10517 = vld [vmem:[%s627 + $0x350] sm:$0xff]
        %v10518 = vld [vmem:[%s627 + $0x358] sm:$0xff]
        %v10519 = vld [vmem:[%s627 + $0x360] sm:$0xff]
        %v10520 = vld [vmem:[%s627 + $0x368] sm:$0xff]
        %v10521 = vld [vmem:[%s627 + $0x370] sm:$0xff]
        %v10522 = vld [vmem:[%s627 + $0x378] sm:$0xff]
        %v10523 = vld [vmem:[%s627 + $0x380] sm:$0xff]
        %v10524 = vld [vmem:[%s627 + $0x388] sm:$0xff]
        %v10525 = vld [vmem:[%s627 + $0x390] sm:$0xff]
        %v10526 = vld [vmem:[%s627 + $0x398] sm:$0xff]
        %v10527 = vld [vmem:[%s627 + $0x3a0] sm:$0xff]
        %v10528 = vld [vmem:[%s627 + $0x3a8] sm:$0xff]
        %v10529 = vld [vmem:[%s627 + $0x3b0] sm:$0xff]
        %v10530 = vld [vmem:[%s627 + $0x3b8] sm:$0xff]
        %v10531 = vld [vmem:[%s627 + $0x3c0] sm:$0xff]
        %v10532 = vld [vmem:[%s627 + $0x3c8] sm:$0xff]
        %v10533 = vld [vmem:[%s627 + $0x3d0] sm:$0xff]
        %v10534 = vld [vmem:[%s627 + $0x3d8] sm:$0xff]
        %v10535 = vld [vmem:[%s627 + $0x3e0] sm:$0xff]
        %v10536 = vld [vmem:[%s627 + $0x3e8] sm:$0xff]
        %v10537 = vld [vmem:[%s627 + $0x3f0] sm:$0xff]
        %v10538 = vld [vmem:[%s627 + $0x3f8] sm:$0xff]
        %v10539 = vpack.c.bf16 %v10403, %v10403
        %v10540 = vpack.c.bf16 %v10404, %v10404
        %v10541 = vpack.c.bf16 %v10405, %v10405
        %v10542 = vpack.c.bf16 %v10406, %v10406
        %v10543 = vpack.c.bf16 %v10407, %v10407
        %v10544 = vpack.c.bf16 %v10408, %v10408
        %v10545 = vpack.c.bf16 %v10409, %v10409
        %v10546 = vpack.c.bf16 %v10410, %v10410
        %v10547 = vld [vmem:[%s636] sm:$0x3]
        %v10549 = vlaneseq
        %v10550 = vshrl.u32 %v10549, 7
        %v10551 = vsub.s32 0, %v10550
        %v10552 = vrot.slane %v10547, %v10551
        %v10553 = vlaneseq
        %v10554 = vshrl.u32 %v10553, 7
        %v10555 = vsub.s32 1, %v10554
        %v10556 = vrot.slane %v10547, %v10555
        %v10687 = vunpack.c.l.b16 %v10411
        %v10688 = vunpack.c.h.b16 %v10411
        %v10689 = vunpack.c.l.b16 %v10412
        %v10690 = vunpack.c.h.b16 %v10412
        %v10691 = vunpack.c.l.b16 %v10413
        %v10692 = vunpack.c.h.b16 %v10413
        %v10693 = vunpack.c.l.b16 %v10414
        %v10694 = vunpack.c.h.b16 %v10414
        %v10695 = vunpack.c.l.b16 %v10415
        %v10696 = vunpack.c.h.b16 %v10415
        %v10697 = vunpack.c.l.b16 %v10416
        %v10698 = vunpack.c.h.b16 %v10416
        %v10699 = vunpack.c.l.b16 %v10417
        %v10700 = vunpack.c.h.b16 %v10417
        %v10701 = vunpack.c.l.b16 %v10418
        %v10702 = vunpack.c.h.b16 %v10418
        %v10703 = vunpack.c.l.b16 %v10419
        %v10704 = vunpack.c.h.b16 %v10419
        %v10705 = vunpack.c.l.b16 %v10420
        %v10706 = vunpack.c.h.b16 %v10420
        %v10707 = vunpack.c.l.b16 %v10421
        %v10708 = vunpack.c.h.b16 %v10421
        %v10709 = vunpack.c.l.b16 %v10422
        %v10710 = vunpack.c.h.b16 %v10422
        %v10711 = vunpack.c.l.b16 %v10423
        %v10712 = vunpack.c.h.b16 %v10423
        %v10713 = vunpack.c.l.b16 %v10424
        %v10714 = vunpack.c.h.b16 %v10424
        %v10715 = vunpack.c.l.b16 %v10425
        %v10716 = vunpack.c.h.b16 %v10425
        %v10717 = vunpack.c.l.b16 %v10426
        %v10718 = vunpack.c.h.b16 %v10426
        %v10719 = vunpack.c.l.b16 %v10427
        %v10720 = vunpack.c.h.b16 %v10427
        %v10721 = vunpack.c.l.b16 %v10428
        %v10722 = vunpack.c.h.b16 %v10428
        %v10723 = vunpack.c.l.b16 %v10429
        %v10724 = vunpack.c.h.b16 %v10429
        %v10725 = vunpack.c.l.b16 %v10430
        %v10726 = vunpack.c.h.b16 %v10430
        %v10727 = vunpack.c.l.b16 %v10431
        %v10728 = vunpack.c.h.b16 %v10431
        %v10729 = vunpack.c.l.b16 %v10432
        %v10730 = vunpack.c.h.b16 %v10432
        %v10731 = vunpack.c.l.b16 %v10433
        %v10732 = vunpack.c.h.b16 %v10433
        %v10733 = vunpack.c.l.b16 %v10434
        %v10734 = vunpack.c.h.b16 %v10434
        %v10735 = vunpack.c.l.b16 %v10435
        %v10736 = vunpack.c.h.b16 %v10435
        %v10737 = vunpack.c.l.b16 %v10436
        %v10738 = vunpack.c.h.b16 %v10436
        %v10739 = vunpack.c.l.b16 %v10437
        %v10740 = vunpack.c.h.b16 %v10437
        %v10741 = vunpack.c.l.b16 %v10438
        %v10742 = vunpack.c.h.b16 %v10438
        %v10743 = vunpack.c.l.b16 %v10439
        %v10744 = vunpack.c.h.b16 %v10439
        %v10745 = vunpack.c.l.b16 %v10440
        %v10746 = vunpack.c.h.b16 %v10440
        %v10747 = vunpack.c.l.b16 %v10441
        %v10748 = vunpack.c.h.b16 %v10441
        %v10749 = vunpack.c.l.b16 %v10442
        %v10750 = vunpack.c.h.b16 %v10442
        %v10751 = vunpack.c.l.b16 %v10443
        %v10752 = vunpack.c.h.b16 %v10443
        %v10753 = vunpack.c.l.b16 %v10444
        %v10754 = vunpack.c.h.b16 %v10444
        %v10755 = vunpack.c.l.b16 %v10445
        %v10756 = vunpack.c.h.b16 %v10445
        %v10757 = vunpack.c.l.b16 %v10446
        %v10758 = vunpack.c.h.b16 %v10446
        %v10759 = vunpack.c.l.b16 %v10447
        %v10760 = vunpack.c.h.b16 %v10447
        %v10761 = vunpack.c.l.b16 %v10448
        %v10762 = vunpack.c.h.b16 %v10448
        %v10763 = vunpack.c.l.b16 %v10449
        %v10764 = vunpack.c.h.b16 %v10449
        %v10765 = vunpack.c.l.b16 %v10450
        %v10766 = vunpack.c.h.b16 %v10450
        %v10767 = vunpack.c.l.b16 %v10451
        %v10768 = vunpack.c.h.b16 %v10451
        %v10769 = vunpack.c.l.b16 %v10452
        %v10770 = vunpack.c.h.b16 %v10452
        %v10771 = vunpack.c.l.b16 %v10453
        %v10772 = vunpack.c.h.b16 %v10453
        %v10773 = vunpack.c.l.b16 %v10454
        %v10774 = vunpack.c.h.b16 %v10454
        %v10775 = vunpack.c.l.b16 %v10455
        %v10776 = vunpack.c.h.b16 %v10455
        %v10777 = vunpack.c.l.b16 %v10456
        %v10778 = vunpack.c.h.b16 %v10456
        %v10779 = vunpack.c.l.b16 %v10457
        %v10780 = vunpack.c.h.b16 %v10457
        %v10781 = vunpack.c.l.b16 %v10458
        %v10782 = vunpack.c.h.b16 %v10458
        %v10783 = vunpack.c.l.b16 %v10459
        %v10784 = vunpack.c.h.b16 %v10459
        %v10785 = vunpack.c.l.b16 %v10460
        %v10786 = vunpack.c.h.b16 %v10460
        %v10787 = vunpack.c.l.b16 %v10461
        %v10788 = vunpack.c.h.b16 %v10461
        %v10789 = vunpack.c.l.b16 %v10462
        %v10790 = vunpack.c.h.b16 %v10462
        %v10791 = vunpack.c.l.b16 %v10463
        %v10792 = vunpack.c.h.b16 %v10463
        %v10793 = vunpack.c.l.b16 %v10464
        %v10794 = vunpack.c.h.b16 %v10464
        %v10795 = vunpack.c.l.b16 %v10465
        %v10796 = vunpack.c.h.b16 %v10465
        %v10797 = vunpack.c.l.b16 %v10466
        %v10798 = vunpack.c.h.b16 %v10466
        %v10799 = vunpack.c.l.b16 %v10467
        %v10800 = vunpack.c.h.b16 %v10467
        %v10801 = vunpack.c.l.b16 %v10468
        %v10802 = vunpack.c.h.b16 %v10468
        %v10803 = vunpack.c.l.b16 %v10469
        %v10804 = vunpack.c.h.b16 %v10469
        %v10805 = vunpack.c.l.b16 %v10470
        %v10806 = vunpack.c.h.b16 %v10470
        %v10807 = vunpack.c.l.b16 %v10471
        %v10808 = vunpack.c.h.b16 %v10471
        %v10809 = vunpack.c.l.b16 %v10472
        %v10810 = vunpack.c.h.b16 %v10472
        %v10811 = vunpack.c.l.b16 %v10473
        %v10812 = vunpack.c.h.b16 %v10473
        %v10813 = vunpack.c.l.b16 %v10474
        %v10814 = vunpack.c.h.b16 %v10474
        %v10815 = vunpack.c.l.b16 %v10475
        %v10816 = vunpack.c.h.b16 %v10475
        %v10817 = vunpack.c.l.b16 %v10476
        %v10818 = vunpack.c.h.b16 %v10476
        %v10819 = vunpack.c.l.b16 %v10477
        %v10820 = vunpack.c.h.b16 %v10477
        %v10821 = vunpack.c.l.b16 %v10478
        %v10822 = vunpack.c.h.b16 %v10478
        %v10823 = vunpack.c.l.b16 %v10479
        %v10824 = vunpack.c.h.b16 %v10479
        %v10825 = vunpack.c.l.b16 %v10480
        %v10826 = vunpack.c.h.b16 %v10480
        %v10827 = vunpack.c.l.b16 %v10481
        %v10828 = vunpack.c.h.b16 %v10481
        %v10829 = vunpack.c.l.b16 %v10482
        %v10830 = vunpack.c.h.b16 %v10482
        %v10831 = vunpack.c.l.b16 %v10483
        %v10832 = vunpack.c.h.b16 %v10483
        %v10833 = vunpack.c.l.b16 %v10484
        %v10834 = vunpack.c.h.b16 %v10484
        %v10835 = vunpack.c.l.b16 %v10485
        %v10836 = vunpack.c.h.b16 %v10485
        %v10837 = vunpack.c.l.b16 %v10486
        %v10838 = vunpack.c.h.b16 %v10486
        %v10839 = vunpack.c.l.b16 %v10487
        %v10840 = vunpack.c.h.b16 %v10487
        %v10841 = vunpack.c.l.b16 %v10488
        %v10842 = vunpack.c.h.b16 %v10488
        %v10843 = vunpack.c.l.b16 %v10489
        %v10844 = vunpack.c.h.b16 %v10489
        %v10845 = vunpack.c.l.b16 %v10490
        %v10846 = vunpack.c.h.b16 %v10490
        %v10847 = vunpack.c.l.b16 %v10491
        %v10848 = vunpack.c.h.b16 %v10491
        %v10849 = vunpack.c.l.b16 %v10492
        %v10850 = vunpack.c.h.b16 %v10492
        %v10851 = vunpack.c.l.b16 %v10493
        %v10852 = vunpack.c.h.b16 %v10493
        %v10853 = vunpack.c.l.b16 %v10494
        %v10854 = vunpack.c.h.b16 %v10494
        %v10855 = vunpack.c.l.b16 %v10495
        %v10856 = vunpack.c.h.b16 %v10495
        %v10857 = vunpack.c.l.b16 %v10496
        %v10858 = vunpack.c.h.b16 %v10496
        %v10859 = vunpack.c.l.b16 %v10497
        %v10860 = vunpack.c.h.b16 %v10497
        %v10861 = vunpack.c.l.b16 %v10498
        %v10862 = vunpack.c.h.b16 %v10498
        %v10863 = vunpack.c.l.b16 %v10499
        %v10864 = vunpack.c.h.b16 %v10499
        %v10865 = vunpack.c.l.b16 %v10500
        %v10866 = vunpack.c.h.b16 %v10500
        %v10867 = vunpack.c.l.b16 %v10501
        %v10868 = vunpack.c.h.b16 %v10501
        %v10869 = vunpack.c.l.b16 %v10502
        %v10870 = vunpack.c.h.b16 %v10502
        %v10871 = vunpack.c.l.b16 %v10503
        %v10872 = vunpack.c.h.b16 %v10503
        %v10873 = vunpack.c.l.b16 %v10504
        %v10874 = vunpack.c.h.b16 %v10504
        %v10875 = vunpack.c.l.b16 %v10505
        %v10876 = vunpack.c.h.b16 %v10505
        %v10877 = vunpack.c.l.b16 %v10506
        %v10878 = vunpack.c.h.b16 %v10506
        %v10879 = vunpack.c.l.b16 %v10507
        %v10880 = vunpack.c.h.b16 %v10507
        %v10881 = vunpack.c.l.b16 %v10508
        %v10882 = vunpack.c.h.b16 %v10508
        %v10883 = vunpack.c.l.b16 %v10509
        %v10884 = vunpack.c.h.b16 %v10509
        %v10885 = vunpack.c.l.b16 %v10510
        %v10886 = vunpack.c.h.b16 %v10510
        %v10887 = vunpack.c.l.b16 %v10511
        %v10888 = vunpack.c.h.b16 %v10511
        %v10889 = vunpack.c.l.b16 %v10512
        %v10890 = vunpack.c.h.b16 %v10512
        %v10891 = vunpack.c.l.b16 %v10513
        %v10892 = vunpack.c.h.b16 %v10513
        %v10893 = vunpack.c.l.b16 %v10514
        %v10894 = vunpack.c.h.b16 %v10514
        %v10895 = vunpack.c.l.b16 %v10515
        %v10896 = vunpack.c.h.b16 %v10515
        %v10897 = vunpack.c.l.b16 %v10516
        %v10898 = vunpack.c.h.b16 %v10516
        %v10899 = vunpack.c.l.b16 %v10517
        %v10900 = vunpack.c.h.b16 %v10517
        %v10901 = vunpack.c.l.b16 %v10518
        %v10902 = vunpack.c.h.b16 %v10518
        %v10903 = vunpack.c.l.b16 %v10519
        %v10904 = vunpack.c.h.b16 %v10519
        %v10905 = vunpack.c.l.b16 %v10520
        %v10906 = vunpack.c.h.b16 %v10520
        %v10907 = vunpack.c.l.b16 %v10521
        %v10908 = vunpack.c.h.b16 %v10521
        %v10909 = vunpack.c.l.b16 %v10522
        %v10910 = vunpack.c.h.b16 %v10522
        %v10911 = vunpack.c.l.b16 %v10523
        %v10912 = vunpack.c.h.b16 %v10523
        %v10913 = vunpack.c.l.b16 %v10524
        %v10914 = vunpack.c.h.b16 %v10524
        %v10915 = vunpack.c.l.b16 %v10525
        %v10916 = vunpack.c.h.b16 %v10525
        %v10917 = vunpack.c.l.b16 %v10526
        %v10918 = vunpack.c.h.b16 %v10526
        %v10919 = vunpack.c.l.b16 %v10527
        %v10920 = vunpack.c.h.b16 %v10527
        %v10921 = vunpack.c.l.b16 %v10528
        %v10922 = vunpack.c.h.b16 %v10528
        %v10923 = vunpack.c.l.b16 %v10529
        %v10924 = vunpack.c.h.b16 %v10529
        %v10925 = vunpack.c.l.b16 %v10530
        %v10926 = vunpack.c.h.b16 %v10530
        %v10927 = vunpack.c.l.b16 %v10531
        %v10928 = vunpack.c.h.b16 %v10531
        %v10929 = vunpack.c.l.b16 %v10532
        %v10930 = vunpack.c.h.b16 %v10532
        %v10931 = vunpack.c.l.b16 %v10533
        %v10932 = vunpack.c.h.b16 %v10533
        %v10933 = vunpack.c.l.b16 %v10534
        %v10934 = vunpack.c.h.b16 %v10534
        %v10935 = vunpack.c.l.b16 %v10535
        %v10936 = vunpack.c.h.b16 %v10535
        %v10937 = vunpack.c.l.b16 %v10536
        %v10938 = vunpack.c.h.b16 %v10536
        %v10939 = vunpack.c.l.b16 %v10537
        %v10940 = vunpack.c.h.b16 %v10537
        %v10941 = vunpack.c.l.b16 %v10538
        %v10942 = vunpack.c.h.b16 %v10538
        %v10943 = vpack.c.b16 %v10689, %v10687
        %v10944 = vpack.c.b16 %v10690, %v10688
        %v10945 = vpack.c.b16 %v10693, %v10691
        %v10946 = vpack.c.b16 %v10694, %v10692
        %v10947 = vpack.c.b16 %v10697, %v10695
        %v10948 = vpack.c.b16 %v10698, %v10696
        %v10949 = vpack.c.b16 %v10701, %v10699
        %v10950 = vpack.c.b16 %v10702, %v10700
        %v10951 = vpack.c.b16 %v10705, %v10703
        %v10952 = vpack.c.b16 %v10706, %v10704
        %v10953 = vpack.c.b16 %v10709, %v10707
        %v10954 = vpack.c.b16 %v10710, %v10708
        %v10955 = vpack.c.b16 %v10713, %v10711
        %v10956 = vpack.c.b16 %v10714, %v10712
        %v10957 = vpack.c.b16 %v10717, %v10715
        %v10958 = vpack.c.b16 %v10718, %v10716
        %v10959 = vpack.c.b16 %v10721, %v10719
        %v10960 = vpack.c.b16 %v10722, %v10720
        %v10961 = vpack.c.b16 %v10725, %v10723
        %v10962 = vpack.c.b16 %v10726, %v10724
        %v10963 = vpack.c.b16 %v10729, %v10727
        %v10964 = vpack.c.b16 %v10730, %v10728
        %v10965 = vpack.c.b16 %v10733, %v10731
        %v10966 = vpack.c.b16 %v10734, %v10732
        %v10967 = vpack.c.b16 %v10737, %v10735
        %v10968 = vpack.c.b16 %v10738, %v10736
        %v10969 = vpack.c.b16 %v10741, %v10739
        %v10970 = vpack.c.b16 %v10742, %v10740
        %v10971 = vpack.c.b16 %v10745, %v10743
        %v10972 = vpack.c.b16 %v10746, %v10744
        %v10973 = vpack.c.b16 %v10749, %v10747
        %v10974 = vpack.c.b16 %v10750, %v10748
        %v10975 = vpack.c.b16 %v10753, %v10751
        %v10976 = vpack.c.b16 %v10754, %v10752
        %v10977 = vpack.c.b16 %v10757, %v10755
        %v10978 = vpack.c.b16 %v10758, %v10756
        %v10979 = vpack.c.b16 %v10761, %v10759
        %v10980 = vpack.c.b16 %v10762, %v10760
        %v10981 = vpack.c.b16 %v10765, %v10763
        %v10982 = vpack.c.b16 %v10766, %v10764
        %v10983 = vpack.c.b16 %v10769, %v10767
        %v10984 = vpack.c.b16 %v10770, %v10768
        %v10985 = vpack.c.b16 %v10773, %v10771
        %v10986 = vpack.c.b16 %v10774, %v10772
        %v10987 = vpack.c.b16 %v10777, %v10775
        %v10988 = vpack.c.b16 %v10778, %v10776
        %v10989 = vpack.c.b16 %v10781, %v10779
        %v10990 = vpack.c.b16 %v10782, %v10780
        %v10991 = vpack.c.b16 %v10785, %v10783
        %v10992 = vpack.c.b16 %v10786, %v10784
        %v10993 = vpack.c.b16 %v10789, %v10787
        %v10994 = vpack.c.b16 %v10790, %v10788
        %v10995 = vpack.c.b16 %v10793, %v10791
        %v10996 = vpack.c.b16 %v10794, %v10792
        %v10997 = vpack.c.b16 %v10797, %v10795
        %v10998 = vpack.c.b16 %v10798, %v10796
        %v10999 = vpack.c.b16 %v10801, %v10799
        %v11000 = vpack.c.b16 %v10802, %v10800
        %v11001 = vpack.c.b16 %v10805, %v10803
        %v11002 = vpack.c.b16 %v10806, %v10804
        %v11003 = vpack.c.b16 %v10809, %v10807
        %v11004 = vpack.c.b16 %v10810, %v10808
        %v11005 = vpack.c.b16 %v10813, %v10811
        %v11006 = vpack.c.b16 %v10814, %v10812
        %v11007 = vpack.c.b16 %v10817, %v10815
        %v11008 = vpack.c.b16 %v10818, %v10816
        %v11009 = vpack.c.b16 %v10821, %v10819
        %v11010 = vpack.c.b16 %v10822, %v10820
        %v11011 = vpack.c.b16 %v10825, %v10823
        %v11012 = vpack.c.b16 %v10826, %v10824
        %v11013 = vpack.c.b16 %v10829, %v10827
        %v11014 = vpack.c.b16 %v10830, %v10828
        %v11015 = vpack.c.b16 %v10833, %v10831
        %v11016 = vpack.c.b16 %v10834, %v10832
        %v11017 = vpack.c.b16 %v10837, %v10835
        %v11018 = vpack.c.b16 %v10838, %v10836
        %v11019 = vpack.c.b16 %v10841, %v10839
        %v11020 = vpack.c.b16 %v10842, %v10840
        %v11021 = vpack.c.b16 %v10845, %v10843
        %v11022 = vpack.c.b16 %v10846, %v10844
        %v11023 = vpack.c.b16 %v10849, %v10847
        %v11024 = vpack.c.b16 %v10850, %v10848
        %v11025 = vpack.c.b16 %v10853, %v10851
        %v11026 = vpack.c.b16 %v10854, %v10852
        %v11027 = vpack.c.b16 %v10857, %v10855
        %v11028 = vpack.c.b16 %v10858, %v10856
        %v11029 = vpack.c.b16 %v10861, %v10859
        %v11030 = vpack.c.b16 %v10862, %v10860
        %v11031 = vpack.c.b16 %v10865, %v10863
        %v11032 = vpack.c.b16 %v10866, %v10864
        %v11033 = vpack.c.b16 %v10869, %v10867
        %v11034 = vpack.c.b16 %v10870, %v10868
        %v11035 = vpack.c.b16 %v10873, %v10871
        %v11036 = vpack.c.b16 %v10874, %v10872
        %v11037 = vpack.c.b16 %v10877, %v10875
        %v11038 = vpack.c.b16 %v10878, %v10876
        %v11039 = vpack.c.b16 %v10881, %v10879
        %v11040 = vpack.c.b16 %v10882, %v10880
        %v11041 = vpack.c.b16 %v10885, %v10883
        %v11042 = vpack.c.b16 %v10886, %v10884
        %v11043 = vpack.c.b16 %v10889, %v10887
        %v11044 = vpack.c.b16 %v10890, %v10888
        %v11045 = vpack.c.b16 %v10893, %v10891
        %v11046 = vpack.c.b16 %v10894, %v10892
        %v11047 = vpack.c.b16 %v10897, %v10895
        %v11048 = vpack.c.b16 %v10898, %v10896
        %v11049 = vpack.c.b16 %v10901, %v10899
        %v11050 = vpack.c.b16 %v10902, %v10900
        %v11051 = vpack.c.b16 %v10905, %v10903
        %v11052 = vpack.c.b16 %v10906, %v10904
        %v11053 = vpack.c.b16 %v10909, %v10907
        %v11054 = vpack.c.b16 %v10910, %v10908
        %v11055 = vpack.c.b16 %v10913, %v10911
        %v11056 = vpack.c.b16 %v10914, %v10912
        %v11057 = vpack.c.b16 %v10917, %v10915
        %v11058 = vpack.c.b16 %v10918, %v10916
        %v11059 = vpack.c.b16 %v10921, %v10919
        %v11060 = vpack.c.b16 %v10922, %v10920
        %v11061 = vpack.c.b16 %v10925, %v10923
        %v11062 = vpack.c.b16 %v10926, %v10924
        %v11063 = vpack.c.b16 %v10929, %v10927
        %v11064 = vpack.c.b16 %v10930, %v10928
        %v11065 = vpack.c.b16 %v10933, %v10931
        %v11066 = vpack.c.b16 %v10934, %v10932
        %v11067 = vpack.c.b16 %v10937, %v10935
        %v11068 = vpack.c.b16 %v10938, %v10936
        %v11069 = vpack.c.b16 %v10941, %v10939
        %v11070 = vpack.c.b16 %v10942, %v10940
        %11199 = vmatprep.subr.bf16.mxu0 %v10944
        %11200 = vmatpush1.bf16.msra.mxu0 %v10943
        %11201 = vmatprep.subr.bf16.mxu0 %v10946
        %11202 = vmatpush1.bf16.msra.mxu0 %v10945
        %11203 = vmatprep.subr.bf16.mxu0 %v10948
        %11204 = vmatpush1.bf16.msra.mxu0 %v10947
        %11205 = vmatprep.subr.bf16.mxu0 %v10950
        %11206 = vmatpush1.bf16.msra.mxu0 %v10949
        %11207 = vmatprep.subr.bf16.mxu0 %v10952
        %11208 = vmatpush1.bf16.msra.mxu0 %v10951
        %11209 = vmatprep.subr.bf16.mxu0 %v10954
        %11210 = vmatpush1.bf16.msra.mxu0 %v10953
        %11211 = vmatprep.subr.bf16.mxu0 %v10956
        %11212 = vmatpush1.bf16.msra.mxu0 %v10955
        %11213 = vmatprep.subr.bf16.mxu0 %v10958
        %11214 = vmatpush1.bf16.msra.mxu0 %v10957
        %11215 = vmatprep.subr.bf16.mxu0 %v10960
        %11216 = vmatpush1.bf16.msra.mxu0 %v10959
        %11217 = vmatprep.subr.bf16.mxu0 %v10962
        %11218 = vmatpush1.bf16.msra.mxu0 %v10961
        %11219 = vmatprep.subr.bf16.mxu0 %v10964
        %11220 = vmatpush1.bf16.msra.mxu0 %v10963
        %11221 = vmatprep.subr.bf16.mxu0 %v10966
        %11222 = vmatpush1.bf16.msra.mxu0 %v10965
        %11223 = vmatprep.subr.bf16.mxu0 %v10968
        %11224 = vmatpush1.bf16.msra.mxu0 %v10967
        %11225 = vmatprep.subr.bf16.mxu0 %v10970
        %11226 = vmatpush1.bf16.msra.mxu0 %v10969
        %11227 = vmatprep.subr.bf16.mxu0 %v10972
        %11228 = vmatpush1.bf16.msra.mxu0 %v10971
        %11229 = vmatprep.subr.bf16.mxu0 %v10974
        %11230 = vmatpush1.bf16.msra.mxu0 %v10973
        %11231 = vmatprep.mubr.bf16.mxu0 %v10540
        %11232 = vmatmul.mubr.bf16.gmra.mrb[0].mxu0 %v10539
        %v11233 = vpop.f32.mrb[0].mxu0
        %v11234 = vadd.f32 %v10552, %v11233
        %v11235 = vpop.f32.mrb[0].mxu0
        %v11236 = vadd.f32 %v10556, %v11235
        %v11237 = vpop.f32.mrb[0].mxu0
        %v11238 = vpop.f32.mrb[0].mxu0
        %11239 = vdwg.mxu0
        %11240 = vmatprep.subr.bf16.mxu0 %v10976
        %11241 = vmatpush1.bf16.msra.mxu0 %v10975
        %11242 = vmatprep.subr.bf16.mxu0 %v10978
        %11243 = vmatpush1.bf16.msra.mxu0 %v10977
        %11244 = vmatprep.subr.bf16.mxu0 %v10980
        %11245 = vmatpush1.bf16.msra.mxu0 %v10979
        %11246 = vmatprep.subr.bf16.mxu0 %v10982
        %11247 = vmatpush1.bf16.msra.mxu0 %v10981
        %11248 = vmatprep.subr.bf16.mxu0 %v10984
        %11249 = vmatpush1.bf16.msra.mxu0 %v10983
        %11250 = vmatprep.subr.bf16.mxu0 %v10986
        %11251 = vmatpush1.bf16.msra.mxu0 %v10985
        %11252 = vmatprep.subr.bf16.mxu0 %v10988
        %11253 = vmatpush1.bf16.msra.mxu0 %v10987
        %11254 = vmatprep.subr.bf16.mxu0 %v10990
        %11255 = vmatpush1.bf16.msra.mxu0 %v10989
        %11256 = vmatprep.subr.bf16.mxu0 %v10992
        %11257 = vmatpush1.bf16.msra.mxu0 %v10991
        %11258 = vmatprep.subr.bf16.mxu0 %v10994
        %11259 = vmatpush1.bf16.msra.mxu0 %v10993
        %11260 = vmatprep.subr.bf16.mxu0 %v10996
        %11261 = vmatpush1.bf16.msra.mxu0 %v10995
        %11262 = vmatprep.subr.bf16.mxu0 %v10998
        %11263 = vmatpush1.bf16.msra.mxu0 %v10997
        %11264 = vmatprep.subr.bf16.mxu0 %v11000
        %11265 = vmatpush1.bf16.msra.mxu0 %v10999
        %11266 = vmatprep.subr.bf16.mxu0 %v11002
        %11267 = vmatpush1.bf16.msra.mxu0 %v11001
        %11268 = vmatprep.subr.bf16.mxu0 %v11004
        %11269 = vmatpush1.bf16.msra.mxu0 %v11003
        %11270 = vmatprep.subr.bf16.mxu0 %v11006
        %11271 = vmatpush1.bf16.msra.mxu0 %v11005
        %11272 = vmatprep.mubr.bf16.mxu0 %v10542
        %11273 = vmatmul.mubr.bf16.gmra.mrb[0].mxu0 %v10541
        %v11274 = vpop.f32.mrb[0].mxu0
        %v11275 = vadd.f32 %v11234, %v11274
        %v11276 = vpop.f32.mrb[0].mxu0
        %v11277 = vadd.f32 %v11236, %v11276
        %v11278 = vpop.f32.mrb[0].mxu0
        %v11279 = vpop.f32.mrb[0].mxu0
        %11280 = vdwg.mxu0
        %11281 = vmatprep.subr.bf16.mxu0 %v11008
        %11282 = vmatpush1.bf16.msra.mxu0 %v11007
        %11283 = vmatprep.subr.bf16.mxu0 %v11010
        %11284 = vmatpush1.bf16.msra.mxu0 %v11009
        %11285 = vmatprep.subr.bf16.mxu0 %v11012
        %11286 = vmatpush1.bf16.msra.mxu0 %v11011
        %11287 = vmatprep.subr.bf16.mxu0 %v11014
        %11288 = vmatpush1.bf16.msra.mxu0 %v11013
        %11289 = vmatprep.subr.bf16.mxu0 %v11016
        %11290 = vmatpush1.bf16.msra.mxu0 %v11015
        %11291 = vmatprep.subr.bf16.mxu0 %v11018
        %11292 = vmatpush1.bf16.msra.mxu0 %v11017
        %11293 = vmatprep.subr.bf16.mxu0 %v11020
        %11294 = vmatpush1.bf16.msra.mxu0 %v11019
        %11295 = vmatprep.subr.bf16.mxu0 %v11022
        %11296 = vmatpush1.bf16.msra.mxu0 %v11021
        %11297 = vmatprep.subr.bf16.mxu0 %v11024
        %11298 = vmatpush1.bf16.msra.mxu0 %v11023
        %11299 = vmatprep.subr.bf16.mxu0 %v11026
        %11300 = vmatpush1.bf16.msra.mxu0 %v11025
        %11301 = vmatprep.subr.bf16.mxu0 %v11028
        %11302 = vmatpush1.bf16.msra.mxu0 %v11027
        %11303 = vmatprep.subr.bf16.mxu0 %v11030
        %11304 = vmatpush1.bf16.msra.mxu0 %v11029
        %11305 = vmatprep.subr.bf16.mxu0 %v11032
        %11306 = vmatpush1.bf16.msra.mxu0 %v11031
        %11307 = vmatprep.subr.bf16.mxu0 %v11034
        %11308 = vmatpush1.bf16.msra.mxu0 %v11033
        %11309 = vmatprep.subr.bf16.mxu0 %v11036
        %11310 = vmatpush1.bf16.msra.mxu0 %v11035
        %11311 = vmatprep.subr.bf16.mxu0 %v11038
        %11312 = vmatpush1.bf16.msra.mxu0 %v11037
        %11313 = vmatprep.mubr.bf16.mxu0 %v10544
        %11314 = vmatmul.mubr.bf16.gmra.mrb[0].mxu0 %v10543
        %v11315 = vpop.f32.mrb[0].mxu0
        %v11316 = vadd.f32 %v11275, %v11315
        %v11317 = vpop.f32.mrb[0].mxu0
        %v11318 = vadd.f32 %v11277, %v11317
        %v11319 = vpop.f32.mrb[0].mxu0
        %v11320 = vpop.f32.mrb[0].mxu0
        %11321 = vdwg.mxu0
        %11322 = vmatprep.subr.bf16.mxu0 %v11040
        %11323 = vmatpush1.bf16.msra.mxu0 %v11039
        %11324 = vmatprep.subr.bf16.mxu0 %v11042
        %11325 = vmatpush1.bf16.msra.mxu0 %v11041
        %11326 = vmatprep.subr.bf16.mxu0 %v11044
        %11327 = vmatpush1.bf16.msra.mxu0 %v11043
        %11328 = vmatprep.subr.bf16.mxu0 %v11046
        %11329 = vmatpush1.bf16.msra.mxu0 %v11045
        %11330 = vmatprep.subr.bf16.mxu0 %v11048
        %11331 = vmatpush1.bf16.msra.mxu0 %v11047
        %11332 = vmatprep.subr.bf16.mxu0 %v11050
        %11333 = vmatpush1.bf16.msra.mxu0 %v11049
        %11334 = vmatprep.subr.bf16.mxu0 %v11052
        %11335 = vmatpush1.bf16.msra.mxu0 %v11051
        %11336 = vmatprep.subr.bf16.mxu0 %v11054
        %11337 = vmatpush1.bf16.msra.mxu0 %v11053
        %11338 = vmatprep.subr.bf16.mxu0 %v11056
        %11339 = vmatpush1.bf16.msra.mxu0 %v11055
        %11340 = vmatprep.subr.bf16.mxu0 %v11058
        %11341 = vmatpush1.bf16.msra.mxu0 %v11057
        %11342 = vmatprep.subr.bf16.mxu0 %v11060
        %11343 = vmatpush1.bf16.msra.mxu0 %v11059
        %11344 = vmatprep.subr.bf16.mxu0 %v11062
        %11345 = vmatpush1.bf16.msra.mxu0 %v11061
        %11346 = vmatprep.subr.bf16.mxu0 %v11064
        %11347 = vmatpush1.bf16.msra.mxu0 %v11063
        %11348 = vmatprep.subr.bf16.mxu0 %v11066
        %11349 = vmatpush1.bf16.msra.mxu0 %v11065
        %11350 = vmatprep.subr.bf16.mxu0 %v11068
        %11351 = vmatpush1.bf16.msra.mxu0 %v11067
        %11352 = vmatprep.subr.bf16.mxu0 %v11070
        %11353 = vmatpush1.bf16.msra.mxu0 %v11069
        %11354 = vmatprep.mubr.bf16.mxu0 %v10546
        %11355 = vmatmul.mubr.bf16.gmra.mrb[0].mxu0 %v10545
        %v11356 = vpop.f32.mrb[0].mxu0
        %v11357 = vadd.f32 %v11316, %v11356
        %v11358 = vpop.f32.mrb[0].mxu0
        %v11359 = vadd.f32 %v11318, %v11358
        %v11360 = vpop.f32.mrb[0].mxu0
        %v11361 = vpop.f32.mrb[0].mxu0
        %11362 = vdwg.mxu0
        %v11363 = vmax.f32 %v11357, 0.0
        %v11364 = vmax.f32 %v11359, 0.0
        %v11365 = vld [vmem:[%s645] sm:$0xf]
        %v11366 = vld [vmem:[%s645 + $0x4] sm:$0xf]
        %v11367 = vld [vmem:[%s645 + $0x8] sm:$0xf]
        %v11368 = vld [vmem:[%s645 + $0xc] sm:$0xf]
        %v11369 = vld [vmem:[%s645 + $0x10] sm:$0xf]
        %v11370 = vld [vmem:[%s645 + $0x14] sm:$0xf]
        %v11371 = vld [vmem:[%s645 + $0x18] sm:$0xf]
        %v11372 = vld [vmem:[%s645 + $0x1c] sm:$0xf]
        %v11373 = vld [vmem:[%s645 + $0x20] sm:$0xf]
        %v11374 = vld [vmem:[%s645 + $0x24] sm:$0xf]
        %v11375 = vld [vmem:[%s645 + $0x28] sm:$0xf]
        %v11376 = vld [vmem:[%s645 + $0x2c] sm:$0xf]
        %v11377 = vld [vmem:[%s645 + $0x30] sm:$0xf]
        %v11378 = vld [vmem:[%s645 + $0x34] sm:$0xf]
        %v11379 = vld [vmem:[%s645 + $0x38] sm:$0xf]
        %v11380 = vld [vmem:[%s645 + $0x3c] sm:$0xf]
        %v11381 = vld [vmem:[%s645 + $0x40] sm:$0xf]
        %v11382 = vld [vmem:[%s645 + $0x44] sm:$0xf]
        %v11383 = vld [vmem:[%s645 + $0x48] sm:$0xf]
        %v11384 = vld [vmem:[%s645 + $0x4c] sm:$0xf]
        %v11385 = vld [vmem:[%s645 + $0x50] sm:$0xf]
        %v11386 = vld [vmem:[%s645 + $0x54] sm:$0xf]
        %v11387 = vld [vmem:[%s645 + $0x58] sm:$0xf]
        %v11388 = vld [vmem:[%s645 + $0x5c] sm:$0xf]
        %v11389 = vld [vmem:[%s645 + $0x60] sm:$0xf]
        %v11390 = vld [vmem:[%s645 + $0x64] sm:$0xf]
        %v11391 = vld [vmem:[%s645 + $0x68] sm:$0xf]
        %v11392 = vld [vmem:[%s645 + $0x6c] sm:$0xf]
        %v11393 = vld [vmem:[%s645 + $0x70] sm:$0xf]
        %v11394 = vld [vmem:[%s645 + $0x74] sm:$0xf]
        %v11395 = vld [vmem:[%s645 + $0x78] sm:$0xf]
        %v11396 = vld [vmem:[%s645 + $0x7c] sm:$0xf]
        %v11397 = vpack.c.bf16 %v11363, %v11363
        %v11398 = vpack.c.bf16 %v11364, %v11364
        %v11399 = vld [vmem:[%s653] sm:$0x1]
        %v11401 = vlaneseq
        %v11402 = vshrl.u32 %v11401, 7
        %v11403 = vsub.s32 0, %v11402
        %v11404 = vrot.slane %v11399, %v11403
        %v11438 = vunpack.c.l.b16 %v11365
        %v11439 = vunpack.c.l.b16 %v11366
        %v11440 = vunpack.c.l.b16 %v11367
        %v11441 = vunpack.c.l.b16 %v11368
        %v11442 = vunpack.c.l.b16 %v11369
        %v11443 = vunpack.c.l.b16 %v11370
        %v11444 = vunpack.c.l.b16 %v11371
        %v11445 = vunpack.c.l.b16 %v11372
        %v11446 = vunpack.c.l.b16 %v11373
        %v11447 = vunpack.c.l.b16 %v11374
        %v11448 = vunpack.c.l.b16 %v11375
        %v11449 = vunpack.c.l.b16 %v11376
        %v11450 = vunpack.c.l.b16 %v11377
        %v11451 = vunpack.c.l.b16 %v11378
        %v11452 = vunpack.c.l.b16 %v11379
        %v11453 = vunpack.c.l.b16 %v11380
        %v11454 = vunpack.c.l.b16 %v11381
        %v11455 = vunpack.c.l.b16 %v11382
        %v11456 = vunpack.c.l.b16 %v11383
        %v11457 = vunpack.c.l.b16 %v11384
        %v11458 = vunpack.c.l.b16 %v11385
        %v11459 = vunpack.c.l.b16 %v11386
        %v11460 = vunpack.c.l.b16 %v11387
        %v11461 = vunpack.c.l.b16 %v11388
        %v11462 = vunpack.c.l.b16 %v11389
        %v11463 = vunpack.c.l.b16 %v11390
        %v11464 = vunpack.c.l.b16 %v11391
        %v11465 = vunpack.c.l.b16 %v11392
        %v11466 = vunpack.c.l.b16 %v11393
        %v11467 = vunpack.c.l.b16 %v11394
        %v11468 = vunpack.c.l.b16 %v11395
        %v11469 = vunpack.c.l.b16 %v11396
        %v11470 = vpack.c.b16 %v11439, %v11438
        %v11471 = vpack.c.b16 %v11441, %v11440
        %v11472 = vpack.c.b16 %v11443, %v11442
        %v11473 = vpack.c.b16 %v11445, %v11444
        %v11474 = vpack.c.b16 %v11447, %v11446
        %v11475 = vpack.c.b16 %v11449, %v11448
        %v11476 = vpack.c.b16 %v11451, %v11450
        %v11477 = vpack.c.b16 %v11453, %v11452
        %v11478 = vpack.c.b16 %v11455, %v11454
        %v11479 = vpack.c.b16 %v11457, %v11456
        %v11480 = vpack.c.b16 %v11459, %v11458
        %v11481 = vpack.c.b16 %v11461, %v11460
        %v11482 = vpack.c.b16 %v11463, %v11462
        %v11483 = vpack.c.b16 %v11465, %v11464
        %v11484 = vpack.c.b16 %v11467, %v11466
        %v11485 = vpack.c.b16 %v11469, %v11468
        %11502 = vmatprep.subr.bf16.mxu0 0
        %11503 = vmatpush1.bf16.msra.mxu0 %v11470
        %11504 = vmatprep.subr.bf16.mxu0 0
        %11505 = vmatpush1.bf16.msra.mxu0 %v11471
        %11506 = vmatprep.subr.bf16.mxu0 0
        %11507 = vmatpush1.bf16.msra.mxu0 %v11472
        %11508 = vmatprep.subr.bf16.mxu0 0
        %11509 = vmatpush1.bf16.msra.mxu0 %v11473
        %11510 = vmatprep.subr.bf16.mxu0 0
        %11511 = vmatpush1.bf16.msra.mxu0 %v11474
        %11512 = vmatprep.subr.bf16.mxu0 0
        %11513 = vmatpush1.bf16.msra.mxu0 %v11475
        %11514 = vmatprep.subr.bf16.mxu0 0
        %11515 = vmatpush1.bf16.msra.mxu0 %v11476
        %11516 = vmatprep.subr.bf16.mxu0 0
        %11517 = vmatpush1.bf16.msra.mxu0 %v11477
        %11518 = vmatprep.subr.bf16.mxu0 0
        %11519 = vmatpush1.bf16.msra.mxu0 %v11478
        %11520 = vmatprep.subr.bf16.mxu0 0
        %11521 = vmatpush1.bf16.msra.mxu0 %v11479
        %11522 = vmatprep.subr.bf16.mxu0 0
        %11523 = vmatpush1.bf16.msra.mxu0 %v11480
        %11524 = vmatprep.subr.bf16.mxu0 0
        %11525 = vmatpush1.bf16.msra.mxu0 %v11481
        %11526 = vmatprep.subr.bf16.mxu0 0
        %11527 = vmatpush1.bf16.msra.mxu0 %v11482
        %11528 = vmatprep.subr.bf16.mxu0 0
        %11529 = vmatpush1.bf16.msra.mxu0 %v11483
        %11530 = vmatprep.subr.bf16.mxu0 0
        %11531 = vmatpush1.bf16.msra.mxu0 %v11484
        %11532 = vmatprep.subr.bf16.mxu0 0
        %11533 = vmatpush1.bf16.msra.mxu0 %v11485
        %11534 = vmatprep.mubr.bf16.mxu0 %v11398
        %11535 = vmatmul.mubr.bf16.gmra.mrb[0].mxu0 %v11397
        %v11536 = vpop.f32.mrb[0].mxu0
        %v11537 = vadd.f32 %v11404, %v11536
        %v11538 = vpop.f32.mrb[0].mxu0
        %v11539 = vpop.f32.mrb[0].mxu0
        %v11540 = vpop.f32.mrb[0].mxu0
        %11541 = vdwg.mxu0
        %p11542 = scmp.eq.s32.totalorder %s40, 0
        // Predicated region
        $region105: #{actor_critic_forward.1} parent=63 // pred_check
          %p11543 = pneg %p11542
        $region106: #{actor_critic_forward.1} parent=63 // pred_check_branch
          %11545 = sbr.rel (%p11543) target = $region108
        $region107: #{actor_critic_forward.1} parent=63 // pred_region
          %v11546 = vsel %vm855, %v11537, -inf
          %11547 = vmax.xlane.f32.xlu0 %v11546
          %v11548 = vpop.xlane.xlu0 %11547
          %v11549 = vsub.f32 %v11537, %v11548
          %v11550 = vmul.f32 %v11549, 1.442695
          %v11551 = vpow.pop %v11550
          %v11552 = vsel %vm855, %v11551, 0.0
          %11553 = vadd.xlane.f32.xlu0 %v11552
          %v11554 = vpop.xlane.xlu0 %11553
          %v11555 = vrcp.pop %v11554
          %v11556 = vmul.f32 %v11551, %v11555
          %11557 = vst [vmem:[%s738] sm:$0x3] %v11556
        $region108: #{actor_critic_forward.1} parent=63 // pred_fallthru
          _
        %p11558 = scmp.eq.s32.totalorder %s40, 1
        // Predicated region
        $region109: #{actor_critic_forward.1} parent=63 // pred_check
          %p11559 = pneg %p11558
        $region110: #{actor_critic_forward.1} parent=63 // pred_check_branch
          %11561 = sbr.rel (%p11559) target = $region112
        $region111: #{actor_critic_forward.1} parent=63 // pred_region
          %11562 = vst [vmem:[%s738] sm:$0x3] %v11537
        $region112: #{actor_critic_forward.1} parent=63 // pred_fallthru
          _
        %p11563 = scmp.lt.s32.totalorder %s40, 1
        %s11564 = scalar_select %p11563, %s40, 1
        %s11565 = smul.addr %s11564, 2
        %s11566 = scalar_lea.vmem %s11, %s11565
        // Predicated region
        $region113: #{actor_critic_forward.1} parent=63 // pred_check
          %p11567 = pneg %p339
        $region114: #{actor_critic_forward.1} parent=63 // pred_check_branch
          %11569 = sbr.rel (%p11567) target = $region116
        $region115: #{actor_critic_forward.1} parent=63 // pred_region
          _
        $region116: #{actor_critic_forward.1} parent=63 // pred_fallthru
          _
      $region64: #{actor_critic_forward.1} parent=5 // pred_fallthru
        _
      %p11570 = scmp.le.s32.totalorder 2, %s35
      // Predicated region
      $region117: #{actor_critic_forward.1} parent=5 // pred_check
        %p11571 = pneg %p11570
      $region118: #{actor_critic_forward.1} parent=5 // pred_check_branch
        %11573 = sbr.rel (%p11571) target = $region120
      $region119: #{actor_critic_forward.1} parent=5 // pred_region
        %s11574 = ssub.s32 %s35, 2
        // Predicated region
        $region121: #{actor_critic_forward.1} parent=119 // pred_check
          %p11575 = pneg %p345
        $region122: #{actor_critic_forward.1} parent=119 // pred_check_branch
          %11577 = sbr.rel (%p11575) target = $region124
        $region123: #{actor_critic_forward.1} parent=119 // pred_region
          %p11578 = scmp.lt.s32.totalorder %s41, 1
          %s11579 = scalar_select %p11578, %s41, 1
          %s11580 = smul.addr %s11579, 2
          %s11581 = scalar_lea.vmem %s11, %s11580
        $region124: #{actor_critic_forward.1} parent=119 // pred_fallthru
          _
      $region120: #{actor_critic_forward.1} parent=5 // pred_fallthru
        _
    $region6: #{actor_critic_forward.1} parent=1 // loop_footer
      %s39 = sadd.s32 1, %s35
    $region7: #{actor_critic_forward.1} parent=1 // loop_footer_branch
      %34 = sbr.rel target = $region3
    $region8: #{actor_critic_forward.1} parent=1 // loop_exit
      _
    %11582 = vsyncpa [#allocation3], 1
    %s11583 = scalar_lea.sflag [#allocation3], 1
    %11584 = vsyncpa %s11583, 1
    %11585 = vsyncpa [#allocation5], 1
    %s11586 = scalar_lea.sflag [#allocation5], 1
    %11587 = vsyncpa %s11586, 1
    %11588 = vsyncpa [#allocation8], 1
    %s11589 = scalar_lea.sflag [#allocation8], 1
    %11590 = vsyncpa %s11589, 1
    %11591 = vsyncpa [#allocation11], 1
    %s11592 = scalar_lea.sflag [#allocation11], 1
    %11593 = vsyncpa %s11592, 1
    %11594 = vsyncpa [#allocation14], 1
    %s11595 = scalar_lea.sflag [#allocation14], 1
    %11596 = vsyncpa %s11595, 1
    %11597 = vsyncpa [#allocation17], 1
    %s11598 = scalar_lea.sflag [#allocation17], 1
    %11599 = vsyncpa %s11598, 1

</llo_original>
